<compile_context>
chip_gen: v7x
topology: tpu7x:2x2x1
jax: 0.10.0
libtpu: 0.0.40
codegen_flags: <defaults>
</compile_context>

<pallas_src>
import jax
import jax.numpy as jnp
from jax.experimental import pallas as pl
from jax.experimental.pallas import tpu as pltpu

# ----------------------------- model dimensions -------------------------------
KH = KW = 3                    # conv kernel (padding = 1, stride = 1)
CIN, COUT = 4, 8
H = W = 16
HW = H * W                     # 256
IN_FEAT = CIN * HW             # 1024  (NCHW-flattened input row)
FEAT = COUT * HW               # 2048  (NCHW-flattened conv output = fc1 input)
HID, NCLS = 32, 2
TB_MAX = 128                   # batch tile per grid step


# ------------------------------- fused kernel ---------------------------------
def fused_conv_mlp_kernel(x_ref, wconv_ref, bconv_ref, w1_ref, b1_ref,
                          w2_ref, b2_ref, out_ref, adv_ref):
    # x_ref    : (TB, IN_FEAT)    NCHW-flattened input images
    # wconv_ref: (IN_FEAT, FEAT)  dense conv operator matrix
    # bconv_ref: (1, FEAT)        conv bias broadcast over spatial positions
    # w1_ref   : (FEAT, HID)      fc1 weights (torch weight transposed)
    # b1_ref   : (1, HID)
    # w2_ref   : (HID, NCLS)
    # b2_ref   : (1, NCLS)
    # out_ref  : (TB, FEAT)       conv+ReLU activation, NCHW-flatten order
    # adv_ref  : (TB, NCLS)

    # Conv + bias + ReLU as one MXU matmul with M = TB.
    feat = jnp.dot(x_ref[...], wconv_ref[...], preferred_element_type=jnp.float32)
    feat = jnp.maximum(feat + bconv_ref[...], 0.0)           # (TB, FEAT)
    out_ref[...] = feat.astype(out_ref.dtype)                # lane-dense unmasked stores

    # Adversarial MLP on the VMEM-resident activation (no HBM round trip).
    h = jnp.dot(feat, w1_ref[...], preferred_element_type=jnp.float32) + b1_ref[...]
    h = jnp.maximum(h, 0.0)                                  # (TB, HID)
    adv = jnp.dot(h, w2_ref[...], preferred_element_type=jnp.float32) + b2_ref[...]
    adv_ref[...] = adv.astype(adv_ref.dtype)                 # one (TB, NCLS) store / tile


# ------------------------------ combined forward ------------------------------
@jax.jit
def local_adversarial_combined_forward(x_nchw, params):
    """Mirrors Local_Adversarial_combined_model.forward.

    Returns (out, adversarial_output); the torch module returns `out` and keeps
    the adversarial output as an attribute.
    `params` must come from prepare_params().
    """
    N = x_nchw.shape[0]
    x_flat = x_nchw.reshape(N, IN_FEAT)          # NCHW kept; just flatten

    TB = min(TB_MAX, N)
    n_steps = pl.cdiv(N, TB)
    N_pad = n_steps * TB
    if N_pad != N:
        x_flat = jnp.pad(x_flat, ((0, N_pad - N), (0, 0)))

    flops = 2 * N_pad * (IN_FEAT * FEAT + FEAT * HID + HID * NCLS)
    bytes_accessed = 4 * (x_flat.size + params["wconv"].size + params["bconv"].size +
                          params["w1"].size + params["b1"].size +
                          params["w2"].size + params["b2"].size +
                          N_pad * FEAT + N_pad * NCLS)

    out_flat, adv = pl.pallas_call(
        fused_conv_mlp_kernel,
        out_shape=(jax.ShapeDtypeStruct((N_pad, FEAT), jnp.float32),
                   jax.ShapeDtypeStruct((N_pad, NCLS), jnp.float32)),
        grid=(n_steps,),
        in_specs=[
            pl.BlockSpec((TB, IN_FEAT), lambda n: (n, 0)),
            pl.BlockSpec((IN_FEAT, FEAT), lambda n: (0, 0)),
            pl.BlockSpec((1, FEAT), lambda n: (0, 0)),
            pl.BlockSpec((FEAT, HID), lambda n: (0, 0)),
            pl.BlockSpec((1, HID), lambda n: (0, 0)),
            pl.BlockSpec((HID, NCLS), lambda n: (0, 0)),
            pl.BlockSpec((1, NCLS), lambda n: (0, 0)),
        ],
        out_specs=(pl.BlockSpec((TB, FEAT), lambda n: (n, 0)),
                   pl.BlockSpec((TB, NCLS), lambda n: (n, 0))),
        compiler_params=pltpu.CompilerParams(
            dimension_semantics=("parallel",),       # batch tiles across TCs on v7x
            vmem_limit_bytes=32 * 1024 * 1024),      # ~20 MiB actually used
        cost_estimate=pl.CostEstimate(flops=flops, transcendentals=0,
                                      bytes_accessed=bytes_accessed),
    )(x_flat, params["wconv"], params["bconv"], params["w1"], params["b1"],
      params["w2"], params["b2"])

    out = out_flat[:N].reshape(N, COUT, H, W)        # same memory order, just 4-D
    return out, adv[:N]


# --------------------- one-time weight layout preparation ---------------------
def prepare_params(conv_w_oihw, conv_b, fc1_w, fc1_b, fc2_w, fc2_b):
    """PyTorch-native parameter layouts -> kernel-friendly layouts (done once)."""
    # Dense conv operator matrix: column co*HW+p of Wconv is the response at
    # output position p / channel co to a one-hot input, so x_flat @ Wconv equals
    # the padded 3x3 conv in NCHW .view(N,-1) order.
    eye = jnp.eye(IN_FEAT, dtype=jnp.float32).reshape(IN_FEAT, CIN, H, W)
    wconv = jax.lax.conv_general_dilated(
        eye, conv_w_oihw, window_strides=(1, 1), padding="SAME",
        dimension_numbers=("NCHW", "OIHW", "NCHW")).reshape(IN_FEAT, FEAT)
    bconv = jnp.broadcast_to(conv_b[:, None], (COUT, HW)).reshape(1, FEAT)
    w1 = jnp.transpose(fc1_w, (1, 0))                # (FEAT, HID)
    b1 = fc1_b.reshape(1, HID)
    w2 = jnp.transpose(fc2_w, (1, 0))                # (HID, NCLS)
    b2 = fc2_b.reshape(1, NCLS)
    return {"wconv": wconv, "bconv": bconv, "w1": w1, "b1": b1, "w2": w2, "b2": b2}


# ------------------------------------ main -------------------------------------
if __name__ == "__main__":
    N = 2
    key = jax.random.PRNGKey(0)
    k_x, k_cw, k_cb, k_w1, k_b1, k_w2, k_b2 = jax.random.split(key, 7)

    x = jax.random.normal(k_x, (N, CIN, H, W), jnp.float32)

    # parameters in PyTorch-native layouts
    conv_w = jax.random.normal(k_cw, (COUT, CIN, KH, KW), jnp.float32) * 0.1
    conv_b = jax.random.normal(k_cb, (COUT,), jnp.float32) * 0.1
    fc1_w = jax.random.normal(k_w1, (HID, FEAT), jnp.float32) * 0.02
    fc1_b = jax.random.normal(k_b1, (HID,), jnp.float32) * 0.02
    fc2_w = jax.random.normal(k_w2, (NCLS, HID), jnp.float32) * 0.1
    fc2_b = jax.random.normal(k_b2, (NCLS,), jnp.float32) * 0.1

    params = prepare_params(conv_w, conv_b, fc1_w, fc1_b, fc2_w, fc2_b)

    out, adv = local_adversarial_combined_forward(x, params)
    jax.block_until_ready((out, adv))

    # ------------------------- pure-JAX reference ------------------------------
    ref_conv = jax.lax.conv_general_dilated(
        x, conv_w, window_strides=(1, 1), padding="SAME",
        dimension_numbers=("NCHW", "OIHW", "NCHW"))
    ref_out = jnp.maximum(ref_conv + conv_b[None, :, None, None], 0.0)
    ref_h = jnp.maximum(ref_out.reshape(N, -1) @ fc1_w.T + fc1_b[None, :], 0.0)
    ref_adv = ref_h @ fc2_w.T + fc2_b[None, :]

    assert out.shape == (N, COUT, H, W) and adv.shape == (N, NCLS)
    assert jnp.allclose(out, ref_out, atol=1e-3, rtol=1e-3), \
        float(jnp.max(jnp.abs(out - ref_out)))
    assert jnp.allclose(adv, ref_adv, atol=1e-2, rtol=1e-2), \
        float(jnp.max(jnp.abs(adv - ref_adv)))

    print("KERNEL_OK")
</pallas_src>

<mosaic_0001>
module attributes {stable_mosaic.version = 11 : i64} {
  func.func @fused_conv_mlp_kernel(%arg0: i32, %arg1: memref<2x1024xf32, #tpu.memory_space<vmem>>, %arg2: memref<1024x2048xf32, #tpu.memory_space<vmem>>, %arg3: memref<1x2048xf32, #tpu.memory_space<vmem>>, %arg4: memref<2048x32xf32, #tpu.memory_space<vmem>>, %arg5: memref<1x32xf32, #tpu.memory_space<vmem>>, %arg6: memref<32x2xf32, #tpu.memory_space<vmem>>, %arg7: memref<1x2xf32, #tpu.memory_space<vmem>>, %arg8: memref<2x2048xf32, #tpu.memory_space<vmem>>, %arg9: memref<2x2xf32, #tpu.memory_space<vmem>>) attributes {dimension_semantics = [#tpu.dimension_semantics<parallel>], iteration_bounds = array<i64: 1>, scalar_prefetch = 0 : i64, scratch_operands = 0 : i64, tpu.core_type = #tpu.core_type<tc>, window_params = [{transform_indices = @transform_0, window_bounds = array<i64: 2, 1024>}, {pipeline_mode = #tpu.pipeline_mode<synchronous>, transform_indices = @transform_1, window_bounds = array<i64: 1024, 2048>}, {pipeline_mode = #tpu.pipeline_mode<synchronous>, transform_indices = @transform_2, window_bounds = array<i64: 1, 2048>}, {pipeline_mode = #tpu.pipeline_mode<synchronous>, transform_indices = @transform_3, window_bounds = array<i64: 2048, 32>}, {pipeline_mode = #tpu.pipeline_mode<synchronous>, transform_indices = @transform_4, window_bounds = array<i64: 1, 32>}, {pipeline_mode = #tpu.pipeline_mode<synchronous>, transform_indices = @transform_5, window_bounds = array<i64: 32, 2>}, {pipeline_mode = #tpu.pipeline_mode<synchronous>, transform_indices = @transform_6, window_bounds = array<i64: 1, 2>}, {transform_indices = @transform_7, window_bounds = array<i64: 2, 2048>}, {transform_indices = @transform_8, window_bounds = array<i64: 2, 2>}]} {
    %c0 = arith.constant 0 : index
    %c0_0 = arith.constant 0 : index
    %0 = vector.load %arg1[%c0, %c0_0] : memref<2x1024xf32, #tpu.memory_space<vmem>>, vector<2x1024xf32>
    %c0_1 = arith.constant 0 : index
    %c0_2 = arith.constant 0 : index
    %1 = vector.load %arg2[%c0_1, %c0_2] : memref<1024x2048xf32, #tpu.memory_space<vmem>>, vector<1024x2048xf32>
    %cst = arith.constant dense<0.000000e+00> : vector<2x2048xf32>
    %2 = tpu.matmul %0, %1, %cst {dimension_numbers = #tpu.dot_dimension_numbers<[1], [0], [0], [1], [0, 0, 1, 1], [], []>} : vector<2x1024xf32>, vector<1024x2048xf32>, vector<2x2048xf32> -> vector<2x2048xf32>
    %c0_3 = arith.constant 0 : index
    %c0_4 = arith.constant 0 : index
    %3 = vector.load %arg3[%c0_3, %c0_4] : memref<1x2048xf32, #tpu.memory_space<vmem>>, vector<1x2048xf32>
    %4 = vector.broadcast %3 : vector<1x2048xf32> to vector<2x2048xf32>
    %5 = arith.addf %2, %4 : vector<2x2048xf32>
    %cst_5 = arith.constant 0.000000e+00 : f32
    %6 = vector.broadcast %cst_5 : f32 to vector<2x2048xf32>
    %7 = arith.maximumf %5, %6 : vector<2x2048xf32>
    %c0_6 = arith.constant 0 : index
    %c0_7 = arith.constant 0 : index
    %8 = vector.load %arg8[%c0_6, %c0_7] : memref<2x2048xf32, #tpu.memory_space<vmem>>, vector<2x2048xf32>
    tpu.vector_store %arg8[%c0_6, %c0_7], %7 {strides = array<i32>} : memref<2x2048xf32, #tpu.memory_space<vmem>>, vector<2x2048xf32>,
    %c0_8 = arith.constant 0 : index
    %c0_9 = arith.constant 0 : index
    %9 = vector.load %arg4[%c0_8, %c0_9] : memref<2048x32xf32, #tpu.memory_space<vmem>>, vector<2048x32xf32>
    %cst_10 = arith.constant dense<0.000000e+00> : vector<2x32xf32>
    %10 = tpu.matmul %7, %9, %cst_10 {dimension_numbers = #tpu.dot_dimension_numbers<[1], [0], [0], [1], [0, 0, 1, 1], [], []>} : vector<2x2048xf32>, vector<2048x32xf32>, vector<2x32xf32> -> vector<2x32xf32>
    %c0_11 = arith.constant 0 : index
    %c0_12 = arith.constant 0 : index
    %11 = vector.load %arg5[%c0_11, %c0_12] : memref<1x32xf32, #tpu.memory_space<vmem>>, vector<1x32xf32>
    %12 = vector.broadcast %11 : vector<1x32xf32> to vector<2x32xf32>
    %13 = arith.addf %10, %12 : vector<2x32xf32>
    %cst_13 = arith.constant 0.000000e+00 : f32
    %14 = vector.broadcast %cst_13 : f32 to vector<2x32xf32>
    %15 = arith.maximumf %13, %14 : vector<2x32xf32>
    %c0_14 = arith.constant 0 : index
    %c0_15 = arith.constant 0 : index
    %16 = vector.load %arg6[%c0_14, %c0_15] : memref<32x2xf32, #tpu.memory_space<vmem>>, vector<32x2xf32>
    %cst_16 = arith.constant dense<0.000000e+00> : vector<2x2xf32>
    %17 = tpu.matmul %15, %16, %cst_16 {dimension_numbers = #tpu.dot_dimension_numbers<[1], [0], [0], [1], [0, 0, 1, 1], [], []>} : vector<2x32xf32>, vector<32x2xf32>, vector<2x2xf32> -> vector<2x2xf32>
    %c0_17 = arith.constant 0 : index
    %c0_18 = arith.constant 0 : index
    %18 = vector.load %arg7[%c0_17, %c0_18] : memref<1x2xf32, #tpu.memory_space<vmem>>, vector<1x2xf32>
    %19 = vector.broadcast %18 : vector<1x2xf32> to vector<2x2xf32>
    %20 = arith.addf %17, %19 : vector<2x2xf32>
    %c0_19 = arith.constant 0 : index
    %c0_20 = arith.constant 0 : index
    %21 = vector.load %arg9[%c0_19, %c0_20] : memref<2x2xf32, #tpu.memory_space<vmem>>, vector<2x2xf32>
    tpu.vector_store %arg9[%c0_19, %c0_20], %20 {strides = array<i32>} : memref<2x2xf32, #tpu.memory_space<vmem>>, vector<2x2xf32>,
    return
  }
  func.func @transform_0(%arg0: i32) -> (i32, i32) {
    %c0_i32 = arith.constant 0 : i32
    %c0_i32_0 = arith.constant 0 : i32
    return %arg0, %c0_i32 : i32, i32
  }
  func.func @transform_1(%arg0: i32) -> (i32, i32) {
    %c0_i32 = arith.constant 0 : i32
    %c0_i32_0 = arith.constant 0 : i32
    %c0_i32_1 = arith.constant 0 : i32
    return %c0_i32, %c0_i32_0 : i32, i32
  }
  func.func @transform_2(%arg0: i32) -> (i32, i32) {
    %c0_i32 = arith.constant 0 : i32
    %c0_i32_0 = arith.constant 0 : i32
    %c0_i32_1 = arith.constant 0 : i32
    return %c0_i32, %c0_i32_0 : i32, i32
  }
  func.func @transform_3(%arg0: i32) -> (i32, i32) {
    %c0_i32 = arith.constant 0 : i32
    %c0_i32_0 = arith.constant 0 : i32
    %c0_i32_1 = arith.constant 0 : i32
    return %c0_i32, %c0_i32_0 : i32, i32
  }
  func.func @transform_4(%arg0: i32) -> (i32, i32) {
    %c0_i32 = arith.constant 0 : i32
    %c0_i32_0 = arith.constant 0 : i32
    %c0_i32_1 = arith.constant 0 : i32
    return %c0_i32, %c0_i32_0 : i32, i32
  }
  func.func @transform_5(%arg0: i32) -> (i32, i32) {
    %c0_i32 = arith.constant 0 : i32
    %c0_i32_0 = arith.constant 0 : i32
    %c0_i32_1 = arith.constant 0 : i32
    return %c0_i32, %c0_i32_0 : i32, i32
  }
  func.func @transform_6(%arg0: i32) -> (i32, i32) {
    %c0_i32 = arith.constant 0 : i32
    %c0_i32_0 = arith.constant 0 : i32
    %c0_i32_1 = arith.constant 0 : i32
    return %c0_i32, %c0_i32_0 : i32, i32
  }
  func.func @transform_7(%arg0: i32) -> (i32, i32) {
    %c0_i32 = arith.constant 0 : i32
    %c0_i32_0 = arith.constant 0 : i32
    return %arg0, %c0_i32 : i32, i32
  }
  func.func @transform_8(%arg0: i32) -> (i32, i32) {
    %c0_i32 = arith.constant 0 : i32
    %c0_i32_0 = arith.constant 0 : i32
    return %arg0, %c0_i32 : i32, i32
  }
}

</mosaic_0001>

<llo_original>
// kernel: local_adversarial_combined_forward.1
$region0: #{local_adversarial_combined_forward.1}
  #allocation0 [shape = 'u32[]', space=smem, size = 0x4, offset = 0x4, fixed_abs, tag = 'smem constant byte address 0x4 - core index']
  #allocation1 [shape = 'u32[144,128]{1,0:T(1,128)}', space=vmem, size = 0x12000, scoped, tag = 'internal scratch']
  %s0 = inlined_call_operand.vmem [shape: f32[2,1024], index: 0, kind: input, shape index: {}]
  %s1 = inlined_call_operand.hbm [shape: f32[1024,2048], index: 1, kind: input, shape index: {}]
  %s2 = inlined_call_operand.hbm [shape: f32[1,2048], index: 2, kind: input, shape index: {}]
  %s3 = inlined_call_operand.vmem [shape: f32[2048,32], index: 3, kind: input, shape index: {}]
  %s4 = inlined_call_operand.hbm [shape: f32[1,32], index: 4, kind: input, shape index: {}]
  %s5 = inlined_call_operand.vmem [shape: f32[32,2], index: 5, kind: input, shape index: {}]
  %s6 = inlined_call_operand.hbm [shape: f32[1,2], index: 6, kind: input, shape index: {}]
  %s7 = inlined_call_operand.vmem [shape: f32[2,2048], index: 7, kind: output, shape index: {0}]
  %s8 = inlined_call_operand.hbm [shape: f32[2,2], index: 8, kind: output, shape index: {1}]
  %9 = xla_tuple %s7, %s8
  %s10 = sld [smem:[#allocation0]]
  $region62: #{local_adversarial_combined_forward.1} parent=0
    _
  %s12 = ssub.s32 1, %s10
  %s13 = scalar_select 0, %s12, %s10
  $region1: #{local_adversarial_combined_forward.1} parent=0
    #allocation2 [shape = 'u8[8388608]{0}', space=vmem, size = 0x800000, scoped, tag = 'input window, operand 1, single buffered']
    #allocation3 [shape = 's32[1]{0}', space=sflag, size = 0x4, scoped, tag = 'scoped memory for local_adversarial_combined_forward.1']
    #allocation4 [shape = 's32[1]{0}', space=sflag, size = 0x4, scoped, tag = 'scoped memory for local_adversarial_combined_forward.1']
    #allocation5 [shape = 'u8[8192]{0}', space=vmem, size = 0x2000, scoped, tag = 'input window, operand 2, single buffered']
    #allocation6 [shape = 's32[1]{0}', space=sflag, size = 0x4, scoped, tag = 'scoped memory for local_adversarial_combined_forward.1']
    #allocation7 [shape = 'u8[512]{0}', space=vmem, size = 0x400, scoped, tag = 'input window, operand 4, single buffered']
    #allocation8 [shape = 'u8[512]{0}', space=vmem, size = 0x400, scoped, tag = 'input window, operand 6, single buffered']
    #allocation9 [shape = 's32[1]{0}', space=sflag, size = 0x4, scoped, tag = 'scoped memory for local_adversarial_combined_forward.1']
    #allocation10 [shape = 'u8[1024]{0}', space=vmem, size = 0x400, scoped, tag = 'output window, operand 1, single buffered']
    %14 = vsyncpa [#allocation3], 0
    %15 = vsyncpa [#allocation6], 0
    %16 = vsyncpa [#allocation9], 0
    %17 = vsyncpa [#allocation4], 0
    // Predicated region
    $region2: #{local_adversarial_combined_forward.1} parent=1 // pred_check
      _
    $region3: #{local_adversarial_combined_forward.1} parent=1 // pred_check_branch
      %19 = sbr.rel (0) target = $region5
    $region4: #{local_adversarial_combined_forward.1} parent=1 // pred_region
      _
    $region5: #{local_adversarial_combined_forward.1} parent=1 // pred_fallthru
      _
    // Predicated region
    $region6: #{local_adversarial_combined_forward.1} parent=1 // pred_check
      _
    $region7: #{local_adversarial_combined_forward.1} parent=1 // pred_check_branch
      %21 = sbr.rel (0) target = $region9
    $region8: #{local_adversarial_combined_forward.1} parent=1 // pred_region
      %s23 = ssub.s32 262144, 262144
      %24 = vsyncadd [#allocation3], %s23
      %s25 = sshll.u32 [#allocation2], 4
      %s26 = int_to_ptr.vmem [resolvable:$true] %s25
      %31 = dma.hbm_to_vmem [thread:$0]  %s1, 262144, %s26, [#allocation3], 2048, 2048, 128
    $region9: #{local_adversarial_combined_forward.1} parent=1 // pred_fallthru
      _
    // Predicated region
    $region10: #{local_adversarial_combined_forward.1} parent=1 // pred_check
      _
    $region11: #{local_adversarial_combined_forward.1} parent=1 // pred_check_branch
      %33 = sbr.rel (0) target = $region13
    $region12: #{local_adversarial_combined_forward.1} parent=1 // pred_region
      %s35 = ssub.s32 256, 256
      %36 = vsyncadd [#allocation6], %s35
      %s38 = sshll.u32 [#allocation5], 4
      %s39 = int_to_ptr.vmem [resolvable:$true] %s38
      %41 = dma.hbm_to_vmem [thread:$0]  %s2, 256, %s39, [#allocation6]
    $region13: #{local_adversarial_combined_forward.1} parent=1 // pred_fallthru
      _
    // Predicated region
    $region14: #{local_adversarial_combined_forward.1} parent=1 // pred_check
      _
    $region15: #{local_adversarial_combined_forward.1} parent=1 // pred_check_branch
      %43 = sbr.rel (0) target = $region17
    $region16: #{local_adversarial_combined_forward.1} parent=1 // pred_region
      _
    $region17: #{local_adversarial_combined_forward.1} parent=1 // pred_fallthru
      _
    // Predicated region
    $region18: #{local_adversarial_combined_forward.1} parent=1 // pred_check
      _
    $region19: #{local_adversarial_combined_forward.1} parent=1 // pred_check_branch
      %45 = sbr.rel (0) target = $region21
    $region20: #{local_adversarial_combined_forward.1} parent=1 // pred_region
      %s47 = ssub.s32 16, 16
      %48 = vsyncadd [#allocation6], %s47
      %s50 = sshll.u32 [#allocation7], 4
      %s51 = int_to_ptr.vmem [resolvable:$true] %s50
      %53 = dma.hbm_to_vmem [thread:$0]  %s4, 16, %s51, [#allocation6]
    $region21: #{local_adversarial_combined_forward.1} parent=1 // pred_fallthru
      _
    // Predicated region
    $region22: #{local_adversarial_combined_forward.1} parent=1 // pred_check
      _
    $region23: #{local_adversarial_combined_forward.1} parent=1 // pred_check_branch
      %55 = sbr.rel (0) target = $region25
    $region24: #{local_adversarial_combined_forward.1} parent=1 // pred_region
      _
    $region25: #{local_adversarial_combined_forward.1} parent=1 // pred_fallthru
      _
    // Predicated region
    $region26: #{local_adversarial_combined_forward.1} parent=1 // pred_check
      _
    $region27: #{local_adversarial_combined_forward.1} parent=1 // pred_check_branch
      %57 = sbr.rel (0) target = $region29
    $region28: #{local_adversarial_combined_forward.1} parent=1 // pred_region
      %s59 = ssub.s32 16, 16
      %60 = vsyncadd [#allocation9], %s59
      %s62 = sshll.u32 [#allocation8], 4
      %s63 = int_to_ptr.vmem [resolvable:$true] %s62
      %65 = dma.hbm_to_vmem [thread:$0]  %s6, 16, %s63, [#allocation9]
    $region29: #{local_adversarial_combined_forward.1} parent=1 // pred_fallthru
      _
    // Predicated region
    $region30: #{local_adversarial_combined_forward.1} parent=1 // pred_check
      _
    $region31: #{local_adversarial_combined_forward.1} parent=1 // pred_check_branch
      %67 = sbr.rel (0) target = $region33
    $region32: #{local_adversarial_combined_forward.1} parent=1 // pred_region
      %68 = dma.done [#allocation3], 262144
    $region33: #{local_adversarial_combined_forward.1} parent=1 // pred_fallthru
      _
    // Predicated region
    $region34: #{local_adversarial_combined_forward.1} parent=1 // pred_check
      _
    $region35: #{local_adversarial_combined_forward.1} parent=1 // pred_check_branch
      %70 = sbr.rel (0) target = $region37
    $region36: #{local_adversarial_combined_forward.1} parent=1 // pred_region
      %71 = dma.done [#allocation6], 256
    $region37: #{local_adversarial_combined_forward.1} parent=1 // pred_fallthru
      _
    // Predicated region
    $region38: #{local_adversarial_combined_forward.1} parent=1 // pred_check
      _
    $region39: #{local_adversarial_combined_forward.1} parent=1 // pred_check_branch
      %73 = sbr.rel (0) target = $region41
    $region40: #{local_adversarial_combined_forward.1} parent=1 // pred_region
      %74 = dma.done [#allocation6], 16
    $region41: #{local_adversarial_combined_forward.1} parent=1 // pred_fallthru
      _
    // Predicated region
    $region42: #{local_adversarial_combined_forward.1} parent=1 // pred_check
      _
    $region43: #{local_adversarial_combined_forward.1} parent=1 // pred_check_branch
      %76 = sbr.rel (0) target = $region45
    $region44: #{local_adversarial_combined_forward.1} parent=1 // pred_region
      %77 = dma.done [#allocation9], 16
    $region45: #{local_adversarial_combined_forward.1} parent=1 // pred_fallthru
      _
    %v78 = vld [vmem:[%s0] sm:$0xff]
    %v79 = vld [vmem:[%s0 + $0x8] sm:$0xff]
    %v80 = vld [vmem:[#allocation2] sm:$0xff]
    %v81 = vld [vmem:[#allocation2 + $0x8] sm:$0xff]
    %v82 = vld [vmem:[#allocation2 + $0x10] sm:$0xff]
    %v83 = vld [vmem:[#allocation2 + $0x18] sm:$0xff]
    %v84 = vld [vmem:[#allocation2 + $0x20] sm:$0xff]
    %v85 = vld [vmem:[#allocation2 + $0x28] sm:$0xff]
    %v86 = vld [vmem:[#allocation2 + $0x30] sm:$0xff]
    %v87 = vld [vmem:[#allocation2 + $0x38] sm:$0xff]
    %v88 = vld [vmem:[#allocation2 + $0x40] sm:$0xff]
    %v89 = vld [vmem:[#allocation2 + $0x48] sm:$0xff]
    %v90 = vld [vmem:[#allocation2 + $0x50] sm:$0xff]
    %v91 = vld [vmem:[#allocation2 + $0x58] sm:$0xff]
    %v92 = vld [vmem:[#allocation2 + $0x60] sm:$0xff]
    %v93 = vld [vmem:[#allocation2 + $0x68] sm:$0xff]
    %v94 = vld [vmem:[#allocation2 + $0x70] sm:$0xff]
    %v95 = vld [vmem:[#allocation2 + $0x78] sm:$0xff]
    %v96 = vld [vmem:[#allocation2 + $0x80] sm:$0xff]
    %v97 = vld [vmem:[#allocation2 + $0x88] sm:$0xff]
    %v98 = vld [vmem:[#allocation2 + $0x90] sm:$0xff]
    %v99 = vld [vmem:[#allocation2 + $0x98] sm:$0xff]
    %v100 = vld [vmem:[#allocation2 + $0xa0] sm:$0xff]
    %v101 = vld [vmem:[#allocation2 + $0xa8] sm:$0xff]
    %v102 = vld [vmem:[#allocation2 + $0xb0] sm:$0xff]
    %v103 = vld [vmem:[#allocation2 + $0xb8] sm:$0xff]
    %v104 = vld [vmem:[#allocation2 + $0xc0] sm:$0xff]
    %v105 = vld [vmem:[#allocation2 + $0xc8] sm:$0xff]
    %v106 = vld [vmem:[#allocation2 + $0xd0] sm:$0xff]
    %v107 = vld [vmem:[#allocation2 + $0xd8] sm:$0xff]
    %v108 = vld [vmem:[#allocation2 + $0xe0] sm:$0xff]
    %v109 = vld [vmem:[#allocation2 + $0xe8] sm:$0xff]
    %v110 = vld [vmem:[#allocation2 + $0xf0] sm:$0xff]
    %v111 = vld [vmem:[#allocation2 + $0xf8] sm:$0xff]
    %v112 = vld [vmem:[#allocation2 + $0x100] sm:$0xff]
    %v113 = vld [vmem:[#allocation2 + $0x108] sm:$0xff]
    %v114 = vld [vmem:[#allocation2 + $0x110] sm:$0xff]
    %v115 = vld [vmem:[#allocation2 + $0x118] sm:$0xff]
    %v116 = vld [vmem:[#allocation2 + $0x120] sm:$0xff]
    %v117 = vld [vmem:[#allocation2 + $0x128] sm:$0xff]
    %v118 = vld [vmem:[#allocation2 + $0x130] sm:$0xff]
    %v119 = vld [vmem:[#allocation2 + $0x138] sm:$0xff]
    %v120 = vld [vmem:[#allocation2 + $0x140] sm:$0xff]
    %v121 = vld [vmem:[#allocation2 + $0x148] sm:$0xff]
    %v122 = vld [vmem:[#allocation2 + $0x150] sm:$0xff]
    %v123 = vld [vmem:[#allocation2 + $0x158] sm:$0xff]
    %v124 = vld [vmem:[#allocation2 + $0x160] sm:$0xff]
    %v125 = vld [vmem:[#allocation2 + $0x168] sm:$0xff]
    %v126 = vld [vmem:[#allocation2 + $0x170] sm:$0xff]
    %v127 = vld [vmem:[#allocation2 + $0x178] sm:$0xff]
    %v128 = vld [vmem:[#allocation2 + $0x180] sm:$0xff]
    %v129 = vld [vmem:[#allocation2 + $0x188] sm:$0xff]
    %v130 = vld [vmem:[#allocation2 + $0x190] sm:$0xff]
    %v131 = vld [vmem:[#allocation2 + $0x198] sm:$0xff]
    %v132 = vld [vmem:[#allocation2 + $0x1a0] sm:$0xff]
    %v133 = vld [vmem:[#allocation2 + $0x1a8] sm:$0xff]
    %v134 = vld [vmem:[#allocation2 + $0x1b0] sm:$0xff]
    %v135 = vld [vmem:[#allocation2 + $0x1b8] sm:$0xff]
    %v136 = vld [vmem:[#allocation2 + $0x1c0] sm:$0xff]
    %v137 = vld [vmem:[#allocation2 + $0x1c8] sm:$0xff]
    %v138 = vld [vmem:[#allocation2 + $0x1d0] sm:$0xff]
    %v139 = vld [vmem:[#allocation2 + $0x1d8] sm:$0xff]
    %v140 = vld [vmem:[#allocation2 + $0x1e0] sm:$0xff]
    %v141 = vld [vmem:[#allocation2 + $0x1e8] sm:$0xff]
    %v142 = vld [vmem:[#allocation2 + $0x1f0] sm:$0xff]
    %v143 = vld [vmem:[#allocation2 + $0x1f8] sm:$0xff]
    %v144 = vld [vmem:[#allocation2 + $0x200] sm:$0xff]
    %v145 = vld [vmem:[#allocation2 + $0x208] sm:$0xff]
    %v146 = vld [vmem:[#allocation2 + $0x210] sm:$0xff]
    %v147 = vld [vmem:[#allocation2 + $0x218] sm:$0xff]
    %v148 = vld [vmem:[#allocation2 + $0x220] sm:$0xff]
    %v149 = vld [vmem:[#allocation2 + $0x228] sm:$0xff]
    %v150 = vld [vmem:[#allocation2 + $0x230] sm:$0xff]
    %v151 = vld [vmem:[#allocation2 + $0x238] sm:$0xff]
    %v152 = vld [vmem:[#allocation2 + $0x240] sm:$0xff]
    %v153 = vld [vmem:[#allocation2 + $0x248] sm:$0xff]
    %v154 = vld [vmem:[#allocation2 + $0x250] sm:$0xff]
    %v155 = vld [vmem:[#allocation2 + $0x258] sm:$0xff]
    %v156 = vld [vmem:[#allocation2 + $0x260] sm:$0xff]
    %v157 = vld [vmem:[#allocation2 + $0x268] sm:$0xff]
    %v158 = vld [vmem:[#allocation2 + $0x270] sm:$0xff]
    %v159 = vld [vmem:[#allocation2 + $0x278] sm:$0xff]
    %v160 = vld [vmem:[#allocation2 + $0x280] sm:$0xff]
    %v161 = vld [vmem:[#allocation2 + $0x288] sm:$0xff]
    %v162 = vld [vmem:[#allocation2 + $0x290] sm:$0xff]
    %v163 = vld [vmem:[#allocation2 + $0x298] sm:$0xff]
    %v164 = vld [vmem:[#allocation2 + $0x2a0] sm:$0xff]
    %v165 = vld [vmem:[#allocation2 + $0x2a8] sm:$0xff]
    %v166 = vld [vmem:[#allocation2 + $0x2b0] sm:$0xff]
    %v167 = vld [vmem:[#allocation2 + $0x2b8] sm:$0xff]
    %v168 = vld [vmem:[#allocation2 + $0x2c0] sm:$0xff]
    %v169 = vld [vmem:[#allocation2 + $0x2c8] sm:$0xff]
    %v170 = vld [vmem:[#allocation2 + $0x2d0] sm:$0xff]
    %v171 = vld [vmem:[#allocation2 + $0x2d8] sm:$0xff]
    %v172 = vld [vmem:[#allocation2 + $0x2e0] sm:$0xff]
    %v173 = vld [vmem:[#allocation2 + $0x2e8] sm:$0xff]
    %v174 = vld [vmem:[#allocation2 + $0x2f0] sm:$0xff]
    %v175 = vld [vmem:[#allocation2 + $0x2f8] sm:$0xff]
    %v176 = vld [vmem:[#allocation2 + $0x300] sm:$0xff]
    %v177 = vld [vmem:[#allocation2 + $0x308] sm:$0xff]
    %v178 = vld [vmem:[#allocation2 + $0x310] sm:$0xff]
    %v179 = vld [vmem:[#allocation2 + $0x318] sm:$0xff]
    %v180 = vld [vmem:[#allocation2 + $0x320] sm:$0xff]
    %v181 = vld [vmem:[#allocation2 + $0x328] sm:$0xff]
    %v182 = vld [vmem:[#allocation2 + $0x330] sm:$0xff]
    %v183 = vld [vmem:[#allocation2 + $0x338] sm:$0xff]
    %v184 = vld [vmem:[#allocation2 + $0x340] sm:$0xff]
    %v185 = vld [vmem:[#allocation2 + $0x348] sm:$0xff]
    %v186 = vld [vmem:[#allocation2 + $0x350] sm:$0xff]
    %v187 = vld [vmem:[#allocation2 + $0x358] sm:$0xff]
    %v188 = vld [vmem:[#allocation2 + $0x360] sm:$0xff]
    %v189 = vld [vmem:[#allocation2 + $0x368] sm:$0xff]
    %v190 = vld [vmem:[#allocation2 + $0x370] sm:$0xff]
    %v191 = vld [vmem:[#allocation2 + $0x378] sm:$0xff]
    %v192 = vld [vmem:[#allocation2 + $0x380] sm:$0xff]
    %v193 = vld [vmem:[#allocation2 + $0x388] sm:$0xff]
    %v194 = vld [vmem:[#allocation2 + $0x390] sm:$0xff]
    %v195 = vld [vmem:[#allocation2 + $0x398] sm:$0xff]
    %v196 = vld [vmem:[#allocation2 + $0x3a0] sm:$0xff]
    %v197 = vld [vmem:[#allocation2 + $0x3a8] sm:$0xff]
    %v198 = vld [vmem:[#allocation2 + $0x3b0] sm:$0xff]
    %v199 = vld [vmem:[#allocation2 + $0x3b8] sm:$0xff]
    %v200 = vld [vmem:[#allocation2 + $0x3c0] sm:$0xff]
    %v201 = vld [vmem:[#allocation2 + $0x3c8] sm:$0xff]
    %v202 = vld [vmem:[#allocation2 + $0x3d0] sm:$0xff]
    %v203 = vld [vmem:[#allocation2 + $0x3d8] sm:$0xff]
    %v204 = vld [vmem:[#allocation2 + $0x3e0] sm:$0xff]
    %v205 = vld [vmem:[#allocation2 + $0x3e8] sm:$0xff]
    %v206 = vld [vmem:[#allocation2 + $0x3f0] sm:$0xff]
    %v207 = vld [vmem:[#allocation2 + $0x3f8] sm:$0xff]
    %v208 = vld [vmem:[#allocation2 + $0x400] sm:$0xff]
    %v209 = vld [vmem:[#allocation2 + $0x408] sm:$0xff]
    %v210 = vld [vmem:[#allocation2 + $0x410] sm:$0xff]
    %v211 = vld [vmem:[#allocation2 + $0x418] sm:$0xff]
    %v212 = vld [vmem:[#allocation2 + $0x420] sm:$0xff]
    %v213 = vld [vmem:[#allocation2 + $0x428] sm:$0xff]
    %v214 = vld [vmem:[#allocation2 + $0x430] sm:$0xff]
    %v215 = vld [vmem:[#allocation2 + $0x438] sm:$0xff]
    %v216 = vld [vmem:[#allocation2 + $0x440] sm:$0xff]
    %v217 = vld [vmem:[#allocation2 + $0x448] sm:$0xff]
    %v218 = vld [vmem:[#allocation2 + $0x450] sm:$0xff]
    %v219 = vld [vmem:[#allocation2 + $0x458] sm:$0xff]
    %v220 = vld [vmem:[#allocation2 + $0x460] sm:$0xff]
    %v221 = vld [vmem:[#allocation2 + $0x468] sm:$0xff]
    %v222 = vld [vmem:[#allocation2 + $0x470] sm:$0xff]
    %v223 = vld [vmem:[#allocation2 + $0x478] sm:$0xff]
    %v224 = vld [vmem:[#allocation2 + $0x480] sm:$0xff]
    %v225 = vld [vmem:[#allocation2 + $0x488] sm:$0xff]
    %v226 = vld [vmem:[#allocation2 + $0x490] sm:$0xff]
    %v227 = vld [vmem:[#allocation2 + $0x498] sm:$0xff]
    %v228 = vld [vmem:[#allocation2 + $0x4a0] sm:$0xff]
    %v229 = vld [vmem:[#allocation2 + $0x4a8] sm:$0xff]
    %v230 = vld [vmem:[#allocation2 + $0x4b0] sm:$0xff]
    %v231 = vld [vmem:[#allocation2 + $0x4b8] sm:$0xff]
    %v232 = vld [vmem:[#allocation2 + $0x4c0] sm:$0xff]
    %v233 = vld [vmem:[#allocation2 + $0x4c8] sm:$0xff]
    %v234 = vld [vmem:[#allocation2 + $0x4d0] sm:$0xff]
    %v235 = vld [vmem:[#allocation2 + $0x4d8] sm:$0xff]
    %v236 = vld [vmem:[#allocation2 + $0x4e0] sm:$0xff]
    %v237 = vld [vmem:[#allocation2 + $0x4e8] sm:$0xff]
    %v238 = vld [vmem:[#allocation2 + $0x4f0] sm:$0xff]
    %v239 = vld [vmem:[#allocation2 + $0x4f8] sm:$0xff]
    %v240 = vld [vmem:[#allocation2 + $0x500] sm:$0xff]
    %v241 = vld [vmem:[#allocation2 + $0x508] sm:$0xff]
    %v242 = vld [vmem:[#allocation2 + $0x510] sm:$0xff]
    %v243 = vld [vmem:[#allocation2 + $0x518] sm:$0xff]
    %v244 = vld [vmem:[#allocation2 + $0x520] sm:$0xff]
    %v245 = vld [vmem:[#allocation2 + $0x528] sm:$0xff]
    %v246 = vld [vmem:[#allocation2 + $0x530] sm:$0xff]
    %v247 = vld [vmem:[#allocation2 + $0x538] sm:$0xff]
    %v248 = vld [vmem:[#allocation2 + $0x540] sm:$0xff]
    %v249 = vld [vmem:[#allocation2 + $0x548] sm:$0xff]
    %v250 = vld [vmem:[#allocation2 + $0x550] sm:$0xff]
    %v251 = vld [vmem:[#allocation2 + $0x558] sm:$0xff]
    %v252 = vld [vmem:[#allocation2 + $0x560] sm:$0xff]
    %v253 = vld [vmem:[#allocation2 + $0x568] sm:$0xff]
    %v254 = vld [vmem:[#allocation2 + $0x570] sm:$0xff]
    %v255 = vld [vmem:[#allocation2 + $0x578] sm:$0xff]
    %v256 = vld [vmem:[#allocation2 + $0x580] sm:$0xff]
    %v257 = vld [vmem:[#allocation2 + $0x588] sm:$0xff]
    %v258 = vld [vmem:[#allocation2 + $0x590] sm:$0xff]
    %v259 = vld [vmem:[#allocation2 + $0x598] sm:$0xff]
    %v260 = vld [vmem:[#allocation2 + $0x5a0] sm:$0xff]
    %v261 = vld [vmem:[#allocation2 + $0x5a8] sm:$0xff]
    %v262 = vld [vmem:[#allocation2 + $0x5b0] sm:$0xff]
    %v263 = vld [vmem:[#allocation2 + $0x5b8] sm:$0xff]
    %v264 = vld [vmem:[#allocation2 + $0x5c0] sm:$0xff]
    %v265 = vld [vmem:[#allocation2 + $0x5c8] sm:$0xff]
    %v266 = vld [vmem:[#allocation2 + $0x5d0] sm:$0xff]
    %v267 = vld [vmem:[#allocation2 + $0x5d8] sm:$0xff]
    %v268 = vld [vmem:[#allocation2 + $0x5e0] sm:$0xff]
    %v269 = vld [vmem:[#allocation2 + $0x5e8] sm:$0xff]
    %v270 = vld [vmem:[#allocation2 + $0x5f0] sm:$0xff]
    %v271 = vld [vmem:[#allocation2 + $0x5f8] sm:$0xff]
    %v272 = vld [vmem:[#allocation2 + $0x600] sm:$0xff]
    %v273 = vld [vmem:[#allocation2 + $0x608] sm:$0xff]
    %v274 = vld [vmem:[#allocation2 + $0x610] sm:$0xff]
    %v275 = vld [vmem:[#allocation2 + $0x618] sm:$0xff]
    %v276 = vld [vmem:[#allocation2 + $0x620] sm:$0xff]
    %v277 = vld [vmem:[#allocation2 + $0x628] sm:$0xff]
    %v278 = vld [vmem:[#allocation2 + $0x630] sm:$0xff]
    %v279 = vld [vmem:[#allocation2 + $0x638] sm:$0xff]
    %v280 = vld [vmem:[#allocation2 + $0x640] sm:$0xff]
    %v281 = vld [vmem:[#allocation2 + $0x648] sm:$0xff]
    %v282 = vld [vmem:[#allocation2 + $0x650] sm:$0xff]
    %v283 = vld [vmem:[#allocation2 + $0x658] sm:$0xff]
    %v284 = vld [vmem:[#allocation2 + $0x660] sm:$0xff]
    %v285 = vld [vmem:[#allocation2 + $0x668] sm:$0xff]
    %v286 = vld [vmem:[#allocation2 + $0x670] sm:$0xff]
    %v287 = vld [vmem:[#allocation2 + $0x678] sm:$0xff]
    %v288 = vld [vmem:[#allocation2 + $0x680] sm:$0xff]
    %v289 = vld [vmem:[#allocation2 + $0x688] sm:$0xff]
    %v290 = vld [vmem:[#allocation2 + $0x690] sm:$0xff]
    %v291 = vld [vmem:[#allocation2 + $0x698] sm:$0xff]
    %v292 = vld [vmem:[#allocation2 + $0x6a0] sm:$0xff]
    %v293 = vld [vmem:[#allocation2 + $0x6a8] sm:$0xff]
    %v294 = vld [vmem:[#allocation2 + $0x6b0] sm:$0xff]
    %v295 = vld [vmem:[#allocation2 + $0x6b8] sm:$0xff]
    %v296 = vld [vmem:[#allocation2 + $0x6c0] sm:$0xff]
    %v297 = vld [vmem:[#allocation2 + $0x6c8] sm:$0xff]
    %v298 = vld [vmem:[#allocation2 + $0x6d0] sm:$0xff]
    %v299 = vld [vmem:[#allocation2 + $0x6d8] sm:$0xff]
    %v300 = vld [vmem:[#allocation2 + $0x6e0] sm:$0xff]
    %v301 = vld [vmem:[#allocation2 + $0x6e8] sm:$0xff]
    %v302 = vld [vmem:[#allocation2 + $0x6f0] sm:$0xff]
    %v303 = vld [vmem:[#allocation2 + $0x6f8] sm:$0xff]
    %v304 = vld [vmem:[#allocation2 + $0x700] sm:$0xff]
    %v305 = vld [vmem:[#allocation2 + $0x708] sm:$0xff]
    %v306 = vld [vmem:[#allocation2 + $0x710] sm:$0xff]
    %v307 = vld [vmem:[#allocation2 + $0x718] sm:$0xff]
    %v308 = vld [vmem:[#allocation2 + $0x720] sm:$0xff]
    %v309 = vld [vmem:[#allocation2 + $0x728] sm:$0xff]
    %v310 = vld [vmem:[#allocation2 + $0x730] sm:$0xff]
    %v311 = vld [vmem:[#allocation2 + $0x738] sm:$0xff]
    %v312 = vld [vmem:[#allocation2 + $0x740] sm:$0xff]
    %v313 = vld [vmem:[#allocation2 + $0x748] sm:$0xff]
    %v314 = vld [vmem:[#allocation2 + $0x750] sm:$0xff]
    %v315 = vld [vmem:[#allocation2 + $0x758] sm:$0xff]
    %v316 = vld [vmem:[#allocation2 + $0x760] sm:$0xff]
    %v317 = vld [vmem:[#allocation2 + $0x768] sm:$0xff]
    %v318 = vld [vmem:[#allocation2 + $0x770] sm:$0xff]
    %v319 = vld [vmem:[#allocation2 + $0x778] sm:$0xff]
    %v320 = vld [vmem:[#allocation2 + $0x780] sm:$0xff]
    %v321 = vld [vmem:[#allocation2 + $0x788] sm:$0xff]
    %v322 = vld [vmem:[#allocation2 + $0x790] sm:$0xff]
    %v323 = vld [vmem:[#allocation2 + $0x798] sm:$0xff]
    %v324 = vld [vmem:[#allocation2 + $0x7a0] sm:$0xff]
    %v325 = vld [vmem:[#allocation2 + $0x7a8] sm:$0xff]
    %v326 = vld [vmem:[#allocation2 + $0x7b0] sm:$0xff]
    %v327 = vld [vmem:[#allocation2 + $0x7b8] sm:$0xff]
    %v328 = vld [vmem:[#allocation2 + $0x7c0] sm:$0xff]
    %v329 = vld [vmem:[#allocation2 + $0x7c8] sm:$0xff]
    %v330 = vld [vmem:[#allocation2 + $0x7d0] sm:$0xff]
    %v331 = vld [vmem:[#allocation2 + $0x7d8] sm:$0xff]
    %v332 = vld [vmem:[#allocation2 + $0x7e0] sm:$0xff]
    %v333 = vld [vmem:[#allocation2 + $0x7e8] sm:$0xff]
    %v334 = vld [vmem:[#allocation2 + $0x7f0] sm:$0xff]
    %v335 = vld [vmem:[#allocation2 + $0x7f8] sm:$0xff]
    %v336 = vld [vmem:[#allocation2 + $0x800] sm:$0xff]
    %v337 = vld [vmem:[#allocation2 + $0x808] sm:$0xff]
    %v338 = vld [vmem:[#allocation2 + $0x810] sm:$0xff]
    %v339 = vld [vmem:[#allocation2 + $0x818] sm:$0xff]
    %v340 = vld [vmem:[#allocation2 + $0x820] sm:$0xff]
    %v341 = vld [vmem:[#allocation2 + $0x828] sm:$0xff]
    %v342 = vld [vmem:[#allocation2 + $0x830] sm:$0xff]
    %v343 = vld [vmem:[#allocation2 + $0x838] sm:$0xff]
    %v344 = vld [vmem:[#allocation2 + $0x840] sm:$0xff]
    %v345 = vld [vmem:[#allocation2 + $0x848] sm:$0xff]
    %v346 = vld [vmem:[#allocation2 + $0x850] sm:$0xff]
    %v347 = vld [vmem:[#allocation2 + $0x858] sm:$0xff]
    %v348 = vld [vmem:[#allocation2 + $0x860] sm:$0xff]
    %v349 = vld [vmem:[#allocation2 + $0x868] sm:$0xff]
    %v350 = vld [vmem:[#allocation2 + $0x870] sm:$0xff]
    %v351 = vld [vmem:[#allocation2 + $0x878] sm:$0xff]
    %v352 = vld [vmem:[#allocation2 + $0x880] sm:$0xff]
    %v353 = vld [vmem:[#allocation2 + $0x888] sm:$0xff]
    %v354 = vld [vmem:[#allocation2 + $0x890] sm:$0xff]
    %v355 = vld [vmem:[#allocation2 + $0x898] sm:$0xff]
    %v356 = vld [vmem:[#allocation2 + $0x8a0] sm:$0xff]
    %v357 = vld [vmem:[#allocation2 + $0x8a8] sm:$0xff]
    %v358 = vld [vmem:[#allocation2 + $0x8b0] sm:$0xff]
    %v359 = vld [vmem:[#allocation2 + $0x8b8] sm:$0xff]
    %v360 = vld [vmem:[#allocation2 + $0x8c0] sm:$0xff]
    %v361 = vld [vmem:[#allocation2 + $0x8c8] sm:$0xff]
    %v362 = vld [vmem:[#allocation2 + $0x8d0] sm:$0xff]
    %v363 = vld [vmem:[#allocation2 + $0x8d8] sm:$0xff]
    %v364 = vld [vmem:[#allocation2 + $0x8e0] sm:$0xff]
    %v365 = vld [vmem:[#allocation2 + $0x8e8] sm:$0xff]
    %v366 = vld [vmem:[#allocation2 + $0x8f0] sm:$0xff]
    %v367 = vld [vmem:[#allocation2 + $0x8f8] sm:$0xff]
    %v368 = vld [vmem:[#allocation2 + $0x900] sm:$0xff]
    %v369 = vld [vmem:[#allocation2 + $0x908] sm:$0xff]
    %v370 = vld [vmem:[#allocation2 + $0x910] sm:$0xff]
    %v371 = vld [vmem:[#allocation2 + $0x918] sm:$0xff]
    %v372 = vld [vmem:[#allocation2 + $0x920] sm:$0xff]
    %v373 = vld [vmem:[#allocation2 + $0x928] sm:$0xff]
    %v374 = vld [vmem:[#allocation2 + $0x930] sm:$0xff]
    %v375 = vld [vmem:[#allocation2 + $0x938] sm:$0xff]
    %v376 = vld [vmem:[#allocation2 + $0x940] sm:$0xff]
    %v377 = vld [vmem:[#allocation2 + $0x948] sm:$0xff]
    %v378 = vld [vmem:[#allocation2 + $0x950] sm:$0xff]
    %v379 = vld [vmem:[#allocation2 + $0x958] sm:$0xff]
    %v380 = vld [vmem:[#allocation2 + $0x960] sm:$0xff]
    %v381 = vld [vmem:[#allocation2 + $0x968] sm:$0xff]
    %v382 = vld [vmem:[#allocation2 + $0x970] sm:$0xff]
    %v383 = vld [vmem:[#allocation2 + $0x978] sm:$0xff]
    %v384 = vld [vmem:[#allocation2 + $0x980] sm:$0xff]
    %v385 = vld [vmem:[#allocation2 + $0x988] sm:$0xff]
    %v386 = vld [vmem:[#allocation2 + $0x990] sm:$0xff]
    %v387 = vld [vmem:[#allocation2 + $0x998] sm:$0xff]
    %v388 = vld [vmem:[#allocation2 + $0x9a0] sm:$0xff]
    %v389 = vld [vmem:[#allocation2 + $0x9a8] sm:$0xff]
    %v390 = vld [vmem:[#allocation2 + $0x9b0] sm:$0xff]
    %v391 = vld [vmem:[#allocation2 + $0x9b8] sm:$0xff]
    %v392 = vld [vmem:[#allocation2 + $0x9c0] sm:$0xff]
    %v393 = vld [vmem:[#allocation2 + $0x9c8] sm:$0xff]
    %v394 = vld [vmem:[#allocation2 + $0x9d0] sm:$0xff]
    %v395 = vld [vmem:[#allocation2 + $0x9d8] sm:$0xff]
    %v396 = vld [vmem:[#allocation2 + $0x9e0] sm:$0xff]
    %v397 = vld [vmem:[#allocation2 + $0x9e8] sm:$0xff]
    %v398 = vld [vmem:[#allocation2 + $0x9f0] sm:$0xff]
    %v399 = vld [vmem:[#allocation2 + $0x9f8] sm:$0xff]
    %v400 = vld [vmem:[#allocation2 + $0xa00] sm:$0xff]
    %v401 = vld [vmem:[#allocation2 + $0xa08] sm:$0xff]
    %v402 = vld [vmem:[#allocation2 + $0xa10] sm:$0xff]
    %v403 = vld [vmem:[#allocation2 + $0xa18] sm:$0xff]
    %v404 = vld [vmem:[#allocation2 + $0xa20] sm:$0xff]
    %v405 = vld [vmem:[#allocation2 + $0xa28] sm:$0xff]
    %v406 = vld [vmem:[#allocation2 + $0xa30] sm:$0xff]
    %v407 = vld [vmem:[#allocation2 + $0xa38] sm:$0xff]
    %v408 = vld [vmem:[#allocation2 + $0xa40] sm:$0xff]
    %v409 = vld [vmem:[#allocation2 + $0xa48] sm:$0xff]
    %v410 = vld [vmem:[#allocation2 + $0xa50] sm:$0xff]
    %v411 = vld [vmem:[#allocation2 + $0xa58] sm:$0xff]
    %v412 = vld [vmem:[#allocation2 + $0xa60] sm:$0xff]
    %v413 = vld [vmem:[#allocation2 + $0xa68] sm:$0xff]
    %v414 = vld [vmem:[#allocation2 + $0xa70] sm:$0xff]
    %v415 = vld [vmem:[#allocation2 + $0xa78] sm:$0xff]
    %v416 = vld [vmem:[#allocation2 + $0xa80] sm:$0xff]
    %v417 = vld [vmem:[#allocation2 + $0xa88] sm:$0xff]
    %v418 = vld [vmem:[#allocation2 + $0xa90] sm:$0xff]
    %v419 = vld [vmem:[#allocation2 + $0xa98] sm:$0xff]
    %v420 = vld [vmem:[#allocation2 + $0xaa0] sm:$0xff]
    %v421 = vld [vmem:[#allocation2 + $0xaa8] sm:$0xff]
    %v422 = vld [vmem:[#allocation2 + $0xab0] sm:$0xff]
    %v423 = vld [vmem:[#allocation2 + $0xab8] sm:$0xff]
    %v424 = vld [vmem:[#allocation2 + $0xac0] sm:$0xff]
    %v425 = vld [vmem:[#allocation2 + $0xac8] sm:$0xff]
    %v426 = vld [vmem:[#allocation2 + $0xad0] sm:$0xff]
    %v427 = vld [vmem:[#allocation2 + $0xad8] sm:$0xff]
    %v428 = vld [vmem:[#allocation2 + $0xae0] sm:$0xff]
    %v429 = vld [vmem:[#allocation2 + $0xae8] sm:$0xff]
    %v430 = vld [vmem:[#allocation2 + $0xaf0] sm:$0xff]
    %v431 = vld [vmem:[#allocation2 + $0xaf8] sm:$0xff]
    %v432 = vld [vmem:[#allocation2 + $0xb00] sm:$0xff]
    %v433 = vld [vmem:[#allocation2 + $0xb08] sm:$0xff]
    %v434 = vld [vmem:[#allocation2 + $0xb10] sm:$0xff]
    %v435 = vld [vmem:[#allocation2 + $0xb18] sm:$0xff]
    %v436 = vld [vmem:[#allocation2 + $0xb20] sm:$0xff]
    %v437 = vld [vmem:[#allocation2 + $0xb28] sm:$0xff]
    %v438 = vld [vmem:[#allocation2 + $0xb30] sm:$0xff]
    %v439 = vld [vmem:[#allocation2 + $0xb38] sm:$0xff]
    %v440 = vld [vmem:[#allocation2 + $0xb40] sm:$0xff]
    %v441 = vld [vmem:[#allocation2 + $0xb48] sm:$0xff]
    %v442 = vld [vmem:[#allocation2 + $0xb50] sm:$0xff]
    %v443 = vld [vmem:[#allocation2 + $0xb58] sm:$0xff]
    %v444 = vld [vmem:[#allocation2 + $0xb60] sm:$0xff]
    %v445 = vld [vmem:[#allocation2 + $0xb68] sm:$0xff]
    %v446 = vld [vmem:[#allocation2 + $0xb70] sm:$0xff]
    %v447 = vld [vmem:[#allocation2 + $0xb78] sm:$0xff]
    %v448 = vld [vmem:[#allocation2 + $0xb80] sm:$0xff]
    %v449 = vld [vmem:[#allocation2 + $0xb88] sm:$0xff]
    %v450 = vld [vmem:[#allocation2 + $0xb90] sm:$0xff]
    %v451 = vld [vmem:[#allocation2 + $0xb98] sm:$0xff]
    %v452 = vld [vmem:[#allocation2 + $0xba0] sm:$0xff]
    %v453 = vld [vmem:[#allocation2 + $0xba8] sm:$0xff]
    %v454 = vld [vmem:[#allocation2 + $0xbb0] sm:$0xff]
    %v455 = vld [vmem:[#allocation2 + $0xbb8] sm:$0xff]
    %v456 = vld [vmem:[#allocation2 + $0xbc0] sm:$0xff]
    %v457 = vld [vmem:[#allocation2 + $0xbc8] sm:$0xff]
    %v458 = vld [vmem:[#allocation2 + $0xbd0] sm:$0xff]
    %v459 = vld [vmem:[#allocation2 + $0xbd8] sm:$0xff]
    %v460 = vld [vmem:[#allocation2 + $0xbe0] sm:$0xff]
    %v461 = vld [vmem:[#allocation2 + $0xbe8] sm:$0xff]
    %v462 = vld [vmem:[#allocation2 + $0xbf0] sm:$0xff]
    %v463 = vld [vmem:[#allocation2 + $0xbf8] sm:$0xff]
    %v464 = vld [vmem:[#allocation2 + $0xc00] sm:$0xff]
    %v465 = vld [vmem:[#allocation2 + $0xc08] sm:$0xff]
    %v466 = vld [vmem:[#allocation2 + $0xc10] sm:$0xff]
    %v467 = vld [vmem:[#allocation2 + $0xc18] sm:$0xff]
    %v468 = vld [vmem:[#allocation2 + $0xc20] sm:$0xff]
    %v469 = vld [vmem:[#allocation2 + $0xc28] sm:$0xff]
    %v470 = vld [vmem:[#allocation2 + $0xc30] sm:$0xff]
    %v471 = vld [vmem:[#allocation2 + $0xc38] sm:$0xff]
    %v472 = vld [vmem:[#allocation2 + $0xc40] sm:$0xff]
    %v473 = vld [vmem:[#allocation2 + $0xc48] sm:$0xff]
    %v474 = vld [vmem:[#allocation2 + $0xc50] sm:$0xff]
    %v475 = vld [vmem:[#allocation2 + $0xc58] sm:$0xff]
    %v476 = vld [vmem:[#allocation2 + $0xc60] sm:$0xff]
    %v477 = vld [vmem:[#allocation2 + $0xc68] sm:$0xff]
    %v478 = vld [vmem:[#allocation2 + $0xc70] sm:$0xff]
    %v479 = vld [vmem:[#allocation2 + $0xc78] sm:$0xff]
    %v480 = vld [vmem:[#allocation2 + $0xc80] sm:$0xff]
    %v481 = vld [vmem:[#allocation2 + $0xc88] sm:$0xff]
    %v482 = vld [vmem:[#allocation2 + $0xc90] sm:$0xff]
    %v483 = vld [vmem:[#allocation2 + $0xc98] sm:$0xff]
    %v484 = vld [vmem:[#allocation2 + $0xca0] sm:$0xff]
    %v485 = vld [vmem:[#allocation2 + $0xca8] sm:$0xff]
    %v486 = vld [vmem:[#allocation2 + $0xcb0] sm:$0xff]
    %v487 = vld [vmem:[#allocation2 + $0xcb8] sm:$0xff]
    %v488 = vld [vmem:[#allocation2 + $0xcc0] sm:$0xff]
    %v489 = vld [vmem:[#allocation2 + $0xcc8] sm:$0xff]
    %v490 = vld [vmem:[#allocation2 + $0xcd0] sm:$0xff]
    %v491 = vld [vmem:[#allocation2 + $0xcd8] sm:$0xff]
    %v492 = vld [vmem:[#allocation2 + $0xce0] sm:$0xff]
    %v493 = vld [vmem:[#allocation2 + $0xce8] sm:$0xff]
    %v494 = vld [vmem:[#allocation2 + $0xcf0] sm:$0xff]
    %v495 = vld [vmem:[#allocation2 + $0xcf8] sm:$0xff]
    %v496 = vld [vmem:[#allocation2 + $0xd00] sm:$0xff]
    %v497 = vld [vmem:[#allocation2 + $0xd08] sm:$0xff]
    %v498 = vld [vmem:[#allocation2 + $0xd10] sm:$0xff]
    %v499 = vld [vmem:[#allocation2 + $0xd18] sm:$0xff]
    %v500 = vld [vmem:[#allocation2 + $0xd20] sm:$0xff]
    %v501 = vld [vmem:[#allocation2 + $0xd28] sm:$0xff]
    %v502 = vld [vmem:[#allocation2 + $0xd30] sm:$0xff]
    %v503 = vld [vmem:[#allocation2 + $0xd38] sm:$0xff]
    %v504 = vld [vmem:[#allocation2 + $0xd40] sm:$0xff]
    %v505 = vld [vmem:[#allocation2 + $0xd48] sm:$0xff]
    %v506 = vld [vmem:[#allocation2 + $0xd50] sm:$0xff]
    %v507 = vld [vmem:[#allocation2 + $0xd58] sm:$0xff]
    %v508 = vld [vmem:[#allocation2 + $0xd60] sm:$0xff]
    %v509 = vld [vmem:[#allocation2 + $0xd68] sm:$0xff]
    %v510 = vld [vmem:[#allocation2 + $0xd70] sm:$0xff]
    %v511 = vld [vmem:[#allocation2 + $0xd78] sm:$0xff]
    %v512 = vld [vmem:[#allocation2 + $0xd80] sm:$0xff]
    %v513 = vld [vmem:[#allocation2 + $0xd88] sm:$0xff]
    %v514 = vld [vmem:[#allocation2 + $0xd90] sm:$0xff]
    %v515 = vld [vmem:[#allocation2 + $0xd98] sm:$0xff]
    %v516 = vld [vmem:[#allocation2 + $0xda0] sm:$0xff]
    %v517 = vld [vmem:[#allocation2 + $0xda8] sm:$0xff]
    %v518 = vld [vmem:[#allocation2 + $0xdb0] sm:$0xff]
    %v519 = vld [vmem:[#allocation2 + $0xdb8] sm:$0xff]
    %v520 = vld [vmem:[#allocation2 + $0xdc0] sm:$0xff]
    %v521 = vld [vmem:[#allocation2 + $0xdc8] sm:$0xff]
    %v522 = vld [vmem:[#allocation2 + $0xdd0] sm:$0xff]
    %v523 = vld [vmem:[#allocation2 + $0xdd8] sm:$0xff]
    %v524 = vld [vmem:[#allocation2 + $0xde0] sm:$0xff]
    %v525 = vld [vmem:[#allocation2 + $0xde8] sm:$0xff]
    %v526 = vld [vmem:[#allocation2 + $0xdf0] sm:$0xff]
    %v527 = vld [vmem:[#allocation2 + $0xdf8] sm:$0xff]
    %v528 = vld [vmem:[#allocation2 + $0xe00] sm:$0xff]
    %v529 = vld [vmem:[#allocation2 + $0xe08] sm:$0xff]
    %v530 = vld [vmem:[#allocation2 + $0xe10] sm:$0xff]
    %v531 = vld [vmem:[#allocation2 + $0xe18] sm:$0xff]
    %v532 = vld [vmem:[#allocation2 + $0xe20] sm:$0xff]
    %v533 = vld [vmem:[#allocation2 + $0xe28] sm:$0xff]
    %v534 = vld [vmem:[#allocation2 + $0xe30] sm:$0xff]
    %v535 = vld [vmem:[#allocation2 + $0xe38] sm:$0xff]
    %v536 = vld [vmem:[#allocation2 + $0xe40] sm:$0xff]
    %v537 = vld [vmem:[#allocation2 + $0xe48] sm:$0xff]
    %v538 = vld [vmem:[#allocation2 + $0xe50] sm:$0xff]
    %v539 = vld [vmem:[#allocation2 + $0xe58] sm:$0xff]
    %v540 = vld [vmem:[#allocation2 + $0xe60] sm:$0xff]
    %v541 = vld [vmem:[#allocation2 + $0xe68] sm:$0xff]
    %v542 = vld [vmem:[#allocation2 + $0xe70] sm:$0xff]
    %v543 = vld [vmem:[#allocation2 + $0xe78] sm:$0xff]
    %v544 = vld [vmem:[#allocation2 + $0xe80] sm:$0xff]
    %v545 = vld [vmem:[#allocation2 + $0xe88] sm:$0xff]
    %v546 = vld [vmem:[#allocation2 + $0xe90] sm:$0xff]
    %v547 = vld [vmem:[#allocation2 + $0xe98] sm:$0xff]
    %v548 = vld [vmem:[#allocation2 + $0xea0] sm:$0xff]
    %v549 = vld [vmem:[#allocation2 + $0xea8] sm:$0xff]
    %v550 = vld [vmem:[#allocation2 + $0xeb0] sm:$0xff]
    %v551 = vld [vmem:[#allocation2 + $0xeb8] sm:$0xff]
    %v552 = vld [vmem:[#allocation2 + $0xec0] sm:$0xff]
    %v553 = vld [vmem:[#allocation2 + $0xec8] sm:$0xff]
    %v554 = vld [vmem:[#allocation2 + $0xed0] sm:$0xff]
    %v555 = vld [vmem:[#allocation2 + $0xed8] sm:$0xff]
    %v556 = vld [vmem:[#allocation2 + $0xee0] sm:$0xff]
    %v557 = vld [vmem:[#allocation2 + $0xee8] sm:$0xff]
    %v558 = vld [vmem:[#allocation2 + $0xef0] sm:$0xff]
    %v559 = vld [vmem:[#allocation2 + $0xef8] sm:$0xff]
    %v560 = vld [vmem:[#allocation2 + $0xf00] sm:$0xff]
    %v561 = vld [vmem:[#allocation2 + $0xf08] sm:$0xff]
    %v562 = vld [vmem:[#allocation2 + $0xf10] sm:$0xff]
    %v563 = vld [vmem:[#allocation2 + $0xf18] sm:$0xff]
    %v564 = vld [vmem:[#allocation2 + $0xf20] sm:$0xff]
    %v565 = vld [vmem:[#allocation2 + $0xf28] sm:$0xff]
    %v566 = vld [vmem:[#allocation2 + $0xf30] sm:$0xff]
    %v567 = vld [vmem:[#allocation2 + $0xf38] sm:$0xff]
    %v568 = vld [vmem:[#allocation2 + $0xf40] sm:$0xff]
    %v569 = vld [vmem:[#allocation2 + $0xf48] sm:$0xff]
    %v570 = vld [vmem:[#allocation2 + $0xf50] sm:$0xff]
    %v571 = vld [vmem:[#allocation2 + $0xf58] sm:$0xff]
    %v572 = vld [vmem:[#allocation2 + $0xf60] sm:$0xff]
    %v573 = vld [vmem:[#allocation2 + $0xf68] sm:$0xff]
    %v574 = vld [vmem:[#allocation2 + $0xf70] sm:$0xff]
    %v575 = vld [vmem:[#allocation2 + $0xf78] sm:$0xff]
    %v576 = vld [vmem:[#allocation2 + $0xf80] sm:$0xff]
    %v577 = vld [vmem:[#allocation2 + $0xf88] sm:$0xff]
    %v578 = vld [vmem:[#allocation2 + $0xf90] sm:$0xff]
    %v579 = vld [vmem:[#allocation2 + $0xf98] sm:$0xff]
    %v580 = vld [vmem:[#allocation2 + $0xfa0] sm:$0xff]
    %v581 = vld [vmem:[#allocation2 + $0xfa8] sm:$0xff]
    %v582 = vld [vmem:[#allocation2 + $0xfb0] sm:$0xff]
    %v583 = vld [vmem:[#allocation2 + $0xfb8] sm:$0xff]
    %v584 = vld [vmem:[#allocation2 + $0xfc0] sm:$0xff]
    %v585 = vld [vmem:[#allocation2 + $0xfc8] sm:$0xff]
    %v586 = vld [vmem:[#allocation2 + $0xfd0] sm:$0xff]
    %v587 = vld [vmem:[#allocation2 + $0xfd8] sm:$0xff]
    %v588 = vld [vmem:[#allocation2 + $0xfe0] sm:$0xff]
    %v589 = vld [vmem:[#allocation2 + $0xfe8] sm:$0xff]
    %v590 = vld [vmem:[#allocation2 + $0xff0] sm:$0xff]
    %v591 = vld [vmem:[#allocation2 + $0xff8] sm:$0xff]
    %v592 = vld [vmem:[#allocation2 + $0x1000] sm:$0xff]
    %v593 = vld [vmem:[#allocation2 + $0x1008] sm:$0xff]
    %v594 = vld [vmem:[#allocation2 + $0x1010] sm:$0xff]
    %v595 = vld [vmem:[#allocation2 + $0x1018] sm:$0xff]
    %v596 = vld [vmem:[#allocation2 + $0x1020] sm:$0xff]
    %v597 = vld [vmem:[#allocation2 + $0x1028] sm:$0xff]
    %v598 = vld [vmem:[#allocation2 + $0x1030] sm:$0xff]
    %v599 = vld [vmem:[#allocation2 + $0x1038] sm:$0xff]
    %v600 = vld [vmem:[#allocation2 + $0x1040] sm:$0xff]
    %v601 = vld [vmem:[#allocation2 + $0x1048] sm:$0xff]
    %v602 = vld [vmem:[#allocation2 + $0x1050] sm:$0xff]
    %v603 = vld [vmem:[#allocation2 + $0x1058] sm:$0xff]
    %v604 = vld [vmem:[#allocation2 + $0x1060] sm:$0xff]
    %v605 = vld [vmem:[#allocation2 + $0x1068] sm:$0xff]
    %v606 = vld [vmem:[#allocation2 + $0x1070] sm:$0xff]
    %v607 = vld [vmem:[#allocation2 + $0x1078] sm:$0xff]
    %v608 = vld [vmem:[#allocation2 + $0x1080] sm:$0xff]
    %v609 = vld [vmem:[#allocation2 + $0x1088] sm:$0xff]
    %v610 = vld [vmem:[#allocation2 + $0x1090] sm:$0xff]
    %v611 = vld [vmem:[#allocation2 + $0x1098] sm:$0xff]
    %v612 = vld [vmem:[#allocation2 + $0x10a0] sm:$0xff]
    %v613 = vld [vmem:[#allocation2 + $0x10a8] sm:$0xff]
    %v614 = vld [vmem:[#allocation2 + $0x10b0] sm:$0xff]
    %v615 = vld [vmem:[#allocation2 + $0x10b8] sm:$0xff]
    %v616 = vld [vmem:[#allocation2 + $0x10c0] sm:$0xff]
    %v617 = vld [vmem:[#allocation2 + $0x10c8] sm:$0xff]
    %v618 = vld [vmem:[#allocation2 + $0x10d0] sm:$0xff]
    %v619 = vld [vmem:[#allocation2 + $0x10d8] sm:$0xff]
    %v620 = vld [vmem:[#allocation2 + $0x10e0] sm:$0xff]
    %v621 = vld [vmem:[#allocation2 + $0x10e8] sm:$0xff]
    %v622 = vld [vmem:[#allocation2 + $0x10f0] sm:$0xff]
    %v623 = vld [vmem:[#allocation2 + $0x10f8] sm:$0xff]
    %v624 = vld [vmem:[#allocation2 + $0x1100] sm:$0xff]
    %v625 = vld [vmem:[#allocation2 + $0x1108] sm:$0xff]
    %v626 = vld [vmem:[#allocation2 + $0x1110] sm:$0xff]
    %v627 = vld [vmem:[#allocation2 + $0x1118] sm:$0xff]
    %v628 = vld [vmem:[#allocation2 + $0x1120] sm:$0xff]
    %v629 = vld [vmem:[#allocation2 + $0x1128] sm:$0xff]
    %v630 = vld [vmem:[#allocation2 + $0x1130] sm:$0xff]
    %v631 = vld [vmem:[#allocation2 + $0x1138] sm:$0xff]
    %v632 = vld [vmem:[#allocation2 + $0x1140] sm:$0xff]
    %v633 = vld [vmem:[#allocation2 + $0x1148] sm:$0xff]
    %v634 = vld [vmem:[#allocation2 + $0x1150] sm:$0xff]
    %v635 = vld [vmem:[#allocation2 + $0x1158] sm:$0xff]
    %v636 = vld [vmem:[#allocation2 + $0x1160] sm:$0xff]
    %v637 = vld [vmem:[#allocation2 + $0x1168] sm:$0xff]
    %v638 = vld [vmem:[#allocation2 + $0x1170] sm:$0xff]
    %v639 = vld [vmem:[#allocation2 + $0x1178] sm:$0xff]
    %v640 = vld [vmem:[#allocation2 + $0x1180] sm:$0xff]
    %v641 = vld [vmem:[#allocation2 + $0x1188] sm:$0xff]
    %v642 = vld [vmem:[#allocation2 + $0x1190] sm:$0xff]
    %v643 = vld [vmem:[#allocation2 + $0x1198] sm:$0xff]
    %v644 = vld [vmem:[#allocation2 + $0x11a0] sm:$0xff]
    %v645 = vld [vmem:[#allocation2 + $0x11a8] sm:$0xff]
    %v646 = vld [vmem:[#allocation2 + $0x11b0] sm:$0xff]
    %v647 = vld [vmem:[#allocation2 + $0x11b8] sm:$0xff]
    %v648 = vld [vmem:[#allocation2 + $0x11c0] sm:$0xff]
    %v649 = vld [vmem:[#allocation2 + $0x11c8] sm:$0xff]
    %v650 = vld [vmem:[#allocation2 + $0x11d0] sm:$0xff]
    %v651 = vld [vmem:[#allocation2 + $0x11d8] sm:$0xff]
    %v652 = vld [vmem:[#allocation2 + $0x11e0] sm:$0xff]
    %v653 = vld [vmem:[#allocation2 + $0x11e8] sm:$0xff]
    %v654 = vld [vmem:[#allocation2 + $0x11f0] sm:$0xff]
    %v655 = vld [vmem:[#allocation2 + $0x11f8] sm:$0xff]
    %v656 = vld [vmem:[#allocation2 + $0x1200] sm:$0xff]
    %v657 = vld [vmem:[#allocation2 + $0x1208] sm:$0xff]
    %v658 = vld [vmem:[#allocation2 + $0x1210] sm:$0xff]
    %v659 = vld [vmem:[#allocation2 + $0x1218] sm:$0xff]
    %v660 = vld [vmem:[#allocation2 + $0x1220] sm:$0xff]
    %v661 = vld [vmem:[#allocation2 + $0x1228] sm:$0xff]
    %v662 = vld [vmem:[#allocation2 + $0x1230] sm:$0xff]
    %v663 = vld [vmem:[#allocation2 + $0x1238] sm:$0xff]
    %v664 = vld [vmem:[#allocation2 + $0x1240] sm:$0xff]
    %v665 = vld [vmem:[#allocation2 + $0x1248] sm:$0xff]
    %v666 = vld [vmem:[#allocation2 + $0x1250] sm:$0xff]
    %v667 = vld [vmem:[#allocation2 + $0x1258] sm:$0xff]
    %v668 = vld [vmem:[#allocation2 + $0x1260] sm:$0xff]
    %v669 = vld [vmem:[#allocation2 + $0x1268] sm:$0xff]
    %v670 = vld [vmem:[#allocation2 + $0x1270] sm:$0xff]
    %v671 = vld [vmem:[#allocation2 + $0x1278] sm:$0xff]
    %v672 = vld [vmem:[#allocation2 + $0x1280] sm:$0xff]
    %v673 = vld [vmem:[#allocation2 + $0x1288] sm:$0xff]
    %v674 = vld [vmem:[#allocation2 + $0x1290] sm:$0xff]
    %v675 = vld [vmem:[#allocation2 + $0x1298] sm:$0xff]
    %v676 = vld [vmem:[#allocation2 + $0x12a0] sm:$0xff]
    %v677 = vld [vmem:[#allocation2 + $0x12a8] sm:$0xff]
    %v678 = vld [vmem:[#allocation2 + $0x12b0] sm:$0xff]
    %v679 = vld [vmem:[#allocation2 + $0x12b8] sm:$0xff]
    %v680 = vld [vmem:[#allocation2 + $0x12c0] sm:$0xff]
    %v681 = vld [vmem:[#allocation2 + $0x12c8] sm:$0xff]
    %v682 = vld [vmem:[#allocation2 + $0x12d0] sm:$0xff]
    %v683 = vld [vmem:[#allocation2 + $0x12d8] sm:$0xff]
    %v684 = vld [vmem:[#allocation2 + $0x12e0] sm:$0xff]
    %v685 = vld [vmem:[#allocation2 + $0x12e8] sm:$0xff]
    %v686 = vld [vmem:[#allocation2 + $0x12f0] sm:$0xff]
    %v687 = vld [vmem:[#allocation2 + $0x12f8] sm:$0xff]
    %v688 = vld [vmem:[#allocation2 + $0x1300] sm:$0xff]
    %v689 = vld [vmem:[#allocation2 + $0x1308] sm:$0xff]
    %v690 = vld [vmem:[#allocation2 + $0x1310] sm:$0xff]
    %v691 = vld [vmem:[#allocation2 + $0x1318] sm:$0xff]
    %v692 = vld [vmem:[#allocation2 + $0x1320] sm:$0xff]
    %v693 = vld [vmem:[#allocation2 + $0x1328] sm:$0xff]
    %v694 = vld [vmem:[#allocation2 + $0x1330] sm:$0xff]
    %v695 = vld [vmem:[#allocation2 + $0x1338] sm:$0xff]
    %v696 = vld [vmem:[#allocation2 + $0x1340] sm:$0xff]
    %v697 = vld [vmem:[#allocation2 + $0x1348] sm:$0xff]
    %v698 = vld [vmem:[#allocation2 + $0x1350] sm:$0xff]
    %v699 = vld [vmem:[#allocation2 + $0x1358] sm:$0xff]
    %v700 = vld [vmem:[#allocation2 + $0x1360] sm:$0xff]
    %v701 = vld [vmem:[#allocation2 + $0x1368] sm:$0xff]
    %v702 = vld [vmem:[#allocation2 + $0x1370] sm:$0xff]
    %v703 = vld [vmem:[#allocation2 + $0x1378] sm:$0xff]
    %v704 = vld [vmem:[#allocation2 + $0x1380] sm:$0xff]
    %v705 = vld [vmem:[#allocation2 + $0x1388] sm:$0xff]
    %v706 = vld [vmem:[#allocation2 + $0x1390] sm:$0xff]
    %v707 = vld [vmem:[#allocation2 + $0x1398] sm:$0xff]
    %v708 = vld [vmem:[#allocation2 + $0x13a0] sm:$0xff]
    %v709 = vld [vmem:[#allocation2 + $0x13a8] sm:$0xff]
    %v710 = vld [vmem:[#allocation2 + $0x13b0] sm:$0xff]
    %v711 = vld [vmem:[#allocation2 + $0x13b8] sm:$0xff]
    %v712 = vld [vmem:[#allocation2 + $0x13c0] sm:$0xff]
    %v713 = vld [vmem:[#allocation2 + $0x13c8] sm:$0xff]
    %v714 = vld [vmem:[#allocation2 + $0x13d0] sm:$0xff]
    %v715 = vld [vmem:[#allocation2 + $0x13d8] sm:$0xff]
    %v716 = vld [vmem:[#allocation2 + $0x13e0] sm:$0xff]
    %v717 = vld [vmem:[#allocation2 + $0x13e8] sm:$0xff]
    %v718 = vld [vmem:[#allocation2 + $0x13f0] sm:$0xff]
    %v719 = vld [vmem:[#allocation2 + $0x13f8] sm:$0xff]
    %v720 = vld [vmem:[#allocation2 + $0x1400] sm:$0xff]
    %v721 = vld [vmem:[#allocation2 + $0x1408] sm:$0xff]
    %v722 = vld [vmem:[#allocation2 + $0x1410] sm:$0xff]
    %v723 = vld [vmem:[#allocation2 + $0x1418] sm:$0xff]
    %v724 = vld [vmem:[#allocation2 + $0x1420] sm:$0xff]
    %v725 = vld [vmem:[#allocation2 + $0x1428] sm:$0xff]
    %v726 = vld [vmem:[#allocation2 + $0x1430] sm:$0xff]
    %v727 = vld [vmem:[#allocation2 + $0x1438] sm:$0xff]
    %v728 = vld [vmem:[#allocation2 + $0x1440] sm:$0xff]
    %v729 = vld [vmem:[#allocation2 + $0x1448] sm:$0xff]
    %v730 = vld [vmem:[#allocation2 + $0x1450] sm:$0xff]
    %v731 = vld [vmem:[#allocation2 + $0x1458] sm:$0xff]
    %v732 = vld [vmem:[#allocation2 + $0x1460] sm:$0xff]
    %v733 = vld [vmem:[#allocation2 + $0x1468] sm:$0xff]
    %v734 = vld [vmem:[#allocation2 + $0x1470] sm:$0xff]
    %v735 = vld [vmem:[#allocation2 + $0x1478] sm:$0xff]
    %v736 = vld [vmem:[#allocation2 + $0x1480] sm:$0xff]
    %v737 = vld [vmem:[#allocation2 + $0x1488] sm:$0xff]
    %v738 = vld [vmem:[#allocation2 + $0x1490] sm:$0xff]
    %v739 = vld [vmem:[#allocation2 + $0x1498] sm:$0xff]
    %v740 = vld [vmem:[#allocation2 + $0x14a0] sm:$0xff]
    %v741 = vld [vmem:[#allocation2 + $0x14a8] sm:$0xff]
    %v742 = vld [vmem:[#allocation2 + $0x14b0] sm:$0xff]
    %v743 = vld [vmem:[#allocation2 + $0x14b8] sm:$0xff]
    %v744 = vld [vmem:[#allocation2 + $0x14c0] sm:$0xff]
    %v745 = vld [vmem:[#allocation2 + $0x14c8] sm:$0xff]
    %v746 = vld [vmem:[#allocation2 + $0x14d0] sm:$0xff]
    %v747 = vld [vmem:[#allocation2 + $0x14d8] sm:$0xff]
    %v748 = vld [vmem:[#allocation2 + $0x14e0] sm:$0xff]
    %v749 = vld [vmem:[#allocation2 + $0x14e8] sm:$0xff]
    %v750 = vld [vmem:[#allocation2 + $0x14f0] sm:$0xff]
    %v751 = vld [vmem:[#allocation2 + $0x14f8] sm:$0xff]
    %v752 = vld [vmem:[#allocation2 + $0x1500] sm:$0xff]
    %v753 = vld [vmem:[#allocation2 + $0x1508] sm:$0xff]
    %v754 = vld [vmem:[#allocation2 + $0x1510] sm:$0xff]
    %v755 = vld [vmem:[#allocation2 + $0x1518] sm:$0xff]
    %v756 = vld [vmem:[#allocation2 + $0x1520] sm:$0xff]
    %v757 = vld [vmem:[#allocation2 + $0x1528] sm:$0xff]
    %v758 = vld [vmem:[#allocation2 + $0x1530] sm:$0xff]
    %v759 = vld [vmem:[#allocation2 + $0x1538] sm:$0xff]
    %v760 = vld [vmem:[#allocation2 + $0x1540] sm:$0xff]
    %v761 = vld [vmem:[#allocation2 + $0x1548] sm:$0xff]
    %v762 = vld [vmem:[#allocation2 + $0x1550] sm:$0xff]
    %v763 = vld [vmem:[#allocation2 + $0x1558] sm:$0xff]
    %v764 = vld [vmem:[#allocation2 + $0x1560] sm:$0xff]
    %v765 = vld [vmem:[#allocation2 + $0x1568] sm:$0xff]
    %v766 = vld [vmem:[#allocation2 + $0x1570] sm:$0xff]
    %v767 = vld [vmem:[#allocation2 + $0x1578] sm:$0xff]
    %v768 = vld [vmem:[#allocation2 + $0x1580] sm:$0xff]
    %v769 = vld [vmem:[#allocation2 + $0x1588] sm:$0xff]
    %v770 = vld [vmem:[#allocation2 + $0x1590] sm:$0xff]
    %v771 = vld [vmem:[#allocation2 + $0x1598] sm:$0xff]
    %v772 = vld [vmem:[#allocation2 + $0x15a0] sm:$0xff]
    %v773 = vld [vmem:[#allocation2 + $0x15a8] sm:$0xff]
    %v774 = vld [vmem:[#allocation2 + $0x15b0] sm:$0xff]
    %v775 = vld [vmem:[#allocation2 + $0x15b8] sm:$0xff]
    %v776 = vld [vmem:[#allocation2 + $0x15c0] sm:$0xff]
    %v777 = vld [vmem:[#allocation2 + $0x15c8] sm:$0xff]
    %v778 = vld [vmem:[#allocation2 + $0x15d0] sm:$0xff]
    %v779 = vld [vmem:[#allocation2 + $0x15d8] sm:$0xff]
    %v780 = vld [vmem:[#allocation2 + $0x15e0] sm:$0xff]
    %v781 = vld [vmem:[#allocation2 + $0x15e8] sm:$0xff]
    %v782 = vld [vmem:[#allocation2 + $0x15f0] sm:$0xff]
    %v783 = vld [vmem:[#allocation2 + $0x15f8] sm:$0xff]
    %v784 = vld [vmem:[#allocation2 + $0x1600] sm:$0xff]
    %v785 = vld [vmem:[#allocation2 + $0x1608] sm:$0xff]
    %v786 = vld [vmem:[#allocation2 + $0x1610] sm:$0xff]
    %v787 = vld [vmem:[#allocation2 + $0x1618] sm:$0xff]
    %v788 = vld [vmem:[#allocation2 + $0x1620] sm:$0xff]
    %v789 = vld [vmem:[#allocation2 + $0x1628] sm:$0xff]
    %v790 = vld [vmem:[#allocation2 + $0x1630] sm:$0xff]
    %v791 = vld [vmem:[#allocation2 + $0x1638] sm:$0xff]
    %v792 = vld [vmem:[#allocation2 + $0x1640] sm:$0xff]
    %v793 = vld [vmem:[#allocation2 + $0x1648] sm:$0xff]
    %v794 = vld [vmem:[#allocation2 + $0x1650] sm:$0xff]
    %v795 = vld [vmem:[#allocation2 + $0x1658] sm:$0xff]
    %v796 = vld [vmem:[#allocation2 + $0x1660] sm:$0xff]
    %v797 = vld [vmem:[#allocation2 + $0x1668] sm:$0xff]
    %v798 = vld [vmem:[#allocation2 + $0x1670] sm:$0xff]
    %v799 = vld [vmem:[#allocation2 + $0x1678] sm:$0xff]
    %v800 = vld [vmem:[#allocation2 + $0x1680] sm:$0xff]
    %v801 = vld [vmem:[#allocation2 + $0x1688] sm:$0xff]
    %v802 = vld [vmem:[#allocation2 + $0x1690] sm:$0xff]
    %v803 = vld [vmem:[#allocation2 + $0x1698] sm:$0xff]
    %v804 = vld [vmem:[#allocation2 + $0x16a0] sm:$0xff]
    %v805 = vld [vmem:[#allocation2 + $0x16a8] sm:$0xff]
    %v806 = vld [vmem:[#allocation2 + $0x16b0] sm:$0xff]
    %v807 = vld [vmem:[#allocation2 + $0x16b8] sm:$0xff]
    %v808 = vld [vmem:[#allocation2 + $0x16c0] sm:$0xff]
    %v809 = vld [vmem:[#allocation2 + $0x16c8] sm:$0xff]
    %v810 = vld [vmem:[#allocation2 + $0x16d0] sm:$0xff]
    %v811 = vld [vmem:[#allocation2 + $0x16d8] sm:$0xff]
    %v812 = vld [vmem:[#allocation2 + $0x16e0] sm:$0xff]
    %v813 = vld [vmem:[#allocation2 + $0x16e8] sm:$0xff]
    %v814 = vld [vmem:[#allocation2 + $0x16f0] sm:$0xff]
    %v815 = vld [vmem:[#allocation2 + $0x16f8] sm:$0xff]
    %v816 = vld [vmem:[#allocation2 + $0x1700] sm:$0xff]
    %v817 = vld [vmem:[#allocation2 + $0x1708] sm:$0xff]
    %v818 = vld [vmem:[#allocation2 + $0x1710] sm:$0xff]
    %v819 = vld [vmem:[#allocation2 + $0x1718] sm:$0xff]
    %v820 = vld [vmem:[#allocation2 + $0x1720] sm:$0xff]
    %v821 = vld [vmem:[#allocation2 + $0x1728] sm:$0xff]
    %v822 = vld [vmem:[#allocation2 + $0x1730] sm:$0xff]
    %v823 = vld [vmem:[#allocation2 + $0x1738] sm:$0xff]
    %v824 = vld [vmem:[#allocation2 + $0x1740] sm:$0xff]
    %v825 = vld [vmem:[#allocation2 + $0x1748] sm:$0xff]
    %v826 = vld [vmem:[#allocation2 + $0x1750] sm:$0xff]
    %v827 = vld [vmem:[#allocation2 + $0x1758] sm:$0xff]
    %v828 = vld [vmem:[#allocation2 + $0x1760] sm:$0xff]
    %v829 = vld [vmem:[#allocation2 + $0x1768] sm:$0xff]
    %v830 = vld [vmem:[#allocation2 + $0x1770] sm:$0xff]
    %v831 = vld [vmem:[#allocation2 + $0x1778] sm:$0xff]
    %v832 = vld [vmem:[#allocation2 + $0x1780] sm:$0xff]
    %v833 = vld [vmem:[#allocation2 + $0x1788] sm:$0xff]
    %v834 = vld [vmem:[#allocation2 + $0x1790] sm:$0xff]
    %v835 = vld [vmem:[#allocation2 + $0x1798] sm:$0xff]
    %v836 = vld [vmem:[#allocation2 + $0x17a0] sm:$0xff]
    %v837 = vld [vmem:[#allocation2 + $0x17a8] sm:$0xff]
    %v838 = vld [vmem:[#allocation2 + $0x17b0] sm:$0xff]
    %v839 = vld [vmem:[#allocation2 + $0x17b8] sm:$0xff]
    %v840 = vld [vmem:[#allocation2 + $0x17c0] sm:$0xff]
    %v841 = vld [vmem:[#allocation2 + $0x17c8] sm:$0xff]
    %v842 = vld [vmem:[#allocation2 + $0x17d0] sm:$0xff]
    %v843 = vld [vmem:[#allocation2 + $0x17d8] sm:$0xff]
    %v844 = vld [vmem:[#allocation2 + $0x17e0] sm:$0xff]
    %v845 = vld [vmem:[#allocation2 + $0x17e8] sm:$0xff]
    %v846 = vld [vmem:[#allocation2 + $0x17f0] sm:$0xff]
    %v847 = vld [vmem:[#allocation2 + $0x17f8] sm:$0xff]
    %v848 = vld [vmem:[#allocation2 + $0x1800] sm:$0xff]
    %v849 = vld [vmem:[#allocation2 + $0x1808] sm:$0xff]
    %v850 = vld [vmem:[#allocation2 + $0x1810] sm:$0xff]
    %v851 = vld [vmem:[#allocation2 + $0x1818] sm:$0xff]
    %v852 = vld [vmem:[#allocation2 + $0x1820] sm:$0xff]
    %v853 = vld [vmem:[#allocation2 + $0x1828] sm:$0xff]
    %v854 = vld [vmem:[#allocation2 + $0x1830] sm:$0xff]
    %v855 = vld [vmem:[#allocation2 + $0x1838] sm:$0xff]
    %v856 = vld [vmem:[#allocation2 + $0x1840] sm:$0xff]
    %v857 = vld [vmem:[#allocation2 + $0x1848] sm:$0xff]
    %v858 = vld [vmem:[#allocation2 + $0x1850] sm:$0xff]
    %v859 = vld [vmem:[#allocation2 + $0x1858] sm:$0xff]
    %v860 = vld [vmem:[#allocation2 + $0x1860] sm:$0xff]
    %v861 = vld [vmem:[#allocation2 + $0x1868] sm:$0xff]
    %v862 = vld [vmem:[#allocation2 + $0x1870] sm:$0xff]
    %v863 = vld [vmem:[#allocation2 + $0x1878] sm:$0xff]
    %v864 = vld [vmem:[#allocation2 + $0x1880] sm:$0xff]
    %v865 = vld [vmem:[#allocation2 + $0x1888] sm:$0xff]
    %v866 = vld [vmem:[#allocation2 + $0x1890] sm:$0xff]
    %v867 = vld [vmem:[#allocation2 + $0x1898] sm:$0xff]
    %v868 = vld [vmem:[#allocation2 + $0x18a0] sm:$0xff]
    %v869 = vld [vmem:[#allocation2 + $0x18a8] sm:$0xff]
    %v870 = vld [vmem:[#allocation2 + $0x18b0] sm:$0xff]
    %v871 = vld [vmem:[#allocation2 + $0x18b8] sm:$0xff]
    %v872 = vld [vmem:[#allocation2 + $0x18c0] sm:$0xff]
    %v873 = vld [vmem:[#allocation2 + $0x18c8] sm:$0xff]
    %v874 = vld [vmem:[#allocation2 + $0x18d0] sm:$0xff]
    %v875 = vld [vmem:[#allocation2 + $0x18d8] sm:$0xff]
    %v876 = vld [vmem:[#allocation2 + $0x18e0] sm:$0xff]
    %v877 = vld [vmem:[#allocation2 + $0x18e8] sm:$0xff]
    %v878 = vld [vmem:[#allocation2 + $0x18f0] sm:$0xff]
    %v879 = vld [vmem:[#allocation2 + $0x18f8] sm:$0xff]
    %v880 = vld [vmem:[#allocation2 + $0x1900] sm:$0xff]
    %v881 = vld [vmem:[#allocation2 + $0x1908] sm:$0xff]
    %v882 = vld [vmem:[#allocation2 + $0x1910] sm:$0xff]
    %v883 = vld [vmem:[#allocation2 + $0x1918] sm:$0xff]
    %v884 = vld [vmem:[#allocation2 + $0x1920] sm:$0xff]
    %v885 = vld [vmem:[#allocation2 + $0x1928] sm:$0xff]
    %v886 = vld [vmem:[#allocation2 + $0x1930] sm:$0xff]
    %v887 = vld [vmem:[#allocation2 + $0x1938] sm:$0xff]
    %v888 = vld [vmem:[#allocation2 + $0x1940] sm:$0xff]
    %v889 = vld [vmem:[#allocation2 + $0x1948] sm:$0xff]
    %v890 = vld [vmem:[#allocation2 + $0x1950] sm:$0xff]
    %v891 = vld [vmem:[#allocation2 + $0x1958] sm:$0xff]
    %v892 = vld [vmem:[#allocation2 + $0x1960] sm:$0xff]
    %v893 = vld [vmem:[#allocation2 + $0x1968] sm:$0xff]
    %v894 = vld [vmem:[#allocation2 + $0x1970] sm:$0xff]
    %v895 = vld [vmem:[#allocation2 + $0x1978] sm:$0xff]
    %v896 = vld [vmem:[#allocation2 + $0x1980] sm:$0xff]
    %v897 = vld [vmem:[#allocation2 + $0x1988] sm:$0xff]
    %v898 = vld [vmem:[#allocation2 + $0x1990] sm:$0xff]
    %v899 = vld [vmem:[#allocation2 + $0x1998] sm:$0xff]
    %v900 = vld [vmem:[#allocation2 + $0x19a0] sm:$0xff]
    %v901 = vld [vmem:[#allocation2 + $0x19a8] sm:$0xff]
    %v902 = vld [vmem:[#allocation2 + $0x19b0] sm:$0xff]
    %v903 = vld [vmem:[#allocation2 + $0x19b8] sm:$0xff]
    %v904 = vld [vmem:[#allocation2 + $0x19c0] sm:$0xff]
    %v905 = vld [vmem:[#allocation2 + $0x19c8] sm:$0xff]
    %v906 = vld [vmem:[#allocation2 + $0x19d0] sm:$0xff]
    %v907 = vld [vmem:[#allocation2 + $0x19d8] sm:$0xff]
    %v908 = vld [vmem:[#allocation2 + $0x19e0] sm:$0xff]
    %v909 = vld [vmem:[#allocation2 + $0x19e8] sm:$0xff]
    %v910 = vld [vmem:[#allocation2 + $0x19f0] sm:$0xff]
    %v911 = vld [vmem:[#allocation2 + $0x19f8] sm:$0xff]
    %v912 = vld [vmem:[#allocation2 + $0x1a00] sm:$0xff]
    %v913 = vld [vmem:[#allocation2 + $0x1a08] sm:$0xff]
    %v914 = vld [vmem:[#allocation2 + $0x1a10] sm:$0xff]
    %v915 = vld [vmem:[#allocation2 + $0x1a18] sm:$0xff]
    %v916 = vld [vmem:[#allocation2 + $0x1a20] sm:$0xff]
    %v917 = vld [vmem:[#allocation2 + $0x1a28] sm:$0xff]
    %v918 = vld [vmem:[#allocation2 + $0x1a30] sm:$0xff]
    %v919 = vld [vmem:[#allocation2 + $0x1a38] sm:$0xff]
    %v920 = vld [vmem:[#allocation2 + $0x1a40] sm:$0xff]
    %v921 = vld [vmem:[#allocation2 + $0x1a48] sm:$0xff]
    %v922 = vld [vmem:[#allocation2 + $0x1a50] sm:$0xff]
    %v923 = vld [vmem:[#allocation2 + $0x1a58] sm:$0xff]
    %v924 = vld [vmem:[#allocation2 + $0x1a60] sm:$0xff]
    %v925 = vld [vmem:[#allocation2 + $0x1a68] sm:$0xff]
    %v926 = vld [vmem:[#allocation2 + $0x1a70] sm:$0xff]
    %v927 = vld [vmem:[#allocation2 + $0x1a78] sm:$0xff]
    %v928 = vld [vmem:[#allocation2 + $0x1a80] sm:$0xff]
    %v929 = vld [vmem:[#allocation2 + $0x1a88] sm:$0xff]
    %v930 = vld [vmem:[#allocation2 + $0x1a90] sm:$0xff]
    %v931 = vld [vmem:[#allocation2 + $0x1a98] sm:$0xff]
    %v932 = vld [vmem:[#allocation2 + $0x1aa0] sm:$0xff]
    %v933 = vld [vmem:[#allocation2 + $0x1aa8] sm:$0xff]
    %v934 = vld [vmem:[#allocation2 + $0x1ab0] sm:$0xff]
    %v935 = vld [vmem:[#allocation2 + $0x1ab8] sm:$0xff]
    %v936 = vld [vmem:[#allocation2 + $0x1ac0] sm:$0xff]
    %v937 = vld [vmem:[#allocation2 + $0x1ac8] sm:$0xff]
    %v938 = vld [vmem:[#allocation2 + $0x1ad0] sm:$0xff]
    %v939 = vld [vmem:[#allocation2 + $0x1ad8] sm:$0xff]
    %v940 = vld [vmem:[#allocation2 + $0x1ae0] sm:$0xff]
    %v941 = vld [vmem:[#allocation2 + $0x1ae8] sm:$0xff]
    %v942 = vld [vmem:[#allocation2 + $0x1af0] sm:$0xff]
    %v943 = vld [vmem:[#allocation2 + $0x1af8] sm:$0xff]
    %v944 = vld [vmem:[#allocation2 + $0x1b00] sm:$0xff]
    %v945 = vld [vmem:[#allocation2 + $0x1b08] sm:$0xff]
    %v946 = vld [vmem:[#allocation2 + $0x1b10] sm:$0xff]
    %v947 = vld [vmem:[#allocation2 + $0x1b18] sm:$0xff]
    %v948 = vld [vmem:[#allocation2 + $0x1b20] sm:$0xff]
    %v949 = vld [vmem:[#allocation2 + $0x1b28] sm:$0xff]
    %v950 = vld [vmem:[#allocation2 + $0x1b30] sm:$0xff]
    %v951 = vld [vmem:[#allocation2 + $0x1b38] sm:$0xff]
    %v952 = vld [vmem:[#allocation2 + $0x1b40] sm:$0xff]
    %v953 = vld [vmem:[#allocation2 + $0x1b48] sm:$0xff]
    %v954 = vld [vmem:[#allocation2 + $0x1b50] sm:$0xff]
    %v955 = vld [vmem:[#allocation2 + $0x1b58] sm:$0xff]
    %v956 = vld [vmem:[#allocation2 + $0x1b60] sm:$0xff]
    %v957 = vld [vmem:[#allocation2 + $0x1b68] sm:$0xff]
    %v958 = vld [vmem:[#allocation2 + $0x1b70] sm:$0xff]
    %v959 = vld [vmem:[#allocation2 + $0x1b78] sm:$0xff]
    %v960 = vld [vmem:[#allocation2 + $0x1b80] sm:$0xff]
    %v961 = vld [vmem:[#allocation2 + $0x1b88] sm:$0xff]
    %v962 = vld [vmem:[#allocation2 + $0x1b90] sm:$0xff]
    %v963 = vld [vmem:[#allocation2 + $0x1b98] sm:$0xff]
    %v964 = vld [vmem:[#allocation2 + $0x1ba0] sm:$0xff]
    %v965 = vld [vmem:[#allocation2 + $0x1ba8] sm:$0xff]
    %v966 = vld [vmem:[#allocation2 + $0x1bb0] sm:$0xff]
    %v967 = vld [vmem:[#allocation2 + $0x1bb8] sm:$0xff]
    %v968 = vld [vmem:[#allocation2 + $0x1bc0] sm:$0xff]
    %v969 = vld [vmem:[#allocation2 + $0x1bc8] sm:$0xff]
    %v970 = vld [vmem:[#allocation2 + $0x1bd0] sm:$0xff]
    %v971 = vld [vmem:[#allocation2 + $0x1bd8] sm:$0xff]
    %v972 = vld [vmem:[#allocation2 + $0x1be0] sm:$0xff]
    %v973 = vld [vmem:[#allocation2 + $0x1be8] sm:$0xff]
    %v974 = vld [vmem:[#allocation2 + $0x1bf0] sm:$0xff]
    %v975 = vld [vmem:[#allocation2 + $0x1bf8] sm:$0xff]
    %v976 = vld [vmem:[#allocation2 + $0x1c00] sm:$0xff]
    %v977 = vld [vmem:[#allocation2 + $0x1c08] sm:$0xff]
    %v978 = vld [vmem:[#allocation2 + $0x1c10] sm:$0xff]
    %v979 = vld [vmem:[#allocation2 + $0x1c18] sm:$0xff]
    %v980 = vld [vmem:[#allocation2 + $0x1c20] sm:$0xff]
    %v981 = vld [vmem:[#allocation2 + $0x1c28] sm:$0xff]
    %v982 = vld [vmem:[#allocation2 + $0x1c30] sm:$0xff]
    %v983 = vld [vmem:[#allocation2 + $0x1c38] sm:$0xff]
    %v984 = vld [vmem:[#allocation2 + $0x1c40] sm:$0xff]
    %v985 = vld [vmem:[#allocation2 + $0x1c48] sm:$0xff]
    %v986 = vld [vmem:[#allocation2 + $0x1c50] sm:$0xff]
    %v987 = vld [vmem:[#allocation2 + $0x1c58] sm:$0xff]
    %v988 = vld [vmem:[#allocation2 + $0x1c60] sm:$0xff]
    %v989 = vld [vmem:[#allocation2 + $0x1c68] sm:$0xff]
    %v990 = vld [vmem:[#allocation2 + $0x1c70] sm:$0xff]
    %v991 = vld [vmem:[#allocation2 + $0x1c78] sm:$0xff]
    %v992 = vld [vmem:[#allocation2 + $0x1c80] sm:$0xff]
    %v993 = vld [vmem:[#allocation2 + $0x1c88] sm:$0xff]
    %v994 = vld [vmem:[#allocation2 + $0x1c90] sm:$0xff]
    %v995 = vld [vmem:[#allocation2 + $0x1c98] sm:$0xff]
    %v996 = vld [vmem:[#allocation2 + $0x1ca0] sm:$0xff]
    %v997 = vld [vmem:[#allocation2 + $0x1ca8] sm:$0xff]
    %v998 = vld [vmem:[#allocation2 + $0x1cb0] sm:$0xff]
    %v999 = vld [vmem:[#allocation2 + $0x1cb8] sm:$0xff]
    %v1000 = vld [vmem:[#allocation2 + $0x1cc0] sm:$0xff]
    %v1001 = vld [vmem:[#allocation2 + $0x1cc8] sm:$0xff]
    %v1002 = vld [vmem:[#allocation2 + $0x1cd0] sm:$0xff]
    %v1003 = vld [vmem:[#allocation2 + $0x1cd8] sm:$0xff]
    %v1004 = vld [vmem:[#allocation2 + $0x1ce0] sm:$0xff]
    %v1005 = vld [vmem:[#allocation2 + $0x1ce8] sm:$0xff]
    %v1006 = vld [vmem:[#allocation2 + $0x1cf0] sm:$0xff]
    %v1007 = vld [vmem:[#allocation2 + $0x1cf8] sm:$0xff]
    %v1008 = vld [vmem:[#allocation2 + $0x1d00] sm:$0xff]
    %v1009 = vld [vmem:[#allocation2 + $0x1d08] sm:$0xff]
    %v1010 = vld [vmem:[#allocation2 + $0x1d10] sm:$0xff]
    %v1011 = vld [vmem:[#allocation2 + $0x1d18] sm:$0xff]
    %v1012 = vld [vmem:[#allocation2 + $0x1d20] sm:$0xff]
    %v1013 = vld [vmem:[#allocation2 + $0x1d28] sm:$0xff]
    %v1014 = vld [vmem:[#allocation2 + $0x1d30] sm:$0xff]
    %v1015 = vld [vmem:[#allocation2 + $0x1d38] sm:$0xff]
    %v1016 = vld [vmem:[#allocation2 + $0x1d40] sm:$0xff]
    %v1017 = vld [vmem:[#allocation2 + $0x1d48] sm:$0xff]
    %v1018 = vld [vmem:[#allocation2 + $0x1d50] sm:$0xff]
    %v1019 = vld [vmem:[#allocation2 + $0x1d58] sm:$0xff]
    %v1020 = vld [vmem:[#allocation2 + $0x1d60] sm:$0xff]
    %v1021 = vld [vmem:[#allocation2 + $0x1d68] sm:$0xff]
    %v1022 = vld [vmem:[#allocation2 + $0x1d70] sm:$0xff]
    %v1023 = vld [vmem:[#allocation2 + $0x1d78] sm:$0xff]
    %v1024 = vld [vmem:[#allocation2 + $0x1d80] sm:$0xff]
    %v1025 = vld [vmem:[#allocation2 + $0x1d88] sm:$0xff]
    %v1026 = vld [vmem:[#allocation2 + $0x1d90] sm:$0xff]
    %v1027 = vld [vmem:[#allocation2 + $0x1d98] sm:$0xff]
    %v1028 = vld [vmem:[#allocation2 + $0x1da0] sm:$0xff]
    %v1029 = vld [vmem:[#allocation2 + $0x1da8] sm:$0xff]
    %v1030 = vld [vmem:[#allocation2 + $0x1db0] sm:$0xff]
    %v1031 = vld [vmem:[#allocation2 + $0x1db8] sm:$0xff]
    %v1032 = vld [vmem:[#allocation2 + $0x1dc0] sm:$0xff]
    %v1033 = vld [vmem:[#allocation2 + $0x1dc8] sm:$0xff]
    %v1034 = vld [vmem:[#allocation2 + $0x1dd0] sm:$0xff]
    %v1035 = vld [vmem:[#allocation2 + $0x1dd8] sm:$0xff]
    %v1036 = vld [vmem:[#allocation2 + $0x1de0] sm:$0xff]
    %v1037 = vld [vmem:[#allocation2 + $0x1de8] sm:$0xff]
    %v1038 = vld [vmem:[#allocation2 + $0x1df0] sm:$0xff]
    %v1039 = vld [vmem:[#allocation2 + $0x1df8] sm:$0xff]
    %v1040 = vld [vmem:[#allocation2 + $0x1e00] sm:$0xff]
    %v1041 = vld [vmem:[#allocation2 + $0x1e08] sm:$0xff]
    %v1042 = vld [vmem:[#allocation2 + $0x1e10] sm:$0xff]
    %v1043 = vld [vmem:[#allocation2 + $0x1e18] sm:$0xff]
    %v1044 = vld [vmem:[#allocation2 + $0x1e20] sm:$0xff]
    %v1045 = vld [vmem:[#allocation2 + $0x1e28] sm:$0xff]
    %v1046 = vld [vmem:[#allocation2 + $0x1e30] sm:$0xff]
    %v1047 = vld [vmem:[#allocation2 + $0x1e38] sm:$0xff]
    %v1048 = vld [vmem:[#allocation2 + $0x1e40] sm:$0xff]
    %v1049 = vld [vmem:[#allocation2 + $0x1e48] sm:$0xff]
    %v1050 = vld [vmem:[#allocation2 + $0x1e50] sm:$0xff]
    %v1051 = vld [vmem:[#allocation2 + $0x1e58] sm:$0xff]
    %v1052 = vld [vmem:[#allocation2 + $0x1e60] sm:$0xff]
    %v1053 = vld [vmem:[#allocation2 + $0x1e68] sm:$0xff]
    %v1054 = vld [vmem:[#allocation2 + $0x1e70] sm:$0xff]
    %v1055 = vld [vmem:[#allocation2 + $0x1e78] sm:$0xff]
    %v1056 = vld [vmem:[#allocation2 + $0x1e80] sm:$0xff]
    %v1057 = vld [vmem:[#allocation2 + $0x1e88] sm:$0xff]
    %v1058 = vld [vmem:[#allocation2 + $0x1e90] sm:$0xff]
    %v1059 = vld [vmem:[#allocation2 + $0x1e98] sm:$0xff]
    %v1060 = vld [vmem:[#allocation2 + $0x1ea0] sm:$0xff]
    %v1061 = vld [vmem:[#allocation2 + $0x1ea8] sm:$0xff]
    %v1062 = vld [vmem:[#allocation2 + $0x1eb0] sm:$0xff]
    %v1063 = vld [vmem:[#allocation2 + $0x1eb8] sm:$0xff]
    %v1064 = vld [vmem:[#allocation2 + $0x1ec0] sm:$0xff]
    %v1065 = vld [vmem:[#allocation2 + $0x1ec8] sm:$0xff]
    %v1066 = vld [vmem:[#allocation2 + $0x1ed0] sm:$0xff]
    %v1067 = vld [vmem:[#allocation2 + $0x1ed8] sm:$0xff]
    %v1068 = vld [vmem:[#allocation2 + $0x1ee0] sm:$0xff]
    %v1069 = vld [vmem:[#allocation2 + $0x1ee8] sm:$0xff]
    %v1070 = vld [vmem:[#allocation2 + $0x1ef0] sm:$0xff]
    %v1071 = vld [vmem:[#allocation2 + $0x1ef8] sm:$0xff]
    %v1072 = vld [vmem:[#allocation2 + $0x1f00] sm:$0xff]
    %v1073 = vld [vmem:[#allocation2 + $0x1f08] sm:$0xff]
    %v1074 = vld [vmem:[#allocation2 + $0x1f10] sm:$0xff]
    %v1075 = vld [vmem:[#allocation2 + $0x1f18] sm:$0xff]
    %v1076 = vld [vmem:[#allocation2 + $0x1f20] sm:$0xff]
    %v1077 = vld [vmem:[#allocation2 + $0x1f28] sm:$0xff]
    %v1078 = vld [vmem:[#allocation2 + $0x1f30] sm:$0xff]
    %v1079 = vld [vmem:[#allocation2 + $0x1f38] sm:$0xff]
    %v1080 = vld [vmem:[#allocation2 + $0x1f40] sm:$0xff]
    %v1081 = vld [vmem:[#allocation2 + $0x1f48] sm:$0xff]
    %v1082 = vld [vmem:[#allocation2 + $0x1f50] sm:$0xff]
    %v1083 = vld [vmem:[#allocation2 + $0x1f58] sm:$0xff]
    %v1084 = vld [vmem:[#allocation2 + $0x1f60] sm:$0xff]
    %v1085 = vld [vmem:[#allocation2 + $0x1f68] sm:$0xff]
    %v1086 = vld [vmem:[#allocation2 + $0x1f70] sm:$0xff]
    %v1087 = vld [vmem:[#allocation2 + $0x1f78] sm:$0xff]
    %v1088 = vld [vmem:[#allocation2 + $0x1f80] sm:$0xff]
    %v1089 = vld [vmem:[#allocation2 + $0x1f88] sm:$0xff]
    %v1090 = vld [vmem:[#allocation2 + $0x1f90] sm:$0xff]
    %v1091 = vld [vmem:[#allocation2 + $0x1f98] sm:$0xff]
    %v1092 = vld [vmem:[#allocation2 + $0x1fa0] sm:$0xff]
    %v1093 = vld [vmem:[#allocation2 + $0x1fa8] sm:$0xff]
    %v1094 = vld [vmem:[#allocation2 + $0x1fb0] sm:$0xff]
    %v1095 = vld [vmem:[#allocation2 + $0x1fb8] sm:$0xff]
    %v1096 = vld [vmem:[#allocation2 + $0x1fc0] sm:$0xff]
    %v1097 = vld [vmem:[#allocation2 + $0x1fc8] sm:$0xff]
    %v1098 = vld [vmem:[#allocation2 + $0x1fd0] sm:$0xff]
    %v1099 = vld [vmem:[#allocation2 + $0x1fd8] sm:$0xff]
    %v1100 = vld [vmem:[#allocation2 + $0x1fe0] sm:$0xff]
    %v1101 = vld [vmem:[#allocation2 + $0x1fe8] sm:$0xff]
    %v1102 = vld [vmem:[#allocation2 + $0x1ff0] sm:$0xff]
    %v1103 = vld [vmem:[#allocation2 + $0x1ff8] sm:$0xff]
    %v1104 = vld [vmem:[#allocation2 + $0x2000] sm:$0xff]
    %v1105 = vld [vmem:[#allocation2 + $0x2008] sm:$0xff]
    %v1106 = vld [vmem:[#allocation2 + $0x2010] sm:$0xff]
    %v1107 = vld [vmem:[#allocation2 + $0x2018] sm:$0xff]
    %v1108 = vld [vmem:[#allocation2 + $0x2020] sm:$0xff]
    %v1109 = vld [vmem:[#allocation2 + $0x2028] sm:$0xff]
    %v1110 = vld [vmem:[#allocation2 + $0x2030] sm:$0xff]
    %v1111 = vld [vmem:[#allocation2 + $0x2038] sm:$0xff]
    %v1112 = vld [vmem:[#allocation2 + $0x2040] sm:$0xff]
    %v1113 = vld [vmem:[#allocation2 + $0x2048] sm:$0xff]
    %v1114 = vld [vmem:[#allocation2 + $0x2050] sm:$0xff]
    %v1115 = vld [vmem:[#allocation2 + $0x2058] sm:$0xff]
    %v1116 = vld [vmem:[#allocation2 + $0x2060] sm:$0xff]
    %v1117 = vld [vmem:[#allocation2 + $0x2068] sm:$0xff]
    %v1118 = vld [vmem:[#allocation2 + $0x2070] sm:$0xff]
    %v1119 = vld [vmem:[#allocation2 + $0x2078] sm:$0xff]
    %v1120 = vld [vmem:[#allocation2 + $0x2080] sm:$0xff]
    %v1121 = vld [vmem:[#allocation2 + $0x2088] sm:$0xff]
    %v1122 = vld [vmem:[#allocation2 + $0x2090] sm:$0xff]
    %v1123 = vld [vmem:[#allocation2 + $0x2098] sm:$0xff]
    %v1124 = vld [vmem:[#allocation2 + $0x20a0] sm:$0xff]
    %v1125 = vld [vmem:[#allocation2 + $0x20a8] sm:$0xff]
    %v1126 = vld [vmem:[#allocation2 + $0x20b0] sm:$0xff]
    %v1127 = vld [vmem:[#allocation2 + $0x20b8] sm:$0xff]
    %v1128 = vld [vmem:[#allocation2 + $0x20c0] sm:$0xff]
    %v1129 = vld [vmem:[#allocation2 + $0x20c8] sm:$0xff]
    %v1130 = vld [vmem:[#allocation2 + $0x20d0] sm:$0xff]
    %v1131 = vld [vmem:[#allocation2 + $0x20d8] sm:$0xff]
    %v1132 = vld [vmem:[#allocation2 + $0x20e0] sm:$0xff]
    %v1133 = vld [vmem:[#allocation2 + $0x20e8] sm:$0xff]
    %v1134 = vld [vmem:[#allocation2 + $0x20f0] sm:$0xff]
    %v1135 = vld [vmem:[#allocation2 + $0x20f8] sm:$0xff]
    %v1136 = vld [vmem:[#allocation2 + $0x2100] sm:$0xff]
    %v1137 = vld [vmem:[#allocation2 + $0x2108] sm:$0xff]
    %v1138 = vld [vmem:[#allocation2 + $0x2110] sm:$0xff]
    %v1139 = vld [vmem:[#allocation2 + $0x2118] sm:$0xff]
    %v1140 = vld [vmem:[#allocation2 + $0x2120] sm:$0xff]
    %v1141 = vld [vmem:[#allocation2 + $0x2128] sm:$0xff]
    %v1142 = vld [vmem:[#allocation2 + $0x2130] sm:$0xff]
    %v1143 = vld [vmem:[#allocation2 + $0x2138] sm:$0xff]
    %v1144 = vld [vmem:[#allocation2 + $0x2140] sm:$0xff]
    %v1145 = vld [vmem:[#allocation2 + $0x2148] sm:$0xff]
    %v1146 = vld [vmem:[#allocation2 + $0x2150] sm:$0xff]
    %v1147 = vld [vmem:[#allocation2 + $0x2158] sm:$0xff]
    %v1148 = vld [vmem:[#allocation2 + $0x2160] sm:$0xff]
    %v1149 = vld [vmem:[#allocation2 + $0x2168] sm:$0xff]
    %v1150 = vld [vmem:[#allocation2 + $0x2170] sm:$0xff]
    %v1151 = vld [vmem:[#allocation2 + $0x2178] sm:$0xff]
    %v1152 = vld [vmem:[#allocation2 + $0x2180] sm:$0xff]
    %v1153 = vld [vmem:[#allocation2 + $0x2188] sm:$0xff]
    %v1154 = vld [vmem:[#allocation2 + $0x2190] sm:$0xff]
    %v1155 = vld [vmem:[#allocation2 + $0x2198] sm:$0xff]
    %v1156 = vld [vmem:[#allocation2 + $0x21a0] sm:$0xff]
    %v1157 = vld [vmem:[#allocation2 + $0x21a8] sm:$0xff]
    %v1158 = vld [vmem:[#allocation2 + $0x21b0] sm:$0xff]
    %v1159 = vld [vmem:[#allocation2 + $0x21b8] sm:$0xff]
    %v1160 = vld [vmem:[#allocation2 + $0x21c0] sm:$0xff]
    %v1161 = vld [vmem:[#allocation2 + $0x21c8] sm:$0xff]
    %v1162 = vld [vmem:[#allocation2 + $0x21d0] sm:$0xff]
    %v1163 = vld [vmem:[#allocation2 + $0x21d8] sm:$0xff]
    %v1164 = vld [vmem:[#allocation2 + $0x21e0] sm:$0xff]
    %v1165 = vld [vmem:[#allocation2 + $0x21e8] sm:$0xff]
    %v1166 = vld [vmem:[#allocation2 + $0x21f0] sm:$0xff]
    %v1167 = vld [vmem:[#allocation2 + $0x21f8] sm:$0xff]
    %v1168 = vld [vmem:[#allocation2 + $0x2200] sm:$0xff]
    %v1169 = vld [vmem:[#allocation2 + $0x2208] sm:$0xff]
    %v1170 = vld [vmem:[#allocation2 + $0x2210] sm:$0xff]
    %v1171 = vld [vmem:[#allocation2 + $0x2218] sm:$0xff]
    %v1172 = vld [vmem:[#allocation2 + $0x2220] sm:$0xff]
    %v1173 = vld [vmem:[#allocation2 + $0x2228] sm:$0xff]
    %v1174 = vld [vmem:[#allocation2 + $0x2230] sm:$0xff]
    %v1175 = vld [vmem:[#allocation2 + $0x2238] sm:$0xff]
    %v1176 = vld [vmem:[#allocation2 + $0x2240] sm:$0xff]
    %v1177 = vld [vmem:[#allocation2 + $0x2248] sm:$0xff]
    %v1178 = vld [vmem:[#allocation2 + $0x2250] sm:$0xff]
    %v1179 = vld [vmem:[#allocation2 + $0x2258] sm:$0xff]
    %v1180 = vld [vmem:[#allocation2 + $0x2260] sm:$0xff]
    %v1181 = vld [vmem:[#allocation2 + $0x2268] sm:$0xff]
    %v1182 = vld [vmem:[#allocation2 + $0x2270] sm:$0xff]
    %v1183 = vld [vmem:[#allocation2 + $0x2278] sm:$0xff]
    %v1184 = vld [vmem:[#allocation2 + $0x2280] sm:$0xff]
    %v1185 = vld [vmem:[#allocation2 + $0x2288] sm:$0xff]
    %v1186 = vld [vmem:[#allocation2 + $0x2290] sm:$0xff]
    %v1187 = vld [vmem:[#allocation2 + $0x2298] sm:$0xff]
    %v1188 = vld [vmem:[#allocation2 + $0x22a0] sm:$0xff]
    %v1189 = vld [vmem:[#allocation2 + $0x22a8] sm:$0xff]
    %v1190 = vld [vmem:[#allocation2 + $0x22b0] sm:$0xff]
    %v1191 = vld [vmem:[#allocation2 + $0x22b8] sm:$0xff]
    %v1192 = vld [vmem:[#allocation2 + $0x22c0] sm:$0xff]
    %v1193 = vld [vmem:[#allocation2 + $0x22c8] sm:$0xff]
    %v1194 = vld [vmem:[#allocation2 + $0x22d0] sm:$0xff]
    %v1195 = vld [vmem:[#allocation2 + $0x22d8] sm:$0xff]
    %v1196 = vld [vmem:[#allocation2 + $0x22e0] sm:$0xff]
    %v1197 = vld [vmem:[#allocation2 + $0x22e8] sm:$0xff]
    %v1198 = vld [vmem:[#allocation2 + $0x22f0] sm:$0xff]
    %v1199 = vld [vmem:[#allocation2 + $0x22f8] sm:$0xff]
    %v1200 = vld [vmem:[#allocation2 + $0x2300] sm:$0xff]
    %v1201 = vld [vmem:[#allocation2 + $0x2308] sm:$0xff]
    %v1202 = vld [vmem:[#allocation2 + $0x2310] sm:$0xff]
    %v1203 = vld [vmem:[#allocation2 + $0x2318] sm:$0xff]
    %v1204 = vld [vmem:[#allocation2 + $0x2320] sm:$0xff]
    %v1205 = vld [vmem:[#allocation2 + $0x2328] sm:$0xff]
    %v1206 = vld [vmem:[#allocation2 + $0x2330] sm:$0xff]
    %v1207 = vld [vmem:[#allocation2 + $0x2338] sm:$0xff]
    %v1208 = vld [vmem:[#allocation2 + $0x2340] sm:$0xff]
    %v1209 = vld [vmem:[#allocation2 + $0x2348] sm:$0xff]
    %v1210 = vld [vmem:[#allocation2 + $0x2350] sm:$0xff]
    %v1211 = vld [vmem:[#allocation2 + $0x2358] sm:$0xff]
    %v1212 = vld [vmem:[#allocation2 + $0x2360] sm:$0xff]
    %v1213 = vld [vmem:[#allocation2 + $0x2368] sm:$0xff]
    %v1214 = vld [vmem:[#allocation2 + $0x2370] sm:$0xff]
    %v1215 = vld [vmem:[#allocation2 + $0x2378] sm:$0xff]
    %v1216 = vld [vmem:[#allocation2 + $0x2380] sm:$0xff]
    %v1217 = vld [vmem:[#allocation2 + $0x2388] sm:$0xff]
    %v1218 = vld [vmem:[#allocation2 + $0x2390] sm:$0xff]
    %v1219 = vld [vmem:[#allocation2 + $0x2398] sm:$0xff]
    %v1220 = vld [vmem:[#allocation2 + $0x23a0] sm:$0xff]
    %v1221 = vld [vmem:[#allocation2 + $0x23a8] sm:$0xff]
    %v1222 = vld [vmem:[#allocation2 + $0x23b0] sm:$0xff]
    %v1223 = vld [vmem:[#allocation2 + $0x23b8] sm:$0xff]
    %v1224 = vld [vmem:[#allocation2 + $0x23c0] sm:$0xff]
    %v1225 = vld [vmem:[#allocation2 + $0x23c8] sm:$0xff]
    %v1226 = vld [vmem:[#allocation2 + $0x23d0] sm:$0xff]
    %v1227 = vld [vmem:[#allocation2 + $0x23d8] sm:$0xff]
    %v1228 = vld [vmem:[#allocation2 + $0x23e0] sm:$0xff]
    %v1229 = vld [vmem:[#allocation2 + $0x23e8] sm:$0xff]
    %v1230 = vld [vmem:[#allocation2 + $0x23f0] sm:$0xff]
    %v1231 = vld [vmem:[#allocation2 + $0x23f8] sm:$0xff]
    %v1232 = vld [vmem:[#allocation2 + $0x2400] sm:$0xff]
    %v1233 = vld [vmem:[#allocation2 + $0x2408] sm:$0xff]
    %v1234 = vld [vmem:[#allocation2 + $0x2410] sm:$0xff]
    %v1235 = vld [vmem:[#allocation2 + $0x2418] sm:$0xff]
    %v1236 = vld [vmem:[#allocation2 + $0x2420] sm:$0xff]
    %v1237 = vld [vmem:[#allocation2 + $0x2428] sm:$0xff]
    %v1238 = vld [vmem:[#allocation2 + $0x2430] sm:$0xff]
    %v1239 = vld [vmem:[#allocation2 + $0x2438] sm:$0xff]
    %v1240 = vld [vmem:[#allocation2 + $0x2440] sm:$0xff]
    %v1241 = vld [vmem:[#allocation2 + $0x2448] sm:$0xff]
    %v1242 = vld [vmem:[#allocation2 + $0x2450] sm:$0xff]
    %v1243 = vld [vmem:[#allocation2 + $0x2458] sm:$0xff]
    %v1244 = vld [vmem:[#allocation2 + $0x2460] sm:$0xff]
    %v1245 = vld [vmem:[#allocation2 + $0x2468] sm:$0xff]
    %v1246 = vld [vmem:[#allocation2 + $0x2470] sm:$0xff]
    %v1247 = vld [vmem:[#allocation2 + $0x2478] sm:$0xff]
    %v1248 = vld [vmem:[#allocation2 + $0x2480] sm:$0xff]
    %v1249 = vld [vmem:[#allocation2 + $0x2488] sm:$0xff]
    %v1250 = vld [vmem:[#allocation2 + $0x2490] sm:$0xff]
    %v1251 = vld [vmem:[#allocation2 + $0x2498] sm:$0xff]
    %v1252 = vld [vmem:[#allocation2 + $0x24a0] sm:$0xff]
    %v1253 = vld [vmem:[#allocation2 + $0x24a8] sm:$0xff]
    %v1254 = vld [vmem:[#allocation2 + $0x24b0] sm:$0xff]
    %v1255 = vld [vmem:[#allocation2 + $0x24b8] sm:$0xff]
    %v1256 = vld [vmem:[#allocation2 + $0x24c0] sm:$0xff]
    %v1257 = vld [vmem:[#allocation2 + $0x24c8] sm:$0xff]
    %v1258 = vld [vmem:[#allocation2 + $0x24d0] sm:$0xff]
    %v1259 = vld [vmem:[#allocation2 + $0x24d8] sm:$0xff]
    %v1260 = vld [vmem:[#allocation2 + $0x24e0] sm:$0xff]
    %v1261 = vld [vmem:[#allocation2 + $0x24e8] sm:$0xff]
    %v1262 = vld [vmem:[#allocation2 + $0x24f0] sm:$0xff]
    %v1263 = vld [vmem:[#allocation2 + $0x24f8] sm:$0xff]
    %v1264 = vld [vmem:[#allocation2 + $0x2500] sm:$0xff]
    %v1265 = vld [vmem:[#allocation2 + $0x2508] sm:$0xff]
    %v1266 = vld [vmem:[#allocation2 + $0x2510] sm:$0xff]
    %v1267 = vld [vmem:[#allocation2 + $0x2518] sm:$0xff]
    %v1268 = vld [vmem:[#allocation2 + $0x2520] sm:$0xff]
    %v1269 = vld [vmem:[#allocation2 + $0x2528] sm:$0xff]
    %v1270 = vld [vmem:[#allocation2 + $0x2530] sm:$0xff]
    %v1271 = vld [vmem:[#allocation2 + $0x2538] sm:$0xff]
    %v1272 = vld [vmem:[#allocation2 + $0x2540] sm:$0xff]
    %v1273 = vld [vmem:[#allocation2 + $0x2548] sm:$0xff]
    %v1274 = vld [vmem:[#allocation2 + $0x2550] sm:$0xff]
    %v1275 = vld [vmem:[#allocation2 + $0x2558] sm:$0xff]
    %v1276 = vld [vmem:[#allocation2 + $0x2560] sm:$0xff]
    %v1277 = vld [vmem:[#allocation2 + $0x2568] sm:$0xff]
    %v1278 = vld [vmem:[#allocation2 + $0x2570] sm:$0xff]
    %v1279 = vld [vmem:[#allocation2 + $0x2578] sm:$0xff]
    %v1280 = vld [vmem:[#allocation2 + $0x2580] sm:$0xff]
    %v1281 = vld [vmem:[#allocation2 + $0x2588] sm:$0xff]
    %v1282 = vld [vmem:[#allocation2 + $0x2590] sm:$0xff]
    %v1283 = vld [vmem:[#allocation2 + $0x2598] sm:$0xff]
    %v1284 = vld [vmem:[#allocation2 + $0x25a0] sm:$0xff]
    %v1285 = vld [vmem:[#allocation2 + $0x25a8] sm:$0xff]
    %v1286 = vld [vmem:[#allocation2 + $0x25b0] sm:$0xff]
    %v1287 = vld [vmem:[#allocation2 + $0x25b8] sm:$0xff]
    %v1288 = vld [vmem:[#allocation2 + $0x25c0] sm:$0xff]
    %v1289 = vld [vmem:[#allocation2 + $0x25c8] sm:$0xff]
    %v1290 = vld [vmem:[#allocation2 + $0x25d0] sm:$0xff]
    %v1291 = vld [vmem:[#allocation2 + $0x25d8] sm:$0xff]
    %v1292 = vld [vmem:[#allocation2 + $0x25e0] sm:$0xff]
    %v1293 = vld [vmem:[#allocation2 + $0x25e8] sm:$0xff]
    %v1294 = vld [vmem:[#allocation2 + $0x25f0] sm:$0xff]
    %v1295 = vld [vmem:[#allocation2 + $0x25f8] sm:$0xff]
    %v1296 = vld [vmem:[#allocation2 + $0x2600] sm:$0xff]
    %v1297 = vld [vmem:[#allocation2 + $0x2608] sm:$0xff]
    %v1298 = vld [vmem:[#allocation2 + $0x2610] sm:$0xff]
    %v1299 = vld [vmem:[#allocation2 + $0x2618] sm:$0xff]
    %v1300 = vld [vmem:[#allocation2 + $0x2620] sm:$0xff]
    %v1301 = vld [vmem:[#allocation2 + $0x2628] sm:$0xff]
    %v1302 = vld [vmem:[#allocation2 + $0x2630] sm:$0xff]
    %v1303 = vld [vmem:[#allocation2 + $0x2638] sm:$0xff]
    %v1304 = vld [vmem:[#allocation2 + $0x2640] sm:$0xff]
    %v1305 = vld [vmem:[#allocation2 + $0x2648] sm:$0xff]
    %v1306 = vld [vmem:[#allocation2 + $0x2650] sm:$0xff]
    %v1307 = vld [vmem:[#allocation2 + $0x2658] sm:$0xff]
    %v1308 = vld [vmem:[#allocation2 + $0x2660] sm:$0xff]
    %v1309 = vld [vmem:[#allocation2 + $0x2668] sm:$0xff]
    %v1310 = vld [vmem:[#allocation2 + $0x2670] sm:$0xff]
    %v1311 = vld [vmem:[#allocation2 + $0x2678] sm:$0xff]
    %v1312 = vld [vmem:[#allocation2 + $0x2680] sm:$0xff]
    %v1313 = vld [vmem:[#allocation2 + $0x2688] sm:$0xff]
    %v1314 = vld [vmem:[#allocation2 + $0x2690] sm:$0xff]
    %v1315 = vld [vmem:[#allocation2 + $0x2698] sm:$0xff]
    %v1316 = vld [vmem:[#allocation2 + $0x26a0] sm:$0xff]
    %v1317 = vld [vmem:[#allocation2 + $0x26a8] sm:$0xff]
    %v1318 = vld [vmem:[#allocation2 + $0x26b0] sm:$0xff]
    %v1319 = vld [vmem:[#allocation2 + $0x26b8] sm:$0xff]
    %v1320 = vld [vmem:[#allocation2 + $0x26c0] sm:$0xff]
    %v1321 = vld [vmem:[#allocation2 + $0x26c8] sm:$0xff]
    %v1322 = vld [vmem:[#allocation2 + $0x26d0] sm:$0xff]
    %v1323 = vld [vmem:[#allocation2 + $0x26d8] sm:$0xff]
    %v1324 = vld [vmem:[#allocation2 + $0x26e0] sm:$0xff]
    %v1325 = vld [vmem:[#allocation2 + $0x26e8] sm:$0xff]
    %v1326 = vld [vmem:[#allocation2 + $0x26f0] sm:$0xff]
    %v1327 = vld [vmem:[#allocation2 + $0x26f8] sm:$0xff]
    %v1328 = vld [vmem:[#allocation2 + $0x2700] sm:$0xff]
    %v1329 = vld [vmem:[#allocation2 + $0x2708] sm:$0xff]
    %v1330 = vld [vmem:[#allocation2 + $0x2710] sm:$0xff]
    %v1331 = vld [vmem:[#allocation2 + $0x2718] sm:$0xff]
    %v1332 = vld [vmem:[#allocation2 + $0x2720] sm:$0xff]
    %v1333 = vld [vmem:[#allocation2 + $0x2728] sm:$0xff]
    %v1334 = vld [vmem:[#allocation2 + $0x2730] sm:$0xff]
    %v1335 = vld [vmem:[#allocation2 + $0x2738] sm:$0xff]
    %v1336 = vld [vmem:[#allocation2 + $0x2740] sm:$0xff]
    %v1337 = vld [vmem:[#allocation2 + $0x2748] sm:$0xff]
    %v1338 = vld [vmem:[#allocation2 + $0x2750] sm:$0xff]
    %v1339 = vld [vmem:[#allocation2 + $0x2758] sm:$0xff]
    %v1340 = vld [vmem:[#allocation2 + $0x2760] sm:$0xff]
    %v1341 = vld [vmem:[#allocation2 + $0x2768] sm:$0xff]
    %v1342 = vld [vmem:[#allocation2 + $0x2770] sm:$0xff]
    %v1343 = vld [vmem:[#allocation2 + $0x2778] sm:$0xff]
    %v1344 = vld [vmem:[#allocation2 + $0x2780] sm:$0xff]
    %v1345 = vld [vmem:[#allocation2 + $0x2788] sm:$0xff]
    %v1346 = vld [vmem:[#allocation2 + $0x2790] sm:$0xff]
    %v1347 = vld [vmem:[#allocation2 + $0x2798] sm:$0xff]
    %v1348 = vld [vmem:[#allocation2 + $0x27a0] sm:$0xff]
    %v1349 = vld [vmem:[#allocation2 + $0x27a8] sm:$0xff]
    %v1350 = vld [vmem:[#allocation2 + $0x27b0] sm:$0xff]
    %v1351 = vld [vmem:[#allocation2 + $0x27b8] sm:$0xff]
    %v1352 = vld [vmem:[#allocation2 + $0x27c0] sm:$0xff]
    %v1353 = vld [vmem:[#allocation2 + $0x27c8] sm:$0xff]
    %v1354 = vld [vmem:[#allocation2 + $0x27d0] sm:$0xff]
    %v1355 = vld [vmem:[#allocation2 + $0x27d8] sm:$0xff]
    %v1356 = vld [vmem:[#allocation2 + $0x27e0] sm:$0xff]
    %v1357 = vld [vmem:[#allocation2 + $0x27e8] sm:$0xff]
    %v1358 = vld [vmem:[#allocation2 + $0x27f0] sm:$0xff]
    %v1359 = vld [vmem:[#allocation2 + $0x27f8] sm:$0xff]
    %v1360 = vld [vmem:[#allocation2 + $0x2800] sm:$0xff]
    %v1361 = vld [vmem:[#allocation2 + $0x2808] sm:$0xff]
    %v1362 = vld [vmem:[#allocation2 + $0x2810] sm:$0xff]
    %v1363 = vld [vmem:[#allocation2 + $0x2818] sm:$0xff]
    %v1364 = vld [vmem:[#allocation2 + $0x2820] sm:$0xff]
    %v1365 = vld [vmem:[#allocation2 + $0x2828] sm:$0xff]
    %v1366 = vld [vmem:[#allocation2 + $0x2830] sm:$0xff]
    %v1367 = vld [vmem:[#allocation2 + $0x2838] sm:$0xff]
    %v1368 = vld [vmem:[#allocation2 + $0x2840] sm:$0xff]
    %v1369 = vld [vmem:[#allocation2 + $0x2848] sm:$0xff]
    %v1370 = vld [vmem:[#allocation2 + $0x2850] sm:$0xff]
    %v1371 = vld [vmem:[#allocation2 + $0x2858] sm:$0xff]
    %v1372 = vld [vmem:[#allocation2 + $0x2860] sm:$0xff]
    %v1373 = vld [vmem:[#allocation2 + $0x2868] sm:$0xff]
    %v1374 = vld [vmem:[#allocation2 + $0x2870] sm:$0xff]
    %v1375 = vld [vmem:[#allocation2 + $0x2878] sm:$0xff]
    %v1376 = vld [vmem:[#allocation2 + $0x2880] sm:$0xff]
    %v1377 = vld [vmem:[#allocation2 + $0x2888] sm:$0xff]
    %v1378 = vld [vmem:[#allocation2 + $0x2890] sm:$0xff]
    %v1379 = vld [vmem:[#allocation2 + $0x2898] sm:$0xff]
    %v1380 = vld [vmem:[#allocation2 + $0x28a0] sm:$0xff]
    %v1381 = vld [vmem:[#allocation2 + $0x28a8] sm:$0xff]
    %v1382 = vld [vmem:[#allocation2 + $0x28b0] sm:$0xff]
    %v1383 = vld [vmem:[#allocation2 + $0x28b8] sm:$0xff]
    %v1384 = vld [vmem:[#allocation2 + $0x28c0] sm:$0xff]
    %v1385 = vld [vmem:[#allocation2 + $0x28c8] sm:$0xff]
    %v1386 = vld [vmem:[#allocation2 + $0x28d0] sm:$0xff]
    %v1387 = vld [vmem:[#allocation2 + $0x28d8] sm:$0xff]
    %v1388 = vld [vmem:[#allocation2 + $0x28e0] sm:$0xff]
    %v1389 = vld [vmem:[#allocation2 + $0x28e8] sm:$0xff]
    %v1390 = vld [vmem:[#allocation2 + $0x28f0] sm:$0xff]
    %v1391 = vld [vmem:[#allocation2 + $0x28f8] sm:$0xff]
    %v1392 = vld [vmem:[#allocation2 + $0x2900] sm:$0xff]
    %v1393 = vld [vmem:[#allocation2 + $0x2908] sm:$0xff]
    %v1394 = vld [vmem:[#allocation2 + $0x2910] sm:$0xff]
    %v1395 = vld [vmem:[#allocation2 + $0x2918] sm:$0xff]
    %v1396 = vld [vmem:[#allocation2 + $0x2920] sm:$0xff]
    %v1397 = vld [vmem:[#allocation2 + $0x2928] sm:$0xff]
    %v1398 = vld [vmem:[#allocation2 + $0x2930] sm:$0xff]
    %v1399 = vld [vmem:[#allocation2 + $0x2938] sm:$0xff]
    %v1400 = vld [vmem:[#allocation2 + $0x2940] sm:$0xff]
    %v1401 = vld [vmem:[#allocation2 + $0x2948] sm:$0xff]
    %v1402 = vld [vmem:[#allocation2 + $0x2950] sm:$0xff]
    %v1403 = vld [vmem:[#allocation2 + $0x2958] sm:$0xff]
    %v1404 = vld [vmem:[#allocation2 + $0x2960] sm:$0xff]
    %v1405 = vld [vmem:[#allocation2 + $0x2968] sm:$0xff]
    %v1406 = vld [vmem:[#allocation2 + $0x2970] sm:$0xff]
    %v1407 = vld [vmem:[#allocation2 + $0x2978] sm:$0xff]
    %v1408 = vld [vmem:[#allocation2 + $0x2980] sm:$0xff]
    %v1409 = vld [vmem:[#allocation2 + $0x2988] sm:$0xff]
    %v1410 = vld [vmem:[#allocation2 + $0x2990] sm:$0xff]
    %v1411 = vld [vmem:[#allocation2 + $0x2998] sm:$0xff]
    %v1412 = vld [vmem:[#allocation2 + $0x29a0] sm:$0xff]
    %v1413 = vld [vmem:[#allocation2 + $0x29a8] sm:$0xff]
    %v1414 = vld [vmem:[#allocation2 + $0x29b0] sm:$0xff]
    %v1415 = vld [vmem:[#allocation2 + $0x29b8] sm:$0xff]
    %v1416 = vld [vmem:[#allocation2 + $0x29c0] sm:$0xff]
    %v1417 = vld [vmem:[#allocation2 + $0x29c8] sm:$0xff]
    %v1418 = vld [vmem:[#allocation2 + $0x29d0] sm:$0xff]
    %v1419 = vld [vmem:[#allocation2 + $0x29d8] sm:$0xff]
    %v1420 = vld [vmem:[#allocation2 + $0x29e0] sm:$0xff]
    %v1421 = vld [vmem:[#allocation2 + $0x29e8] sm:$0xff]
    %v1422 = vld [vmem:[#allocation2 + $0x29f0] sm:$0xff]
    %v1423 = vld [vmem:[#allocation2 + $0x29f8] sm:$0xff]
    %v1424 = vld [vmem:[#allocation2 + $0x2a00] sm:$0xff]
    %v1425 = vld [vmem:[#allocation2 + $0x2a08] sm:$0xff]
    %v1426 = vld [vmem:[#allocation2 + $0x2a10] sm:$0xff]
    %v1427 = vld [vmem:[#allocation2 + $0x2a18] sm:$0xff]
    %v1428 = vld [vmem:[#allocation2 + $0x2a20] sm:$0xff]
    %v1429 = vld [vmem:[#allocation2 + $0x2a28] sm:$0xff]
    %v1430 = vld [vmem:[#allocation2 + $0x2a30] sm:$0xff]
    %v1431 = vld [vmem:[#allocation2 + $0x2a38] sm:$0xff]
    %v1432 = vld [vmem:[#allocation2 + $0x2a40] sm:$0xff]
    %v1433 = vld [vmem:[#allocation2 + $0x2a48] sm:$0xff]
    %v1434 = vld [vmem:[#allocation2 + $0x2a50] sm:$0xff]
    %v1435 = vld [vmem:[#allocation2 + $0x2a58] sm:$0xff]
    %v1436 = vld [vmem:[#allocation2 + $0x2a60] sm:$0xff]
    %v1437 = vld [vmem:[#allocation2 + $0x2a68] sm:$0xff]
    %v1438 = vld [vmem:[#allocation2 + $0x2a70] sm:$0xff]
    %v1439 = vld [vmem:[#allocation2 + $0x2a78] sm:$0xff]
    %v1440 = vld [vmem:[#allocation2 + $0x2a80] sm:$0xff]
    %v1441 = vld [vmem:[#allocation2 + $0x2a88] sm:$0xff]
    %v1442 = vld [vmem:[#allocation2 + $0x2a90] sm:$0xff]
    %v1443 = vld [vmem:[#allocation2 + $0x2a98] sm:$0xff]
    %v1444 = vld [vmem:[#allocation2 + $0x2aa0] sm:$0xff]
    %v1445 = vld [vmem:[#allocation2 + $0x2aa8] sm:$0xff]
    %v1446 = vld [vmem:[#allocation2 + $0x2ab0] sm:$0xff]
    %v1447 = vld [vmem:[#allocation2 + $0x2ab8] sm:$0xff]
    %v1448 = vld [vmem:[#allocation2 + $0x2ac0] sm:$0xff]
    %v1449 = vld [vmem:[#allocation2 + $0x2ac8] sm:$0xff]
    %v1450 = vld [vmem:[#allocation2 + $0x2ad0] sm:$0xff]
    %v1451 = vld [vmem:[#allocation2 + $0x2ad8] sm:$0xff]
    %v1452 = vld [vmem:[#allocation2 + $0x2ae0] sm:$0xff]
    %v1453 = vld [vmem:[#allocation2 + $0x2ae8] sm:$0xff]
    %v1454 = vld [vmem:[#allocation2 + $0x2af0] sm:$0xff]
    %v1455 = vld [vmem:[#allocation2 + $0x2af8] sm:$0xff]
    %v1456 = vld [vmem:[#allocation2 + $0x2b00] sm:$0xff]
    %v1457 = vld [vmem:[#allocation2 + $0x2b08] sm:$0xff]
    %v1458 = vld [vmem:[#allocation2 + $0x2b10] sm:$0xff]
    %v1459 = vld [vmem:[#allocation2 + $0x2b18] sm:$0xff]
    %v1460 = vld [vmem:[#allocation2 + $0x2b20] sm:$0xff]
    %v1461 = vld [vmem:[#allocation2 + $0x2b28] sm:$0xff]
    %v1462 = vld [vmem:[#allocation2 + $0x2b30] sm:$0xff]
    %v1463 = vld [vmem:[#allocation2 + $0x2b38] sm:$0xff]
    %v1464 = vld [vmem:[#allocation2 + $0x2b40] sm:$0xff]
    %v1465 = vld [vmem:[#allocation2 + $0x2b48] sm:$0xff]
    %v1466 = vld [vmem:[#allocation2 + $0x2b50] sm:$0xff]
    %v1467 = vld [vmem:[#allocation2 + $0x2b58] sm:$0xff]
    %v1468 = vld [vmem:[#allocation2 + $0x2b60] sm:$0xff]
    %v1469 = vld [vmem:[#allocation2 + $0x2b68] sm:$0xff]
    %v1470 = vld [vmem:[#allocation2 + $0x2b70] sm:$0xff]
    %v1471 = vld [vmem:[#allocation2 + $0x2b78] sm:$0xff]
    %v1472 = vld [vmem:[#allocation2 + $0x2b80] sm:$0xff]
    %v1473 = vld [vmem:[#allocation2 + $0x2b88] sm:$0xff]
    %v1474 = vld [vmem:[#allocation2 + $0x2b90] sm:$0xff]
    %v1475 = vld [vmem:[#allocation2 + $0x2b98] sm:$0xff]
    %v1476 = vld [vmem:[#allocation2 + $0x2ba0] sm:$0xff]
    %v1477 = vld [vmem:[#allocation2 + $0x2ba8] sm:$0xff]
    %v1478 = vld [vmem:[#allocation2 + $0x2bb0] sm:$0xff]
    %v1479 = vld [vmem:[#allocation2 + $0x2bb8] sm:$0xff]
    %v1480 = vld [vmem:[#allocation2 + $0x2bc0] sm:$0xff]
    %v1481 = vld [vmem:[#allocation2 + $0x2bc8] sm:$0xff]
    %v1482 = vld [vmem:[#allocation2 + $0x2bd0] sm:$0xff]
    %v1483 = vld [vmem:[#allocation2 + $0x2bd8] sm:$0xff]
    %v1484 = vld [vmem:[#allocation2 + $0x2be0] sm:$0xff]
    %v1485 = vld [vmem:[#allocation2 + $0x2be8] sm:$0xff]
    %v1486 = vld [vmem:[#allocation2 + $0x2bf0] sm:$0xff]
    %v1487 = vld [vmem:[#allocation2 + $0x2bf8] sm:$0xff]
    %v1488 = vld [vmem:[#allocation2 + $0x2c00] sm:$0xff]
    %v1489 = vld [vmem:[#allocation2 + $0x2c08] sm:$0xff]
    %v1490 = vld [vmem:[#allocation2 + $0x2c10] sm:$0xff]
    %v1491 = vld [vmem:[#allocation2 + $0x2c18] sm:$0xff]
    %v1492 = vld [vmem:[#allocation2 + $0x2c20] sm:$0xff]
    %v1493 = vld [vmem:[#allocation2 + $0x2c28] sm:$0xff]
    %v1494 = vld [vmem:[#allocation2 + $0x2c30] sm:$0xff]
    %v1495 = vld [vmem:[#allocation2 + $0x2c38] sm:$0xff]
    %v1496 = vld [vmem:[#allocation2 + $0x2c40] sm:$0xff]
    %v1497 = vld [vmem:[#allocation2 + $0x2c48] sm:$0xff]
    %v1498 = vld [vmem:[#allocation2 + $0x2c50] sm:$0xff]
    %v1499 = vld [vmem:[#allocation2 + $0x2c58] sm:$0xff]
    %v1500 = vld [vmem:[#allocation2 + $0x2c60] sm:$0xff]
    %v1501 = vld [vmem:[#allocation2 + $0x2c68] sm:$0xff]
    %v1502 = vld [vmem:[#allocation2 + $0x2c70] sm:$0xff]
    %v1503 = vld [vmem:[#allocation2 + $0x2c78] sm:$0xff]
    %v1504 = vld [vmem:[#allocation2 + $0x2c80] sm:$0xff]
    %v1505 = vld [vmem:[#allocation2 + $0x2c88] sm:$0xff]
    %v1506 = vld [vmem:[#allocation2 + $0x2c90] sm:$0xff]
    %v1507 = vld [vmem:[#allocation2 + $0x2c98] sm:$0xff]
    %v1508 = vld [vmem:[#allocation2 + $0x2ca0] sm:$0xff]
    %v1509 = vld [vmem:[#allocation2 + $0x2ca8] sm:$0xff]
    %v1510 = vld [vmem:[#allocation2 + $0x2cb0] sm:$0xff]
    %v1511 = vld [vmem:[#allocation2 + $0x2cb8] sm:$0xff]
    %v1512 = vld [vmem:[#allocation2 + $0x2cc0] sm:$0xff]
    %v1513 = vld [vmem:[#allocation2 + $0x2cc8] sm:$0xff]
    %v1514 = vld [vmem:[#allocation2 + $0x2cd0] sm:$0xff]
    %v1515 = vld [vmem:[#allocation2 + $0x2cd8] sm:$0xff]
    %v1516 = vld [vmem:[#allocation2 + $0x2ce0] sm:$0xff]
    %v1517 = vld [vmem:[#allocation2 + $0x2ce8] sm:$0xff]
    %v1518 = vld [vmem:[#allocation2 + $0x2cf0] sm:$0xff]
    %v1519 = vld [vmem:[#allocation2 + $0x2cf8] sm:$0xff]
    %v1520 = vld [vmem:[#allocation2 + $0x2d00] sm:$0xff]
    %v1521 = vld [vmem:[#allocation2 + $0x2d08] sm:$0xff]
    %v1522 = vld [vmem:[#allocation2 + $0x2d10] sm:$0xff]
    %v1523 = vld [vmem:[#allocation2 + $0x2d18] sm:$0xff]
    %v1524 = vld [vmem:[#allocation2 + $0x2d20] sm:$0xff]
    %v1525 = vld [vmem:[#allocation2 + $0x2d28] sm:$0xff]
    %v1526 = vld [vmem:[#allocation2 + $0x2d30] sm:$0xff]
    %v1527 = vld [vmem:[#allocation2 + $0x2d38] sm:$0xff]
    %v1528 = vld [vmem:[#allocation2 + $0x2d40] sm:$0xff]
    %v1529 = vld [vmem:[#allocation2 + $0x2d48] sm:$0xff]
    %v1530 = vld [vmem:[#allocation2 + $0x2d50] sm:$0xff]
    %v1531 = vld [vmem:[#allocation2 + $0x2d58] sm:$0xff]
    %v1532 = vld [vmem:[#allocation2 + $0x2d60] sm:$0xff]
    %v1533 = vld [vmem:[#allocation2 + $0x2d68] sm:$0xff]
    %v1534 = vld [vmem:[#allocation2 + $0x2d70] sm:$0xff]
    %v1535 = vld [vmem:[#allocation2 + $0x2d78] sm:$0xff]
    %v1536 = vld [vmem:[#allocation2 + $0x2d80] sm:$0xff]
    %v1537 = vld [vmem:[#allocation2 + $0x2d88] sm:$0xff]
    %v1538 = vld [vmem:[#allocation2 + $0x2d90] sm:$0xff]
    %v1539 = vld [vmem:[#allocation2 + $0x2d98] sm:$0xff]
    %v1540 = vld [vmem:[#allocation2 + $0x2da0] sm:$0xff]
    %v1541 = vld [vmem:[#allocation2 + $0x2da8] sm:$0xff]
    %v1542 = vld [vmem:[#allocation2 + $0x2db0] sm:$0xff]
    %v1543 = vld [vmem:[#allocation2 + $0x2db8] sm:$0xff]
    %v1544 = vld [vmem:[#allocation2 + $0x2dc0] sm:$0xff]
    %v1545 = vld [vmem:[#allocation2 + $0x2dc8] sm:$0xff]
    %v1546 = vld [vmem:[#allocation2 + $0x2dd0] sm:$0xff]
    %v1547 = vld [vmem:[#allocation2 + $0x2dd8] sm:$0xff]
    %v1548 = vld [vmem:[#allocation2 + $0x2de0] sm:$0xff]
    %v1549 = vld [vmem:[#allocation2 + $0x2de8] sm:$0xff]
    %v1550 = vld [vmem:[#allocation2 + $0x2df0] sm:$0xff]
    %v1551 = vld [vmem:[#allocation2 + $0x2df8] sm:$0xff]
    %v1552 = vld [vmem:[#allocation2 + $0x2e00] sm:$0xff]
    %v1553 = vld [vmem:[#allocation2 + $0x2e08] sm:$0xff]
    %v1554 = vld [vmem:[#allocation2 + $0x2e10] sm:$0xff]
    %v1555 = vld [vmem:[#allocation2 + $0x2e18] sm:$0xff]
    %v1556 = vld [vmem:[#allocation2 + $0x2e20] sm:$0xff]
    %v1557 = vld [vmem:[#allocation2 + $0x2e28] sm:$0xff]
    %v1558 = vld [vmem:[#allocation2 + $0x2e30] sm:$0xff]
    %v1559 = vld [vmem:[#allocation2 + $0x2e38] sm:$0xff]
    %v1560 = vld [vmem:[#allocation2 + $0x2e40] sm:$0xff]
    %v1561 = vld [vmem:[#allocation2 + $0x2e48] sm:$0xff]
    %v1562 = vld [vmem:[#allocation2 + $0x2e50] sm:$0xff]
    %v1563 = vld [vmem:[#allocation2 + $0x2e58] sm:$0xff]
    %v1564 = vld [vmem:[#allocation2 + $0x2e60] sm:$0xff]
    %v1565 = vld [vmem:[#allocation2 + $0x2e68] sm:$0xff]
    %v1566 = vld [vmem:[#allocation2 + $0x2e70] sm:$0xff]
    %v1567 = vld [vmem:[#allocation2 + $0x2e78] sm:$0xff]
    %v1568 = vld [vmem:[#allocation2 + $0x2e80] sm:$0xff]
    %v1569 = vld [vmem:[#allocation2 + $0x2e88] sm:$0xff]
    %v1570 = vld [vmem:[#allocation2 + $0x2e90] sm:$0xff]
    %v1571 = vld [vmem:[#allocation2 + $0x2e98] sm:$0xff]
    %v1572 = vld [vmem:[#allocation2 + $0x2ea0] sm:$0xff]
    %v1573 = vld [vmem:[#allocation2 + $0x2ea8] sm:$0xff]
    %v1574 = vld [vmem:[#allocation2 + $0x2eb0] sm:$0xff]
    %v1575 = vld [vmem:[#allocation2 + $0x2eb8] sm:$0xff]
    %v1576 = vld [vmem:[#allocation2 + $0x2ec0] sm:$0xff]
    %v1577 = vld [vmem:[#allocation2 + $0x2ec8] sm:$0xff]
    %v1578 = vld [vmem:[#allocation2 + $0x2ed0] sm:$0xff]
    %v1579 = vld [vmem:[#allocation2 + $0x2ed8] sm:$0xff]
    %v1580 = vld [vmem:[#allocation2 + $0x2ee0] sm:$0xff]
    %v1581 = vld [vmem:[#allocation2 + $0x2ee8] sm:$0xff]
    %v1582 = vld [vmem:[#allocation2 + $0x2ef0] sm:$0xff]
    %v1583 = vld [vmem:[#allocation2 + $0x2ef8] sm:$0xff]
    %v1584 = vld [vmem:[#allocation2 + $0x2f00] sm:$0xff]
    %v1585 = vld [vmem:[#allocation2 + $0x2f08] sm:$0xff]
    %v1586 = vld [vmem:[#allocation2 + $0x2f10] sm:$0xff]
    %v1587 = vld [vmem:[#allocation2 + $0x2f18] sm:$0xff]
    %v1588 = vld [vmem:[#allocation2 + $0x2f20] sm:$0xff]
    %v1589 = vld [vmem:[#allocation2 + $0x2f28] sm:$0xff]
    %v1590 = vld [vmem:[#allocation2 + $0x2f30] sm:$0xff]
    %v1591 = vld [vmem:[#allocation2 + $0x2f38] sm:$0xff]
    %v1592 = vld [vmem:[#allocation2 + $0x2f40] sm:$0xff]
    %v1593 = vld [vmem:[#allocation2 + $0x2f48] sm:$0xff]
    %v1594 = vld [vmem:[#allocation2 + $0x2f50] sm:$0xff]
    %v1595 = vld [vmem:[#allocation2 + $0x2f58] sm:$0xff]
    %v1596 = vld [vmem:[#allocation2 + $0x2f60] sm:$0xff]
    %v1597 = vld [vmem:[#allocation2 + $0x2f68] sm:$0xff]
    %v1598 = vld [vmem:[#allocation2 + $0x2f70] sm:$0xff]
    %v1599 = vld [vmem:[#allocation2 + $0x2f78] sm:$0xff]
    %v1600 = vld [vmem:[#allocation2 + $0x2f80] sm:$0xff]
    %v1601 = vld [vmem:[#allocation2 + $0x2f88] sm:$0xff]
    %v1602 = vld [vmem:[#allocation2 + $0x2f90] sm:$0xff]
    %v1603 = vld [vmem:[#allocation2 + $0x2f98] sm:$0xff]
    %v1604 = vld [vmem:[#allocation2 + $0x2fa0] sm:$0xff]
    %v1605 = vld [vmem:[#allocation2 + $0x2fa8] sm:$0xff]
    %v1606 = vld [vmem:[#allocation2 + $0x2fb0] sm:$0xff]
    %v1607 = vld [vmem:[#allocation2 + $0x2fb8] sm:$0xff]
    %v1608 = vld [vmem:[#allocation2 + $0x2fc0] sm:$0xff]
    %v1609 = vld [vmem:[#allocation2 + $0x2fc8] sm:$0xff]
    %v1610 = vld [vmem:[#allocation2 + $0x2fd0] sm:$0xff]
    %v1611 = vld [vmem:[#allocation2 + $0x2fd8] sm:$0xff]
    %v1612 = vld [vmem:[#allocation2 + $0x2fe0] sm:$0xff]
    %v1613 = vld [vmem:[#allocation2 + $0x2fe8] sm:$0xff]
    %v1614 = vld [vmem:[#allocation2 + $0x2ff0] sm:$0xff]
    %v1615 = vld [vmem:[#allocation2 + $0x2ff8] sm:$0xff]
    %v1616 = vld [vmem:[#allocation2 + $0x3000] sm:$0xff]
    %v1617 = vld [vmem:[#allocation2 + $0x3008] sm:$0xff]
    %v1618 = vld [vmem:[#allocation2 + $0x3010] sm:$0xff]
    %v1619 = vld [vmem:[#allocation2 + $0x3018] sm:$0xff]
    %v1620 = vld [vmem:[#allocation2 + $0x3020] sm:$0xff]
    %v1621 = vld [vmem:[#allocation2 + $0x3028] sm:$0xff]
    %v1622 = vld [vmem:[#allocation2 + $0x3030] sm:$0xff]
    %v1623 = vld [vmem:[#allocation2 + $0x3038] sm:$0xff]
    %v1624 = vld [vmem:[#allocation2 + $0x3040] sm:$0xff]
    %v1625 = vld [vmem:[#allocation2 + $0x3048] sm:$0xff]
    %v1626 = vld [vmem:[#allocation2 + $0x3050] sm:$0xff]
    %v1627 = vld [vmem:[#allocation2 + $0x3058] sm:$0xff]
    %v1628 = vld [vmem:[#allocation2 + $0x3060] sm:$0xff]
    %v1629 = vld [vmem:[#allocation2 + $0x3068] sm:$0xff]
    %v1630 = vld [vmem:[#allocation2 + $0x3070] sm:$0xff]
    %v1631 = vld [vmem:[#allocation2 + $0x3078] sm:$0xff]
    %v1632 = vld [vmem:[#allocation2 + $0x3080] sm:$0xff]
    %v1633 = vld [vmem:[#allocation2 + $0x3088] sm:$0xff]
    %v1634 = vld [vmem:[#allocation2 + $0x3090] sm:$0xff]
    %v1635 = vld [vmem:[#allocation2 + $0x3098] sm:$0xff]
    %v1636 = vld [vmem:[#allocation2 + $0x30a0] sm:$0xff]
    %v1637 = vld [vmem:[#allocation2 + $0x30a8] sm:$0xff]
    %v1638 = vld [vmem:[#allocation2 + $0x30b0] sm:$0xff]
    %v1639 = vld [vmem:[#allocation2 + $0x30b8] sm:$0xff]
    %v1640 = vld [vmem:[#allocation2 + $0x30c0] sm:$0xff]
    %v1641 = vld [vmem:[#allocation2 + $0x30c8] sm:$0xff]
    %v1642 = vld [vmem:[#allocation2 + $0x30d0] sm:$0xff]
    %v1643 = vld [vmem:[#allocation2 + $0x30d8] sm:$0xff]
    %v1644 = vld [vmem:[#allocation2 + $0x30e0] sm:$0xff]
    %v1645 = vld [vmem:[#allocation2 + $0x30e8] sm:$0xff]
    %v1646 = vld [vmem:[#allocation2 + $0x30f0] sm:$0xff]
    %v1647 = vld [vmem:[#allocation2 + $0x30f8] sm:$0xff]
    %v1648 = vld [vmem:[#allocation2 + $0x3100] sm:$0xff]
    %v1649 = vld [vmem:[#allocation2 + $0x3108] sm:$0xff]
    %v1650 = vld [vmem:[#allocation2 + $0x3110] sm:$0xff]
    %v1651 = vld [vmem:[#allocation2 + $0x3118] sm:$0xff]
    %v1652 = vld [vmem:[#allocation2 + $0x3120] sm:$0xff]
    %v1653 = vld [vmem:[#allocation2 + $0x3128] sm:$0xff]
    %v1654 = vld [vmem:[#allocation2 + $0x3130] sm:$0xff]
    %v1655 = vld [vmem:[#allocation2 + $0x3138] sm:$0xff]
    %v1656 = vld [vmem:[#allocation2 + $0x3140] sm:$0xff]
    %v1657 = vld [vmem:[#allocation2 + $0x3148] sm:$0xff]
    %v1658 = vld [vmem:[#allocation2 + $0x3150] sm:$0xff]
    %v1659 = vld [vmem:[#allocation2 + $0x3158] sm:$0xff]
    %v1660 = vld [vmem:[#allocation2 + $0x3160] sm:$0xff]
    %v1661 = vld [vmem:[#allocation2 + $0x3168] sm:$0xff]
    %v1662 = vld [vmem:[#allocation2 + $0x3170] sm:$0xff]
    %v1663 = vld [vmem:[#allocation2 + $0x3178] sm:$0xff]
    %v1664 = vld [vmem:[#allocation2 + $0x3180] sm:$0xff]
    %v1665 = vld [vmem:[#allocation2 + $0x3188] sm:$0xff]
    %v1666 = vld [vmem:[#allocation2 + $0x3190] sm:$0xff]
    %v1667 = vld [vmem:[#allocation2 + $0x3198] sm:$0xff]
    %v1668 = vld [vmem:[#allocation2 + $0x31a0] sm:$0xff]
    %v1669 = vld [vmem:[#allocation2 + $0x31a8] sm:$0xff]
    %v1670 = vld [vmem:[#allocation2 + $0x31b0] sm:$0xff]
    %v1671 = vld [vmem:[#allocation2 + $0x31b8] sm:$0xff]
    %v1672 = vld [vmem:[#allocation2 + $0x31c0] sm:$0xff]
    %v1673 = vld [vmem:[#allocation2 + $0x31c8] sm:$0xff]
    %v1674 = vld [vmem:[#allocation2 + $0x31d0] sm:$0xff]
    %v1675 = vld [vmem:[#allocation2 + $0x31d8] sm:$0xff]
    %v1676 = vld [vmem:[#allocation2 + $0x31e0] sm:$0xff]
    %v1677 = vld [vmem:[#allocation2 + $0x31e8] sm:$0xff]
    %v1678 = vld [vmem:[#allocation2 + $0x31f0] sm:$0xff]
    %v1679 = vld [vmem:[#allocation2 + $0x31f8] sm:$0xff]
    %v1680 = vld [vmem:[#allocation2 + $0x3200] sm:$0xff]
    %v1681 = vld [vmem:[#allocation2 + $0x3208] sm:$0xff]
    %v1682 = vld [vmem:[#allocation2 + $0x3210] sm:$0xff]
    %v1683 = vld [vmem:[#allocation2 + $0x3218] sm:$0xff]
    %v1684 = vld [vmem:[#allocation2 + $0x3220] sm:$0xff]
    %v1685 = vld [vmem:[#allocation2 + $0x3228] sm:$0xff]
    %v1686 = vld [vmem:[#allocation2 + $0x3230] sm:$0xff]
    %v1687 = vld [vmem:[#allocation2 + $0x3238] sm:$0xff]
    %v1688 = vld [vmem:[#allocation2 + $0x3240] sm:$0xff]
    %v1689 = vld [vmem:[#allocation2 + $0x3248] sm:$0xff]
    %v1690 = vld [vmem:[#allocation2 + $0x3250] sm:$0xff]
    %v1691 = vld [vmem:[#allocation2 + $0x3258] sm:$0xff]
    %v1692 = vld [vmem:[#allocation2 + $0x3260] sm:$0xff]
    %v1693 = vld [vmem:[#allocation2 + $0x3268] sm:$0xff]
    %v1694 = vld [vmem:[#allocation2 + $0x3270] sm:$0xff]
    %v1695 = vld [vmem:[#allocation2 + $0x3278] sm:$0xff]
    %v1696 = vld [vmem:[#allocation2 + $0x3280] sm:$0xff]
    %v1697 = vld [vmem:[#allocation2 + $0x3288] sm:$0xff]
    %v1698 = vld [vmem:[#allocation2 + $0x3290] sm:$0xff]
    %v1699 = vld [vmem:[#allocation2 + $0x3298] sm:$0xff]
    %v1700 = vld [vmem:[#allocation2 + $0x32a0] sm:$0xff]
    %v1701 = vld [vmem:[#allocation2 + $0x32a8] sm:$0xff]
    %v1702 = vld [vmem:[#allocation2 + $0x32b0] sm:$0xff]
    %v1703 = vld [vmem:[#allocation2 + $0x32b8] sm:$0xff]
    %v1704 = vld [vmem:[#allocation2 + $0x32c0] sm:$0xff]
    %v1705 = vld [vmem:[#allocation2 + $0x32c8] sm:$0xff]
    %v1706 = vld [vmem:[#allocation2 + $0x32d0] sm:$0xff]
    %v1707 = vld [vmem:[#allocation2 + $0x32d8] sm:$0xff]
    %v1708 = vld [vmem:[#allocation2 + $0x32e0] sm:$0xff]
    %v1709 = vld [vmem:[#allocation2 + $0x32e8] sm:$0xff]
    %v1710 = vld [vmem:[#allocation2 + $0x32f0] sm:$0xff]
    %v1711 = vld [vmem:[#allocation2 + $0x32f8] sm:$0xff]
    %v1712 = vld [vmem:[#allocation2 + $0x3300] sm:$0xff]
    %v1713 = vld [vmem:[#allocation2 + $0x3308] sm:$0xff]
    %v1714 = vld [vmem:[#allocation2 + $0x3310] sm:$0xff]
    %v1715 = vld [vmem:[#allocation2 + $0x3318] sm:$0xff]
    %v1716 = vld [vmem:[#allocation2 + $0x3320] sm:$0xff]
    %v1717 = vld [vmem:[#allocation2 + $0x3328] sm:$0xff]
    %v1718 = vld [vmem:[#allocation2 + $0x3330] sm:$0xff]
    %v1719 = vld [vmem:[#allocation2 + $0x3338] sm:$0xff]
    %v1720 = vld [vmem:[#allocation2 + $0x3340] sm:$0xff]
    %v1721 = vld [vmem:[#allocation2 + $0x3348] sm:$0xff]
    %v1722 = vld [vmem:[#allocation2 + $0x3350] sm:$0xff]
    %v1723 = vld [vmem:[#allocation2 + $0x3358] sm:$0xff]
    %v1724 = vld [vmem:[#allocation2 + $0x3360] sm:$0xff]
    %v1725 = vld [vmem:[#allocation2 + $0x3368] sm:$0xff]
    %v1726 = vld [vmem:[#allocation2 + $0x3370] sm:$0xff]
    %v1727 = vld [vmem:[#allocation2 + $0x3378] sm:$0xff]
    %v1728 = vld [vmem:[#allocation2 + $0x3380] sm:$0xff]
    %v1729 = vld [vmem:[#allocation2 + $0x3388] sm:$0xff]
    %v1730 = vld [vmem:[#allocation2 + $0x3390] sm:$0xff]
    %v1731 = vld [vmem:[#allocation2 + $0x3398] sm:$0xff]
    %v1732 = vld [vmem:[#allocation2 + $0x33a0] sm:$0xff]
    %v1733 = vld [vmem:[#allocation2 + $0x33a8] sm:$0xff]
    %v1734 = vld [vmem:[#allocation2 + $0x33b0] sm:$0xff]
    %v1735 = vld [vmem:[#allocation2 + $0x33b8] sm:$0xff]
    %v1736 = vld [vmem:[#allocation2 + $0x33c0] sm:$0xff]
    %v1737 = vld [vmem:[#allocation2 + $0x33c8] sm:$0xff]
    %v1738 = vld [vmem:[#allocation2 + $0x33d0] sm:$0xff]
    %v1739 = vld [vmem:[#allocation2 + $0x33d8] sm:$0xff]
    %v1740 = vld [vmem:[#allocation2 + $0x33e0] sm:$0xff]
    %v1741 = vld [vmem:[#allocation2 + $0x33e8] sm:$0xff]
    %v1742 = vld [vmem:[#allocation2 + $0x33f0] sm:$0xff]
    %v1743 = vld [vmem:[#allocation2 + $0x33f8] sm:$0xff]
    %v1744 = vld [vmem:[#allocation2 + $0x3400] sm:$0xff]
    %v1745 = vld [vmem:[#allocation2 + $0x3408] sm:$0xff]
    %v1746 = vld [vmem:[#allocation2 + $0x3410] sm:$0xff]
    %v1747 = vld [vmem:[#allocation2 + $0x3418] sm:$0xff]
    %v1748 = vld [vmem:[#allocation2 + $0x3420] sm:$0xff]
    %v1749 = vld [vmem:[#allocation2 + $0x3428] sm:$0xff]
    %v1750 = vld [vmem:[#allocation2 + $0x3430] sm:$0xff]
    %v1751 = vld [vmem:[#allocation2 + $0x3438] sm:$0xff]
    %v1752 = vld [vmem:[#allocation2 + $0x3440] sm:$0xff]
    %v1753 = vld [vmem:[#allocation2 + $0x3448] sm:$0xff]
    %v1754 = vld [vmem:[#allocation2 + $0x3450] sm:$0xff]
    %v1755 = vld [vmem:[#allocation2 + $0x3458] sm:$0xff]
    %v1756 = vld [vmem:[#allocation2 + $0x3460] sm:$0xff]
    %v1757 = vld [vmem:[#allocation2 + $0x3468] sm:$0xff]
    %v1758 = vld [vmem:[#allocation2 + $0x3470] sm:$0xff]
    %v1759 = vld [vmem:[#allocation2 + $0x3478] sm:$0xff]
    %v1760 = vld [vmem:[#allocation2 + $0x3480] sm:$0xff]
    %v1761 = vld [vmem:[#allocation2 + $0x3488] sm:$0xff]
    %v1762 = vld [vmem:[#allocation2 + $0x3490] sm:$0xff]
    %v1763 = vld [vmem:[#allocation2 + $0x3498] sm:$0xff]
    %v1764 = vld [vmem:[#allocation2 + $0x34a0] sm:$0xff]
    %v1765 = vld [vmem:[#allocation2 + $0x34a8] sm:$0xff]
    %v1766 = vld [vmem:[#allocation2 + $0x34b0] sm:$0xff]
    %v1767 = vld [vmem:[#allocation2 + $0x34b8] sm:$0xff]
    %v1768 = vld [vmem:[#allocation2 + $0x34c0] sm:$0xff]
    %v1769 = vld [vmem:[#allocation2 + $0x34c8] sm:$0xff]
    %v1770 = vld [vmem:[#allocation2 + $0x34d0] sm:$0xff]
    %v1771 = vld [vmem:[#allocation2 + $0x34d8] sm:$0xff]
    %v1772 = vld [vmem:[#allocation2 + $0x34e0] sm:$0xff]
    %v1773 = vld [vmem:[#allocation2 + $0x34e8] sm:$0xff]
    %v1774 = vld [vmem:[#allocation2 + $0x34f0] sm:$0xff]
    %v1775 = vld [vmem:[#allocation2 + $0x34f8] sm:$0xff]
    %v1776 = vld [vmem:[#allocation2 + $0x3500] sm:$0xff]
    %v1777 = vld [vmem:[#allocation2 + $0x3508] sm:$0xff]
    %v1778 = vld [vmem:[#allocation2 + $0x3510] sm:$0xff]
    %v1779 = vld [vmem:[#allocation2 + $0x3518] sm:$0xff]
    %v1780 = vld [vmem:[#allocation2 + $0x3520] sm:$0xff]
    %v1781 = vld [vmem:[#allocation2 + $0x3528] sm:$0xff]
    %v1782 = vld [vmem:[#allocation2 + $0x3530] sm:$0xff]
    %v1783 = vld [vmem:[#allocation2 + $0x3538] sm:$0xff]
    %v1784 = vld [vmem:[#allocation2 + $0x3540] sm:$0xff]
    %v1785 = vld [vmem:[#allocation2 + $0x3548] sm:$0xff]
    %v1786 = vld [vmem:[#allocation2 + $0x3550] sm:$0xff]
    %v1787 = vld [vmem:[#allocation2 + $0x3558] sm:$0xff]
    %v1788 = vld [vmem:[#allocation2 + $0x3560] sm:$0xff]
    %v1789 = vld [vmem:[#allocation2 + $0x3568] sm:$0xff]
    %v1790 = vld [vmem:[#allocation2 + $0x3570] sm:$0xff]
    %v1791 = vld [vmem:[#allocation2 + $0x3578] sm:$0xff]
    %v1792 = vld [vmem:[#allocation2 + $0x3580] sm:$0xff]
    %v1793 = vld [vmem:[#allocation2 + $0x3588] sm:$0xff]
    %v1794 = vld [vmem:[#allocation2 + $0x3590] sm:$0xff]
    %v1795 = vld [vmem:[#allocation2 + $0x3598] sm:$0xff]
    %v1796 = vld [vmem:[#allocation2 + $0x35a0] sm:$0xff]
    %v1797 = vld [vmem:[#allocation2 + $0x35a8] sm:$0xff]
    %v1798 = vld [vmem:[#allocation2 + $0x35b0] sm:$0xff]
    %v1799 = vld [vmem:[#allocation2 + $0x35b8] sm:$0xff]
    %v1800 = vld [vmem:[#allocation2 + $0x35c0] sm:$0xff]
    %v1801 = vld [vmem:[#allocation2 + $0x35c8] sm:$0xff]
    %v1802 = vld [vmem:[#allocation2 + $0x35d0] sm:$0xff]
    %v1803 = vld [vmem:[#allocation2 + $0x35d8] sm:$0xff]
    %v1804 = vld [vmem:[#allocation2 + $0x35e0] sm:$0xff]
    %v1805 = vld [vmem:[#allocation2 + $0x35e8] sm:$0xff]
    %v1806 = vld [vmem:[#allocation2 + $0x35f0] sm:$0xff]
    %v1807 = vld [vmem:[#allocation2 + $0x35f8] sm:$0xff]
    %v1808 = vld [vmem:[#allocation2 + $0x3600] sm:$0xff]
    %v1809 = vld [vmem:[#allocation2 + $0x3608] sm:$0xff]
    %v1810 = vld [vmem:[#allocation2 + $0x3610] sm:$0xff]
    %v1811 = vld [vmem:[#allocation2 + $0x3618] sm:$0xff]
    %v1812 = vld [vmem:[#allocation2 + $0x3620] sm:$0xff]
    %v1813 = vld [vmem:[#allocation2 + $0x3628] sm:$0xff]
    %v1814 = vld [vmem:[#allocation2 + $0x3630] sm:$0xff]
    %v1815 = vld [vmem:[#allocation2 + $0x3638] sm:$0xff]
    %v1816 = vld [vmem:[#allocation2 + $0x3640] sm:$0xff]
    %v1817 = vld [vmem:[#allocation2 + $0x3648] sm:$0xff]
    %v1818 = vld [vmem:[#allocation2 + $0x3650] sm:$0xff]
    %v1819 = vld [vmem:[#allocation2 + $0x3658] sm:$0xff]
    %v1820 = vld [vmem:[#allocation2 + $0x3660] sm:$0xff]
    %v1821 = vld [vmem:[#allocation2 + $0x3668] sm:$0xff]
    %v1822 = vld [vmem:[#allocation2 + $0x3670] sm:$0xff]
    %v1823 = vld [vmem:[#allocation2 + $0x3678] sm:$0xff]
    %v1824 = vld [vmem:[#allocation2 + $0x3680] sm:$0xff]
    %v1825 = vld [vmem:[#allocation2 + $0x3688] sm:$0xff]
    %v1826 = vld [vmem:[#allocation2 + $0x3690] sm:$0xff]
    %v1827 = vld [vmem:[#allocation2 + $0x3698] sm:$0xff]
    %v1828 = vld [vmem:[#allocation2 + $0x36a0] sm:$0xff]
    %v1829 = vld [vmem:[#allocation2 + $0x36a8] sm:$0xff]
    %v1830 = vld [vmem:[#allocation2 + $0x36b0] sm:$0xff]
    %v1831 = vld [vmem:[#allocation2 + $0x36b8] sm:$0xff]
    %v1832 = vld [vmem:[#allocation2 + $0x36c0] sm:$0xff]
    %v1833 = vld [vmem:[#allocation2 + $0x36c8] sm:$0xff]
    %v1834 = vld [vmem:[#allocation2 + $0x36d0] sm:$0xff]
    %v1835 = vld [vmem:[#allocation2 + $0x36d8] sm:$0xff]
    %v1836 = vld [vmem:[#allocation2 + $0x36e0] sm:$0xff]
    %v1837 = vld [vmem:[#allocation2 + $0x36e8] sm:$0xff]
    %v1838 = vld [vmem:[#allocation2 + $0x36f0] sm:$0xff]
    %v1839 = vld [vmem:[#allocation2 + $0x36f8] sm:$0xff]
    %v1840 = vld [vmem:[#allocation2 + $0x3700] sm:$0xff]
    %v1841 = vld [vmem:[#allocation2 + $0x3708] sm:$0xff]
    %v1842 = vld [vmem:[#allocation2 + $0x3710] sm:$0xff]
    %v1843 = vld [vmem:[#allocation2 + $0x3718] sm:$0xff]
    %v1844 = vld [vmem:[#allocation2 + $0x3720] sm:$0xff]
    %v1845 = vld [vmem:[#allocation2 + $0x3728] sm:$0xff]
    %v1846 = vld [vmem:[#allocation2 + $0x3730] sm:$0xff]
    %v1847 = vld [vmem:[#allocation2 + $0x3738] sm:$0xff]
    %v1848 = vld [vmem:[#allocation2 + $0x3740] sm:$0xff]
    %v1849 = vld [vmem:[#allocation2 + $0x3748] sm:$0xff]
    %v1850 = vld [vmem:[#allocation2 + $0x3750] sm:$0xff]
    %v1851 = vld [vmem:[#allocation2 + $0x3758] sm:$0xff]
    %v1852 = vld [vmem:[#allocation2 + $0x3760] sm:$0xff]
    %v1853 = vld [vmem:[#allocation2 + $0x3768] sm:$0xff]
    %v1854 = vld [vmem:[#allocation2 + $0x3770] sm:$0xff]
    %v1855 = vld [vmem:[#allocation2 + $0x3778] sm:$0xff]
    %v1856 = vld [vmem:[#allocation2 + $0x3780] sm:$0xff]
    %v1857 = vld [vmem:[#allocation2 + $0x3788] sm:$0xff]
    %v1858 = vld [vmem:[#allocation2 + $0x3790] sm:$0xff]
    %v1859 = vld [vmem:[#allocation2 + $0x3798] sm:$0xff]
    %v1860 = vld [vmem:[#allocation2 + $0x37a0] sm:$0xff]
    %v1861 = vld [vmem:[#allocation2 + $0x37a8] sm:$0xff]
    %v1862 = vld [vmem:[#allocation2 + $0x37b0] sm:$0xff]
    %v1863 = vld [vmem:[#allocation2 + $0x37b8] sm:$0xff]
    %v1864 = vld [vmem:[#allocation2 + $0x37c0] sm:$0xff]
    %v1865 = vld [vmem:[#allocation2 + $0x37c8] sm:$0xff]
    %v1866 = vld [vmem:[#allocation2 + $0x37d0] sm:$0xff]
    %v1867 = vld [vmem:[#allocation2 + $0x37d8] sm:$0xff]
    %v1868 = vld [vmem:[#allocation2 + $0x37e0] sm:$0xff]
    %v1869 = vld [vmem:[#allocation2 + $0x37e8] sm:$0xff]
    %v1870 = vld [vmem:[#allocation2 + $0x37f0] sm:$0xff]
    %v1871 = vld [vmem:[#allocation2 + $0x37f8] sm:$0xff]
    %v1872 = vld [vmem:[#allocation2 + $0x3800] sm:$0xff]
    %v1873 = vld [vmem:[#allocation2 + $0x3808] sm:$0xff]
    %v1874 = vld [vmem:[#allocation2 + $0x3810] sm:$0xff]
    %v1875 = vld [vmem:[#allocation2 + $0x3818] sm:$0xff]
    %v1876 = vld [vmem:[#allocation2 + $0x3820] sm:$0xff]
    %v1877 = vld [vmem:[#allocation2 + $0x3828] sm:$0xff]
    %v1878 = vld [vmem:[#allocation2 + $0x3830] sm:$0xff]
    %v1879 = vld [vmem:[#allocation2 + $0x3838] sm:$0xff]
    %v1880 = vld [vmem:[#allocation2 + $0x3840] sm:$0xff]
    %v1881 = vld [vmem:[#allocation2 + $0x3848] sm:$0xff]
    %v1882 = vld [vmem:[#allocation2 + $0x3850] sm:$0xff]
    %v1883 = vld [vmem:[#allocation2 + $0x3858] sm:$0xff]
    %v1884 = vld [vmem:[#allocation2 + $0x3860] sm:$0xff]
    %v1885 = vld [vmem:[#allocation2 + $0x3868] sm:$0xff]
    %v1886 = vld [vmem:[#allocation2 + $0x3870] sm:$0xff]
    %v1887 = vld [vmem:[#allocation2 + $0x3878] sm:$0xff]
    %v1888 = vld [vmem:[#allocation2 + $0x3880] sm:$0xff]
    %v1889 = vld [vmem:[#allocation2 + $0x3888] sm:$0xff]
    %v1890 = vld [vmem:[#allocation2 + $0x3890] sm:$0xff]
    %v1891 = vld [vmem:[#allocation2 + $0x3898] sm:$0xff]
    %v1892 = vld [vmem:[#allocation2 + $0x38a0] sm:$0xff]
    %v1893 = vld [vmem:[#allocation2 + $0x38a8] sm:$0xff]
    %v1894 = vld [vmem:[#allocation2 + $0x38b0] sm:$0xff]
    %v1895 = vld [vmem:[#allocation2 + $0x38b8] sm:$0xff]
    %v1896 = vld [vmem:[#allocation2 + $0x38c0] sm:$0xff]
    %v1897 = vld [vmem:[#allocation2 + $0x38c8] sm:$0xff]
    %v1898 = vld [vmem:[#allocation2 + $0x38d0] sm:$0xff]
    %v1899 = vld [vmem:[#allocation2 + $0x38d8] sm:$0xff]
    %v1900 = vld [vmem:[#allocation2 + $0x38e0] sm:$0xff]
    %v1901 = vld [vmem:[#allocation2 + $0x38e8] sm:$0xff]
    %v1902 = vld [vmem:[#allocation2 + $0x38f0] sm:$0xff]
    %v1903 = vld [vmem:[#allocation2 + $0x38f8] sm:$0xff]
    %v1904 = vld [vmem:[#allocation2 + $0x3900] sm:$0xff]
    %v1905 = vld [vmem:[#allocation2 + $0x3908] sm:$0xff]
    %v1906 = vld [vmem:[#allocation2 + $0x3910] sm:$0xff]
    %v1907 = vld [vmem:[#allocation2 + $0x3918] sm:$0xff]
    %v1908 = vld [vmem:[#allocation2 + $0x3920] sm:$0xff]
    %v1909 = vld [vmem:[#allocation2 + $0x3928] sm:$0xff]
    %v1910 = vld [vmem:[#allocation2 + $0x3930] sm:$0xff]
    %v1911 = vld [vmem:[#allocation2 + $0x3938] sm:$0xff]
    %v1912 = vld [vmem:[#allocation2 + $0x3940] sm:$0xff]
    %v1913 = vld [vmem:[#allocation2 + $0x3948] sm:$0xff]
    %v1914 = vld [vmem:[#allocation2 + $0x3950] sm:$0xff]
    %v1915 = vld [vmem:[#allocation2 + $0x3958] sm:$0xff]
    %v1916 = vld [vmem:[#allocation2 + $0x3960] sm:$0xff]
    %v1917 = vld [vmem:[#allocation2 + $0x3968] sm:$0xff]
    %v1918 = vld [vmem:[#allocation2 + $0x3970] sm:$0xff]
    %v1919 = vld [vmem:[#allocation2 + $0x3978] sm:$0xff]
    %v1920 = vld [vmem:[#allocation2 + $0x3980] sm:$0xff]
    %v1921 = vld [vmem:[#allocation2 + $0x3988] sm:$0xff]
    %v1922 = vld [vmem:[#allocation2 + $0x3990] sm:$0xff]
    %v1923 = vld [vmem:[#allocation2 + $0x3998] sm:$0xff]
    %v1924 = vld [vmem:[#allocation2 + $0x39a0] sm:$0xff]
    %v1925 = vld [vmem:[#allocation2 + $0x39a8] sm:$0xff]
    %v1926 = vld [vmem:[#allocation2 + $0x39b0] sm:$0xff]
    %v1927 = vld [vmem:[#allocation2 + $0x39b8] sm:$0xff]
    %v1928 = vld [vmem:[#allocation2 + $0x39c0] sm:$0xff]
    %v1929 = vld [vmem:[#allocation2 + $0x39c8] sm:$0xff]
    %v1930 = vld [vmem:[#allocation2 + $0x39d0] sm:$0xff]
    %v1931 = vld [vmem:[#allocation2 + $0x39d8] sm:$0xff]
    %v1932 = vld [vmem:[#allocation2 + $0x39e0] sm:$0xff]
    %v1933 = vld [vmem:[#allocation2 + $0x39e8] sm:$0xff]
    %v1934 = vld [vmem:[#allocation2 + $0x39f0] sm:$0xff]
    %v1935 = vld [vmem:[#allocation2 + $0x39f8] sm:$0xff]
    %v1936 = vld [vmem:[#allocation2 + $0x3a00] sm:$0xff]
    %v1937 = vld [vmem:[#allocation2 + $0x3a08] sm:$0xff]
    %v1938 = vld [vmem:[#allocation2 + $0x3a10] sm:$0xff]
    %v1939 = vld [vmem:[#allocation2 + $0x3a18] sm:$0xff]
    %v1940 = vld [vmem:[#allocation2 + $0x3a20] sm:$0xff]
    %v1941 = vld [vmem:[#allocation2 + $0x3a28] sm:$0xff]
    %v1942 = vld [vmem:[#allocation2 + $0x3a30] sm:$0xff]
    %v1943 = vld [vmem:[#allocation2 + $0x3a38] sm:$0xff]
    %v1944 = vld [vmem:[#allocation2 + $0x3a40] sm:$0xff]
    %v1945 = vld [vmem:[#allocation2 + $0x3a48] sm:$0xff]
    %v1946 = vld [vmem:[#allocation2 + $0x3a50] sm:$0xff]
    %v1947 = vld [vmem:[#allocation2 + $0x3a58] sm:$0xff]
    %v1948 = vld [vmem:[#allocation2 + $0x3a60] sm:$0xff]
    %v1949 = vld [vmem:[#allocation2 + $0x3a68] sm:$0xff]
    %v1950 = vld [vmem:[#allocation2 + $0x3a70] sm:$0xff]
    %v1951 = vld [vmem:[#allocation2 + $0x3a78] sm:$0xff]
    %v1952 = vld [vmem:[#allocation2 + $0x3a80] sm:$0xff]
    %v1953 = vld [vmem:[#allocation2 + $0x3a88] sm:$0xff]
    %v1954 = vld [vmem:[#allocation2 + $0x3a90] sm:$0xff]
    %v1955 = vld [vmem:[#allocation2 + $0x3a98] sm:$0xff]
    %v1956 = vld [vmem:[#allocation2 + $0x3aa0] sm:$0xff]
    %v1957 = vld [vmem:[#allocation2 + $0x3aa8] sm:$0xff]
    %v1958 = vld [vmem:[#allocation2 + $0x3ab0] sm:$0xff]
    %v1959 = vld [vmem:[#allocation2 + $0x3ab8] sm:$0xff]
    %v1960 = vld [vmem:[#allocation2 + $0x3ac0] sm:$0xff]
    %v1961 = vld [vmem:[#allocation2 + $0x3ac8] sm:$0xff]
    %v1962 = vld [vmem:[#allocation2 + $0x3ad0] sm:$0xff]
    %v1963 = vld [vmem:[#allocation2 + $0x3ad8] sm:$0xff]
    %v1964 = vld [vmem:[#allocation2 + $0x3ae0] sm:$0xff]
    %v1965 = vld [vmem:[#allocation2 + $0x3ae8] sm:$0xff]
    %v1966 = vld [vmem:[#allocation2 + $0x3af0] sm:$0xff]
    %v1967 = vld [vmem:[#allocation2 + $0x3af8] sm:$0xff]
    %v1968 = vld [vmem:[#allocation2 + $0x3b00] sm:$0xff]
    %v1969 = vld [vmem:[#allocation2 + $0x3b08] sm:$0xff]
    %v1970 = vld [vmem:[#allocation2 + $0x3b10] sm:$0xff]
    %v1971 = vld [vmem:[#allocation2 + $0x3b18] sm:$0xff]
    %v1972 = vld [vmem:[#allocation2 + $0x3b20] sm:$0xff]
    %v1973 = vld [vmem:[#allocation2 + $0x3b28] sm:$0xff]
    %v1974 = vld [vmem:[#allocation2 + $0x3b30] sm:$0xff]
    %v1975 = vld [vmem:[#allocation2 + $0x3b38] sm:$0xff]
    %v1976 = vld [vmem:[#allocation2 + $0x3b40] sm:$0xff]
    %v1977 = vld [vmem:[#allocation2 + $0x3b48] sm:$0xff]
    %v1978 = vld [vmem:[#allocation2 + $0x3b50] sm:$0xff]
    %v1979 = vld [vmem:[#allocation2 + $0x3b58] sm:$0xff]
    %v1980 = vld [vmem:[#allocation2 + $0x3b60] sm:$0xff]
    %v1981 = vld [vmem:[#allocation2 + $0x3b68] sm:$0xff]
    %v1982 = vld [vmem:[#allocation2 + $0x3b70] sm:$0xff]
    %v1983 = vld [vmem:[#allocation2 + $0x3b78] sm:$0xff]
    %v1984 = vld [vmem:[#allocation2 + $0x3b80] sm:$0xff]
    %v1985 = vld [vmem:[#allocation2 + $0x3b88] sm:$0xff]
    %v1986 = vld [vmem:[#allocation2 + $0x3b90] sm:$0xff]
    %v1987 = vld [vmem:[#allocation2 + $0x3b98] sm:$0xff]
    %v1988 = vld [vmem:[#allocation2 + $0x3ba0] sm:$0xff]
    %v1989 = vld [vmem:[#allocation2 + $0x3ba8] sm:$0xff]
    %v1990 = vld [vmem:[#allocation2 + $0x3bb0] sm:$0xff]
    %v1991 = vld [vmem:[#allocation2 + $0x3bb8] sm:$0xff]
    %v1992 = vld [vmem:[#allocation2 + $0x3bc0] sm:$0xff]
    %v1993 = vld [vmem:[#allocation2 + $0x3bc8] sm:$0xff]
    %v1994 = vld [vmem:[#allocation2 + $0x3bd0] sm:$0xff]
    %v1995 = vld [vmem:[#allocation2 + $0x3bd8] sm:$0xff]
    %v1996 = vld [vmem:[#allocation2 + $0x3be0] sm:$0xff]
    %v1997 = vld [vmem:[#allocation2 + $0x3be8] sm:$0xff]
    %v1998 = vld [vmem:[#allocation2 + $0x3bf0] sm:$0xff]
    %v1999 = vld [vmem:[#allocation2 + $0x3bf8] sm:$0xff]
    %v2000 = vld [vmem:[#allocation2 + $0x3c00] sm:$0xff]
    %v2001 = vld [vmem:[#allocation2 + $0x3c08] sm:$0xff]
    %v2002 = vld [vmem:[#allocation2 + $0x3c10] sm:$0xff]
    %v2003 = vld [vmem:[#allocation2 + $0x3c18] sm:$0xff]
    %v2004 = vld [vmem:[#allocation2 + $0x3c20] sm:$0xff]
    %v2005 = vld [vmem:[#allocation2 + $0x3c28] sm:$0xff]
    %v2006 = vld [vmem:[#allocation2 + $0x3c30] sm:$0xff]
    %v2007 = vld [vmem:[#allocation2 + $0x3c38] sm:$0xff]
    %v2008 = vld [vmem:[#allocation2 + $0x3c40] sm:$0xff]
    %v2009 = vld [vmem:[#allocation2 + $0x3c48] sm:$0xff]
    %v2010 = vld [vmem:[#allocation2 + $0x3c50] sm:$0xff]
    %v2011 = vld [vmem:[#allocation2 + $0x3c58] sm:$0xff]
    %v2012 = vld [vmem:[#allocation2 + $0x3c60] sm:$0xff]
    %v2013 = vld [vmem:[#allocation2 + $0x3c68] sm:$0xff]
    %v2014 = vld [vmem:[#allocation2 + $0x3c70] sm:$0xff]
    %v2015 = vld [vmem:[#allocation2 + $0x3c78] sm:$0xff]
    %v2016 = vld [vmem:[#allocation2 + $0x3c80] sm:$0xff]
    %v2017 = vld [vmem:[#allocation2 + $0x3c88] sm:$0xff]
    %v2018 = vld [vmem:[#allocation2 + $0x3c90] sm:$0xff]
    %v2019 = vld [vmem:[#allocation2 + $0x3c98] sm:$0xff]
    %v2020 = vld [vmem:[#allocation2 + $0x3ca0] sm:$0xff]
    %v2021 = vld [vmem:[#allocation2 + $0x3ca8] sm:$0xff]
    %v2022 = vld [vmem:[#allocation2 + $0x3cb0] sm:$0xff]
    %v2023 = vld [vmem:[#allocation2 + $0x3cb8] sm:$0xff]
    %v2024 = vld [vmem:[#allocation2 + $0x3cc0] sm:$0xff]
    %v2025 = vld [vmem:[#allocation2 + $0x3cc8] sm:$0xff]
    %v2026 = vld [vmem:[#allocation2 + $0x3cd0] sm:$0xff]
    %v2027 = vld [vmem:[#allocation2 + $0x3cd8] sm:$0xff]
    %v2028 = vld [vmem:[#allocation2 + $0x3ce0] sm:$0xff]
    %v2029 = vld [vmem:[#allocation2 + $0x3ce8] sm:$0xff]
    %v2030 = vld [vmem:[#allocation2 + $0x3cf0] sm:$0xff]
    %v2031 = vld [vmem:[#allocation2 + $0x3cf8] sm:$0xff]
    %v2032 = vld [vmem:[#allocation2 + $0x3d00] sm:$0xff]
    %v2033 = vld [vmem:[#allocation2 + $0x3d08] sm:$0xff]
    %v2034 = vld [vmem:[#allocation2 + $0x3d10] sm:$0xff]
    %v2035 = vld [vmem:[#allocation2 + $0x3d18] sm:$0xff]
    %v2036 = vld [vmem:[#allocation2 + $0x3d20] sm:$0xff]
    %v2037 = vld [vmem:[#allocation2 + $0x3d28] sm:$0xff]
    %v2038 = vld [vmem:[#allocation2 + $0x3d30] sm:$0xff]
    %v2039 = vld [vmem:[#allocation2 + $0x3d38] sm:$0xff]
    %v2040 = vld [vmem:[#allocation2 + $0x3d40] sm:$0xff]
    %v2041 = vld [vmem:[#allocation2 + $0x3d48] sm:$0xff]
    %v2042 = vld [vmem:[#allocation2 + $0x3d50] sm:$0xff]
    %v2043 = vld [vmem:[#allocation2 + $0x3d58] sm:$0xff]
    %v2044 = vld [vmem:[#allocation2 + $0x3d60] sm:$0xff]
    %v2045 = vld [vmem:[#allocation2 + $0x3d68] sm:$0xff]
    %v2046 = vld [vmem:[#allocation2 + $0x3d70] sm:$0xff]
    %v2047 = vld [vmem:[#allocation2 + $0x3d78] sm:$0xff]
    %v2048 = vld [vmem:[#allocation2 + $0x3d80] sm:$0xff]
    %v2049 = vld [vmem:[#allocation2 + $0x3d88] sm:$0xff]
    %v2050 = vld [vmem:[#allocation2 + $0x3d90] sm:$0xff]
    %v2051 = vld [vmem:[#allocation2 + $0x3d98] sm:$0xff]
    %v2052 = vld [vmem:[#allocation2 + $0x3da0] sm:$0xff]
    %v2053 = vld [vmem:[#allocation2 + $0x3da8] sm:$0xff]
    %v2054 = vld [vmem:[#allocation2 + $0x3db0] sm:$0xff]
    %v2055 = vld [vmem:[#allocation2 + $0x3db8] sm:$0xff]
    %v2056 = vld [vmem:[#allocation2 + $0x3dc0] sm:$0xff]
    %v2057 = vld [vmem:[#allocation2 + $0x3dc8] sm:$0xff]
    %v2058 = vld [vmem:[#allocation2 + $0x3dd0] sm:$0xff]
    %v2059 = vld [vmem:[#allocation2 + $0x3dd8] sm:$0xff]
    %v2060 = vld [vmem:[#allocation2 + $0x3de0] sm:$0xff]
    %v2061 = vld [vmem:[#allocation2 + $0x3de8] sm:$0xff]
    %v2062 = vld [vmem:[#allocation2 + $0x3df0] sm:$0xff]
    %v2063 = vld [vmem:[#allocation2 + $0x3df8] sm:$0xff]
    %v2064 = vld [vmem:[#allocation2 + $0x3e00] sm:$0xff]
    %v2065 = vld [vmem:[#allocation2 + $0x3e08] sm:$0xff]
    %v2066 = vld [vmem:[#allocation2 + $0x3e10] sm:$0xff]
    %v2067 = vld [vmem:[#allocation2 + $0x3e18] sm:$0xff]
    %v2068 = vld [vmem:[#allocation2 + $0x3e20] sm:$0xff]
    %v2069 = vld [vmem:[#allocation2 + $0x3e28] sm:$0xff]
    %v2070 = vld [vmem:[#allocation2 + $0x3e30] sm:$0xff]
    %v2071 = vld [vmem:[#allocation2 + $0x3e38] sm:$0xff]
    %v2072 = vld [vmem:[#allocation2 + $0x3e40] sm:$0xff]
    %v2073 = vld [vmem:[#allocation2 + $0x3e48] sm:$0xff]
    %v2074 = vld [vmem:[#allocation2 + $0x3e50] sm:$0xff]
    %v2075 = vld [vmem:[#allocation2 + $0x3e58] sm:$0xff]
    %v2076 = vld [vmem:[#allocation2 + $0x3e60] sm:$0xff]
    %v2077 = vld [vmem:[#allocation2 + $0x3e68] sm:$0xff]
    %v2078 = vld [vmem:[#allocation2 + $0x3e70] sm:$0xff]
    %v2079 = vld [vmem:[#allocation2 + $0x3e78] sm:$0xff]
    %v2080 = vld [vmem:[#allocation2 + $0x3e80] sm:$0xff]
    %v2081 = vld [vmem:[#allocation2 + $0x3e88] sm:$0xff]
    %v2082 = vld [vmem:[#allocation2 + $0x3e90] sm:$0xff]
    %v2083 = vld [vmem:[#allocation2 + $0x3e98] sm:$0xff]
    %v2084 = vld [vmem:[#allocation2 + $0x3ea0] sm:$0xff]
    %v2085 = vld [vmem:[#allocation2 + $0x3ea8] sm:$0xff]
    %v2086 = vld [vmem:[#allocation2 + $0x3eb0] sm:$0xff]
    %v2087 = vld [vmem:[#allocation2 + $0x3eb8] sm:$0xff]
    %v2088 = vld [vmem:[#allocation2 + $0x3ec0] sm:$0xff]
    %v2089 = vld [vmem:[#allocation2 + $0x3ec8] sm:$0xff]
    %v2090 = vld [vmem:[#allocation2 + $0x3ed0] sm:$0xff]
    %v2091 = vld [vmem:[#allocation2 + $0x3ed8] sm:$0xff]
    %v2092 = vld [vmem:[#allocation2 + $0x3ee0] sm:$0xff]
    %v2093 = vld [vmem:[#allocation2 + $0x3ee8] sm:$0xff]
    %v2094 = vld [vmem:[#allocation2 + $0x3ef0] sm:$0xff]
    %v2095 = vld [vmem:[#allocation2 + $0x3ef8] sm:$0xff]
    %v2096 = vld [vmem:[#allocation2 + $0x3f00] sm:$0xff]
    %v2097 = vld [vmem:[#allocation2 + $0x3f08] sm:$0xff]
    %v2098 = vld [vmem:[#allocation2 + $0x3f10] sm:$0xff]
    %v2099 = vld [vmem:[#allocation2 + $0x3f18] sm:$0xff]
    %v2100 = vld [vmem:[#allocation2 + $0x3f20] sm:$0xff]
    %v2101 = vld [vmem:[#allocation2 + $0x3f28] sm:$0xff]
    %v2102 = vld [vmem:[#allocation2 + $0x3f30] sm:$0xff]
    %v2103 = vld [vmem:[#allocation2 + $0x3f38] sm:$0xff]
    %v2104 = vld [vmem:[#allocation2 + $0x3f40] sm:$0xff]
    %v2105 = vld [vmem:[#allocation2 + $0x3f48] sm:$0xff]
    %v2106 = vld [vmem:[#allocation2 + $0x3f50] sm:$0xff]
    %v2107 = vld [vmem:[#allocation2 + $0x3f58] sm:$0xff]
    %v2108 = vld [vmem:[#allocation2 + $0x3f60] sm:$0xff]
    %v2109 = vld [vmem:[#allocation2 + $0x3f68] sm:$0xff]
    %v2110 = vld [vmem:[#allocation2 + $0x3f70] sm:$0xff]
    %v2111 = vld [vmem:[#allocation2 + $0x3f78] sm:$0xff]
    %v2112 = vld [vmem:[#allocation2 + $0x3f80] sm:$0xff]
    %v2113 = vld [vmem:[#allocation2 + $0x3f88] sm:$0xff]
    %v2114 = vld [vmem:[#allocation2 + $0x3f90] sm:$0xff]
    %v2115 = vld [vmem:[#allocation2 + $0x3f98] sm:$0xff]
    %v2116 = vld [vmem:[#allocation2 + $0x3fa0] sm:$0xff]
    %v2117 = vld [vmem:[#allocation2 + $0x3fa8] sm:$0xff]
    %v2118 = vld [vmem:[#allocation2 + $0x3fb0] sm:$0xff]
    %v2119 = vld [vmem:[#allocation2 + $0x3fb8] sm:$0xff]
    %v2120 = vld [vmem:[#allocation2 + $0x3fc0] sm:$0xff]
    %v2121 = vld [vmem:[#allocation2 + $0x3fc8] sm:$0xff]
    %v2122 = vld [vmem:[#allocation2 + $0x3fd0] sm:$0xff]
    %v2123 = vld [vmem:[#allocation2 + $0x3fd8] sm:$0xff]
    %v2124 = vld [vmem:[#allocation2 + $0x3fe0] sm:$0xff]
    %v2125 = vld [vmem:[#allocation2 + $0x3fe8] sm:$0xff]
    %v2126 = vld [vmem:[#allocation2 + $0x3ff0] sm:$0xff]
    %v2127 = vld [vmem:[#allocation2 + $0x3ff8] sm:$0xff]
    %v2128 = vld [vmem:[#allocation5] sm:$0xff]
    %v2129 = vld [vmem:[#allocation5 + $0x8] sm:$0xff]
    %v2132 = vlaneseq
    %v2133 = vshrl.u32 %v2132, 7
    %v2134 = vsub.s32 0, %v2133
    %v2135 = vrot.slane %v2128, %v2134
    %v2136 = vlaneseq
    %v2137 = vshrl.u32 %v2136, 7
    %v2138 = vsub.s32 1, %v2137
    %v2139 = vrot.slane %v2128, %v2138
    %v2140 = vlaneseq
    %v2141 = vshrl.u32 %v2140, 7
    %v2142 = vsub.s32 2, %v2141
    %v2143 = vrot.slane %v2128, %v2142
    %v2144 = vlaneseq
    %v2145 = vshrl.u32 %v2144, 7
    %v2146 = vsub.s32 3, %v2145
    %v2147 = vrot.slane %v2128, %v2146
    %v2148 = vlaneseq
    %v2149 = vshrl.u32 %v2148, 7
    %v2150 = vsub.s32 4, %v2149
    %v2151 = vrot.slane %v2128, %v2150
    %v2152 = vlaneseq
    %v2153 = vshrl.u32 %v2152, 7
    %v2154 = vsub.s32 5, %v2153
    %v2155 = vrot.slane %v2128, %v2154
    %v2156 = vlaneseq
    %v2157 = vshrl.u32 %v2156, 7
    %v2158 = vsub.s32 6, %v2157
    %v2159 = vrot.slane %v2128, %v2158
    %v2160 = vlaneseq
    %v2161 = vshrl.u32 %v2160, 7
    %v2162 = vsub.s32 7, %v2161
    %v2163 = vrot.slane %v2128, %v2162
    %v2164 = vlaneseq
    %v2165 = vshrl.u32 %v2164, 7
    %v2166 = vsub.s32 0, %v2165
    %v2167 = vrot.slane %v2129, %v2166
    %v2168 = vlaneseq
    %v2169 = vshrl.u32 %v2168, 7
    %v2170 = vsub.s32 1, %v2169
    %v2171 = vrot.slane %v2129, %v2170
    %v2172 = vlaneseq
    %v2173 = vshrl.u32 %v2172, 7
    %v2174 = vsub.s32 2, %v2173
    %v2175 = vrot.slane %v2129, %v2174
    %v2176 = vlaneseq
    %v2177 = vshrl.u32 %v2176, 7
    %v2178 = vsub.s32 3, %v2177
    %v2179 = vrot.slane %v2129, %v2178
    %v2180 = vlaneseq
    %v2181 = vshrl.u32 %v2180, 7
    %v2182 = vsub.s32 4, %v2181
    %v2183 = vrot.slane %v2129, %v2182
    %v2184 = vlaneseq
    %v2185 = vshrl.u32 %v2184, 7
    %v2186 = vsub.s32 5, %v2185
    %v2187 = vrot.slane %v2129, %v2186
    %v2188 = vlaneseq
    %v2189 = vshrl.u32 %v2188, 7
    %v2190 = vsub.s32 6, %v2189
    %v2191 = vrot.slane %v2129, %v2190
    %v2192 = vlaneseq
    %v2193 = vshrl.u32 %v2192, 7
    %v2194 = vsub.s32 7, %v2193
    %v2195 = vrot.slane %v2129, %v2194
    %v2214 = vcombine.high %v78, %v78
    %v2216 = vunpack.c.l.s4 1983009808
    %v2217 = vunpack.c.0.s8 %v2216
    %v2218 = vlaneseq
    %v2219 = vshrl.u32 %v2218, 7
    %v2220 = vsub.s32 %v2217, %v2219
    %v2221 = vrot.slane %v78, %v2220
    %v2223 = vunpack.c.l.s4 1983009808
    %v2224 = vunpack.c.0.s8 %v2223
    %v2225 = vlaneseq
    %v2226 = vshrl.u32 %v2225, 7
    %v2227 = vsub.s32 %v2224, %v2226
    %v2228 = vrot.slane %v2214, %v2227
    %v2229 = vcombine.high %v2221, %v2221
    %v2230 = vcombine.high %v2228, %v2228
    %v2231 = vcombine.high %v79, %v79
    %v2233 = vunpack.c.l.s4 1983009808
    %v2234 = vunpack.c.0.s8 %v2233
    %v2235 = vlaneseq
    %v2236 = vshrl.u32 %v2235, 7
    %v2237 = vsub.s32 %v2234, %v2236
    %v2238 = vrot.slane %v79, %v2237
    %v2240 = vunpack.c.l.s4 1983009808
    %v2241 = vunpack.c.0.s8 %v2240
    %v2242 = vlaneseq
    %v2243 = vshrl.u32 %v2242, 7
    %v2244 = vsub.s32 %v2241, %v2243
    %v2245 = vrot.slane %v2231, %v2244
    %v2246 = vcombine.high %v2238, %v2238
    %v2247 = vcombine.high %v2245, %v2245
    %2256 = vmatprep.subr.mxu0 %v81
    %2257 = vmatpush1.msra.mxu0 %v80
    %2258 = vmatprep.subr.mxu0 %v97
    %2259 = vmatpush1.msra.mxu0 %v96
    %2260 = vmatprep.subr.mxu0 %v113
    %2261 = vmatpush1.msra.mxu0 %v112
    %2262 = vmatprep.subr.mxu0 %v129
    %2263 = vmatpush1.msra.mxu0 %v128
    %2264 = vmatprep.subr.mxu0 %v145
    %2265 = vmatpush1.msra.mxu0 %v144
    %2266 = vmatprep.subr.mxu0 %v161
    %2267 = vmatpush1.msra.mxu0 %v160
    %2268 = vmatprep.subr.mxu0 %v177
    %2269 = vmatpush1.msra.mxu0 %v176
    %2270 = vmatprep.subr.mxu0 %v193
    %2271 = vmatpush1.msra.mxu0 %v192
    %2272 = vmatprep.subr.mxu0 %v209
    %2273 = vmatpush1.msra.mxu0 %v208
    %2274 = vmatprep.subr.mxu0 %v225
    %2275 = vmatpush1.msra.mxu0 %v224
    %2276 = vmatprep.subr.mxu0 %v241
    %2277 = vmatpush1.msra.mxu0 %v240
    %2278 = vmatprep.subr.mxu0 %v257
    %2279 = vmatpush1.msra.mxu0 %v256
    %2280 = vmatprep.subr.mxu0 %v273
    %2281 = vmatpush1.msra.mxu0 %v272
    %2282 = vmatprep.subr.mxu0 %v289
    %2283 = vmatpush1.msra.mxu0 %v288
    %2284 = vmatprep.subr.mxu0 %v305
    %2285 = vmatpush1.msra.mxu0 %v304
    %2286 = vmatprep.subr.mxu0 %v321
    %2287 = vmatpush1.msra.mxu0 %v320
    %2288 = vmatprep.subr.mxu0 %v337
    %2289 = vmatpush1.msra.mxu0 %v336
    %2290 = vmatprep.subr.mxu0 %v353
    %2291 = vmatpush1.msra.mxu0 %v352
    %2292 = vmatprep.subr.mxu0 %v369
    %2293 = vmatpush1.msra.mxu0 %v368
    %2294 = vmatprep.subr.mxu0 %v385
    %2295 = vmatpush1.msra.mxu0 %v384
    %2296 = vmatprep.subr.mxu0 %v401
    %2297 = vmatpush1.msra.mxu0 %v400
    %2298 = vmatprep.subr.mxu0 %v417
    %2299 = vmatpush1.msra.mxu0 %v416
    %2300 = vmatprep.subr.mxu0 %v433
    %2301 = vmatpush1.msra.mxu0 %v432
    %2302 = vmatprep.subr.mxu0 %v449
    %2303 = vmatpush1.msra.mxu0 %v448
    %2304 = vmatprep.subr.mxu0 %v465
    %2305 = vmatpush1.msra.mxu0 %v464
    %2306 = vmatprep.subr.mxu0 %v481
    %2307 = vmatpush1.msra.mxu0 %v480
    %2308 = vmatprep.subr.mxu0 %v497
    %2309 = vmatpush1.msra.mxu0 %v496
    %2310 = vmatprep.subr.mxu0 %v513
    %2311 = vmatpush1.msra.mxu0 %v512
    %2312 = vmatprep.subr.mxu0 %v529
    %2313 = vmatpush1.msra.mxu0 %v528
    %2314 = vmatprep.subr.mxu0 %v545
    %2315 = vmatpush1.msra.mxu0 %v544
    %2316 = vmatprep.subr.mxu0 %v561
    %2317 = vmatpush1.msra.mxu0 %v560
    %2318 = vmatprep.subr.mxu0 %v577
    %2319 = vmatpush1.msra.mxu0 %v576
    %2320 = vmatprep.mubr.f32.mxu0 %v2229
    %2321 = vmatmul.mubr.f32.gmra.mrb[0].mxu0 %v2221
    %v2322 = vpop.f32.mrb[0].mxu0
    %v2323 = vadd.f32 %v2135, %v2322
    %v2324 = vpop.f32.mrb[0].mxu0
    %v2325 = vadd.f32 %v2139, %v2324
    %2326 = vdwg.mxu0
    %2327 = vmatprep.subr.mxu0 %v593
    %2328 = vmatpush1.msra.mxu0 %v592
    %2329 = vmatprep.subr.mxu0 %v609
    %2330 = vmatpush1.msra.mxu0 %v608
    %2331 = vmatprep.subr.mxu0 %v625
    %2332 = vmatpush1.msra.mxu0 %v624
    %2333 = vmatprep.subr.mxu0 %v641
    %2334 = vmatpush1.msra.mxu0 %v640
    %2335 = vmatprep.subr.mxu0 %v657
    %2336 = vmatpush1.msra.mxu0 %v656
    %2337 = vmatprep.subr.mxu0 %v673
    %2338 = vmatpush1.msra.mxu0 %v672
    %2339 = vmatprep.subr.mxu0 %v689
    %2340 = vmatpush1.msra.mxu0 %v688
    %2341 = vmatprep.subr.mxu0 %v705
    %2342 = vmatpush1.msra.mxu0 %v704
    %2343 = vmatprep.subr.mxu0 %v721
    %2344 = vmatpush1.msra.mxu0 %v720
    %2345 = vmatprep.subr.mxu0 %v737
    %2346 = vmatpush1.msra.mxu0 %v736
    %2347 = vmatprep.subr.mxu0 %v753
    %2348 = vmatpush1.msra.mxu0 %v752
    %2349 = vmatprep.subr.mxu0 %v769
    %2350 = vmatpush1.msra.mxu0 %v768
    %2351 = vmatprep.subr.mxu0 %v785
    %2352 = vmatpush1.msra.mxu0 %v784
    %2353 = vmatprep.subr.mxu0 %v801
    %2354 = vmatpush1.msra.mxu0 %v800
    %2355 = vmatprep.subr.mxu0 %v817
    %2356 = vmatpush1.msra.mxu0 %v816
    %2357 = vmatprep.subr.mxu0 %v833
    %2358 = vmatpush1.msra.mxu0 %v832
    %2359 = vmatprep.subr.mxu0 %v849
    %2360 = vmatpush1.msra.mxu0 %v848
    %2361 = vmatprep.subr.mxu0 %v865
    %2362 = vmatpush1.msra.mxu0 %v864
    %2363 = vmatprep.subr.mxu0 %v881
    %2364 = vmatpush1.msra.mxu0 %v880
    %2365 = vmatprep.subr.mxu0 %v897
    %2366 = vmatpush1.msra.mxu0 %v896
    %2367 = vmatprep.subr.mxu0 %v913
    %2368 = vmatpush1.msra.mxu0 %v912
    %2369 = vmatprep.subr.mxu0 %v929
    %2370 = vmatpush1.msra.mxu0 %v928
    %2371 = vmatprep.subr.mxu0 %v945
    %2372 = vmatpush1.msra.mxu0 %v944
    %2373 = vmatprep.subr.mxu0 %v961
    %2374 = vmatpush1.msra.mxu0 %v960
    %2375 = vmatprep.subr.mxu0 %v977
    %2376 = vmatpush1.msra.mxu0 %v976
    %2377 = vmatprep.subr.mxu0 %v993
    %2378 = vmatpush1.msra.mxu0 %v992
    %2379 = vmatprep.subr.mxu0 %v1009
    %2380 = vmatpush1.msra.mxu0 %v1008
    %2381 = vmatprep.subr.mxu0 %v1025
    %2382 = vmatpush1.msra.mxu0 %v1024
    %2383 = vmatprep.subr.mxu0 %v1041
    %2384 = vmatpush1.msra.mxu0 %v1040
    %2385 = vmatprep.subr.mxu0 %v1057
    %2386 = vmatpush1.msra.mxu0 %v1056
    %2387 = vmatprep.subr.mxu0 %v1073
    %2388 = vmatpush1.msra.mxu0 %v1072
    %2389 = vmatprep.subr.mxu0 %v1089
    %2390 = vmatpush1.msra.mxu0 %v1088
    %2391 = vmatprep.mubr.f32.mxu0 %v2230
    %2392 = vmatmul.mubr.f32.gmra.mrb[0].mxu0 %v2228
    %v2393 = vpop.f32.mrb[0].mxu0
    %v2394 = vadd.f32 %v2323, %v2393
    %v2395 = vpop.f32.mrb[0].mxu0
    %v2396 = vadd.f32 %v2325, %v2395
    %2397 = vdwg.mxu0
    %2398 = vmatprep.subr.mxu0 %v1105
    %2399 = vmatpush1.msra.mxu0 %v1104
    %2400 = vmatprep.subr.mxu0 %v1121
    %2401 = vmatpush1.msra.mxu0 %v1120
    %2402 = vmatprep.subr.mxu0 %v1137
    %2403 = vmatpush1.msra.mxu0 %v1136
    %2404 = vmatprep.subr.mxu0 %v1153
    %2405 = vmatpush1.msra.mxu0 %v1152
    %2406 = vmatprep.subr.mxu0 %v1169
    %2407 = vmatpush1.msra.mxu0 %v1168
    %2408 = vmatprep.subr.mxu0 %v1185
    %2409 = vmatpush1.msra.mxu0 %v1184
    %2410 = vmatprep.subr.mxu0 %v1201
    %2411 = vmatpush1.msra.mxu0 %v1200
    %2412 = vmatprep.subr.mxu0 %v1217
    %2413 = vmatpush1.msra.mxu0 %v1216
    %2414 = vmatprep.subr.mxu0 %v1233
    %2415 = vmatpush1.msra.mxu0 %v1232
    %2416 = vmatprep.subr.mxu0 %v1249
    %2417 = vmatpush1.msra.mxu0 %v1248
    %2418 = vmatprep.subr.mxu0 %v1265
    %2419 = vmatpush1.msra.mxu0 %v1264
    %2420 = vmatprep.subr.mxu0 %v1281
    %2421 = vmatpush1.msra.mxu0 %v1280
    %2422 = vmatprep.subr.mxu0 %v1297
    %2423 = vmatpush1.msra.mxu0 %v1296
    %2424 = vmatprep.subr.mxu0 %v1313
    %2425 = vmatpush1.msra.mxu0 %v1312
    %2426 = vmatprep.subr.mxu0 %v1329
    %2427 = vmatpush1.msra.mxu0 %v1328
    %2428 = vmatprep.subr.mxu0 %v1345
    %2429 = vmatpush1.msra.mxu0 %v1344
    %2430 = vmatprep.subr.mxu0 %v1361
    %2431 = vmatpush1.msra.mxu0 %v1360
    %2432 = vmatprep.subr.mxu0 %v1377
    %2433 = vmatpush1.msra.mxu0 %v1376
    %2434 = vmatprep.subr.mxu0 %v1393
    %2435 = vmatpush1.msra.mxu0 %v1392
    %2436 = vmatprep.subr.mxu0 %v1409
    %2437 = vmatpush1.msra.mxu0 %v1408
    %2438 = vmatprep.subr.mxu0 %v1425
    %2439 = vmatpush1.msra.mxu0 %v1424
    %2440 = vmatprep.subr.mxu0 %v1441
    %2441 = vmatpush1.msra.mxu0 %v1440
    %2442 = vmatprep.subr.mxu0 %v1457
    %2443 = vmatpush1.msra.mxu0 %v1456
    %2444 = vmatprep.subr.mxu0 %v1473
    %2445 = vmatpush1.msra.mxu0 %v1472
    %2446 = vmatprep.subr.mxu0 %v1489
    %2447 = vmatpush1.msra.mxu0 %v1488
    %2448 = vmatprep.subr.mxu0 %v1505
    %2449 = vmatpush1.msra.mxu0 %v1504
    %2450 = vmatprep.subr.mxu0 %v1521
    %2451 = vmatpush1.msra.mxu0 %v1520
    %2452 = vmatprep.subr.mxu0 %v1537
    %2453 = vmatpush1.msra.mxu0 %v1536
    %2454 = vmatprep.subr.mxu0 %v1553
    %2455 = vmatpush1.msra.mxu0 %v1552
    %2456 = vmatprep.subr.mxu0 %v1569
    %2457 = vmatpush1.msra.mxu0 %v1568
    %2458 = vmatprep.subr.mxu0 %v1585
    %2459 = vmatpush1.msra.mxu0 %v1584
    %2460 = vmatprep.subr.mxu0 %v1601
    %2461 = vmatpush1.msra.mxu0 %v1600
    %2462 = vmatprep.mubr.f32.mxu0 %v2246
    %2463 = vmatmul.mubr.f32.gmra.mrb[0].mxu0 %v2238
    %v2464 = vpop.f32.mrb[0].mxu0
    %v2465 = vadd.f32 %v2394, %v2464
    %v2466 = vpop.f32.mrb[0].mxu0
    %v2467 = vadd.f32 %v2396, %v2466
    %2468 = vdwg.mxu0
    %2469 = vmatprep.subr.mxu0 %v1617
    %2470 = vmatpush1.msra.mxu0 %v1616
    %2471 = vmatprep.subr.mxu0 %v1633
    %2472 = vmatpush1.msra.mxu0 %v1632
    %2473 = vmatprep.subr.mxu0 %v1649
    %2474 = vmatpush1.msra.mxu0 %v1648
    %2475 = vmatprep.subr.mxu0 %v1665
    %2476 = vmatpush1.msra.mxu0 %v1664
    %2477 = vmatprep.subr.mxu0 %v1681
    %2478 = vmatpush1.msra.mxu0 %v1680
    %2479 = vmatprep.subr.mxu0 %v1697
    %2480 = vmatpush1.msra.mxu0 %v1696
    %2481 = vmatprep.subr.mxu0 %v1713
    %2482 = vmatpush1.msra.mxu0 %v1712
    %2483 = vmatprep.subr.mxu0 %v1729
    %2484 = vmatpush1.msra.mxu0 %v1728
    %2485 = vmatprep.subr.mxu0 %v1745
    %2486 = vmatpush1.msra.mxu0 %v1744
    %2487 = vmatprep.subr.mxu0 %v1761
    %2488 = vmatpush1.msra.mxu0 %v1760
    %2489 = vmatprep.subr.mxu0 %v1777
    %2490 = vmatpush1.msra.mxu0 %v1776
    %2491 = vmatprep.subr.mxu0 %v1793
    %2492 = vmatpush1.msra.mxu0 %v1792
    %2493 = vmatprep.subr.mxu0 %v1809
    %2494 = vmatpush1.msra.mxu0 %v1808
    %2495 = vmatprep.subr.mxu0 %v1825
    %2496 = vmatpush1.msra.mxu0 %v1824
    %2497 = vmatprep.subr.mxu0 %v1841
    %2498 = vmatpush1.msra.mxu0 %v1840
    %2499 = vmatprep.subr.mxu0 %v1857
    %2500 = vmatpush1.msra.mxu0 %v1856
    %2501 = vmatprep.subr.mxu0 %v1873
    %2502 = vmatpush1.msra.mxu0 %v1872
    %2503 = vmatprep.subr.mxu0 %v1889
    %2504 = vmatpush1.msra.mxu0 %v1888
    %2505 = vmatprep.subr.mxu0 %v1905
    %2506 = vmatpush1.msra.mxu0 %v1904
    %2507 = vmatprep.subr.mxu0 %v1921
    %2508 = vmatpush1.msra.mxu0 %v1920
    %2509 = vmatprep.subr.mxu0 %v1937
    %2510 = vmatpush1.msra.mxu0 %v1936
    %2511 = vmatprep.subr.mxu0 %v1953
    %2512 = vmatpush1.msra.mxu0 %v1952
    %2513 = vmatprep.subr.mxu0 %v1969
    %2514 = vmatpush1.msra.mxu0 %v1968
    %2515 = vmatprep.subr.mxu0 %v1985
    %2516 = vmatpush1.msra.mxu0 %v1984
    %2517 = vmatprep.subr.mxu0 %v2001
    %2518 = vmatpush1.msra.mxu0 %v2000
    %2519 = vmatprep.subr.mxu0 %v2017
    %2520 = vmatpush1.msra.mxu0 %v2016
    %2521 = vmatprep.subr.mxu0 %v2033
    %2522 = vmatpush1.msra.mxu0 %v2032
    %2523 = vmatprep.subr.mxu0 %v2049
    %2524 = vmatpush1.msra.mxu0 %v2048
    %2525 = vmatprep.subr.mxu0 %v2065
    %2526 = vmatpush1.msra.mxu0 %v2064
    %2527 = vmatprep.subr.mxu0 %v2081
    %2528 = vmatpush1.msra.mxu0 %v2080
    %2529 = vmatprep.subr.mxu0 %v2097
    %2530 = vmatpush1.msra.mxu0 %v2096
    %2531 = vmatprep.subr.mxu0 %v2113
    %2532 = vmatpush1.msra.mxu0 %v2112
    %2533 = vmatprep.mubr.f32.mxu0 %v2247
    %2534 = vmatmul.mubr.f32.gmra.mrb[0].mxu0 %v2245
    %v2535 = vpop.f32.mrb[0].mxu0
    %v2536 = vadd.f32 %v2465, %v2535
    %v2537 = vpop.f32.mrb[0].mxu0
    %v2538 = vadd.f32 %v2467, %v2537
    %2539 = vdwg.mxu0
    %2540 = vmatprep.subr.mxu0 %v83
    %2541 = vmatpush1.msra.mxu0 %v82
    %2542 = vmatprep.subr.mxu0 %v99
    %2543 = vmatpush1.msra.mxu0 %v98
    %2544 = vmatprep.subr.mxu0 %v115
    %2545 = vmatpush1.msra.mxu0 %v114
    %2546 = vmatprep.subr.mxu0 %v131
    %2547 = vmatpush1.msra.mxu0 %v130
    %2548 = vmatprep.subr.mxu0 %v147
    %2549 = vmatpush1.msra.mxu0 %v146
    %2550 = vmatprep.subr.mxu0 %v163
    %2551 = vmatpush1.msra.mxu0 %v162
    %2552 = vmatprep.subr.mxu0 %v179
    %2553 = vmatpush1.msra.mxu0 %v178
    %2554 = vmatprep.subr.mxu0 %v195
    %2555 = vmatpush1.msra.mxu0 %v194
    %2556 = vmatprep.subr.mxu0 %v211
    %2557 = vmatpush1.msra.mxu0 %v210
    %2558 = vmatprep.subr.mxu0 %v227
    %2559 = vmatpush1.msra.mxu0 %v226
    %2560 = vmatprep.subr.mxu0 %v243
    %2561 = vmatpush1.msra.mxu0 %v242
    %2562 = vmatprep.subr.mxu0 %v259
    %2563 = vmatpush1.msra.mxu0 %v258
    %2564 = vmatprep.subr.mxu0 %v275
    %2565 = vmatpush1.msra.mxu0 %v274
    %2566 = vmatprep.subr.mxu0 %v291
    %2567 = vmatpush1.msra.mxu0 %v290
    %2568 = vmatprep.subr.mxu0 %v307
    %2569 = vmatpush1.msra.mxu0 %v306
    %2570 = vmatprep.subr.mxu0 %v323
    %2571 = vmatpush1.msra.mxu0 %v322
    %2572 = vmatprep.subr.mxu0 %v339
    %2573 = vmatpush1.msra.mxu0 %v338
    %2574 = vmatprep.subr.mxu0 %v355
    %2575 = vmatpush1.msra.mxu0 %v354
    %2576 = vmatprep.subr.mxu0 %v371
    %2577 = vmatpush1.msra.mxu0 %v370
    %2578 = vmatprep.subr.mxu0 %v387
    %2579 = vmatpush1.msra.mxu0 %v386
    %2580 = vmatprep.subr.mxu0 %v403
    %2581 = vmatpush1.msra.mxu0 %v402
    %2582 = vmatprep.subr.mxu0 %v419
    %2583 = vmatpush1.msra.mxu0 %v418
    %2584 = vmatprep.subr.mxu0 %v435
    %2585 = vmatpush1.msra.mxu0 %v434
    %2586 = vmatprep.subr.mxu0 %v451
    %2587 = vmatpush1.msra.mxu0 %v450
    %2588 = vmatprep.subr.mxu0 %v467
    %2589 = vmatpush1.msra.mxu0 %v466
    %2590 = vmatprep.subr.mxu0 %v483
    %2591 = vmatpush1.msra.mxu0 %v482
    %2592 = vmatprep.subr.mxu0 %v499
    %2593 = vmatpush1.msra.mxu0 %v498
    %2594 = vmatprep.subr.mxu0 %v515
    %2595 = vmatpush1.msra.mxu0 %v514
    %2596 = vmatprep.subr.mxu0 %v531
    %2597 = vmatpush1.msra.mxu0 %v530
    %2598 = vmatprep.subr.mxu0 %v547
    %2599 = vmatpush1.msra.mxu0 %v546
    %2600 = vmatprep.subr.mxu0 %v563
    %2601 = vmatpush1.msra.mxu0 %v562
    %2602 = vmatprep.subr.mxu0 %v579
    %2603 = vmatpush1.msra.mxu0 %v578
    %2604 = vmatprep.mubr.f32.mxu0 %v2229
    %2605 = vmatmul.mubr.f32.gmra.mrb[0].mxu0 %v2221
    %v2606 = vpop.f32.mrb[0].mxu0
    %v2607 = vadd.f32 %v2143, %v2606
    %v2608 = vpop.f32.mrb[0].mxu0
    %v2609 = vadd.f32 %v2147, %v2608
    %2610 = vdwg.mxu0
    %2611 = vmatprep.subr.mxu0 %v595
    %2612 = vmatpush1.msra.mxu0 %v594
    %2613 = vmatprep.subr.mxu0 %v611
    %2614 = vmatpush1.msra.mxu0 %v610
    %2615 = vmatprep.subr.mxu0 %v627
    %2616 = vmatpush1.msra.mxu0 %v626
    %2617 = vmatprep.subr.mxu0 %v643
    %2618 = vmatpush1.msra.mxu0 %v642
    %2619 = vmatprep.subr.mxu0 %v659
    %2620 = vmatpush1.msra.mxu0 %v658
    %2621 = vmatprep.subr.mxu0 %v675
    %2622 = vmatpush1.msra.mxu0 %v674
    %2623 = vmatprep.subr.mxu0 %v691
    %2624 = vmatpush1.msra.mxu0 %v690
    %2625 = vmatprep.subr.mxu0 %v707
    %2626 = vmatpush1.msra.mxu0 %v706
    %2627 = vmatprep.subr.mxu0 %v723
    %2628 = vmatpush1.msra.mxu0 %v722
    %2629 = vmatprep.subr.mxu0 %v739
    %2630 = vmatpush1.msra.mxu0 %v738
    %2631 = vmatprep.subr.mxu0 %v755
    %2632 = vmatpush1.msra.mxu0 %v754
    %2633 = vmatprep.subr.mxu0 %v771
    %2634 = vmatpush1.msra.mxu0 %v770
    %2635 = vmatprep.subr.mxu0 %v787
    %2636 = vmatpush1.msra.mxu0 %v786
    %2637 = vmatprep.subr.mxu0 %v803
    %2638 = vmatpush1.msra.mxu0 %v802
    %2639 = vmatprep.subr.mxu0 %v819
    %2640 = vmatpush1.msra.mxu0 %v818
    %2641 = vmatprep.subr.mxu0 %v835
    %2642 = vmatpush1.msra.mxu0 %v834
    %2643 = vmatprep.subr.mxu0 %v851
    %2644 = vmatpush1.msra.mxu0 %v850
    %2645 = vmatprep.subr.mxu0 %v867
    %2646 = vmatpush1.msra.mxu0 %v866
    %2647 = vmatprep.subr.mxu0 %v883
    %2648 = vmatpush1.msra.mxu0 %v882
    %2649 = vmatprep.subr.mxu0 %v899
    %2650 = vmatpush1.msra.mxu0 %v898
    %2651 = vmatprep.subr.mxu0 %v915
    %2652 = vmatpush1.msra.mxu0 %v914
    %2653 = vmatprep.subr.mxu0 %v931
    %2654 = vmatpush1.msra.mxu0 %v930
    %2655 = vmatprep.subr.mxu0 %v947
    %2656 = vmatpush1.msra.mxu0 %v946
    %2657 = vmatprep.subr.mxu0 %v963
    %2658 = vmatpush1.msra.mxu0 %v962
    %2659 = vmatprep.subr.mxu0 %v979
    %2660 = vmatpush1.msra.mxu0 %v978
    %2661 = vmatprep.subr.mxu0 %v995
    %2662 = vmatpush1.msra.mxu0 %v994
    %2663 = vmatprep.subr.mxu0 %v1011
    %2664 = vmatpush1.msra.mxu0 %v1010
    %2665 = vmatprep.subr.mxu0 %v1027
    %2666 = vmatpush1.msra.mxu0 %v1026
    %2667 = vmatprep.subr.mxu0 %v1043
    %2668 = vmatpush1.msra.mxu0 %v1042
    %2669 = vmatprep.subr.mxu0 %v1059
    %2670 = vmatpush1.msra.mxu0 %v1058
    %2671 = vmatprep.subr.mxu0 %v1075
    %2672 = vmatpush1.msra.mxu0 %v1074
    %2673 = vmatprep.subr.mxu0 %v1091
    %2674 = vmatpush1.msra.mxu0 %v1090
    %2675 = vmatprep.mubr.f32.mxu0 %v2230
    %2676 = vmatmul.mubr.f32.gmra.mrb[0].mxu0 %v2228
    %v2677 = vpop.f32.mrb[0].mxu0
    %v2678 = vadd.f32 %v2607, %v2677
    %v2679 = vpop.f32.mrb[0].mxu0
    %v2680 = vadd.f32 %v2609, %v2679
    %2681 = vdwg.mxu0
    %2682 = vmatprep.subr.mxu0 %v1107
    %2683 = vmatpush1.msra.mxu0 %v1106
    %2684 = vmatprep.subr.mxu0 %v1123
    %2685 = vmatpush1.msra.mxu0 %v1122
    %2686 = vmatprep.subr.mxu0 %v1139
    %2687 = vmatpush1.msra.mxu0 %v1138
    %2688 = vmatprep.subr.mxu0 %v1155
    %2689 = vmatpush1.msra.mxu0 %v1154
    %2690 = vmatprep.subr.mxu0 %v1171
    %2691 = vmatpush1.msra.mxu0 %v1170
    %2692 = vmatprep.subr.mxu0 %v1187
    %2693 = vmatpush1.msra.mxu0 %v1186
    %2694 = vmatprep.subr.mxu0 %v1203
    %2695 = vmatpush1.msra.mxu0 %v1202
    %2696 = vmatprep.subr.mxu0 %v1219
    %2697 = vmatpush1.msra.mxu0 %v1218
    %2698 = vmatprep.subr.mxu0 %v1235
    %2699 = vmatpush1.msra.mxu0 %v1234
    %2700 = vmatprep.subr.mxu0 %v1251
    %2701 = vmatpush1.msra.mxu0 %v1250
    %2702 = vmatprep.subr.mxu0 %v1267
    %2703 = vmatpush1.msra.mxu0 %v1266
    %2704 = vmatprep.subr.mxu0 %v1283
    %2705 = vmatpush1.msra.mxu0 %v1282
    %2706 = vmatprep.subr.mxu0 %v1299
    %2707 = vmatpush1.msra.mxu0 %v1298
    %2708 = vmatprep.subr.mxu0 %v1315
    %2709 = vmatpush1.msra.mxu0 %v1314
    %2710 = vmatprep.subr.mxu0 %v1331
    %2711 = vmatpush1.msra.mxu0 %v1330
    %2712 = vmatprep.subr.mxu0 %v1347
    %2713 = vmatpush1.msra.mxu0 %v1346
    %2714 = vmatprep.subr.mxu0 %v1363
    %2715 = vmatpush1.msra.mxu0 %v1362
    %2716 = vmatprep.subr.mxu0 %v1379
    %2717 = vmatpush1.msra.mxu0 %v1378
    %2718 = vmatprep.subr.mxu0 %v1395
    %2719 = vmatpush1.msra.mxu0 %v1394
    %2720 = vmatprep.subr.mxu0 %v1411
    %2721 = vmatpush1.msra.mxu0 %v1410
    %2722 = vmatprep.subr.mxu0 %v1427
    %2723 = vmatpush1.msra.mxu0 %v1426
    %2724 = vmatprep.subr.mxu0 %v1443
    %2725 = vmatpush1.msra.mxu0 %v1442
    %2726 = vmatprep.subr.mxu0 %v1459
    %2727 = vmatpush1.msra.mxu0 %v1458
    %2728 = vmatprep.subr.mxu0 %v1475
    %2729 = vmatpush1.msra.mxu0 %v1474
    %2730 = vmatprep.subr.mxu0 %v1491
    %2731 = vmatpush1.msra.mxu0 %v1490
    %2732 = vmatprep.subr.mxu0 %v1507
    %2733 = vmatpush1.msra.mxu0 %v1506
    %2734 = vmatprep.subr.mxu0 %v1523
    %2735 = vmatpush1.msra.mxu0 %v1522
    %2736 = vmatprep.subr.mxu0 %v1539
    %2737 = vmatpush1.msra.mxu0 %v1538
    %2738 = vmatprep.subr.mxu0 %v1555
    %2739 = vmatpush1.msra.mxu0 %v1554
    %2740 = vmatprep.subr.mxu0 %v1571
    %2741 = vmatpush1.msra.mxu0 %v1570
    %2742 = vmatprep.subr.mxu0 %v1587
    %2743 = vmatpush1.msra.mxu0 %v1586
    %2744 = vmatprep.subr.mxu0 %v1603
    %2745 = vmatpush1.msra.mxu0 %v1602
    %2746 = vmatprep.mubr.f32.mxu0 %v2246
    %2747 = vmatmul.mubr.f32.gmra.mrb[0].mxu0 %v2238
    %v2748 = vpop.f32.mrb[0].mxu0
    %v2749 = vadd.f32 %v2678, %v2748
    %v2750 = vpop.f32.mrb[0].mxu0
    %v2751 = vadd.f32 %v2680, %v2750
    %2752 = vdwg.mxu0
    %2753 = vmatprep.subr.mxu0 %v1619
    %2754 = vmatpush1.msra.mxu0 %v1618
    %2755 = vmatprep.subr.mxu0 %v1635
    %2756 = vmatpush1.msra.mxu0 %v1634
    %2757 = vmatprep.subr.mxu0 %v1651
    %2758 = vmatpush1.msra.mxu0 %v1650
    %2759 = vmatprep.subr.mxu0 %v1667
    %2760 = vmatpush1.msra.mxu0 %v1666
    %2761 = vmatprep.subr.mxu0 %v1683
    %2762 = vmatpush1.msra.mxu0 %v1682
    %2763 = vmatprep.subr.mxu0 %v1699
    %2764 = vmatpush1.msra.mxu0 %v1698
    %2765 = vmatprep.subr.mxu0 %v1715
    %2766 = vmatpush1.msra.mxu0 %v1714
    %2767 = vmatprep.subr.mxu0 %v1731
    %2768 = vmatpush1.msra.mxu0 %v1730
    %2769 = vmatprep.subr.mxu0 %v1747
    %2770 = vmatpush1.msra.mxu0 %v1746
    %2771 = vmatprep.subr.mxu0 %v1763
    %2772 = vmatpush1.msra.mxu0 %v1762
    %2773 = vmatprep.subr.mxu0 %v1779
    %2774 = vmatpush1.msra.mxu0 %v1778
    %2775 = vmatprep.subr.mxu0 %v1795
    %2776 = vmatpush1.msra.mxu0 %v1794
    %2777 = vmatprep.subr.mxu0 %v1811
    %2778 = vmatpush1.msra.mxu0 %v1810
    %2779 = vmatprep.subr.mxu0 %v1827
    %2780 = vmatpush1.msra.mxu0 %v1826
    %2781 = vmatprep.subr.mxu0 %v1843
    %2782 = vmatpush1.msra.mxu0 %v1842
    %2783 = vmatprep.subr.mxu0 %v1859
    %2784 = vmatpush1.msra.mxu0 %v1858
    %2785 = vmatprep.subr.mxu0 %v1875
    %2786 = vmatpush1.msra.mxu0 %v1874
    %2787 = vmatprep.subr.mxu0 %v1891
    %2788 = vmatpush1.msra.mxu0 %v1890
    %2789 = vmatprep.subr.mxu0 %v1907
    %2790 = vmatpush1.msra.mxu0 %v1906
    %2791 = vmatprep.subr.mxu0 %v1923
    %2792 = vmatpush1.msra.mxu0 %v1922
    %2793 = vmatprep.subr.mxu0 %v1939
    %2794 = vmatpush1.msra.mxu0 %v1938
    %2795 = vmatprep.subr.mxu0 %v1955
    %2796 = vmatpush1.msra.mxu0 %v1954
    %2797 = vmatprep.subr.mxu0 %v1971
    %2798 = vmatpush1.msra.mxu0 %v1970
    %2799 = vmatprep.subr.mxu0 %v1987
    %2800 = vmatpush1.msra.mxu0 %v1986
    %2801 = vmatprep.subr.mxu0 %v2003
    %2802 = vmatpush1.msra.mxu0 %v2002
    %2803 = vmatprep.subr.mxu0 %v2019
    %2804 = vmatpush1.msra.mxu0 %v2018
    %2805 = vmatprep.subr.mxu0 %v2035
    %2806 = vmatpush1.msra.mxu0 %v2034
    %2807 = vmatprep.subr.mxu0 %v2051
    %2808 = vmatpush1.msra.mxu0 %v2050
    %2809 = vmatprep.subr.mxu0 %v2067
    %2810 = vmatpush1.msra.mxu0 %v2066
    %2811 = vmatprep.subr.mxu0 %v2083
    %2812 = vmatpush1.msra.mxu0 %v2082
    %2813 = vmatprep.subr.mxu0 %v2099
    %2814 = vmatpush1.msra.mxu0 %v2098
    %2815 = vmatprep.subr.mxu0 %v2115
    %2816 = vmatpush1.msra.mxu0 %v2114
    %2817 = vmatprep.mubr.f32.mxu0 %v2247
    %2818 = vmatmul.mubr.f32.gmra.mrb[0].mxu0 %v2245
    %v2819 = vpop.f32.mrb[0].mxu0
    %v2820 = vadd.f32 %v2749, %v2819
    %v2821 = vpop.f32.mrb[0].mxu0
    %v2822 = vadd.f32 %v2751, %v2821
    %2823 = vdwg.mxu0
    %2824 = vmatprep.subr.mxu0 %v85
    %2825 = vmatpush1.msra.mxu0 %v84
    %2826 = vmatprep.subr.mxu0 %v101
    %2827 = vmatpush1.msra.mxu0 %v100
    %2828 = vmatprep.subr.mxu0 %v117
    %2829 = vmatpush1.msra.mxu0 %v116
    %2830 = vmatprep.subr.mxu0 %v133
    %2831 = vmatpush1.msra.mxu0 %v132
    %2832 = vmatprep.subr.mxu0 %v149
    %2833 = vmatpush1.msra.mxu0 %v148
    %2834 = vmatprep.subr.mxu0 %v165
    %2835 = vmatpush1.msra.mxu0 %v164
    %2836 = vmatprep.subr.mxu0 %v181
    %2837 = vmatpush1.msra.mxu0 %v180
    %2838 = vmatprep.subr.mxu0 %v197
    %2839 = vmatpush1.msra.mxu0 %v196
    %2840 = vmatprep.subr.mxu0 %v213
    %2841 = vmatpush1.msra.mxu0 %v212
    %2842 = vmatprep.subr.mxu0 %v229
    %2843 = vmatpush1.msra.mxu0 %v228
    %2844 = vmatprep.subr.mxu0 %v245
    %2845 = vmatpush1.msra.mxu0 %v244
    %2846 = vmatprep.subr.mxu0 %v261
    %2847 = vmatpush1.msra.mxu0 %v260
    %2848 = vmatprep.subr.mxu0 %v277
    %2849 = vmatpush1.msra.mxu0 %v276
    %2850 = vmatprep.subr.mxu0 %v293
    %2851 = vmatpush1.msra.mxu0 %v292
    %2852 = vmatprep.subr.mxu0 %v309
    %2853 = vmatpush1.msra.mxu0 %v308
    %2854 = vmatprep.subr.mxu0 %v325
    %2855 = vmatpush1.msra.mxu0 %v324
    %2856 = vmatprep.subr.mxu0 %v341
    %2857 = vmatpush1.msra.mxu0 %v340
    %2858 = vmatprep.subr.mxu0 %v357
    %2859 = vmatpush1.msra.mxu0 %v356
    %2860 = vmatprep.subr.mxu0 %v373
    %2861 = vmatpush1.msra.mxu0 %v372
    %2862 = vmatprep.subr.mxu0 %v389
    %2863 = vmatpush1.msra.mxu0 %v388
    %2864 = vmatprep.subr.mxu0 %v405
    %2865 = vmatpush1.msra.mxu0 %v404
    %2866 = vmatprep.subr.mxu0 %v421
    %2867 = vmatpush1.msra.mxu0 %v420
    %2868 = vmatprep.subr.mxu0 %v437
    %2869 = vmatpush1.msra.mxu0 %v436
    %2870 = vmatprep.subr.mxu0 %v453
    %2871 = vmatpush1.msra.mxu0 %v452
    %2872 = vmatprep.subr.mxu0 %v469
    %2873 = vmatpush1.msra.mxu0 %v468
    %2874 = vmatprep.subr.mxu0 %v485
    %2875 = vmatpush1.msra.mxu0 %v484
    %2876 = vmatprep.subr.mxu0 %v501
    %2877 = vmatpush1.msra.mxu0 %v500
    %2878 = vmatprep.subr.mxu0 %v517
    %2879 = vmatpush1.msra.mxu0 %v516
    %2880 = vmatprep.subr.mxu0 %v533
    %2881 = vmatpush1.msra.mxu0 %v532
    %2882 = vmatprep.subr.mxu0 %v549
    %2883 = vmatpush1.msra.mxu0 %v548
    %2884 = vmatprep.subr.mxu0 %v565
    %2885 = vmatpush1.msra.mxu0 %v564
    %2886 = vmatprep.subr.mxu0 %v581
    %2887 = vmatpush1.msra.mxu0 %v580
    %2888 = vmatprep.mubr.f32.mxu0 %v2229
    %2889 = vmatmul.mubr.f32.gmra.mrb[0].mxu0 %v2221
    %v2890 = vpop.f32.mrb[0].mxu0
    %v2891 = vadd.f32 %v2151, %v2890
    %v2892 = vpop.f32.mrb[0].mxu0
    %v2893 = vadd.f32 %v2155, %v2892
    %2894 = vdwg.mxu0
    %2895 = vmatprep.subr.mxu0 %v597
    %2896 = vmatpush1.msra.mxu0 %v596
    %2897 = vmatprep.subr.mxu0 %v613
    %2898 = vmatpush1.msra.mxu0 %v612
    %2899 = vmatprep.subr.mxu0 %v629
    %2900 = vmatpush1.msra.mxu0 %v628
    %2901 = vmatprep.subr.mxu0 %v645
    %2902 = vmatpush1.msra.mxu0 %v644
    %2903 = vmatprep.subr.mxu0 %v661
    %2904 = vmatpush1.msra.mxu0 %v660
    %2905 = vmatprep.subr.mxu0 %v677
    %2906 = vmatpush1.msra.mxu0 %v676
    %2907 = vmatprep.subr.mxu0 %v693
    %2908 = vmatpush1.msra.mxu0 %v692
    %2909 = vmatprep.subr.mxu0 %v709
    %2910 = vmatpush1.msra.mxu0 %v708
    %2911 = vmatprep.subr.mxu0 %v725
    %2912 = vmatpush1.msra.mxu0 %v724
    %2913 = vmatprep.subr.mxu0 %v741
    %2914 = vmatpush1.msra.mxu0 %v740
    %2915 = vmatprep.subr.mxu0 %v757
    %2916 = vmatpush1.msra.mxu0 %v756
    %2917 = vmatprep.subr.mxu0 %v773
    %2918 = vmatpush1.msra.mxu0 %v772
    %2919 = vmatprep.subr.mxu0 %v789
    %2920 = vmatpush1.msra.mxu0 %v788
    %2921 = vmatprep.subr.mxu0 %v805
    %2922 = vmatpush1.msra.mxu0 %v804
    %2923 = vmatprep.subr.mxu0 %v821
    %2924 = vmatpush1.msra.mxu0 %v820
    %2925 = vmatprep.subr.mxu0 %v837
    %2926 = vmatpush1.msra.mxu0 %v836
    %2927 = vmatprep.subr.mxu0 %v853
    %2928 = vmatpush1.msra.mxu0 %v852
    %2929 = vmatprep.subr.mxu0 %v869
    %2930 = vmatpush1.msra.mxu0 %v868
    %2931 = vmatprep.subr.mxu0 %v885
    %2932 = vmatpush1.msra.mxu0 %v884
    %2933 = vmatprep.subr.mxu0 %v901
    %2934 = vmatpush1.msra.mxu0 %v900
    %2935 = vmatprep.subr.mxu0 %v917
    %2936 = vmatpush1.msra.mxu0 %v916
    %2937 = vmatprep.subr.mxu0 %v933
    %2938 = vmatpush1.msra.mxu0 %v932
    %2939 = vmatprep.subr.mxu0 %v949
    %2940 = vmatpush1.msra.mxu0 %v948
    %2941 = vmatprep.subr.mxu0 %v965
    %2942 = vmatpush1.msra.mxu0 %v964
    %2943 = vmatprep.subr.mxu0 %v981
    %2944 = vmatpush1.msra.mxu0 %v980
    %2945 = vmatprep.subr.mxu0 %v997
    %2946 = vmatpush1.msra.mxu0 %v996
    %2947 = vmatprep.subr.mxu0 %v1013
    %2948 = vmatpush1.msra.mxu0 %v1012
    %2949 = vmatprep.subr.mxu0 %v1029
    %2950 = vmatpush1.msra.mxu0 %v1028
    %2951 = vmatprep.subr.mxu0 %v1045
    %2952 = vmatpush1.msra.mxu0 %v1044
    %2953 = vmatprep.subr.mxu0 %v1061
    %2954 = vmatpush1.msra.mxu0 %v1060
    %2955 = vmatprep.subr.mxu0 %v1077
    %2956 = vmatpush1.msra.mxu0 %v1076
    %2957 = vmatprep.subr.mxu0 %v1093
    %2958 = vmatpush1.msra.mxu0 %v1092
    %2959 = vmatprep.mubr.f32.mxu0 %v2230
    %2960 = vmatmul.mubr.f32.gmra.mrb[0].mxu0 %v2228
    %v2961 = vpop.f32.mrb[0].mxu0
    %v2962 = vadd.f32 %v2891, %v2961
    %v2963 = vpop.f32.mrb[0].mxu0
    %v2964 = vadd.f32 %v2893, %v2963
    %2965 = vdwg.mxu0
    %2966 = vmatprep.subr.mxu0 %v1109
    %2967 = vmatpush1.msra.mxu0 %v1108
    %2968 = vmatprep.subr.mxu0 %v1125
    %2969 = vmatpush1.msra.mxu0 %v1124
    %2970 = vmatprep.subr.mxu0 %v1141
    %2971 = vmatpush1.msra.mxu0 %v1140
    %2972 = vmatprep.subr.mxu0 %v1157
    %2973 = vmatpush1.msra.mxu0 %v1156
    %2974 = vmatprep.subr.mxu0 %v1173
    %2975 = vmatpush1.msra.mxu0 %v1172
    %2976 = vmatprep.subr.mxu0 %v1189
    %2977 = vmatpush1.msra.mxu0 %v1188
    %2978 = vmatprep.subr.mxu0 %v1205
    %2979 = vmatpush1.msra.mxu0 %v1204
    %2980 = vmatprep.subr.mxu0 %v1221
    %2981 = vmatpush1.msra.mxu0 %v1220
    %2982 = vmatprep.subr.mxu0 %v1237
    %2983 = vmatpush1.msra.mxu0 %v1236
    %2984 = vmatprep.subr.mxu0 %v1253
    %2985 = vmatpush1.msra.mxu0 %v1252
    %2986 = vmatprep.subr.mxu0 %v1269
    %2987 = vmatpush1.msra.mxu0 %v1268
    %2988 = vmatprep.subr.mxu0 %v1285
    %2989 = vmatpush1.msra.mxu0 %v1284
    %2990 = vmatprep.subr.mxu0 %v1301
    %2991 = vmatpush1.msra.mxu0 %v1300
    %2992 = vmatprep.subr.mxu0 %v1317
    %2993 = vmatpush1.msra.mxu0 %v1316
    %2994 = vmatprep.subr.mxu0 %v1333
    %2995 = vmatpush1.msra.mxu0 %v1332
    %2996 = vmatprep.subr.mxu0 %v1349
    %2997 = vmatpush1.msra.mxu0 %v1348
    %2998 = vmatprep.subr.mxu0 %v1365
    %2999 = vmatpush1.msra.mxu0 %v1364
    %3000 = vmatprep.subr.mxu0 %v1381
    %3001 = vmatpush1.msra.mxu0 %v1380
    %3002 = vmatprep.subr.mxu0 %v1397
    %3003 = vmatpush1.msra.mxu0 %v1396
    %3004 = vmatprep.subr.mxu0 %v1413
    %3005 = vmatpush1.msra.mxu0 %v1412
    %3006 = vmatprep.subr.mxu0 %v1429
    %3007 = vmatpush1.msra.mxu0 %v1428
    %3008 = vmatprep.subr.mxu0 %v1445
    %3009 = vmatpush1.msra.mxu0 %v1444
    %3010 = vmatprep.subr.mxu0 %v1461
    %3011 = vmatpush1.msra.mxu0 %v1460
    %3012 = vmatprep.subr.mxu0 %v1477
    %3013 = vmatpush1.msra.mxu0 %v1476
    %3014 = vmatprep.subr.mxu0 %v1493
    %3015 = vmatpush1.msra.mxu0 %v1492
    %3016 = vmatprep.subr.mxu0 %v1509
    %3017 = vmatpush1.msra.mxu0 %v1508
    %3018 = vmatprep.subr.mxu0 %v1525
    %3019 = vmatpush1.msra.mxu0 %v1524
    %3020 = vmatprep.subr.mxu0 %v1541
    %3021 = vmatpush1.msra.mxu0 %v1540
    %3022 = vmatprep.subr.mxu0 %v1557
    %3023 = vmatpush1.msra.mxu0 %v1556
    %3024 = vmatprep.subr.mxu0 %v1573
    %3025 = vmatpush1.msra.mxu0 %v1572
    %3026 = vmatprep.subr.mxu0 %v1589
    %3027 = vmatpush1.msra.mxu0 %v1588
    %3028 = vmatprep.subr.mxu0 %v1605
    %3029 = vmatpush1.msra.mxu0 %v1604
    %3030 = vmatprep.mubr.f32.mxu0 %v2246
    %3031 = vmatmul.mubr.f32.gmra.mrb[0].mxu0 %v2238
    %v3032 = vpop.f32.mrb[0].mxu0
    %v3033 = vadd.f32 %v2962, %v3032
    %v3034 = vpop.f32.mrb[0].mxu0
    %v3035 = vadd.f32 %v2964, %v3034
    %3036 = vdwg.mxu0
    %3037 = vmatprep.subr.mxu0 %v1621
    %3038 = vmatpush1.msra.mxu0 %v1620
    %3039 = vmatprep.subr.mxu0 %v1637
    %3040 = vmatpush1.msra.mxu0 %v1636
    %3041 = vmatprep.subr.mxu0 %v1653
    %3042 = vmatpush1.msra.mxu0 %v1652
    %3043 = vmatprep.subr.mxu0 %v1669
    %3044 = vmatpush1.msra.mxu0 %v1668
    %3045 = vmatprep.subr.mxu0 %v1685
    %3046 = vmatpush1.msra.mxu0 %v1684
    %3047 = vmatprep.subr.mxu0 %v1701
    %3048 = vmatpush1.msra.mxu0 %v1700
    %3049 = vmatprep.subr.mxu0 %v1717
    %3050 = vmatpush1.msra.mxu0 %v1716
    %3051 = vmatprep.subr.mxu0 %v1733
    %3052 = vmatpush1.msra.mxu0 %v1732
    %3053 = vmatprep.subr.mxu0 %v1749
    %3054 = vmatpush1.msra.mxu0 %v1748
    %3055 = vmatprep.subr.mxu0 %v1765
    %3056 = vmatpush1.msra.mxu0 %v1764
    %3057 = vmatprep.subr.mxu0 %v1781
    %3058 = vmatpush1.msra.mxu0 %v1780
    %3059 = vmatprep.subr.mxu0 %v1797
    %3060 = vmatpush1.msra.mxu0 %v1796
    %3061 = vmatprep.subr.mxu0 %v1813
    %3062 = vmatpush1.msra.mxu0 %v1812
    %3063 = vmatprep.subr.mxu0 %v1829
    %3064 = vmatpush1.msra.mxu0 %v1828
    %3065 = vmatprep.subr.mxu0 %v1845
    %3066 = vmatpush1.msra.mxu0 %v1844
    %3067 = vmatprep.subr.mxu0 %v1861
    %3068 = vmatpush1.msra.mxu0 %v1860
    %3069 = vmatprep.subr.mxu0 %v1877
    %3070 = vmatpush1.msra.mxu0 %v1876
    %3071 = vmatprep.subr.mxu0 %v1893
    %3072 = vmatpush1.msra.mxu0 %v1892
    %3073 = vmatprep.subr.mxu0 %v1909
    %3074 = vmatpush1.msra.mxu0 %v1908
    %3075 = vmatprep.subr.mxu0 %v1925
    %3076 = vmatpush1.msra.mxu0 %v1924
    %3077 = vmatprep.subr.mxu0 %v1941
    %3078 = vmatpush1.msra.mxu0 %v1940
    %3079 = vmatprep.subr.mxu0 %v1957
    %3080 = vmatpush1.msra.mxu0 %v1956
    %3081 = vmatprep.subr.mxu0 %v1973
    %3082 = vmatpush1.msra.mxu0 %v1972
    %3083 = vmatprep.subr.mxu0 %v1989
    %3084 = vmatpush1.msra.mxu0 %v1988
    %3085 = vmatprep.subr.mxu0 %v2005
    %3086 = vmatpush1.msra.mxu0 %v2004
    %3087 = vmatprep.subr.mxu0 %v2021
    %3088 = vmatpush1.msra.mxu0 %v2020
    %3089 = vmatprep.subr.mxu0 %v2037
    %3090 = vmatpush1.msra.mxu0 %v2036
    %3091 = vmatprep.subr.mxu0 %v2053
    %3092 = vmatpush1.msra.mxu0 %v2052
    %3093 = vmatprep.subr.mxu0 %v2069
    %3094 = vmatpush1.msra.mxu0 %v2068
    %3095 = vmatprep.subr.mxu0 %v2085
    %3096 = vmatpush1.msra.mxu0 %v2084
    %3097 = vmatprep.subr.mxu0 %v2101
    %3098 = vmatpush1.msra.mxu0 %v2100
    %3099 = vmatprep.subr.mxu0 %v2117
    %3100 = vmatpush1.msra.mxu0 %v2116
    %3101 = vmatprep.mubr.f32.mxu0 %v2247
    %3102 = vmatmul.mubr.f32.gmra.mrb[0].mxu0 %v2245
    %v3103 = vpop.f32.mrb[0].mxu0
    %v3104 = vadd.f32 %v3033, %v3103
    %v3105 = vpop.f32.mrb[0].mxu0
    %v3106 = vadd.f32 %v3035, %v3105
    %3107 = vdwg.mxu0
    %3108 = vmatprep.subr.mxu0 %v87
    %3109 = vmatpush1.msra.mxu0 %v86
    %3110 = vmatprep.subr.mxu0 %v103
    %3111 = vmatpush1.msra.mxu0 %v102
    %3112 = vmatprep.subr.mxu0 %v119
    %3113 = vmatpush1.msra.mxu0 %v118
    %3114 = vmatprep.subr.mxu0 %v135
    %3115 = vmatpush1.msra.mxu0 %v134
    %3116 = vmatprep.subr.mxu0 %v151
    %3117 = vmatpush1.msra.mxu0 %v150
    %3118 = vmatprep.subr.mxu0 %v167
    %3119 = vmatpush1.msra.mxu0 %v166
    %3120 = vmatprep.subr.mxu0 %v183
    %3121 = vmatpush1.msra.mxu0 %v182
    %3122 = vmatprep.subr.mxu0 %v199
    %3123 = vmatpush1.msra.mxu0 %v198
    %3124 = vmatprep.subr.mxu0 %v215
    %3125 = vmatpush1.msra.mxu0 %v214
    %3126 = vmatprep.subr.mxu0 %v231
    %3127 = vmatpush1.msra.mxu0 %v230
    %3128 = vmatprep.subr.mxu0 %v247
    %3129 = vmatpush1.msra.mxu0 %v246
    %3130 = vmatprep.subr.mxu0 %v263
    %3131 = vmatpush1.msra.mxu0 %v262
    %3132 = vmatprep.subr.mxu0 %v279
    %3133 = vmatpush1.msra.mxu0 %v278
    %3134 = vmatprep.subr.mxu0 %v295
    %3135 = vmatpush1.msra.mxu0 %v294
    %3136 = vmatprep.subr.mxu0 %v311
    %3137 = vmatpush1.msra.mxu0 %v310
    %3138 = vmatprep.subr.mxu0 %v327
    %3139 = vmatpush1.msra.mxu0 %v326
    %3140 = vmatprep.subr.mxu0 %v343
    %3141 = vmatpush1.msra.mxu0 %v342
    %3142 = vmatprep.subr.mxu0 %v359
    %3143 = vmatpush1.msra.mxu0 %v358
    %3144 = vmatprep.subr.mxu0 %v375
    %3145 = vmatpush1.msra.mxu0 %v374
    %3146 = vmatprep.subr.mxu0 %v391
    %3147 = vmatpush1.msra.mxu0 %v390
    %3148 = vmatprep.subr.mxu0 %v407
    %3149 = vmatpush1.msra.mxu0 %v406
    %3150 = vmatprep.subr.mxu0 %v423
    %3151 = vmatpush1.msra.mxu0 %v422
    %3152 = vmatprep.subr.mxu0 %v439
    %3153 = vmatpush1.msra.mxu0 %v438
    %3154 = vmatprep.subr.mxu0 %v455
    %3155 = vmatpush1.msra.mxu0 %v454
    %3156 = vmatprep.subr.mxu0 %v471
    %3157 = vmatpush1.msra.mxu0 %v470
    %3158 = vmatprep.subr.mxu0 %v487
    %3159 = vmatpush1.msra.mxu0 %v486
    %3160 = vmatprep.subr.mxu0 %v503
    %3161 = vmatpush1.msra.mxu0 %v502
    %3162 = vmatprep.subr.mxu0 %v519
    %3163 = vmatpush1.msra.mxu0 %v518
    %3164 = vmatprep.subr.mxu0 %v535
    %3165 = vmatpush1.msra.mxu0 %v534
    %3166 = vmatprep.subr.mxu0 %v551
    %3167 = vmatpush1.msra.mxu0 %v550
    %3168 = vmatprep.subr.mxu0 %v567
    %3169 = vmatpush1.msra.mxu0 %v566
    %3170 = vmatprep.subr.mxu0 %v583
    %3171 = vmatpush1.msra.mxu0 %v582
    %3172 = vmatprep.mubr.f32.mxu0 %v2229
    %3173 = vmatmul.mubr.f32.gmra.mrb[0].mxu0 %v2221
    %v3174 = vpop.f32.mrb[0].mxu0
    %v3175 = vadd.f32 %v2159, %v3174
    %v3176 = vpop.f32.mrb[0].mxu0
    %v3177 = vadd.f32 %v2163, %v3176
    %3178 = vdwg.mxu0
    %3179 = vmatprep.subr.mxu0 %v599
    %3180 = vmatpush1.msra.mxu0 %v598
    %3181 = vmatprep.subr.mxu0 %v615
    %3182 = vmatpush1.msra.mxu0 %v614
    %3183 = vmatprep.subr.mxu0 %v631
    %3184 = vmatpush1.msra.mxu0 %v630
    %3185 = vmatprep.subr.mxu0 %v647
    %3186 = vmatpush1.msra.mxu0 %v646
    %3187 = vmatprep.subr.mxu0 %v663
    %3188 = vmatpush1.msra.mxu0 %v662
    %3189 = vmatprep.subr.mxu0 %v679
    %3190 = vmatpush1.msra.mxu0 %v678
    %3191 = vmatprep.subr.mxu0 %v695
    %3192 = vmatpush1.msra.mxu0 %v694
    %3193 = vmatprep.subr.mxu0 %v711
    %3194 = vmatpush1.msra.mxu0 %v710
    %3195 = vmatprep.subr.mxu0 %v727
    %3196 = vmatpush1.msra.mxu0 %v726
    %3197 = vmatprep.subr.mxu0 %v743
    %3198 = vmatpush1.msra.mxu0 %v742
    %3199 = vmatprep.subr.mxu0 %v759
    %3200 = vmatpush1.msra.mxu0 %v758
    %3201 = vmatprep.subr.mxu0 %v775
    %3202 = vmatpush1.msra.mxu0 %v774
    %3203 = vmatprep.subr.mxu0 %v791
    %3204 = vmatpush1.msra.mxu0 %v790
    %3205 = vmatprep.subr.mxu0 %v807
    %3206 = vmatpush1.msra.mxu0 %v806
    %3207 = vmatprep.subr.mxu0 %v823
    %3208 = vmatpush1.msra.mxu0 %v822
    %3209 = vmatprep.subr.mxu0 %v839
    %3210 = vmatpush1.msra.mxu0 %v838
    %3211 = vmatprep.subr.mxu0 %v855
    %3212 = vmatpush1.msra.mxu0 %v854
    %3213 = vmatprep.subr.mxu0 %v871
    %3214 = vmatpush1.msra.mxu0 %v870
    %3215 = vmatprep.subr.mxu0 %v887
    %3216 = vmatpush1.msra.mxu0 %v886
    %3217 = vmatprep.subr.mxu0 %v903
    %3218 = vmatpush1.msra.mxu0 %v902
    %3219 = vmatprep.subr.mxu0 %v919
    %3220 = vmatpush1.msra.mxu0 %v918
    %3221 = vmatprep.subr.mxu0 %v935
    %3222 = vmatpush1.msra.mxu0 %v934
    %3223 = vmatprep.subr.mxu0 %v951
    %3224 = vmatpush1.msra.mxu0 %v950
    %3225 = vmatprep.subr.mxu0 %v967
    %3226 = vmatpush1.msra.mxu0 %v966
    %3227 = vmatprep.subr.mxu0 %v983
    %3228 = vmatpush1.msra.mxu0 %v982
    %3229 = vmatprep.subr.mxu0 %v999
    %3230 = vmatpush1.msra.mxu0 %v998
    %3231 = vmatprep.subr.mxu0 %v1015
    %3232 = vmatpush1.msra.mxu0 %v1014
    %3233 = vmatprep.subr.mxu0 %v1031
    %3234 = vmatpush1.msra.mxu0 %v1030
    %3235 = vmatprep.subr.mxu0 %v1047
    %3236 = vmatpush1.msra.mxu0 %v1046
    %3237 = vmatprep.subr.mxu0 %v1063
    %3238 = vmatpush1.msra.mxu0 %v1062
    %3239 = vmatprep.subr.mxu0 %v1079
    %3240 = vmatpush1.msra.mxu0 %v1078
    %3241 = vmatprep.subr.mxu0 %v1095
    %3242 = vmatpush1.msra.mxu0 %v1094
    %3243 = vmatprep.mubr.f32.mxu0 %v2230
    %3244 = vmatmul.mubr.f32.gmra.mrb[0].mxu0 %v2228
    %v3245 = vpop.f32.mrb[0].mxu0
    %v3246 = vadd.f32 %v3175, %v3245
    %v3247 = vpop.f32.mrb[0].mxu0
    %v3248 = vadd.f32 %v3177, %v3247
    %3249 = vdwg.mxu0
    %3250 = vmatprep.subr.mxu0 %v1111
    %3251 = vmatpush1.msra.mxu0 %v1110
    %3252 = vmatprep.subr.mxu0 %v1127
    %3253 = vmatpush1.msra.mxu0 %v1126
    %3254 = vmatprep.subr.mxu0 %v1143
    %3255 = vmatpush1.msra.mxu0 %v1142
    %3256 = vmatprep.subr.mxu0 %v1159
    %3257 = vmatpush1.msra.mxu0 %v1158
    %3258 = vmatprep.subr.mxu0 %v1175
    %3259 = vmatpush1.msra.mxu0 %v1174
    %3260 = vmatprep.subr.mxu0 %v1191
    %3261 = vmatpush1.msra.mxu0 %v1190
    %3262 = vmatprep.subr.mxu0 %v1207
    %3263 = vmatpush1.msra.mxu0 %v1206
    %3264 = vmatprep.subr.mxu0 %v1223
    %3265 = vmatpush1.msra.mxu0 %v1222
    %3266 = vmatprep.subr.mxu0 %v1239
    %3267 = vmatpush1.msra.mxu0 %v1238
    %3268 = vmatprep.subr.mxu0 %v1255
    %3269 = vmatpush1.msra.mxu0 %v1254
    %3270 = vmatprep.subr.mxu0 %v1271
    %3271 = vmatpush1.msra.mxu0 %v1270
    %3272 = vmatprep.subr.mxu0 %v1287
    %3273 = vmatpush1.msra.mxu0 %v1286
    %3274 = vmatprep.subr.mxu0 %v1303
    %3275 = vmatpush1.msra.mxu0 %v1302
    %3276 = vmatprep.subr.mxu0 %v1319
    %3277 = vmatpush1.msra.mxu0 %v1318
    %3278 = vmatprep.subr.mxu0 %v1335
    %3279 = vmatpush1.msra.mxu0 %v1334
    %3280 = vmatprep.subr.mxu0 %v1351
    %3281 = vmatpush1.msra.mxu0 %v1350
    %3282 = vmatprep.subr.mxu0 %v1367
    %3283 = vmatpush1.msra.mxu0 %v1366
    %3284 = vmatprep.subr.mxu0 %v1383
    %3285 = vmatpush1.msra.mxu0 %v1382
    %3286 = vmatprep.subr.mxu0 %v1399
    %3287 = vmatpush1.msra.mxu0 %v1398
    %3288 = vmatprep.subr.mxu0 %v1415
    %3289 = vmatpush1.msra.mxu0 %v1414
    %3290 = vmatprep.subr.mxu0 %v1431
    %3291 = vmatpush1.msra.mxu0 %v1430
    %3292 = vmatprep.subr.mxu0 %v1447
    %3293 = vmatpush1.msra.mxu0 %v1446
    %3294 = vmatprep.subr.mxu0 %v1463
    %3295 = vmatpush1.msra.mxu0 %v1462
    %3296 = vmatprep.subr.mxu0 %v1479
    %3297 = vmatpush1.msra.mxu0 %v1478
    %3298 = vmatprep.subr.mxu0 %v1495
    %3299 = vmatpush1.msra.mxu0 %v1494
    %3300 = vmatprep.subr.mxu0 %v1511
    %3301 = vmatpush1.msra.mxu0 %v1510
    %3302 = vmatprep.subr.mxu0 %v1527
    %3303 = vmatpush1.msra.mxu0 %v1526
    %3304 = vmatprep.subr.mxu0 %v1543
    %3305 = vmatpush1.msra.mxu0 %v1542
    %3306 = vmatprep.subr.mxu0 %v1559
    %3307 = vmatpush1.msra.mxu0 %v1558
    %3308 = vmatprep.subr.mxu0 %v1575
    %3309 = vmatpush1.msra.mxu0 %v1574
    %3310 = vmatprep.subr.mxu0 %v1591
    %3311 = vmatpush1.msra.mxu0 %v1590
    %3312 = vmatprep.subr.mxu0 %v1607
    %3313 = vmatpush1.msra.mxu0 %v1606
    %3314 = vmatprep.mubr.f32.mxu0 %v2246
    %3315 = vmatmul.mubr.f32.gmra.mrb[0].mxu0 %v2238
    %v3316 = vpop.f32.mrb[0].mxu0
    %v3317 = vadd.f32 %v3246, %v3316
    %v3318 = vpop.f32.mrb[0].mxu0
    %v3319 = vadd.f32 %v3248, %v3318
    %3320 = vdwg.mxu0
    %3321 = vmatprep.subr.mxu0 %v1623
    %3322 = vmatpush1.msra.mxu0 %v1622
    %3323 = vmatprep.subr.mxu0 %v1639
    %3324 = vmatpush1.msra.mxu0 %v1638
    %3325 = vmatprep.subr.mxu0 %v1655
    %3326 = vmatpush1.msra.mxu0 %v1654
    %3327 = vmatprep.subr.mxu0 %v1671
    %3328 = vmatpush1.msra.mxu0 %v1670
    %3329 = vmatprep.subr.mxu0 %v1687
    %3330 = vmatpush1.msra.mxu0 %v1686
    %3331 = vmatprep.subr.mxu0 %v1703
    %3332 = vmatpush1.msra.mxu0 %v1702
    %3333 = vmatprep.subr.mxu0 %v1719
    %3334 = vmatpush1.msra.mxu0 %v1718
    %3335 = vmatprep.subr.mxu0 %v1735
    %3336 = vmatpush1.msra.mxu0 %v1734
    %3337 = vmatprep.subr.mxu0 %v1751
    %3338 = vmatpush1.msra.mxu0 %v1750
    %3339 = vmatprep.subr.mxu0 %v1767
    %3340 = vmatpush1.msra.mxu0 %v1766
    %3341 = vmatprep.subr.mxu0 %v1783
    %3342 = vmatpush1.msra.mxu0 %v1782
    %3343 = vmatprep.subr.mxu0 %v1799
    %3344 = vmatpush1.msra.mxu0 %v1798
    %3345 = vmatprep.subr.mxu0 %v1815
    %3346 = vmatpush1.msra.mxu0 %v1814
    %3347 = vmatprep.subr.mxu0 %v1831
    %3348 = vmatpush1.msra.mxu0 %v1830
    %3349 = vmatprep.subr.mxu0 %v1847
    %3350 = vmatpush1.msra.mxu0 %v1846
    %3351 = vmatprep.subr.mxu0 %v1863
    %3352 = vmatpush1.msra.mxu0 %v1862
    %3353 = vmatprep.subr.mxu0 %v1879
    %3354 = vmatpush1.msra.mxu0 %v1878
    %3355 = vmatprep.subr.mxu0 %v1895
    %3356 = vmatpush1.msra.mxu0 %v1894
    %3357 = vmatprep.subr.mxu0 %v1911
    %3358 = vmatpush1.msra.mxu0 %v1910
    %3359 = vmatprep.subr.mxu0 %v1927
    %3360 = vmatpush1.msra.mxu0 %v1926
    %3361 = vmatprep.subr.mxu0 %v1943
    %3362 = vmatpush1.msra.mxu0 %v1942
    %3363 = vmatprep.subr.mxu0 %v1959
    %3364 = vmatpush1.msra.mxu0 %v1958
    %3365 = vmatprep.subr.mxu0 %v1975
    %3366 = vmatpush1.msra.mxu0 %v1974
    %3367 = vmatprep.subr.mxu0 %v1991
    %3368 = vmatpush1.msra.mxu0 %v1990
    %3369 = vmatprep.subr.mxu0 %v2007
    %3370 = vmatpush1.msra.mxu0 %v2006
    %3371 = vmatprep.subr.mxu0 %v2023
    %3372 = vmatpush1.msra.mxu0 %v2022
    %3373 = vmatprep.subr.mxu0 %v2039
    %3374 = vmatpush1.msra.mxu0 %v2038
    %3375 = vmatprep.subr.mxu0 %v2055
    %3376 = vmatpush1.msra.mxu0 %v2054
    %3377 = vmatprep.subr.mxu0 %v2071
    %3378 = vmatpush1.msra.mxu0 %v2070
    %3379 = vmatprep.subr.mxu0 %v2087
    %3380 = vmatpush1.msra.mxu0 %v2086
    %3381 = vmatprep.subr.mxu0 %v2103
    %3382 = vmatpush1.msra.mxu0 %v2102
    %3383 = vmatprep.subr.mxu0 %v2119
    %3384 = vmatpush1.msra.mxu0 %v2118
    %3385 = vmatprep.mubr.f32.mxu0 %v2247
    %3386 = vmatmul.mubr.f32.gmra.mrb[0].mxu0 %v2245
    %v3387 = vpop.f32.mrb[0].mxu0
    %v3388 = vadd.f32 %v3317, %v3387
    %v3389 = vpop.f32.mrb[0].mxu0
    %v3390 = vadd.f32 %v3319, %v3389
    %3391 = vdwg.mxu0
    %3392 = vmatprep.subr.mxu0 %v89
    %3393 = vmatpush1.msra.mxu0 %v88
    %3394 = vmatprep.subr.mxu0 %v105
    %3395 = vmatpush1.msra.mxu0 %v104
    %3396 = vmatprep.subr.mxu0 %v121
    %3397 = vmatpush1.msra.mxu0 %v120
    %3398 = vmatprep.subr.mxu0 %v137
    %3399 = vmatpush1.msra.mxu0 %v136
    %3400 = vmatprep.subr.mxu0 %v153
    %3401 = vmatpush1.msra.mxu0 %v152
    %3402 = vmatprep.subr.mxu0 %v169
    %3403 = vmatpush1.msra.mxu0 %v168
    %3404 = vmatprep.subr.mxu0 %v185
    %3405 = vmatpush1.msra.mxu0 %v184
    %3406 = vmatprep.subr.mxu0 %v201
    %3407 = vmatpush1.msra.mxu0 %v200
    %3408 = vmatprep.subr.mxu0 %v217
    %3409 = vmatpush1.msra.mxu0 %v216
    %3410 = vmatprep.subr.mxu0 %v233
    %3411 = vmatpush1.msra.mxu0 %v232
    %3412 = vmatprep.subr.mxu0 %v249
    %3413 = vmatpush1.msra.mxu0 %v248
    %3414 = vmatprep.subr.mxu0 %v265
    %3415 = vmatpush1.msra.mxu0 %v264
    %3416 = vmatprep.subr.mxu0 %v281
    %3417 = vmatpush1.msra.mxu0 %v280
    %3418 = vmatprep.subr.mxu0 %v297
    %3419 = vmatpush1.msra.mxu0 %v296
    %3420 = vmatprep.subr.mxu0 %v313
    %3421 = vmatpush1.msra.mxu0 %v312
    %3422 = vmatprep.subr.mxu0 %v329
    %3423 = vmatpush1.msra.mxu0 %v328
    %3424 = vmatprep.subr.mxu0 %v345
    %3425 = vmatpush1.msra.mxu0 %v344
    %3426 = vmatprep.subr.mxu0 %v361
    %3427 = vmatpush1.msra.mxu0 %v360
    %3428 = vmatprep.subr.mxu0 %v377
    %3429 = vmatpush1.msra.mxu0 %v376
    %3430 = vmatprep.subr.mxu0 %v393
    %3431 = vmatpush1.msra.mxu0 %v392
    %3432 = vmatprep.subr.mxu0 %v409
    %3433 = vmatpush1.msra.mxu0 %v408
    %3434 = vmatprep.subr.mxu0 %v425
    %3435 = vmatpush1.msra.mxu0 %v424
    %3436 = vmatprep.subr.mxu0 %v441
    %3437 = vmatpush1.msra.mxu0 %v440
    %3438 = vmatprep.subr.mxu0 %v457
    %3439 = vmatpush1.msra.mxu0 %v456
    %3440 = vmatprep.subr.mxu0 %v473
    %3441 = vmatpush1.msra.mxu0 %v472
    %3442 = vmatprep.subr.mxu0 %v489
    %3443 = vmatpush1.msra.mxu0 %v488
    %3444 = vmatprep.subr.mxu0 %v505
    %3445 = vmatpush1.msra.mxu0 %v504
    %3446 = vmatprep.subr.mxu0 %v521
    %3447 = vmatpush1.msra.mxu0 %v520
    %3448 = vmatprep.subr.mxu0 %v537
    %3449 = vmatpush1.msra.mxu0 %v536
    %3450 = vmatprep.subr.mxu0 %v553
    %3451 = vmatpush1.msra.mxu0 %v552
    %3452 = vmatprep.subr.mxu0 %v569
    %3453 = vmatpush1.msra.mxu0 %v568
    %3454 = vmatprep.subr.mxu0 %v585
    %3455 = vmatpush1.msra.mxu0 %v584
    %3456 = vmatprep.mubr.f32.mxu0 %v2229
    %3457 = vmatmul.mubr.f32.gmra.mrb[0].mxu0 %v2221
    %v3458 = vpop.f32.mrb[0].mxu0
    %v3459 = vadd.f32 %v2167, %v3458
    %v3460 = vpop.f32.mrb[0].mxu0
    %v3461 = vadd.f32 %v2171, %v3460
    %3462 = vdwg.mxu0
    %3463 = vmatprep.subr.mxu0 %v601
    %3464 = vmatpush1.msra.mxu0 %v600
    %3465 = vmatprep.subr.mxu0 %v617
    %3466 = vmatpush1.msra.mxu0 %v616
    %3467 = vmatprep.subr.mxu0 %v633
    %3468 = vmatpush1.msra.mxu0 %v632
    %3469 = vmatprep.subr.mxu0 %v649
    %3470 = vmatpush1.msra.mxu0 %v648
    %3471 = vmatprep.subr.mxu0 %v665
    %3472 = vmatpush1.msra.mxu0 %v664
    %3473 = vmatprep.subr.mxu0 %v681
    %3474 = vmatpush1.msra.mxu0 %v680
    %3475 = vmatprep.subr.mxu0 %v697
    %3476 = vmatpush1.msra.mxu0 %v696
    %3477 = vmatprep.subr.mxu0 %v713
    %3478 = vmatpush1.msra.mxu0 %v712
    %3479 = vmatprep.subr.mxu0 %v729
    %3480 = vmatpush1.msra.mxu0 %v728
    %3481 = vmatprep.subr.mxu0 %v745
    %3482 = vmatpush1.msra.mxu0 %v744
    %3483 = vmatprep.subr.mxu0 %v761
    %3484 = vmatpush1.msra.mxu0 %v760
    %3485 = vmatprep.subr.mxu0 %v777
    %3486 = vmatpush1.msra.mxu0 %v776
    %3487 = vmatprep.subr.mxu0 %v793
    %3488 = vmatpush1.msra.mxu0 %v792
    %3489 = vmatprep.subr.mxu0 %v809
    %3490 = vmatpush1.msra.mxu0 %v808
    %3491 = vmatprep.subr.mxu0 %v825
    %3492 = vmatpush1.msra.mxu0 %v824
    %3493 = vmatprep.subr.mxu0 %v841
    %3494 = vmatpush1.msra.mxu0 %v840
    %3495 = vmatprep.subr.mxu0 %v857
    %3496 = vmatpush1.msra.mxu0 %v856
    %3497 = vmatprep.subr.mxu0 %v873
    %3498 = vmatpush1.msra.mxu0 %v872
    %3499 = vmatprep.subr.mxu0 %v889
    %3500 = vmatpush1.msra.mxu0 %v888
    %3501 = vmatprep.subr.mxu0 %v905
    %3502 = vmatpush1.msra.mxu0 %v904
    %3503 = vmatprep.subr.mxu0 %v921
    %3504 = vmatpush1.msra.mxu0 %v920
    %3505 = vmatprep.subr.mxu0 %v937
    %3506 = vmatpush1.msra.mxu0 %v936
    %3507 = vmatprep.subr.mxu0 %v953
    %3508 = vmatpush1.msra.mxu0 %v952
    %3509 = vmatprep.subr.mxu0 %v969
    %3510 = vmatpush1.msra.mxu0 %v968
    %3511 = vmatprep.subr.mxu0 %v985
    %3512 = vmatpush1.msra.mxu0 %v984
    %3513 = vmatprep.subr.mxu0 %v1001
    %3514 = vmatpush1.msra.mxu0 %v1000
    %3515 = vmatprep.subr.mxu0 %v1017
    %3516 = vmatpush1.msra.mxu0 %v1016
    %3517 = vmatprep.subr.mxu0 %v1033
    %3518 = vmatpush1.msra.mxu0 %v1032
    %3519 = vmatprep.subr.mxu0 %v1049
    %3520 = vmatpush1.msra.mxu0 %v1048
    %3521 = vmatprep.subr.mxu0 %v1065
    %3522 = vmatpush1.msra.mxu0 %v1064
    %3523 = vmatprep.subr.mxu0 %v1081
    %3524 = vmatpush1.msra.mxu0 %v1080
    %3525 = vmatprep.subr.mxu0 %v1097
    %3526 = vmatpush1.msra.mxu0 %v1096
    %3527 = vmatprep.mubr.f32.mxu0 %v2230
    %3528 = vmatmul.mubr.f32.gmra.mrb[0].mxu0 %v2228
    %v3529 = vpop.f32.mrb[0].mxu0
    %v3530 = vadd.f32 %v3459, %v3529
    %v3531 = vpop.f32.mrb[0].mxu0
    %v3532 = vadd.f32 %v3461, %v3531
    %3533 = vdwg.mxu0
    %3534 = vmatprep.subr.mxu0 %v1113
    %3535 = vmatpush1.msra.mxu0 %v1112
    %3536 = vmatprep.subr.mxu0 %v1129
    %3537 = vmatpush1.msra.mxu0 %v1128
    %3538 = vmatprep.subr.mxu0 %v1145
    %3539 = vmatpush1.msra.mxu0 %v1144
    %3540 = vmatprep.subr.mxu0 %v1161
    %3541 = vmatpush1.msra.mxu0 %v1160
    %3542 = vmatprep.subr.mxu0 %v1177
    %3543 = vmatpush1.msra.mxu0 %v1176
    %3544 = vmatprep.subr.mxu0 %v1193
    %3545 = vmatpush1.msra.mxu0 %v1192
    %3546 = vmatprep.subr.mxu0 %v1209
    %3547 = vmatpush1.msra.mxu0 %v1208
    %3548 = vmatprep.subr.mxu0 %v1225
    %3549 = vmatpush1.msra.mxu0 %v1224
    %3550 = vmatprep.subr.mxu0 %v1241
    %3551 = vmatpush1.msra.mxu0 %v1240
    %3552 = vmatprep.subr.mxu0 %v1257
    %3553 = vmatpush1.msra.mxu0 %v1256
    %3554 = vmatprep.subr.mxu0 %v1273
    %3555 = vmatpush1.msra.mxu0 %v1272
    %3556 = vmatprep.subr.mxu0 %v1289
    %3557 = vmatpush1.msra.mxu0 %v1288
    %3558 = vmatprep.subr.mxu0 %v1305
    %3559 = vmatpush1.msra.mxu0 %v1304
    %3560 = vmatprep.subr.mxu0 %v1321
    %3561 = vmatpush1.msra.mxu0 %v1320
    %3562 = vmatprep.subr.mxu0 %v1337
    %3563 = vmatpush1.msra.mxu0 %v1336
    %3564 = vmatprep.subr.mxu0 %v1353
    %3565 = vmatpush1.msra.mxu0 %v1352
    %3566 = vmatprep.subr.mxu0 %v1369
    %3567 = vmatpush1.msra.mxu0 %v1368
    %3568 = vmatprep.subr.mxu0 %v1385
    %3569 = vmatpush1.msra.mxu0 %v1384
    %3570 = vmatprep.subr.mxu0 %v1401
    %3571 = vmatpush1.msra.mxu0 %v1400
    %3572 = vmatprep.subr.mxu0 %v1417
    %3573 = vmatpush1.msra.mxu0 %v1416
    %3574 = vmatprep.subr.mxu0 %v1433
    %3575 = vmatpush1.msra.mxu0 %v1432
    %3576 = vmatprep.subr.mxu0 %v1449
    %3577 = vmatpush1.msra.mxu0 %v1448
    %3578 = vmatprep.subr.mxu0 %v1465
    %3579 = vmatpush1.msra.mxu0 %v1464
    %3580 = vmatprep.subr.mxu0 %v1481
    %3581 = vmatpush1.msra.mxu0 %v1480
    %3582 = vmatprep.subr.mxu0 %v1497
    %3583 = vmatpush1.msra.mxu0 %v1496
    %3584 = vmatprep.subr.mxu0 %v1513
    %3585 = vmatpush1.msra.mxu0 %v1512
    %3586 = vmatprep.subr.mxu0 %v1529
    %3587 = vmatpush1.msra.mxu0 %v1528
    %3588 = vmatprep.subr.mxu0 %v1545
    %3589 = vmatpush1.msra.mxu0 %v1544
    %3590 = vmatprep.subr.mxu0 %v1561
    %3591 = vmatpush1.msra.mxu0 %v1560
    %3592 = vmatprep.subr.mxu0 %v1577
    %3593 = vmatpush1.msra.mxu0 %v1576
    %3594 = vmatprep.subr.mxu0 %v1593
    %3595 = vmatpush1.msra.mxu0 %v1592
    %3596 = vmatprep.subr.mxu0 %v1609
    %3597 = vmatpush1.msra.mxu0 %v1608
    %3598 = vmatprep.mubr.f32.mxu0 %v2246
    %3599 = vmatmul.mubr.f32.gmra.mrb[0].mxu0 %v2238
    %v3600 = vpop.f32.mrb[0].mxu0
    %v3601 = vadd.f32 %v3530, %v3600
    %v3602 = vpop.f32.mrb[0].mxu0
    %v3603 = vadd.f32 %v3532, %v3602
    %3604 = vdwg.mxu0
    %3605 = vmatprep.subr.mxu0 %v1625
    %3606 = vmatpush1.msra.mxu0 %v1624
    %3607 = vmatprep.subr.mxu0 %v1641
    %3608 = vmatpush1.msra.mxu0 %v1640
    %3609 = vmatprep.subr.mxu0 %v1657
    %3610 = vmatpush1.msra.mxu0 %v1656
    %3611 = vmatprep.subr.mxu0 %v1673
    %3612 = vmatpush1.msra.mxu0 %v1672
    %3613 = vmatprep.subr.mxu0 %v1689
    %3614 = vmatpush1.msra.mxu0 %v1688
    %3615 = vmatprep.subr.mxu0 %v1705
    %3616 = vmatpush1.msra.mxu0 %v1704
    %3617 = vmatprep.subr.mxu0 %v1721
    %3618 = vmatpush1.msra.mxu0 %v1720
    %3619 = vmatprep.subr.mxu0 %v1737
    %3620 = vmatpush1.msra.mxu0 %v1736
    %3621 = vmatprep.subr.mxu0 %v1753
    %3622 = vmatpush1.msra.mxu0 %v1752
    %3623 = vmatprep.subr.mxu0 %v1769
    %3624 = vmatpush1.msra.mxu0 %v1768
    %3625 = vmatprep.subr.mxu0 %v1785
    %3626 = vmatpush1.msra.mxu0 %v1784
    %3627 = vmatprep.subr.mxu0 %v1801
    %3628 = vmatpush1.msra.mxu0 %v1800
    %3629 = vmatprep.subr.mxu0 %v1817
    %3630 = vmatpush1.msra.mxu0 %v1816
    %3631 = vmatprep.subr.mxu0 %v1833
    %3632 = vmatpush1.msra.mxu0 %v1832
    %3633 = vmatprep.subr.mxu0 %v1849
    %3634 = vmatpush1.msra.mxu0 %v1848
    %3635 = vmatprep.subr.mxu0 %v1865
    %3636 = vmatpush1.msra.mxu0 %v1864
    %3637 = vmatprep.subr.mxu0 %v1881
    %3638 = vmatpush1.msra.mxu0 %v1880
    %3639 = vmatprep.subr.mxu0 %v1897
    %3640 = vmatpush1.msra.mxu0 %v1896
    %3641 = vmatprep.subr.mxu0 %v1913
    %3642 = vmatpush1.msra.mxu0 %v1912
    %3643 = vmatprep.subr.mxu0 %v1929
    %3644 = vmatpush1.msra.mxu0 %v1928
    %3645 = vmatprep.subr.mxu0 %v1945
    %3646 = vmatpush1.msra.mxu0 %v1944
    %3647 = vmatprep.subr.mxu0 %v1961
    %3648 = vmatpush1.msra.mxu0 %v1960
    %3649 = vmatprep.subr.mxu0 %v1977
    %3650 = vmatpush1.msra.mxu0 %v1976
    %3651 = vmatprep.subr.mxu0 %v1993
    %3652 = vmatpush1.msra.mxu0 %v1992
    %3653 = vmatprep.subr.mxu0 %v2009
    %3654 = vmatpush1.msra.mxu0 %v2008
    %3655 = vmatprep.subr.mxu0 %v2025
    %3656 = vmatpush1.msra.mxu0 %v2024
    %3657 = vmatprep.subr.mxu0 %v2041
    %3658 = vmatpush1.msra.mxu0 %v2040
    %3659 = vmatprep.subr.mxu0 %v2057
    %3660 = vmatpush1.msra.mxu0 %v2056
    %3661 = vmatprep.subr.mxu0 %v2073
    %3662 = vmatpush1.msra.mxu0 %v2072
    %3663 = vmatprep.subr.mxu0 %v2089
    %3664 = vmatpush1.msra.mxu0 %v2088
    %3665 = vmatprep.subr.mxu0 %v2105
    %3666 = vmatpush1.msra.mxu0 %v2104
    %3667 = vmatprep.subr.mxu0 %v2121
    %3668 = vmatpush1.msra.mxu0 %v2120
    %3669 = vmatprep.mubr.f32.mxu0 %v2247
    %3670 = vmatmul.mubr.f32.gmra.mrb[0].mxu0 %v2245
    %v3671 = vpop.f32.mrb[0].mxu0
    %v3672 = vadd.f32 %v3601, %v3671
    %v3673 = vpop.f32.mrb[0].mxu0
    %v3674 = vadd.f32 %v3603, %v3673
    %3675 = vdwg.mxu0
    %3676 = vmatprep.subr.mxu0 %v91
    %3677 = vmatpush1.msra.mxu0 %v90
    %3678 = vmatprep.subr.mxu0 %v107
    %3679 = vmatpush1.msra.mxu0 %v106
    %3680 = vmatprep.subr.mxu0 %v123
    %3681 = vmatpush1.msra.mxu0 %v122
    %3682 = vmatprep.subr.mxu0 %v139
    %3683 = vmatpush1.msra.mxu0 %v138
    %3684 = vmatprep.subr.mxu0 %v155
    %3685 = vmatpush1.msra.mxu0 %v154
    %3686 = vmatprep.subr.mxu0 %v171
    %3687 = vmatpush1.msra.mxu0 %v170
    %3688 = vmatprep.subr.mxu0 %v187
    %3689 = vmatpush1.msra.mxu0 %v186
    %3690 = vmatprep.subr.mxu0 %v203
    %3691 = vmatpush1.msra.mxu0 %v202
    %3692 = vmatprep.subr.mxu0 %v219
    %3693 = vmatpush1.msra.mxu0 %v218
    %3694 = vmatprep.subr.mxu0 %v235
    %3695 = vmatpush1.msra.mxu0 %v234
    %3696 = vmatprep.subr.mxu0 %v251
    %3697 = vmatpush1.msra.mxu0 %v250
    %3698 = vmatprep.subr.mxu0 %v267
    %3699 = vmatpush1.msra.mxu0 %v266
    %3700 = vmatprep.subr.mxu0 %v283
    %3701 = vmatpush1.msra.mxu0 %v282
    %3702 = vmatprep.subr.mxu0 %v299
    %3703 = vmatpush1.msra.mxu0 %v298
    %3704 = vmatprep.subr.mxu0 %v315
    %3705 = vmatpush1.msra.mxu0 %v314
    %3706 = vmatprep.subr.mxu0 %v331
    %3707 = vmatpush1.msra.mxu0 %v330
    %3708 = vmatprep.subr.mxu0 %v347
    %3709 = vmatpush1.msra.mxu0 %v346
    %3710 = vmatprep.subr.mxu0 %v363
    %3711 = vmatpush1.msra.mxu0 %v362
    %3712 = vmatprep.subr.mxu0 %v379
    %3713 = vmatpush1.msra.mxu0 %v378
    %3714 = vmatprep.subr.mxu0 %v395
    %3715 = vmatpush1.msra.mxu0 %v394
    %3716 = vmatprep.subr.mxu0 %v411
    %3717 = vmatpush1.msra.mxu0 %v410
    %3718 = vmatprep.subr.mxu0 %v427
    %3719 = vmatpush1.msra.mxu0 %v426
    %3720 = vmatprep.subr.mxu0 %v443
    %3721 = vmatpush1.msra.mxu0 %v442
    %3722 = vmatprep.subr.mxu0 %v459
    %3723 = vmatpush1.msra.mxu0 %v458
    %3724 = vmatprep.subr.mxu0 %v475
    %3725 = vmatpush1.msra.mxu0 %v474
    %3726 = vmatprep.subr.mxu0 %v491
    %3727 = vmatpush1.msra.mxu0 %v490
    %3728 = vmatprep.subr.mxu0 %v507
    %3729 = vmatpush1.msra.mxu0 %v506
    %3730 = vmatprep.subr.mxu0 %v523
    %3731 = vmatpush1.msra.mxu0 %v522
    %3732 = vmatprep.subr.mxu0 %v539
    %3733 = vmatpush1.msra.mxu0 %v538
    %3734 = vmatprep.subr.mxu0 %v555
    %3735 = vmatpush1.msra.mxu0 %v554
    %3736 = vmatprep.subr.mxu0 %v571
    %3737 = vmatpush1.msra.mxu0 %v570
    %3738 = vmatprep.subr.mxu0 %v587
    %3739 = vmatpush1.msra.mxu0 %v586
    %3740 = vmatprep.mubr.f32.mxu0 %v2229
    %3741 = vmatmul.mubr.f32.gmra.mrb[0].mxu0 %v2221
    %v3742 = vpop.f32.mrb[0].mxu0
    %v3743 = vadd.f32 %v2175, %v3742
    %v3744 = vpop.f32.mrb[0].mxu0
    %v3745 = vadd.f32 %v2179, %v3744
    %3746 = vdwg.mxu0
    %3747 = vmatprep.subr.mxu0 %v603
    %3748 = vmatpush1.msra.mxu0 %v602
    %3749 = vmatprep.subr.mxu0 %v619
    %3750 = vmatpush1.msra.mxu0 %v618
    %3751 = vmatprep.subr.mxu0 %v635
    %3752 = vmatpush1.msra.mxu0 %v634
    %3753 = vmatprep.subr.mxu0 %v651
    %3754 = vmatpush1.msra.mxu0 %v650
    %3755 = vmatprep.subr.mxu0 %v667
    %3756 = vmatpush1.msra.mxu0 %v666
    %3757 = vmatprep.subr.mxu0 %v683
    %3758 = vmatpush1.msra.mxu0 %v682
    %3759 = vmatprep.subr.mxu0 %v699
    %3760 = vmatpush1.msra.mxu0 %v698
    %3761 = vmatprep.subr.mxu0 %v715
    %3762 = vmatpush1.msra.mxu0 %v714
    %3763 = vmatprep.subr.mxu0 %v731
    %3764 = vmatpush1.msra.mxu0 %v730
    %3765 = vmatprep.subr.mxu0 %v747
    %3766 = vmatpush1.msra.mxu0 %v746
    %3767 = vmatprep.subr.mxu0 %v763
    %3768 = vmatpush1.msra.mxu0 %v762
    %3769 = vmatprep.subr.mxu0 %v779
    %3770 = vmatpush1.msra.mxu0 %v778
    %3771 = vmatprep.subr.mxu0 %v795
    %3772 = vmatpush1.msra.mxu0 %v794
    %3773 = vmatprep.subr.mxu0 %v811
    %3774 = vmatpush1.msra.mxu0 %v810
    %3775 = vmatprep.subr.mxu0 %v827
    %3776 = vmatpush1.msra.mxu0 %v826
    %3777 = vmatprep.subr.mxu0 %v843
    %3778 = vmatpush1.msra.mxu0 %v842
    %3779 = vmatprep.subr.mxu0 %v859
    %3780 = vmatpush1.msra.mxu0 %v858
    %3781 = vmatprep.subr.mxu0 %v875
    %3782 = vmatpush1.msra.mxu0 %v874
    %3783 = vmatprep.subr.mxu0 %v891
    %3784 = vmatpush1.msra.mxu0 %v890
    %3785 = vmatprep.subr.mxu0 %v907
    %3786 = vmatpush1.msra.mxu0 %v906
    %3787 = vmatprep.subr.mxu0 %v923
    %3788 = vmatpush1.msra.mxu0 %v922
    %3789 = vmatprep.subr.mxu0 %v939
    %3790 = vmatpush1.msra.mxu0 %v938
    %3791 = vmatprep.subr.mxu0 %v955
    %3792 = vmatpush1.msra.mxu0 %v954
    %3793 = vmatprep.subr.mxu0 %v971
    %3794 = vmatpush1.msra.mxu0 %v970
    %3795 = vmatprep.subr.mxu0 %v987
    %3796 = vmatpush1.msra.mxu0 %v986
    %3797 = vmatprep.subr.mxu0 %v1003
    %3798 = vmatpush1.msra.mxu0 %v1002
    %3799 = vmatprep.subr.mxu0 %v1019
    %3800 = vmatpush1.msra.mxu0 %v1018
    %3801 = vmatprep.subr.mxu0 %v1035
    %3802 = vmatpush1.msra.mxu0 %v1034
    %3803 = vmatprep.subr.mxu0 %v1051
    %3804 = vmatpush1.msra.mxu0 %v1050
    %3805 = vmatprep.subr.mxu0 %v1067
    %3806 = vmatpush1.msra.mxu0 %v1066
    %3807 = vmatprep.subr.mxu0 %v1083
    %3808 = vmatpush1.msra.mxu0 %v1082
    %3809 = vmatprep.subr.mxu0 %v1099
    %3810 = vmatpush1.msra.mxu0 %v1098
    %3811 = vmatprep.mubr.f32.mxu0 %v2230
    %3812 = vmatmul.mubr.f32.gmra.mrb[0].mxu0 %v2228
    %v3813 = vpop.f32.mrb[0].mxu0
    %v3814 = vadd.f32 %v3743, %v3813
    %v3815 = vpop.f32.mrb[0].mxu0
    %v3816 = vadd.f32 %v3745, %v3815
    %3817 = vdwg.mxu0
    %3818 = vmatprep.subr.mxu0 %v1115
    %3819 = vmatpush1.msra.mxu0 %v1114
    %3820 = vmatprep.subr.mxu0 %v1131
    %3821 = vmatpush1.msra.mxu0 %v1130
    %3822 = vmatprep.subr.mxu0 %v1147
    %3823 = vmatpush1.msra.mxu0 %v1146
    %3824 = vmatprep.subr.mxu0 %v1163
    %3825 = vmatpush1.msra.mxu0 %v1162
    %3826 = vmatprep.subr.mxu0 %v1179
    %3827 = vmatpush1.msra.mxu0 %v1178
    %3828 = vmatprep.subr.mxu0 %v1195
    %3829 = vmatpush1.msra.mxu0 %v1194
    %3830 = vmatprep.subr.mxu0 %v1211
    %3831 = vmatpush1.msra.mxu0 %v1210
    %3832 = vmatprep.subr.mxu0 %v1227
    %3833 = vmatpush1.msra.mxu0 %v1226
    %3834 = vmatprep.subr.mxu0 %v1243
    %3835 = vmatpush1.msra.mxu0 %v1242
    %3836 = vmatprep.subr.mxu0 %v1259
    %3837 = vmatpush1.msra.mxu0 %v1258
    %3838 = vmatprep.subr.mxu0 %v1275
    %3839 = vmatpush1.msra.mxu0 %v1274
    %3840 = vmatprep.subr.mxu0 %v1291
    %3841 = vmatpush1.msra.mxu0 %v1290
    %3842 = vmatprep.subr.mxu0 %v1307
    %3843 = vmatpush1.msra.mxu0 %v1306
    %3844 = vmatprep.subr.mxu0 %v1323
    %3845 = vmatpush1.msra.mxu0 %v1322
    %3846 = vmatprep.subr.mxu0 %v1339
    %3847 = vmatpush1.msra.mxu0 %v1338
    %3848 = vmatprep.subr.mxu0 %v1355
    %3849 = vmatpush1.msra.mxu0 %v1354
    %3850 = vmatprep.subr.mxu0 %v1371
    %3851 = vmatpush1.msra.mxu0 %v1370
    %3852 = vmatprep.subr.mxu0 %v1387
    %3853 = vmatpush1.msra.mxu0 %v1386
    %3854 = vmatprep.subr.mxu0 %v1403
    %3855 = vmatpush1.msra.mxu0 %v1402
    %3856 = vmatprep.subr.mxu0 %v1419
    %3857 = vmatpush1.msra.mxu0 %v1418
    %3858 = vmatprep.subr.mxu0 %v1435
    %3859 = vmatpush1.msra.mxu0 %v1434
    %3860 = vmatprep.subr.mxu0 %v1451
    %3861 = vmatpush1.msra.mxu0 %v1450
    %3862 = vmatprep.subr.mxu0 %v1467
    %3863 = vmatpush1.msra.mxu0 %v1466
    %3864 = vmatprep.subr.mxu0 %v1483
    %3865 = vmatpush1.msra.mxu0 %v1482
    %3866 = vmatprep.subr.mxu0 %v1499
    %3867 = vmatpush1.msra.mxu0 %v1498
    %3868 = vmatprep.subr.mxu0 %v1515
    %3869 = vmatpush1.msra.mxu0 %v1514
    %3870 = vmatprep.subr.mxu0 %v1531
    %3871 = vmatpush1.msra.mxu0 %v1530
    %3872 = vmatprep.subr.mxu0 %v1547
    %3873 = vmatpush1.msra.mxu0 %v1546
    %3874 = vmatprep.subr.mxu0 %v1563
    %3875 = vmatpush1.msra.mxu0 %v1562
    %3876 = vmatprep.subr.mxu0 %v1579
    %3877 = vmatpush1.msra.mxu0 %v1578
    %3878 = vmatprep.subr.mxu0 %v1595
    %3879 = vmatpush1.msra.mxu0 %v1594
    %3880 = vmatprep.subr.mxu0 %v1611
    %3881 = vmatpush1.msra.mxu0 %v1610
    %3882 = vmatprep.mubr.f32.mxu0 %v2246
    %3883 = vmatmul.mubr.f32.gmra.mrb[0].mxu0 %v2238
    %v3884 = vpop.f32.mrb[0].mxu0
    %v3885 = vadd.f32 %v3814, %v3884
    %v3886 = vpop.f32.mrb[0].mxu0
    %v3887 = vadd.f32 %v3816, %v3886
    %3888 = vdwg.mxu0
    %3889 = vmatprep.subr.mxu0 %v1627
    %3890 = vmatpush1.msra.mxu0 %v1626
    %3891 = vmatprep.subr.mxu0 %v1643
    %3892 = vmatpush1.msra.mxu0 %v1642
    %3893 = vmatprep.subr.mxu0 %v1659
    %3894 = vmatpush1.msra.mxu0 %v1658
    %3895 = vmatprep.subr.mxu0 %v1675
    %3896 = vmatpush1.msra.mxu0 %v1674
    %3897 = vmatprep.subr.mxu0 %v1691
    %3898 = vmatpush1.msra.mxu0 %v1690
    %3899 = vmatprep.subr.mxu0 %v1707
    %3900 = vmatpush1.msra.mxu0 %v1706
    %3901 = vmatprep.subr.mxu0 %v1723
    %3902 = vmatpush1.msra.mxu0 %v1722
    %3903 = vmatprep.subr.mxu0 %v1739
    %3904 = vmatpush1.msra.mxu0 %v1738
    %3905 = vmatprep.subr.mxu0 %v1755
    %3906 = vmatpush1.msra.mxu0 %v1754
    %3907 = vmatprep.subr.mxu0 %v1771
    %3908 = vmatpush1.msra.mxu0 %v1770
    %3909 = vmatprep.subr.mxu0 %v1787
    %3910 = vmatpush1.msra.mxu0 %v1786
    %3911 = vmatprep.subr.mxu0 %v1803
    %3912 = vmatpush1.msra.mxu0 %v1802
    %3913 = vmatprep.subr.mxu0 %v1819
    %3914 = vmatpush1.msra.mxu0 %v1818
    %3915 = vmatprep.subr.mxu0 %v1835
    %3916 = vmatpush1.msra.mxu0 %v1834
    %3917 = vmatprep.subr.mxu0 %v1851
    %3918 = vmatpush1.msra.mxu0 %v1850
    %3919 = vmatprep.subr.mxu0 %v1867
    %3920 = vmatpush1.msra.mxu0 %v1866
    %3921 = vmatprep.subr.mxu0 %v1883
    %3922 = vmatpush1.msra.mxu0 %v1882
    %3923 = vmatprep.subr.mxu0 %v1899
    %3924 = vmatpush1.msra.mxu0 %v1898
    %3925 = vmatprep.subr.mxu0 %v1915
    %3926 = vmatpush1.msra.mxu0 %v1914
    %3927 = vmatprep.subr.mxu0 %v1931
    %3928 = vmatpush1.msra.mxu0 %v1930
    %3929 = vmatprep.subr.mxu0 %v1947
    %3930 = vmatpush1.msra.mxu0 %v1946
    %3931 = vmatprep.subr.mxu0 %v1963
    %3932 = vmatpush1.msra.mxu0 %v1962
    %3933 = vmatprep.subr.mxu0 %v1979
    %3934 = vmatpush1.msra.mxu0 %v1978
    %3935 = vmatprep.subr.mxu0 %v1995
    %3936 = vmatpush1.msra.mxu0 %v1994
    %3937 = vmatprep.subr.mxu0 %v2011
    %3938 = vmatpush1.msra.mxu0 %v2010
    %3939 = vmatprep.subr.mxu0 %v2027
    %3940 = vmatpush1.msra.mxu0 %v2026
    %3941 = vmatprep.subr.mxu0 %v2043
    %3942 = vmatpush1.msra.mxu0 %v2042
    %3943 = vmatprep.subr.mxu0 %v2059
    %3944 = vmatpush1.msra.mxu0 %v2058
    %3945 = vmatprep.subr.mxu0 %v2075
    %3946 = vmatpush1.msra.mxu0 %v2074
    %3947 = vmatprep.subr.mxu0 %v2091
    %3948 = vmatpush1.msra.mxu0 %v2090
    %3949 = vmatprep.subr.mxu0 %v2107
    %3950 = vmatpush1.msra.mxu0 %v2106
    %3951 = vmatprep.subr.mxu0 %v2123
    %3952 = vmatpush1.msra.mxu0 %v2122
    %3953 = vmatprep.mubr.f32.mxu0 %v2247
    %3954 = vmatmul.mubr.f32.gmra.mrb[0].mxu0 %v2245
    %v3955 = vpop.f32.mrb[0].mxu0
    %v3956 = vadd.f32 %v3885, %v3955
    %v3957 = vpop.f32.mrb[0].mxu0
    %v3958 = vadd.f32 %v3887, %v3957
    %3959 = vdwg.mxu0
    %3960 = vmatprep.subr.mxu0 %v93
    %3961 = vmatpush1.msra.mxu0 %v92
    %3962 = vmatprep.subr.mxu0 %v109
    %3963 = vmatpush1.msra.mxu0 %v108
    %3964 = vmatprep.subr.mxu0 %v125
    %3965 = vmatpush1.msra.mxu0 %v124
    %3966 = vmatprep.subr.mxu0 %v141
    %3967 = vmatpush1.msra.mxu0 %v140
    %3968 = vmatprep.subr.mxu0 %v157
    %3969 = vmatpush1.msra.mxu0 %v156
    %3970 = vmatprep.subr.mxu0 %v173
    %3971 = vmatpush1.msra.mxu0 %v172
    %3972 = vmatprep.subr.mxu0 %v189
    %3973 = vmatpush1.msra.mxu0 %v188
    %3974 = vmatprep.subr.mxu0 %v205
    %3975 = vmatpush1.msra.mxu0 %v204
    %3976 = vmatprep.subr.mxu0 %v221
    %3977 = vmatpush1.msra.mxu0 %v220
    %3978 = vmatprep.subr.mxu0 %v237
    %3979 = vmatpush1.msra.mxu0 %v236
    %3980 = vmatprep.subr.mxu0 %v253
    %3981 = vmatpush1.msra.mxu0 %v252
    %3982 = vmatprep.subr.mxu0 %v269
    %3983 = vmatpush1.msra.mxu0 %v268
    %3984 = vmatprep.subr.mxu0 %v285
    %3985 = vmatpush1.msra.mxu0 %v284
    %3986 = vmatprep.subr.mxu0 %v301
    %3987 = vmatpush1.msra.mxu0 %v300
    %3988 = vmatprep.subr.mxu0 %v317
    %3989 = vmatpush1.msra.mxu0 %v316
    %3990 = vmatprep.subr.mxu0 %v333
    %3991 = vmatpush1.msra.mxu0 %v332
    %3992 = vmatprep.subr.mxu0 %v349
    %3993 = vmatpush1.msra.mxu0 %v348
    %3994 = vmatprep.subr.mxu0 %v365
    %3995 = vmatpush1.msra.mxu0 %v364
    %3996 = vmatprep.subr.mxu0 %v381
    %3997 = vmatpush1.msra.mxu0 %v380
    %3998 = vmatprep.subr.mxu0 %v397
    %3999 = vmatpush1.msra.mxu0 %v396
    %4000 = vmatprep.subr.mxu0 %v413
    %4001 = vmatpush1.msra.mxu0 %v412
    %4002 = vmatprep.subr.mxu0 %v429
    %4003 = vmatpush1.msra.mxu0 %v428
    %4004 = vmatprep.subr.mxu0 %v445
    %4005 = vmatpush1.msra.mxu0 %v444
    %4006 = vmatprep.subr.mxu0 %v461
    %4007 = vmatpush1.msra.mxu0 %v460
    %4008 = vmatprep.subr.mxu0 %v477
    %4009 = vmatpush1.msra.mxu0 %v476
    %4010 = vmatprep.subr.mxu0 %v493
    %4011 = vmatpush1.msra.mxu0 %v492
    %4012 = vmatprep.subr.mxu0 %v509
    %4013 = vmatpush1.msra.mxu0 %v508
    %4014 = vmatprep.subr.mxu0 %v525
    %4015 = vmatpush1.msra.mxu0 %v524
    %4016 = vmatprep.subr.mxu0 %v541
    %4017 = vmatpush1.msra.mxu0 %v540
    %4018 = vmatprep.subr.mxu0 %v557
    %4019 = vmatpush1.msra.mxu0 %v556
    %4020 = vmatprep.subr.mxu0 %v573
    %4021 = vmatpush1.msra.mxu0 %v572
    %4022 = vmatprep.subr.mxu0 %v589
    %4023 = vmatpush1.msra.mxu0 %v588
    %4024 = vmatprep.mubr.f32.mxu0 %v2229
    %4025 = vmatmul.mubr.f32.gmra.mrb[0].mxu0 %v2221
    %v4026 = vpop.f32.mrb[0].mxu0
    %v4027 = vadd.f32 %v2183, %v4026
    %v4028 = vpop.f32.mrb[0].mxu0
    %v4029 = vadd.f32 %v2187, %v4028
    %4030 = vdwg.mxu0
    %4031 = vmatprep.subr.mxu0 %v605
    %4032 = vmatpush1.msra.mxu0 %v604
    %4033 = vmatprep.subr.mxu0 %v621
    %4034 = vmatpush1.msra.mxu0 %v620
    %4035 = vmatprep.subr.mxu0 %v637
    %4036 = vmatpush1.msra.mxu0 %v636
    %4037 = vmatprep.subr.mxu0 %v653
    %4038 = vmatpush1.msra.mxu0 %v652
    %4039 = vmatprep.subr.mxu0 %v669
    %4040 = vmatpush1.msra.mxu0 %v668
    %4041 = vmatprep.subr.mxu0 %v685
    %4042 = vmatpush1.msra.mxu0 %v684
    %4043 = vmatprep.subr.mxu0 %v701
    %4044 = vmatpush1.msra.mxu0 %v700
    %4045 = vmatprep.subr.mxu0 %v717
    %4046 = vmatpush1.msra.mxu0 %v716
    %4047 = vmatprep.subr.mxu0 %v733
    %4048 = vmatpush1.msra.mxu0 %v732
    %4049 = vmatprep.subr.mxu0 %v749
    %4050 = vmatpush1.msra.mxu0 %v748
    %4051 = vmatprep.subr.mxu0 %v765
    %4052 = vmatpush1.msra.mxu0 %v764
    %4053 = vmatprep.subr.mxu0 %v781
    %4054 = vmatpush1.msra.mxu0 %v780
    %4055 = vmatprep.subr.mxu0 %v797
    %4056 = vmatpush1.msra.mxu0 %v796
    %4057 = vmatprep.subr.mxu0 %v813
    %4058 = vmatpush1.msra.mxu0 %v812
    %4059 = vmatprep.subr.mxu0 %v829
    %4060 = vmatpush1.msra.mxu0 %v828
    %4061 = vmatprep.subr.mxu0 %v845
    %4062 = vmatpush1.msra.mxu0 %v844
    %4063 = vmatprep.subr.mxu0 %v861
    %4064 = vmatpush1.msra.mxu0 %v860
    %4065 = vmatprep.subr.mxu0 %v877
    %4066 = vmatpush1.msra.mxu0 %v876
    %4067 = vmatprep.subr.mxu0 %v893
    %4068 = vmatpush1.msra.mxu0 %v892
    %4069 = vmatprep.subr.mxu0 %v909
    %4070 = vmatpush1.msra.mxu0 %v908
    %4071 = vmatprep.subr.mxu0 %v925
    %4072 = vmatpush1.msra.mxu0 %v924
    %4073 = vmatprep.subr.mxu0 %v941
    %4074 = vmatpush1.msra.mxu0 %v940
    %4075 = vmatprep.subr.mxu0 %v957
    %4076 = vmatpush1.msra.mxu0 %v956
    %4077 = vmatprep.subr.mxu0 %v973
    %4078 = vmatpush1.msra.mxu0 %v972
    %4079 = vmatprep.subr.mxu0 %v989
    %4080 = vmatpush1.msra.mxu0 %v988
    %4081 = vmatprep.subr.mxu0 %v1005
    %4082 = vmatpush1.msra.mxu0 %v1004
    %4083 = vmatprep.subr.mxu0 %v1021
    %4084 = vmatpush1.msra.mxu0 %v1020
    %4085 = vmatprep.subr.mxu0 %v1037
    %4086 = vmatpush1.msra.mxu0 %v1036
    %4087 = vmatprep.subr.mxu0 %v1053
    %4088 = vmatpush1.msra.mxu0 %v1052
    %4089 = vmatprep.subr.mxu0 %v1069
    %4090 = vmatpush1.msra.mxu0 %v1068
    %4091 = vmatprep.subr.mxu0 %v1085
    %4092 = vmatpush1.msra.mxu0 %v1084
    %4093 = vmatprep.subr.mxu0 %v1101
    %4094 = vmatpush1.msra.mxu0 %v1100
    %4095 = vmatprep.mubr.f32.mxu0 %v2230
    %4096 = vmatmul.mubr.f32.gmra.mrb[0].mxu0 %v2228
    %v4097 = vpop.f32.mrb[0].mxu0
    %v4098 = vadd.f32 %v4027, %v4097
    %v4099 = vpop.f32.mrb[0].mxu0
    %v4100 = vadd.f32 %v4029, %v4099
    %4101 = vdwg.mxu0
    %4102 = vmatprep.subr.mxu0 %v1117
    %4103 = vmatpush1.msra.mxu0 %v1116
    %4104 = vmatprep.subr.mxu0 %v1133
    %4105 = vmatpush1.msra.mxu0 %v1132
    %4106 = vmatprep.subr.mxu0 %v1149
    %4107 = vmatpush1.msra.mxu0 %v1148
    %4108 = vmatprep.subr.mxu0 %v1165
    %4109 = vmatpush1.msra.mxu0 %v1164
    %4110 = vmatprep.subr.mxu0 %v1181
    %4111 = vmatpush1.msra.mxu0 %v1180
    %4112 = vmatprep.subr.mxu0 %v1197
    %4113 = vmatpush1.msra.mxu0 %v1196
    %4114 = vmatprep.subr.mxu0 %v1213
    %4115 = vmatpush1.msra.mxu0 %v1212
    %4116 = vmatprep.subr.mxu0 %v1229
    %4117 = vmatpush1.msra.mxu0 %v1228
    %4118 = vmatprep.subr.mxu0 %v1245
    %4119 = vmatpush1.msra.mxu0 %v1244
    %4120 = vmatprep.subr.mxu0 %v1261
    %4121 = vmatpush1.msra.mxu0 %v1260
    %4122 = vmatprep.subr.mxu0 %v1277
    %4123 = vmatpush1.msra.mxu0 %v1276
    %4124 = vmatprep.subr.mxu0 %v1293
    %4125 = vmatpush1.msra.mxu0 %v1292
    %4126 = vmatprep.subr.mxu0 %v1309
    %4127 = vmatpush1.msra.mxu0 %v1308
    %4128 = vmatprep.subr.mxu0 %v1325
    %4129 = vmatpush1.msra.mxu0 %v1324
    %4130 = vmatprep.subr.mxu0 %v1341
    %4131 = vmatpush1.msra.mxu0 %v1340
    %4132 = vmatprep.subr.mxu0 %v1357
    %4133 = vmatpush1.msra.mxu0 %v1356
    %4134 = vmatprep.subr.mxu0 %v1373
    %4135 = vmatpush1.msra.mxu0 %v1372
    %4136 = vmatprep.subr.mxu0 %v1389
    %4137 = vmatpush1.msra.mxu0 %v1388
    %4138 = vmatprep.subr.mxu0 %v1405
    %4139 = vmatpush1.msra.mxu0 %v1404
    %4140 = vmatprep.subr.mxu0 %v1421
    %4141 = vmatpush1.msra.mxu0 %v1420
    %4142 = vmatprep.subr.mxu0 %v1437
    %4143 = vmatpush1.msra.mxu0 %v1436
    %4144 = vmatprep.subr.mxu0 %v1453
    %4145 = vmatpush1.msra.mxu0 %v1452
    %4146 = vmatprep.subr.mxu0 %v1469
    %4147 = vmatpush1.msra.mxu0 %v1468
    %4148 = vmatprep.subr.mxu0 %v1485
    %4149 = vmatpush1.msra.mxu0 %v1484
    %4150 = vmatprep.subr.mxu0 %v1501
    %4151 = vmatpush1.msra.mxu0 %v1500
    %4152 = vmatprep.subr.mxu0 %v1517
    %4153 = vmatpush1.msra.mxu0 %v1516
    %4154 = vmatprep.subr.mxu0 %v1533
    %4155 = vmatpush1.msra.mxu0 %v1532
    %4156 = vmatprep.subr.mxu0 %v1549
    %4157 = vmatpush1.msra.mxu0 %v1548
    %4158 = vmatprep.subr.mxu0 %v1565
    %4159 = vmatpush1.msra.mxu0 %v1564
    %4160 = vmatprep.subr.mxu0 %v1581
    %4161 = vmatpush1.msra.mxu0 %v1580
    %4162 = vmatprep.subr.mxu0 %v1597
    %4163 = vmatpush1.msra.mxu0 %v1596
    %4164 = vmatprep.subr.mxu0 %v1613
    %4165 = vmatpush1.msra.mxu0 %v1612
    %4166 = vmatprep.mubr.f32.mxu0 %v2246
    %4167 = vmatmul.mubr.f32.gmra.mrb[0].mxu0 %v2238
    %v4168 = vpop.f32.mrb[0].mxu0
    %v4169 = vadd.f32 %v4098, %v4168
    %v4170 = vpop.f32.mrb[0].mxu0
    %v4171 = vadd.f32 %v4100, %v4170
    %4172 = vdwg.mxu0
    %4173 = vmatprep.subr.mxu0 %v1629
    %4174 = vmatpush1.msra.mxu0 %v1628
    %4175 = vmatprep.subr.mxu0 %v1645
    %4176 = vmatpush1.msra.mxu0 %v1644
    %4177 = vmatprep.subr.mxu0 %v1661
    %4178 = vmatpush1.msra.mxu0 %v1660
    %4179 = vmatprep.subr.mxu0 %v1677
    %4180 = vmatpush1.msra.mxu0 %v1676
    %4181 = vmatprep.subr.mxu0 %v1693
    %4182 = vmatpush1.msra.mxu0 %v1692
    %4183 = vmatprep.subr.mxu0 %v1709
    %4184 = vmatpush1.msra.mxu0 %v1708
    %4185 = vmatprep.subr.mxu0 %v1725
    %4186 = vmatpush1.msra.mxu0 %v1724
    %4187 = vmatprep.subr.mxu0 %v1741
    %4188 = vmatpush1.msra.mxu0 %v1740
    %4189 = vmatprep.subr.mxu0 %v1757
    %4190 = vmatpush1.msra.mxu0 %v1756
    %4191 = vmatprep.subr.mxu0 %v1773
    %4192 = vmatpush1.msra.mxu0 %v1772
    %4193 = vmatprep.subr.mxu0 %v1789
    %4194 = vmatpush1.msra.mxu0 %v1788
    %4195 = vmatprep.subr.mxu0 %v1805
    %4196 = vmatpush1.msra.mxu0 %v1804
    %4197 = vmatprep.subr.mxu0 %v1821
    %4198 = vmatpush1.msra.mxu0 %v1820
    %4199 = vmatprep.subr.mxu0 %v1837
    %4200 = vmatpush1.msra.mxu0 %v1836
    %4201 = vmatprep.subr.mxu0 %v1853
    %4202 = vmatpush1.msra.mxu0 %v1852
    %4203 = vmatprep.subr.mxu0 %v1869
    %4204 = vmatpush1.msra.mxu0 %v1868
    %4205 = vmatprep.subr.mxu0 %v1885
    %4206 = vmatpush1.msra.mxu0 %v1884
    %4207 = vmatprep.subr.mxu0 %v1901
    %4208 = vmatpush1.msra.mxu0 %v1900
    %4209 = vmatprep.subr.mxu0 %v1917
    %4210 = vmatpush1.msra.mxu0 %v1916
    %4211 = vmatprep.subr.mxu0 %v1933
    %4212 = vmatpush1.msra.mxu0 %v1932
    %4213 = vmatprep.subr.mxu0 %v1949
    %4214 = vmatpush1.msra.mxu0 %v1948
    %4215 = vmatprep.subr.mxu0 %v1965
    %4216 = vmatpush1.msra.mxu0 %v1964
    %4217 = vmatprep.subr.mxu0 %v1981
    %4218 = vmatpush1.msra.mxu0 %v1980
    %4219 = vmatprep.subr.mxu0 %v1997
    %4220 = vmatpush1.msra.mxu0 %v1996
    %4221 = vmatprep.subr.mxu0 %v2013
    %4222 = vmatpush1.msra.mxu0 %v2012
    %4223 = vmatprep.subr.mxu0 %v2029
    %4224 = vmatpush1.msra.mxu0 %v2028
    %4225 = vmatprep.subr.mxu0 %v2045
    %4226 = vmatpush1.msra.mxu0 %v2044
    %4227 = vmatprep.subr.mxu0 %v2061
    %4228 = vmatpush1.msra.mxu0 %v2060
    %4229 = vmatprep.subr.mxu0 %v2077
    %4230 = vmatpush1.msra.mxu0 %v2076
    %4231 = vmatprep.subr.mxu0 %v2093
    %4232 = vmatpush1.msra.mxu0 %v2092
    %4233 = vmatprep.subr.mxu0 %v2109
    %4234 = vmatpush1.msra.mxu0 %v2108
    %4235 = vmatprep.subr.mxu0 %v2125
    %4236 = vmatpush1.msra.mxu0 %v2124
    %4237 = vmatprep.mubr.f32.mxu0 %v2247
    %4238 = vmatmul.mubr.f32.gmra.mrb[0].mxu0 %v2245
    %v4239 = vpop.f32.mrb[0].mxu0
    %v4240 = vadd.f32 %v4169, %v4239
    %v4241 = vpop.f32.mrb[0].mxu0
    %v4242 = vadd.f32 %v4171, %v4241
    %4243 = vdwg.mxu0
    %4244 = vmatprep.subr.mxu0 %v95
    %4245 = vmatpush1.msra.mxu0 %v94
    %4246 = vmatprep.subr.mxu0 %v111
    %4247 = vmatpush1.msra.mxu0 %v110
    %4248 = vmatprep.subr.mxu0 %v127
    %4249 = vmatpush1.msra.mxu0 %v126
    %4250 = vmatprep.subr.mxu0 %v143
    %4251 = vmatpush1.msra.mxu0 %v142
    %4252 = vmatprep.subr.mxu0 %v159
    %4253 = vmatpush1.msra.mxu0 %v158
    %4254 = vmatprep.subr.mxu0 %v175
    %4255 = vmatpush1.msra.mxu0 %v174
    %4256 = vmatprep.subr.mxu0 %v191
    %4257 = vmatpush1.msra.mxu0 %v190
    %4258 = vmatprep.subr.mxu0 %v207
    %4259 = vmatpush1.msra.mxu0 %v206
    %4260 = vmatprep.subr.mxu0 %v223
    %4261 = vmatpush1.msra.mxu0 %v222
    %4262 = vmatprep.subr.mxu0 %v239
    %4263 = vmatpush1.msra.mxu0 %v238
    %4264 = vmatprep.subr.mxu0 %v255
    %4265 = vmatpush1.msra.mxu0 %v254
    %4266 = vmatprep.subr.mxu0 %v271
    %4267 = vmatpush1.msra.mxu0 %v270
    %4268 = vmatprep.subr.mxu0 %v287
    %4269 = vmatpush1.msra.mxu0 %v286
    %4270 = vmatprep.subr.mxu0 %v303
    %4271 = vmatpush1.msra.mxu0 %v302
    %4272 = vmatprep.subr.mxu0 %v319
    %4273 = vmatpush1.msra.mxu0 %v318
    %4274 = vmatprep.subr.mxu0 %v335
    %4275 = vmatpush1.msra.mxu0 %v334
    %4276 = vmatprep.subr.mxu0 %v351
    %4277 = vmatpush1.msra.mxu0 %v350
    %4278 = vmatprep.subr.mxu0 %v367
    %4279 = vmatpush1.msra.mxu0 %v366
    %4280 = vmatprep.subr.mxu0 %v383
    %4281 = vmatpush1.msra.mxu0 %v382
    %4282 = vmatprep.subr.mxu0 %v399
    %4283 = vmatpush1.msra.mxu0 %v398
    %4284 = vmatprep.subr.mxu0 %v415
    %4285 = vmatpush1.msra.mxu0 %v414
    %4286 = vmatprep.subr.mxu0 %v431
    %4287 = vmatpush1.msra.mxu0 %v430
    %4288 = vmatprep.subr.mxu0 %v447
    %4289 = vmatpush1.msra.mxu0 %v446
    %4290 = vmatprep.subr.mxu0 %v463
    %4291 = vmatpush1.msra.mxu0 %v462
    %4292 = vmatprep.subr.mxu0 %v479
    %4293 = vmatpush1.msra.mxu0 %v478
    %4294 = vmatprep.subr.mxu0 %v495
    %4295 = vmatpush1.msra.mxu0 %v494
    %4296 = vmatprep.subr.mxu0 %v511
    %4297 = vmatpush1.msra.mxu0 %v510
    %4298 = vmatprep.subr.mxu0 %v527
    %4299 = vmatpush1.msra.mxu0 %v526
    %4300 = vmatprep.subr.mxu0 %v543
    %4301 = vmatpush1.msra.mxu0 %v542
    %4302 = vmatprep.subr.mxu0 %v559
    %4303 = vmatpush1.msra.mxu0 %v558
    %4304 = vmatprep.subr.mxu0 %v575
    %4305 = vmatpush1.msra.mxu0 %v574
    %4306 = vmatprep.subr.mxu0 %v591
    %4307 = vmatpush1.msra.mxu0 %v590
    %4308 = vmatprep.mubr.f32.mxu0 %v2229
    %4309 = vmatmul.mubr.f32.gmra.mrb[0].mxu0 %v2221
    %v4310 = vpop.f32.mrb[0].mxu0
    %v4311 = vadd.f32 %v2191, %v4310
    %v4312 = vpop.f32.mrb[0].mxu0
    %v4313 = vadd.f32 %v2195, %v4312
    %4314 = vdwg.mxu0
    %4315 = vmatprep.subr.mxu0 %v607
    %4316 = vmatpush1.msra.mxu0 %v606
    %4317 = vmatprep.subr.mxu0 %v623
    %4318 = vmatpush1.msra.mxu0 %v622
    %4319 = vmatprep.subr.mxu0 %v639
    %4320 = vmatpush1.msra.mxu0 %v638
    %4321 = vmatprep.subr.mxu0 %v655
    %4322 = vmatpush1.msra.mxu0 %v654
    %4323 = vmatprep.subr.mxu0 %v671
    %4324 = vmatpush1.msra.mxu0 %v670
    %4325 = vmatprep.subr.mxu0 %v687
    %4326 = vmatpush1.msra.mxu0 %v686
    %4327 = vmatprep.subr.mxu0 %v703
    %4328 = vmatpush1.msra.mxu0 %v702
    %4329 = vmatprep.subr.mxu0 %v719
    %4330 = vmatpush1.msra.mxu0 %v718
    %4331 = vmatprep.subr.mxu0 %v735
    %4332 = vmatpush1.msra.mxu0 %v734
    %4333 = vmatprep.subr.mxu0 %v751
    %4334 = vmatpush1.msra.mxu0 %v750
    %4335 = vmatprep.subr.mxu0 %v767
    %4336 = vmatpush1.msra.mxu0 %v766
    %4337 = vmatprep.subr.mxu0 %v783
    %4338 = vmatpush1.msra.mxu0 %v782
    %4339 = vmatprep.subr.mxu0 %v799
    %4340 = vmatpush1.msra.mxu0 %v798
    %4341 = vmatprep.subr.mxu0 %v815
    %4342 = vmatpush1.msra.mxu0 %v814
    %4343 = vmatprep.subr.mxu0 %v831
    %4344 = vmatpush1.msra.mxu0 %v830
    %4345 = vmatprep.subr.mxu0 %v847
    %4346 = vmatpush1.msra.mxu0 %v846
    %4347 = vmatprep.subr.mxu0 %v863
    %4348 = vmatpush1.msra.mxu0 %v862
    %4349 = vmatprep.subr.mxu0 %v879
    %4350 = vmatpush1.msra.mxu0 %v878
    %4351 = vmatprep.subr.mxu0 %v895
    %4352 = vmatpush1.msra.mxu0 %v894
    %4353 = vmatprep.subr.mxu0 %v911
    %4354 = vmatpush1.msra.mxu0 %v910
    %4355 = vmatprep.subr.mxu0 %v927
    %4356 = vmatpush1.msra.mxu0 %v926
    %4357 = vmatprep.subr.mxu0 %v943
    %4358 = vmatpush1.msra.mxu0 %v942
    %4359 = vmatprep.subr.mxu0 %v959
    %4360 = vmatpush1.msra.mxu0 %v958
    %4361 = vmatprep.subr.mxu0 %v975
    %4362 = vmatpush1.msra.mxu0 %v974
    %4363 = vmatprep.subr.mxu0 %v991
    %4364 = vmatpush1.msra.mxu0 %v990
    %4365 = vmatprep.subr.mxu0 %v1007
    %4366 = vmatpush1.msra.mxu0 %v1006
    %4367 = vmatprep.subr.mxu0 %v1023
    %4368 = vmatpush1.msra.mxu0 %v1022
    %4369 = vmatprep.subr.mxu0 %v1039
    %4370 = vmatpush1.msra.mxu0 %v1038
    %4371 = vmatprep.subr.mxu0 %v1055
    %4372 = vmatpush1.msra.mxu0 %v1054
    %4373 = vmatprep.subr.mxu0 %v1071
    %4374 = vmatpush1.msra.mxu0 %v1070
    %4375 = vmatprep.subr.mxu0 %v1087
    %4376 = vmatpush1.msra.mxu0 %v1086
    %4377 = vmatprep.subr.mxu0 %v1103
    %4378 = vmatpush1.msra.mxu0 %v1102
    %4379 = vmatprep.mubr.f32.mxu0 %v2230
    %4380 = vmatmul.mubr.f32.gmra.mrb[0].mxu0 %v2228
    %v4381 = vpop.f32.mrb[0].mxu0
    %v4382 = vadd.f32 %v4311, %v4381
    %v4383 = vpop.f32.mrb[0].mxu0
    %v4384 = vadd.f32 %v4313, %v4383
    %4385 = vdwg.mxu0
    %4386 = vmatprep.subr.mxu0 %v1119
    %4387 = vmatpush1.msra.mxu0 %v1118
    %4388 = vmatprep.subr.mxu0 %v1135
    %4389 = vmatpush1.msra.mxu0 %v1134
    %4390 = vmatprep.subr.mxu0 %v1151
    %4391 = vmatpush1.msra.mxu0 %v1150
    %4392 = vmatprep.subr.mxu0 %v1167
    %4393 = vmatpush1.msra.mxu0 %v1166
    %4394 = vmatprep.subr.mxu0 %v1183
    %4395 = vmatpush1.msra.mxu0 %v1182
    %4396 = vmatprep.subr.mxu0 %v1199
    %4397 = vmatpush1.msra.mxu0 %v1198
    %4398 = vmatprep.subr.mxu0 %v1215
    %4399 = vmatpush1.msra.mxu0 %v1214
    %4400 = vmatprep.subr.mxu0 %v1231
    %4401 = vmatpush1.msra.mxu0 %v1230
    %4402 = vmatprep.subr.mxu0 %v1247
    %4403 = vmatpush1.msra.mxu0 %v1246
    %4404 = vmatprep.subr.mxu0 %v1263
    %4405 = vmatpush1.msra.mxu0 %v1262
    %4406 = vmatprep.subr.mxu0 %v1279
    %4407 = vmatpush1.msra.mxu0 %v1278
    %4408 = vmatprep.subr.mxu0 %v1295
    %4409 = vmatpush1.msra.mxu0 %v1294
    %4410 = vmatprep.subr.mxu0 %v1311
    %4411 = vmatpush1.msra.mxu0 %v1310
    %4412 = vmatprep.subr.mxu0 %v1327
    %4413 = vmatpush1.msra.mxu0 %v1326
    %4414 = vmatprep.subr.mxu0 %v1343
    %4415 = vmatpush1.msra.mxu0 %v1342
    %4416 = vmatprep.subr.mxu0 %v1359
    %4417 = vmatpush1.msra.mxu0 %v1358
    %4418 = vmatprep.subr.mxu0 %v1375
    %4419 = vmatpush1.msra.mxu0 %v1374
    %4420 = vmatprep.subr.mxu0 %v1391
    %4421 = vmatpush1.msra.mxu0 %v1390
    %4422 = vmatprep.subr.mxu0 %v1407
    %4423 = vmatpush1.msra.mxu0 %v1406
    %4424 = vmatprep.subr.mxu0 %v1423
    %4425 = vmatpush1.msra.mxu0 %v1422
    %4426 = vmatprep.subr.mxu0 %v1439
    %4427 = vmatpush1.msra.mxu0 %v1438
    %4428 = vmatprep.subr.mxu0 %v1455
    %4429 = vmatpush1.msra.mxu0 %v1454
    %4430 = vmatprep.subr.mxu0 %v1471
    %4431 = vmatpush1.msra.mxu0 %v1470
    %4432 = vmatprep.subr.mxu0 %v1487
    %4433 = vmatpush1.msra.mxu0 %v1486
    %4434 = vmatprep.subr.mxu0 %v1503
    %4435 = vmatpush1.msra.mxu0 %v1502
    %4436 = vmatprep.subr.mxu0 %v1519
    %4437 = vmatpush1.msra.mxu0 %v1518
    %4438 = vmatprep.subr.mxu0 %v1535
    %4439 = vmatpush1.msra.mxu0 %v1534
    %4440 = vmatprep.subr.mxu0 %v1551
    %4441 = vmatpush1.msra.mxu0 %v1550
    %4442 = vmatprep.subr.mxu0 %v1567
    %4443 = vmatpush1.msra.mxu0 %v1566
    %4444 = vmatprep.subr.mxu0 %v1583
    %4445 = vmatpush1.msra.mxu0 %v1582
    %4446 = vmatprep.subr.mxu0 %v1599
    %4447 = vmatpush1.msra.mxu0 %v1598
    %4448 = vmatprep.subr.mxu0 %v1615
    %4449 = vmatpush1.msra.mxu0 %v1614
    %4450 = vmatprep.mubr.f32.mxu0 %v2246
    %4451 = vmatmul.mubr.f32.gmra.mrb[0].mxu0 %v2238
    %v4452 = vpop.f32.mrb[0].mxu0
    %v4453 = vadd.f32 %v4382, %v4452
    %v4454 = vpop.f32.mrb[0].mxu0
    %v4455 = vadd.f32 %v4384, %v4454
    %4456 = vdwg.mxu0
    %4457 = vmatprep.subr.mxu0 %v1631
    %4458 = vmatpush1.msra.mxu0 %v1630
    %4459 = vmatprep.subr.mxu0 %v1647
    %4460 = vmatpush1.msra.mxu0 %v1646
    %4461 = vmatprep.subr.mxu0 %v1663
    %4462 = vmatpush1.msra.mxu0 %v1662
    %4463 = vmatprep.subr.mxu0 %v1679
    %4464 = vmatpush1.msra.mxu0 %v1678
    %4465 = vmatprep.subr.mxu0 %v1695
    %4466 = vmatpush1.msra.mxu0 %v1694
    %4467 = vmatprep.subr.mxu0 %v1711
    %4468 = vmatpush1.msra.mxu0 %v1710
    %4469 = vmatprep.subr.mxu0 %v1727
    %4470 = vmatpush1.msra.mxu0 %v1726
    %4471 = vmatprep.subr.mxu0 %v1743
    %4472 = vmatpush1.msra.mxu0 %v1742
    %4473 = vmatprep.subr.mxu0 %v1759
    %4474 = vmatpush1.msra.mxu0 %v1758
    %4475 = vmatprep.subr.mxu0 %v1775
    %4476 = vmatpush1.msra.mxu0 %v1774
    %4477 = vmatprep.subr.mxu0 %v1791
    %4478 = vmatpush1.msra.mxu0 %v1790
    %4479 = vmatprep.subr.mxu0 %v1807
    %4480 = vmatpush1.msra.mxu0 %v1806
    %4481 = vmatprep.subr.mxu0 %v1823
    %4482 = vmatpush1.msra.mxu0 %v1822
    %4483 = vmatprep.subr.mxu0 %v1839
    %4484 = vmatpush1.msra.mxu0 %v1838
    %4485 = vmatprep.subr.mxu0 %v1855
    %4486 = vmatpush1.msra.mxu0 %v1854
    %4487 = vmatprep.subr.mxu0 %v1871
    %4488 = vmatpush1.msra.mxu0 %v1870
    %4489 = vmatprep.subr.mxu0 %v1887
    %4490 = vmatpush1.msra.mxu0 %v1886
    %4491 = vmatprep.subr.mxu0 %v1903
    %4492 = vmatpush1.msra.mxu0 %v1902
    %4493 = vmatprep.subr.mxu0 %v1919
    %4494 = vmatpush1.msra.mxu0 %v1918
    %4495 = vmatprep.subr.mxu0 %v1935
    %4496 = vmatpush1.msra.mxu0 %v1934
    %4497 = vmatprep.subr.mxu0 %v1951
    %4498 = vmatpush1.msra.mxu0 %v1950
    %4499 = vmatprep.subr.mxu0 %v1967
    %4500 = vmatpush1.msra.mxu0 %v1966
    %4501 = vmatprep.subr.mxu0 %v1983
    %4502 = vmatpush1.msra.mxu0 %v1982
    %4503 = vmatprep.subr.mxu0 %v1999
    %4504 = vmatpush1.msra.mxu0 %v1998
    %4505 = vmatprep.subr.mxu0 %v2015
    %4506 = vmatpush1.msra.mxu0 %v2014
    %4507 = vmatprep.subr.mxu0 %v2031
    %4508 = vmatpush1.msra.mxu0 %v2030
    %4509 = vmatprep.subr.mxu0 %v2047
    %4510 = vmatpush1.msra.mxu0 %v2046
    %4511 = vmatprep.subr.mxu0 %v2063
    %4512 = vmatpush1.msra.mxu0 %v2062
    %4513 = vmatprep.subr.mxu0 %v2079
    %4514 = vmatpush1.msra.mxu0 %v2078
    %4515 = vmatprep.subr.mxu0 %v2095
    %4516 = vmatpush1.msra.mxu0 %v2094
    %4517 = vmatprep.subr.mxu0 %v2111
    %4518 = vmatpush1.msra.mxu0 %v2110
    %4519 = vmatprep.subr.mxu0 %v2127
    %4520 = vmatpush1.msra.mxu0 %v2126
    %4521 = vmatprep.mubr.f32.mxu0 %v2247
    %4522 = vmatmul.mubr.f32.gmra.mrb[0].mxu0 %v2245
    %v4523 = vpop.f32.mrb[0].mxu0
    %v4524 = vadd.f32 %v4453, %v4523
    %v4525 = vpop.f32.mrb[0].mxu0
    %v4526 = vadd.f32 %v4455, %v4525
    %4527 = vdwg.mxu0
    %v4528 = vmax.f32 %v2536, 0.0
    %v4529 = vmax.f32 %v2538, 0.0
    %v4530 = vmax.f32 %v2820, 0.0
    %v4531 = vmax.f32 %v2822, 0.0
    %v4532 = vmax.f32 %v3104, 0.0
    %v4533 = vmax.f32 %v3106, 0.0
    %v4534 = vmax.f32 %v3388, 0.0
    %v4535 = vmax.f32 %v3390, 0.0
    %v4536 = vmax.f32 %v3672, 0.0
    %v4537 = vmax.f32 %v3674, 0.0
    %v4538 = vmax.f32 %v3956, 0.0
    %v4539 = vmax.f32 %v3958, 0.0
    %v4540 = vmax.f32 %v4240, 0.0
    %v4541 = vmax.f32 %v4242, 0.0
    %v4542 = vmax.f32 %v4524, 0.0
    %v4543 = vmax.f32 %v4526, 0.0
    %v4560 = vcombine.low %v4528, %v4529
    %v4561 = vcombine.low %v4530, %v4531
    %v4563 = vunpack.c.l.s4 1983009808
    %v4564 = vunpack.c.0.s8 %v4563
    %v4565 = vlaneseq
    %v4566 = vshrl.u32 %v4565, 7
    %v4567 = vsub.s32 %v4564, %v4566
    %v4568 = vrot.slane %v4560, %v4567
    %v4570 = vunpack.c.l.s4 1983009808
    %v4571 = vunpack.c.0.s8 %v4570
    %v4572 = vlaneseq
    %v4573 = vshrl.u32 %v4572, 7
    %v4574 = vsub.s32 %v4571, %v4573
    %v4575 = vrot.slane %v4561, %v4574
    %v4576 = vcombine.low %v4568, %v4575
    %v4577 = vcombine.low %v4532, %v4533
    %v4578 = vcombine.low %v4534, %v4535
    %v4580 = vunpack.c.l.s4 1983009808
    %v4581 = vunpack.c.0.s8 %v4580
    %v4582 = vlaneseq
    %v4583 = vshrl.u32 %v4582, 7
    %v4584 = vsub.s32 %v4581, %v4583
    %v4585 = vrot.slane %v4577, %v4584
    %v4587 = vunpack.c.l.s4 1983009808
    %v4588 = vunpack.c.0.s8 %v4587
    %v4589 = vlaneseq
    %v4590 = vshrl.u32 %v4589, 7
    %v4591 = vsub.s32 %v4588, %v4590
    %v4592 = vrot.slane %v4578, %v4591
    %v4593 = vcombine.low %v4585, %v4592
    %v4594 = vcombine.low %v4536, %v4537
    %v4595 = vcombine.low %v4538, %v4539
    %v4597 = vunpack.c.l.s4 1983009808
    %v4598 = vunpack.c.0.s8 %v4597
    %v4599 = vlaneseq
    %v4600 = vshrl.u32 %v4599, 7
    %v4601 = vsub.s32 %v4598, %v4600
    %v4602 = vrot.slane %v4594, %v4601
    %v4604 = vunpack.c.l.s4 1983009808
    %v4605 = vunpack.c.0.s8 %v4604
    %v4606 = vlaneseq
    %v4607 = vshrl.u32 %v4606, 7
    %v4608 = vsub.s32 %v4605, %v4607
    %v4609 = vrot.slane %v4595, %v4608
    %v4610 = vcombine.low %v4602, %v4609
    %v4611 = vcombine.low %v4540, %v4541
    %v4612 = vcombine.low %v4542, %v4543
    %v4614 = vunpack.c.l.s4 1983009808
    %v4615 = vunpack.c.0.s8 %v4614
    %v4616 = vlaneseq
    %v4617 = vshrl.u32 %v4616, 7
    %v4618 = vsub.s32 %v4615, %v4617
    %v4619 = vrot.slane %v4611, %v4618
    %v4621 = vunpack.c.l.s4 1983009808
    %v4622 = vunpack.c.0.s8 %v4621
    %v4623 = vlaneseq
    %v4624 = vshrl.u32 %v4623, 7
    %v4625 = vsub.s32 %v4622, %v4624
    %v4626 = vrot.slane %v4612, %v4625
    %v4627 = vcombine.low %v4619, %v4626
    %4632 = vst [vmem:[%s7] sm:$0xff] %v4576
    %4633 = vst [vmem:[%s7 + $0x8] sm:$0xff] %v4593
    %4634 = vst [vmem:[%s7 + $0x10] sm:$0xff] %v4610
    %4635 = vst [vmem:[%s7 + $0x18] sm:$0xff] %v4627
    %v4636 = vld [vmem:[%s3] sm:$0xff]
    %v4637 = vld [vmem:[%s3 + $0x8] sm:$0xff]
    %v4638 = vld [vmem:[%s3 + $0x10] sm:$0xff]
    %v4639 = vld [vmem:[%s3 + $0x18] sm:$0xff]
    %v4640 = vld [vmem:[%s3 + $0x20] sm:$0xff]
    %v4641 = vld [vmem:[%s3 + $0x28] sm:$0xff]
    %v4642 = vld [vmem:[%s3 + $0x30] sm:$0xff]
    %v4643 = vld [vmem:[%s3 + $0x38] sm:$0xff]
    %v4644 = vld [vmem:[%s3 + $0x40] sm:$0xff]
    %v4645 = vld [vmem:[%s3 + $0x48] sm:$0xff]
    %v4646 = vld [vmem:[%s3 + $0x50] sm:$0xff]
    %v4647 = vld [vmem:[%s3 + $0x58] sm:$0xff]
    %v4648 = vld [vmem:[%s3 + $0x60] sm:$0xff]
    %v4649 = vld [vmem:[%s3 + $0x68] sm:$0xff]
    %v4650 = vld [vmem:[%s3 + $0x70] sm:$0xff]
    %v4651 = vld [vmem:[%s3 + $0x78] sm:$0xff]
    %v4652 = vld [vmem:[%s3 + $0x80] sm:$0xff]
    %v4653 = vld [vmem:[%s3 + $0x88] sm:$0xff]
    %v4654 = vld [vmem:[%s3 + $0x90] sm:$0xff]
    %v4655 = vld [vmem:[%s3 + $0x98] sm:$0xff]
    %v4656 = vld [vmem:[%s3 + $0xa0] sm:$0xff]
    %v4657 = vld [vmem:[%s3 + $0xa8] sm:$0xff]
    %v4658 = vld [vmem:[%s3 + $0xb0] sm:$0xff]
    %v4659 = vld [vmem:[%s3 + $0xb8] sm:$0xff]
    %v4660 = vld [vmem:[%s3 + $0xc0] sm:$0xff]
    %v4661 = vld [vmem:[%s3 + $0xc8] sm:$0xff]
    %v4662 = vld [vmem:[%s3 + $0xd0] sm:$0xff]
    %v4663 = vld [vmem:[%s3 + $0xd8] sm:$0xff]
    %v4664 = vld [vmem:[%s3 + $0xe0] sm:$0xff]
    %v4665 = vld [vmem:[%s3 + $0xe8] sm:$0xff]
    %v4666 = vld [vmem:[%s3 + $0xf0] sm:$0xff]
    %v4667 = vld [vmem:[%s3 + $0xf8] sm:$0xff]
    %v4668 = vld [vmem:[%s3 + $0x100] sm:$0xff]
    %v4669 = vld [vmem:[%s3 + $0x108] sm:$0xff]
    %v4670 = vld [vmem:[%s3 + $0x110] sm:$0xff]
    %v4671 = vld [vmem:[%s3 + $0x118] sm:$0xff]
    %v4672 = vld [vmem:[%s3 + $0x120] sm:$0xff]
    %v4673 = vld [vmem:[%s3 + $0x128] sm:$0xff]
    %v4674 = vld [vmem:[%s3 + $0x130] sm:$0xff]
    %v4675 = vld [vmem:[%s3 + $0x138] sm:$0xff]
    %v4676 = vld [vmem:[%s3 + $0x140] sm:$0xff]
    %v4677 = vld [vmem:[%s3 + $0x148] sm:$0xff]
    %v4678 = vld [vmem:[%s3 + $0x150] sm:$0xff]
    %v4679 = vld [vmem:[%s3 + $0x158] sm:$0xff]
    %v4680 = vld [vmem:[%s3 + $0x160] sm:$0xff]
    %v4681 = vld [vmem:[%s3 + $0x168] sm:$0xff]
    %v4682 = vld [vmem:[%s3 + $0x170] sm:$0xff]
    %v4683 = vld [vmem:[%s3 + $0x178] sm:$0xff]
    %v4684 = vld [vmem:[%s3 + $0x180] sm:$0xff]
    %v4685 = vld [vmem:[%s3 + $0x188] sm:$0xff]
    %v4686 = vld [vmem:[%s3 + $0x190] sm:$0xff]
    %v4687 = vld [vmem:[%s3 + $0x198] sm:$0xff]
    %v4688 = vld [vmem:[%s3 + $0x1a0] sm:$0xff]
    %v4689 = vld [vmem:[%s3 + $0x1a8] sm:$0xff]
    %v4690 = vld [vmem:[%s3 + $0x1b0] sm:$0xff]
    %v4691 = vld [vmem:[%s3 + $0x1b8] sm:$0xff]
    %v4692 = vld [vmem:[%s3 + $0x1c0] sm:$0xff]
    %v4693 = vld [vmem:[%s3 + $0x1c8] sm:$0xff]
    %v4694 = vld [vmem:[%s3 + $0x1d0] sm:$0xff]
    %v4695 = vld [vmem:[%s3 + $0x1d8] sm:$0xff]
    %v4696 = vld [vmem:[%s3 + $0x1e0] sm:$0xff]
    %v4697 = vld [vmem:[%s3 + $0x1e8] sm:$0xff]
    %v4698 = vld [vmem:[%s3 + $0x1f0] sm:$0xff]
    %v4699 = vld [vmem:[%s3 + $0x1f8] sm:$0xff]
    %v4700 = vld [vmem:[%s3 + $0x200] sm:$0xff]
    %v4701 = vld [vmem:[%s3 + $0x208] sm:$0xff]
    %v4702 = vld [vmem:[%s3 + $0x210] sm:$0xff]
    %v4703 = vld [vmem:[%s3 + $0x218] sm:$0xff]
    %v4704 = vld [vmem:[%s3 + $0x220] sm:$0xff]
    %v4705 = vld [vmem:[%s3 + $0x228] sm:$0xff]
    %v4706 = vld [vmem:[%s3 + $0x230] sm:$0xff]
    %v4707 = vld [vmem:[%s3 + $0x238] sm:$0xff]
    %v4708 = vld [vmem:[%s3 + $0x240] sm:$0xff]
    %v4709 = vld [vmem:[%s3 + $0x248] sm:$0xff]
    %v4710 = vld [vmem:[%s3 + $0x250] sm:$0xff]
    %v4711 = vld [vmem:[%s3 + $0x258] sm:$0xff]
    %v4712 = vld [vmem:[%s3 + $0x260] sm:$0xff]
    %v4713 = vld [vmem:[%s3 + $0x268] sm:$0xff]
    %v4714 = vld [vmem:[%s3 + $0x270] sm:$0xff]
    %v4715 = vld [vmem:[%s3 + $0x278] sm:$0xff]
    %v4716 = vld [vmem:[%s3 + $0x280] sm:$0xff]
    %v4717 = vld [vmem:[%s3 + $0x288] sm:$0xff]
    %v4718 = vld [vmem:[%s3 + $0x290] sm:$0xff]
    %v4719 = vld [vmem:[%s3 + $0x298] sm:$0xff]
    %v4720 = vld [vmem:[%s3 + $0x2a0] sm:$0xff]
    %v4721 = vld [vmem:[%s3 + $0x2a8] sm:$0xff]
    %v4722 = vld [vmem:[%s3 + $0x2b0] sm:$0xff]
    %v4723 = vld [vmem:[%s3 + $0x2b8] sm:$0xff]
    %v4724 = vld [vmem:[%s3 + $0x2c0] sm:$0xff]
    %v4725 = vld [vmem:[%s3 + $0x2c8] sm:$0xff]
    %v4726 = vld [vmem:[%s3 + $0x2d0] sm:$0xff]
    %v4727 = vld [vmem:[%s3 + $0x2d8] sm:$0xff]
    %v4728 = vld [vmem:[%s3 + $0x2e0] sm:$0xff]
    %v4729 = vld [vmem:[%s3 + $0x2e8] sm:$0xff]
    %v4730 = vld [vmem:[%s3 + $0x2f0] sm:$0xff]
    %v4731 = vld [vmem:[%s3 + $0x2f8] sm:$0xff]
    %v4732 = vld [vmem:[%s3 + $0x300] sm:$0xff]
    %v4733 = vld [vmem:[%s3 + $0x308] sm:$0xff]
    %v4734 = vld [vmem:[%s3 + $0x310] sm:$0xff]
    %v4735 = vld [vmem:[%s3 + $0x318] sm:$0xff]
    %v4736 = vld [vmem:[%s3 + $0x320] sm:$0xff]
    %v4737 = vld [vmem:[%s3 + $0x328] sm:$0xff]
    %v4738 = vld [vmem:[%s3 + $0x330] sm:$0xff]
    %v4739 = vld [vmem:[%s3 + $0x338] sm:$0xff]
    %v4740 = vld [vmem:[%s3 + $0x340] sm:$0xff]
    %v4741 = vld [vmem:[%s3 + $0x348] sm:$0xff]
    %v4742 = vld [vmem:[%s3 + $0x350] sm:$0xff]
    %v4743 = vld [vmem:[%s3 + $0x358] sm:$0xff]
    %v4744 = vld [vmem:[%s3 + $0x360] sm:$0xff]
    %v4745 = vld [vmem:[%s3 + $0x368] sm:$0xff]
    %v4746 = vld [vmem:[%s3 + $0x370] sm:$0xff]
    %v4747 = vld [vmem:[%s3 + $0x378] sm:$0xff]
    %v4748 = vld [vmem:[%s3 + $0x380] sm:$0xff]
    %v4749 = vld [vmem:[%s3 + $0x388] sm:$0xff]
    %v4750 = vld [vmem:[%s3 + $0x390] sm:$0xff]
    %v4751 = vld [vmem:[%s3 + $0x398] sm:$0xff]
    %v4752 = vld [vmem:[%s3 + $0x3a0] sm:$0xff]
    %v4753 = vld [vmem:[%s3 + $0x3a8] sm:$0xff]
    %v4754 = vld [vmem:[%s3 + $0x3b0] sm:$0xff]
    %v4755 = vld [vmem:[%s3 + $0x3b8] sm:$0xff]
    %v4756 = vld [vmem:[%s3 + $0x3c0] sm:$0xff]
    %v4757 = vld [vmem:[%s3 + $0x3c8] sm:$0xff]
    %v4758 = vld [vmem:[%s3 + $0x3d0] sm:$0xff]
    %v4759 = vld [vmem:[%s3 + $0x3d8] sm:$0xff]
    %v4760 = vld [vmem:[%s3 + $0x3e0] sm:$0xff]
    %v4761 = vld [vmem:[%s3 + $0x3e8] sm:$0xff]
    %v4762 = vld [vmem:[%s3 + $0x3f0] sm:$0xff]
    %v4763 = vld [vmem:[%s3 + $0x3f8] sm:$0xff]
    %v4764 = vld [vmem:[%s3 + $0x400] sm:$0xff]
    %v4765 = vld [vmem:[%s3 + $0x408] sm:$0xff]
    %v4766 = vld [vmem:[%s3 + $0x410] sm:$0xff]
    %v4767 = vld [vmem:[%s3 + $0x418] sm:$0xff]
    %v4768 = vld [vmem:[%s3 + $0x420] sm:$0xff]
    %v4769 = vld [vmem:[%s3 + $0x428] sm:$0xff]
    %v4770 = vld [vmem:[%s3 + $0x430] sm:$0xff]
    %v4771 = vld [vmem:[%s3 + $0x438] sm:$0xff]
    %v4772 = vld [vmem:[%s3 + $0x440] sm:$0xff]
    %v4773 = vld [vmem:[%s3 + $0x448] sm:$0xff]
    %v4774 = vld [vmem:[%s3 + $0x450] sm:$0xff]
    %v4775 = vld [vmem:[%s3 + $0x458] sm:$0xff]
    %v4776 = vld [vmem:[%s3 + $0x460] sm:$0xff]
    %v4777 = vld [vmem:[%s3 + $0x468] sm:$0xff]
    %v4778 = vld [vmem:[%s3 + $0x470] sm:$0xff]
    %v4779 = vld [vmem:[%s3 + $0x478] sm:$0xff]
    %v4780 = vld [vmem:[%s3 + $0x480] sm:$0xff]
    %v4781 = vld [vmem:[%s3 + $0x488] sm:$0xff]
    %v4782 = vld [vmem:[%s3 + $0x490] sm:$0xff]
    %v4783 = vld [vmem:[%s3 + $0x498] sm:$0xff]
    %v4784 = vld [vmem:[%s3 + $0x4a0] sm:$0xff]
    %v4785 = vld [vmem:[%s3 + $0x4a8] sm:$0xff]
    %v4786 = vld [vmem:[%s3 + $0x4b0] sm:$0xff]
    %v4787 = vld [vmem:[%s3 + $0x4b8] sm:$0xff]
    %v4788 = vld [vmem:[%s3 + $0x4c0] sm:$0xff]
    %v4789 = vld [vmem:[%s3 + $0x4c8] sm:$0xff]
    %v4790 = vld [vmem:[%s3 + $0x4d0] sm:$0xff]
    %v4791 = vld [vmem:[%s3 + $0x4d8] sm:$0xff]
    %v4792 = vld [vmem:[%s3 + $0x4e0] sm:$0xff]
    %v4793 = vld [vmem:[%s3 + $0x4e8] sm:$0xff]
    %v4794 = vld [vmem:[%s3 + $0x4f0] sm:$0xff]
    %v4795 = vld [vmem:[%s3 + $0x4f8] sm:$0xff]
    %v4796 = vld [vmem:[%s3 + $0x500] sm:$0xff]
    %v4797 = vld [vmem:[%s3 + $0x508] sm:$0xff]
    %v4798 = vld [vmem:[%s3 + $0x510] sm:$0xff]
    %v4799 = vld [vmem:[%s3 + $0x518] sm:$0xff]
    %v4800 = vld [vmem:[%s3 + $0x520] sm:$0xff]
    %v4801 = vld [vmem:[%s3 + $0x528] sm:$0xff]
    %v4802 = vld [vmem:[%s3 + $0x530] sm:$0xff]
    %v4803 = vld [vmem:[%s3 + $0x538] sm:$0xff]
    %v4804 = vld [vmem:[%s3 + $0x540] sm:$0xff]
    %v4805 = vld [vmem:[%s3 + $0x548] sm:$0xff]
    %v4806 = vld [vmem:[%s3 + $0x550] sm:$0xff]
    %v4807 = vld [vmem:[%s3 + $0x558] sm:$0xff]
    %v4808 = vld [vmem:[%s3 + $0x560] sm:$0xff]
    %v4809 = vld [vmem:[%s3 + $0x568] sm:$0xff]
    %v4810 = vld [vmem:[%s3 + $0x570] sm:$0xff]
    %v4811 = vld [vmem:[%s3 + $0x578] sm:$0xff]
    %v4812 = vld [vmem:[%s3 + $0x580] sm:$0xff]
    %v4813 = vld [vmem:[%s3 + $0x588] sm:$0xff]
    %v4814 = vld [vmem:[%s3 + $0x590] sm:$0xff]
    %v4815 = vld [vmem:[%s3 + $0x598] sm:$0xff]
    %v4816 = vld [vmem:[%s3 + $0x5a0] sm:$0xff]
    %v4817 = vld [vmem:[%s3 + $0x5a8] sm:$0xff]
    %v4818 = vld [vmem:[%s3 + $0x5b0] sm:$0xff]
    %v4819 = vld [vmem:[%s3 + $0x5b8] sm:$0xff]
    %v4820 = vld [vmem:[%s3 + $0x5c0] sm:$0xff]
    %v4821 = vld [vmem:[%s3 + $0x5c8] sm:$0xff]
    %v4822 = vld [vmem:[%s3 + $0x5d0] sm:$0xff]
    %v4823 = vld [vmem:[%s3 + $0x5d8] sm:$0xff]
    %v4824 = vld [vmem:[%s3 + $0x5e0] sm:$0xff]
    %v4825 = vld [vmem:[%s3 + $0x5e8] sm:$0xff]
    %v4826 = vld [vmem:[%s3 + $0x5f0] sm:$0xff]
    %v4827 = vld [vmem:[%s3 + $0x5f8] sm:$0xff]
    %v4828 = vld [vmem:[%s3 + $0x600] sm:$0xff]
    %v4829 = vld [vmem:[%s3 + $0x608] sm:$0xff]
    %v4830 = vld [vmem:[%s3 + $0x610] sm:$0xff]
    %v4831 = vld [vmem:[%s3 + $0x618] sm:$0xff]
    %v4832 = vld [vmem:[%s3 + $0x620] sm:$0xff]
    %v4833 = vld [vmem:[%s3 + $0x628] sm:$0xff]
    %v4834 = vld [vmem:[%s3 + $0x630] sm:$0xff]
    %v4835 = vld [vmem:[%s3 + $0x638] sm:$0xff]
    %v4836 = vld [vmem:[%s3 + $0x640] sm:$0xff]
    %v4837 = vld [vmem:[%s3 + $0x648] sm:$0xff]
    %v4838 = vld [vmem:[%s3 + $0x650] sm:$0xff]
    %v4839 = vld [vmem:[%s3 + $0x658] sm:$0xff]
    %v4840 = vld [vmem:[%s3 + $0x660] sm:$0xff]
    %v4841 = vld [vmem:[%s3 + $0x668] sm:$0xff]
    %v4842 = vld [vmem:[%s3 + $0x670] sm:$0xff]
    %v4843 = vld [vmem:[%s3 + $0x678] sm:$0xff]
    %v4844 = vld [vmem:[%s3 + $0x680] sm:$0xff]
    %v4845 = vld [vmem:[%s3 + $0x688] sm:$0xff]
    %v4846 = vld [vmem:[%s3 + $0x690] sm:$0xff]
    %v4847 = vld [vmem:[%s3 + $0x698] sm:$0xff]
    %v4848 = vld [vmem:[%s3 + $0x6a0] sm:$0xff]
    %v4849 = vld [vmem:[%s3 + $0x6a8] sm:$0xff]
    %v4850 = vld [vmem:[%s3 + $0x6b0] sm:$0xff]
    %v4851 = vld [vmem:[%s3 + $0x6b8] sm:$0xff]
    %v4852 = vld [vmem:[%s3 + $0x6c0] sm:$0xff]
    %v4853 = vld [vmem:[%s3 + $0x6c8] sm:$0xff]
    %v4854 = vld [vmem:[%s3 + $0x6d0] sm:$0xff]
    %v4855 = vld [vmem:[%s3 + $0x6d8] sm:$0xff]
    %v4856 = vld [vmem:[%s3 + $0x6e0] sm:$0xff]
    %v4857 = vld [vmem:[%s3 + $0x6e8] sm:$0xff]
    %v4858 = vld [vmem:[%s3 + $0x6f0] sm:$0xff]
    %v4859 = vld [vmem:[%s3 + $0x6f8] sm:$0xff]
    %v4860 = vld [vmem:[%s3 + $0x700] sm:$0xff]
    %v4861 = vld [vmem:[%s3 + $0x708] sm:$0xff]
    %v4862 = vld [vmem:[%s3 + $0x710] sm:$0xff]
    %v4863 = vld [vmem:[%s3 + $0x718] sm:$0xff]
    %v4864 = vld [vmem:[%s3 + $0x720] sm:$0xff]
    %v4865 = vld [vmem:[%s3 + $0x728] sm:$0xff]
    %v4866 = vld [vmem:[%s3 + $0x730] sm:$0xff]
    %v4867 = vld [vmem:[%s3 + $0x738] sm:$0xff]
    %v4868 = vld [vmem:[%s3 + $0x740] sm:$0xff]
    %v4869 = vld [vmem:[%s3 + $0x748] sm:$0xff]
    %v4870 = vld [vmem:[%s3 + $0x750] sm:$0xff]
    %v4871 = vld [vmem:[%s3 + $0x758] sm:$0xff]
    %v4872 = vld [vmem:[%s3 + $0x760] sm:$0xff]
    %v4873 = vld [vmem:[%s3 + $0x768] sm:$0xff]
    %v4874 = vld [vmem:[%s3 + $0x770] sm:$0xff]
    %v4875 = vld [vmem:[%s3 + $0x778] sm:$0xff]
    %v4876 = vld [vmem:[%s3 + $0x780] sm:$0xff]
    %v4877 = vld [vmem:[%s3 + $0x788] sm:$0xff]
    %v4878 = vld [vmem:[%s3 + $0x790] sm:$0xff]
    %v4879 = vld [vmem:[%s3 + $0x798] sm:$0xff]
    %v4880 = vld [vmem:[%s3 + $0x7a0] sm:$0xff]
    %v4881 = vld [vmem:[%s3 + $0x7a8] sm:$0xff]
    %v4882 = vld [vmem:[%s3 + $0x7b0] sm:$0xff]
    %v4883 = vld [vmem:[%s3 + $0x7b8] sm:$0xff]
    %v4884 = vld [vmem:[%s3 + $0x7c0] sm:$0xff]
    %v4885 = vld [vmem:[%s3 + $0x7c8] sm:$0xff]
    %v4886 = vld [vmem:[%s3 + $0x7d0] sm:$0xff]
    %v4887 = vld [vmem:[%s3 + $0x7d8] sm:$0xff]
    %v4888 = vld [vmem:[%s3 + $0x7e0] sm:$0xff]
    %v4889 = vld [vmem:[%s3 + $0x7e8] sm:$0xff]
    %v4890 = vld [vmem:[%s3 + $0x7f0] sm:$0xff]
    %v4891 = vld [vmem:[%s3 + $0x7f8] sm:$0xff]
    %v4892 = vld [vmem:[#allocation7] sm:$0x1]
    %v4894 = vlaneseq
    %v4895 = vshrl.u32 %v4894, 7
    %v4896 = vsub.s32 0, %v4895
    %v4897 = vrot.slane %v4892, %v4896
    %4899 = vmatprep.subr.mxu0 0.0
    %4900 = vmatpush1.msra.mxu0 %v4636
    %4901 = vmatprep.subr.mxu0 0.0
    %4902 = vmatpush1.msra.mxu0 %v4637
    %4903 = vmatprep.subr.mxu0 0.0
    %4904 = vmatpush1.msra.mxu0 %v4638
    %4905 = vmatprep.subr.mxu0 0.0
    %4906 = vmatpush1.msra.mxu0 %v4639
    %4907 = vmatprep.subr.mxu0 0.0
    %4908 = vmatpush1.msra.mxu0 %v4640
    %4909 = vmatprep.subr.mxu0 0.0
    %4910 = vmatpush1.msra.mxu0 %v4641
    %4911 = vmatprep.subr.mxu0 0.0
    %4912 = vmatpush1.msra.mxu0 %v4642
    %4913 = vmatprep.subr.mxu0 0.0
    %4914 = vmatpush1.msra.mxu0 %v4643
    %4915 = vmatprep.subr.mxu0 0.0
    %4916 = vmatpush1.msra.mxu0 %v4644
    %4917 = vmatprep.subr.mxu0 0.0
    %4918 = vmatpush1.msra.mxu0 %v4645
    %4919 = vmatprep.subr.mxu0 0.0
    %4920 = vmatpush1.msra.mxu0 %v4646
    %4921 = vmatprep.subr.mxu0 0.0
    %4922 = vmatpush1.msra.mxu0 %v4647
    %4923 = vmatprep.subr.mxu0 0.0
    %4924 = vmatpush1.msra.mxu0 %v4648
    %4925 = vmatprep.subr.mxu0 0.0
    %4926 = vmatpush1.msra.mxu0 %v4649
    %4927 = vmatprep.subr.mxu0 0.0
    %4928 = vmatpush1.msra.mxu0 %v4650
    %4929 = vmatprep.subr.mxu0 0.0
    %4930 = vmatpush1.msra.mxu0 %v4651
    %4931 = vmatprep.subr.mxu0 0.0
    %4932 = vmatpush1.msra.mxu0 %v4652
    %4933 = vmatprep.subr.mxu0 0.0
    %4934 = vmatpush1.msra.mxu0 %v4653
    %4935 = vmatprep.subr.mxu0 0.0
    %4936 = vmatpush1.msra.mxu0 %v4654
    %4937 = vmatprep.subr.mxu0 0.0
    %4938 = vmatpush1.msra.mxu0 %v4655
    %4939 = vmatprep.subr.mxu0 0.0
    %4940 = vmatpush1.msra.mxu0 %v4656
    %4941 = vmatprep.subr.mxu0 0.0
    %4942 = vmatpush1.msra.mxu0 %v4657
    %4943 = vmatprep.subr.mxu0 0.0
    %4944 = vmatpush1.msra.mxu0 %v4658
    %4945 = vmatprep.subr.mxu0 0.0
    %4946 = vmatpush1.msra.mxu0 %v4659
    %4947 = vmatprep.subr.mxu0 0.0
    %4948 = vmatpush1.msra.mxu0 %v4660
    %4949 = vmatprep.subr.mxu0 0.0
    %4950 = vmatpush1.msra.mxu0 %v4661
    %4951 = vmatprep.subr.mxu0 0.0
    %4952 = vmatpush1.msra.mxu0 %v4662
    %4953 = vmatprep.subr.mxu0 0.0
    %4954 = vmatpush1.msra.mxu0 %v4663
    %4955 = vmatprep.subr.mxu0 0.0
    %4956 = vmatpush1.msra.mxu0 %v4664
    %4957 = vmatprep.subr.mxu0 0.0
    %4958 = vmatpush1.msra.mxu0 %v4665
    %4959 = vmatprep.subr.mxu0 0.0
    %4960 = vmatpush1.msra.mxu0 %v4666
    %4961 = vmatprep.subr.mxu0 0.0
    %4962 = vmatpush1.msra.mxu0 %v4667
    %4963 = vmatprep.mubr.f32.mxu0 %v4529
    %4964 = vmatmul.mubr.f32.gmra.mrb[0].mxu0 %v4528
    %v4965 = vpop.f32.mrb[0].mxu0
    %v4966 = vadd.f32 %v4897, %v4965
    %v4967 = vpop.f32.mrb[0].mxu0
    %4968 = vdwg.mxu0
    %4969 = vmatprep.subr.mxu0 0.0
    %4970 = vmatpush1.msra.mxu0 %v4668
    %4971 = vmatprep.subr.mxu0 0.0
    %4972 = vmatpush1.msra.mxu0 %v4669
    %4973 = vmatprep.subr.mxu0 0.0
    %4974 = vmatpush1.msra.mxu0 %v4670
    %4975 = vmatprep.subr.mxu0 0.0
    %4976 = vmatpush1.msra.mxu0 %v4671
    %4977 = vmatprep.subr.mxu0 0.0
    %4978 = vmatpush1.msra.mxu0 %v4672
    %4979 = vmatprep.subr.mxu0 0.0
    %4980 = vmatpush1.msra.mxu0 %v4673
    %4981 = vmatprep.subr.mxu0 0.0
    %4982 = vmatpush1.msra.mxu0 %v4674
    %4983 = vmatprep.subr.mxu0 0.0
    %4984 = vmatpush1.msra.mxu0 %v4675
    %4985 = vmatprep.subr.mxu0 0.0
    %4986 = vmatpush1.msra.mxu0 %v4676
    %4987 = vmatprep.subr.mxu0 0.0
    %4988 = vmatpush1.msra.mxu0 %v4677
    %4989 = vmatprep.subr.mxu0 0.0
    %4990 = vmatpush1.msra.mxu0 %v4678
    %4991 = vmatprep.subr.mxu0 0.0
    %4992 = vmatpush1.msra.mxu0 %v4679
    %4993 = vmatprep.subr.mxu0 0.0
    %4994 = vmatpush1.msra.mxu0 %v4680
    %4995 = vmatprep.subr.mxu0 0.0
    %4996 = vmatpush1.msra.mxu0 %v4681
    %4997 = vmatprep.subr.mxu0 0.0
    %4998 = vmatpush1.msra.mxu0 %v4682
    %4999 = vmatprep.subr.mxu0 0.0
    %5000 = vmatpush1.msra.mxu0 %v4683
    %5001 = vmatprep.subr.mxu0 0.0
    %5002 = vmatpush1.msra.mxu0 %v4684
    %5003 = vmatprep.subr.mxu0 0.0
    %5004 = vmatpush1.msra.mxu0 %v4685
    %5005 = vmatprep.subr.mxu0 0.0
    %5006 = vmatpush1.msra.mxu0 %v4686
    %5007 = vmatprep.subr.mxu0 0.0
    %5008 = vmatpush1.msra.mxu0 %v4687
    %5009 = vmatprep.subr.mxu0 0.0
    %5010 = vmatpush1.msra.mxu0 %v4688
    %5011 = vmatprep.subr.mxu0 0.0
    %5012 = vmatpush1.msra.mxu0 %v4689
    %5013 = vmatprep.subr.mxu0 0.0
    %5014 = vmatpush1.msra.mxu0 %v4690
    %5015 = vmatprep.subr.mxu0 0.0
    %5016 = vmatpush1.msra.mxu0 %v4691
    %5017 = vmatprep.subr.mxu0 0.0
    %5018 = vmatpush1.msra.mxu0 %v4692
    %5019 = vmatprep.subr.mxu0 0.0
    %5020 = vmatpush1.msra.mxu0 %v4693
    %5021 = vmatprep.subr.mxu0 0.0
    %5022 = vmatpush1.msra.mxu0 %v4694
    %5023 = vmatprep.subr.mxu0 0.0
    %5024 = vmatpush1.msra.mxu0 %v4695
    %5025 = vmatprep.subr.mxu0 0.0
    %5026 = vmatpush1.msra.mxu0 %v4696
    %5027 = vmatprep.subr.mxu0 0.0
    %5028 = vmatpush1.msra.mxu0 %v4697
    %5029 = vmatprep.subr.mxu0 0.0
    %5030 = vmatpush1.msra.mxu0 %v4698
    %5031 = vmatprep.subr.mxu0 0.0
    %5032 = vmatpush1.msra.mxu0 %v4699
    %5033 = vmatprep.mubr.f32.mxu0 %v4531
    %5034 = vmatmul.mubr.f32.gmra.mrb[0].mxu0 %v4530
    %v5035 = vpop.f32.mrb[0].mxu0
    %v5036 = vadd.f32 %v4966, %v5035
    %v5037 = vpop.f32.mrb[0].mxu0
    %5038 = vdwg.mxu0
    %5039 = vmatprep.subr.mxu0 0.0
    %5040 = vmatpush1.msra.mxu0 %v4700
    %5041 = vmatprep.subr.mxu0 0.0
    %5042 = vmatpush1.msra.mxu0 %v4701
    %5043 = vmatprep.subr.mxu0 0.0
    %5044 = vmatpush1.msra.mxu0 %v4702
    %5045 = vmatprep.subr.mxu0 0.0
    %5046 = vmatpush1.msra.mxu0 %v4703
    %5047 = vmatprep.subr.mxu0 0.0
    %5048 = vmatpush1.msra.mxu0 %v4704
    %5049 = vmatprep.subr.mxu0 0.0
    %5050 = vmatpush1.msra.mxu0 %v4705
    %5051 = vmatprep.subr.mxu0 0.0
    %5052 = vmatpush1.msra.mxu0 %v4706
    %5053 = vmatprep.subr.mxu0 0.0
    %5054 = vmatpush1.msra.mxu0 %v4707
    %5055 = vmatprep.subr.mxu0 0.0
    %5056 = vmatpush1.msra.mxu0 %v4708
    %5057 = vmatprep.subr.mxu0 0.0
    %5058 = vmatpush1.msra.mxu0 %v4709
    %5059 = vmatprep.subr.mxu0 0.0
    %5060 = vmatpush1.msra.mxu0 %v4710
    %5061 = vmatprep.subr.mxu0 0.0
    %5062 = vmatpush1.msra.mxu0 %v4711
    %5063 = vmatprep.subr.mxu0 0.0
    %5064 = vmatpush1.msra.mxu0 %v4712
    %5065 = vmatprep.subr.mxu0 0.0
    %5066 = vmatpush1.msra.mxu0 %v4713
    %5067 = vmatprep.subr.mxu0 0.0
    %5068 = vmatpush1.msra.mxu0 %v4714
    %5069 = vmatprep.subr.mxu0 0.0
    %5070 = vmatpush1.msra.mxu0 %v4715
    %5071 = vmatprep.subr.mxu0 0.0
    %5072 = vmatpush1.msra.mxu0 %v4716
    %5073 = vmatprep.subr.mxu0 0.0
    %5074 = vmatpush1.msra.mxu0 %v4717
    %5075 = vmatprep.subr.mxu0 0.0
    %5076 = vmatpush1.msra.mxu0 %v4718
    %5077 = vmatprep.subr.mxu0 0.0
    %5078 = vmatpush1.msra.mxu0 %v4719
    %5079 = vmatprep.subr.mxu0 0.0
    %5080 = vmatpush1.msra.mxu0 %v4720
    %5081 = vmatprep.subr.mxu0 0.0
    %5082 = vmatpush1.msra.mxu0 %v4721
    %5083 = vmatprep.subr.mxu0 0.0
    %5084 = vmatpush1.msra.mxu0 %v4722
    %5085 = vmatprep.subr.mxu0 0.0
    %5086 = vmatpush1.msra.mxu0 %v4723
    %5087 = vmatprep.subr.mxu0 0.0
    %5088 = vmatpush1.msra.mxu0 %v4724
    %5089 = vmatprep.subr.mxu0 0.0
    %5090 = vmatpush1.msra.mxu0 %v4725
    %5091 = vmatprep.subr.mxu0 0.0
    %5092 = vmatpush1.msra.mxu0 %v4726
    %5093 = vmatprep.subr.mxu0 0.0
    %5094 = vmatpush1.msra.mxu0 %v4727
    %5095 = vmatprep.subr.mxu0 0.0
    %5096 = vmatpush1.msra.mxu0 %v4728
    %5097 = vmatprep.subr.mxu0 0.0
    %5098 = vmatpush1.msra.mxu0 %v4729
    %5099 = vmatprep.subr.mxu0 0.0
    %5100 = vmatpush1.msra.mxu0 %v4730
    %5101 = vmatprep.subr.mxu0 0.0
    %5102 = vmatpush1.msra.mxu0 %v4731
    %5103 = vmatprep.mubr.f32.mxu0 %v4533
    %5104 = vmatmul.mubr.f32.gmra.mrb[0].mxu0 %v4532
    %v5105 = vpop.f32.mrb[0].mxu0
    %v5106 = vadd.f32 %v5036, %v5105
    %v5107 = vpop.f32.mrb[0].mxu0
    %5108 = vdwg.mxu0
    %5109 = vmatprep.subr.mxu0 0.0
    %5110 = vmatpush1.msra.mxu0 %v4732
    %5111 = vmatprep.subr.mxu0 0.0
    %5112 = vmatpush1.msra.mxu0 %v4733
    %5113 = vmatprep.subr.mxu0 0.0
    %5114 = vmatpush1.msra.mxu0 %v4734
    %5115 = vmatprep.subr.mxu0 0.0
    %5116 = vmatpush1.msra.mxu0 %v4735
    %5117 = vmatprep.subr.mxu0 0.0
    %5118 = vmatpush1.msra.mxu0 %v4736
    %5119 = vmatprep.subr.mxu0 0.0
    %5120 = vmatpush1.msra.mxu0 %v4737
    %5121 = vmatprep.subr.mxu0 0.0
    %5122 = vmatpush1.msra.mxu0 %v4738
    %5123 = vmatprep.subr.mxu0 0.0
    %5124 = vmatpush1.msra.mxu0 %v4739
    %5125 = vmatprep.subr.mxu0 0.0
    %5126 = vmatpush1.msra.mxu0 %v4740
    %5127 = vmatprep.subr.mxu0 0.0
    %5128 = vmatpush1.msra.mxu0 %v4741
    %5129 = vmatprep.subr.mxu0 0.0
    %5130 = vmatpush1.msra.mxu0 %v4742
    %5131 = vmatprep.subr.mxu0 0.0
    %5132 = vmatpush1.msra.mxu0 %v4743
    %5133 = vmatprep.subr.mxu0 0.0
    %5134 = vmatpush1.msra.mxu0 %v4744
    %5135 = vmatprep.subr.mxu0 0.0
    %5136 = vmatpush1.msra.mxu0 %v4745
    %5137 = vmatprep.subr.mxu0 0.0
    %5138 = vmatpush1.msra.mxu0 %v4746
    %5139 = vmatprep.subr.mxu0 0.0
    %5140 = vmatpush1.msra.mxu0 %v4747
    %5141 = vmatprep.subr.mxu0 0.0
    %5142 = vmatpush1.msra.mxu0 %v4748
    %5143 = vmatprep.subr.mxu0 0.0
    %5144 = vmatpush1.msra.mxu0 %v4749
    %5145 = vmatprep.subr.mxu0 0.0
    %5146 = vmatpush1.msra.mxu0 %v4750
    %5147 = vmatprep.subr.mxu0 0.0
    %5148 = vmatpush1.msra.mxu0 %v4751
    %5149 = vmatprep.subr.mxu0 0.0
    %5150 = vmatpush1.msra.mxu0 %v4752
    %5151 = vmatprep.subr.mxu0 0.0
    %5152 = vmatpush1.msra.mxu0 %v4753
    %5153 = vmatprep.subr.mxu0 0.0
    %5154 = vmatpush1.msra.mxu0 %v4754
    %5155 = vmatprep.subr.mxu0 0.0
    %5156 = vmatpush1.msra.mxu0 %v4755
    %5157 = vmatprep.subr.mxu0 0.0
    %5158 = vmatpush1.msra.mxu0 %v4756
    %5159 = vmatprep.subr.mxu0 0.0
    %5160 = vmatpush1.msra.mxu0 %v4757
    %5161 = vmatprep.subr.mxu0 0.0
    %5162 = vmatpush1.msra.mxu0 %v4758
    %5163 = vmatprep.subr.mxu0 0.0
    %5164 = vmatpush1.msra.mxu0 %v4759
    %5165 = vmatprep.subr.mxu0 0.0
    %5166 = vmatpush1.msra.mxu0 %v4760
    %5167 = vmatprep.subr.mxu0 0.0
    %5168 = vmatpush1.msra.mxu0 %v4761
    %5169 = vmatprep.subr.mxu0 0.0
    %5170 = vmatpush1.msra.mxu0 %v4762
    %5171 = vmatprep.subr.mxu0 0.0
    %5172 = vmatpush1.msra.mxu0 %v4763
    %5173 = vmatprep.mubr.f32.mxu0 %v4535
    %5174 = vmatmul.mubr.f32.gmra.mrb[0].mxu0 %v4534
    %v5175 = vpop.f32.mrb[0].mxu0
    %v5176 = vadd.f32 %v5106, %v5175
    %v5177 = vpop.f32.mrb[0].mxu0
    %5178 = vdwg.mxu0
    %5179 = vmatprep.subr.mxu0 0.0
    %5180 = vmatpush1.msra.mxu0 %v4764
    %5181 = vmatprep.subr.mxu0 0.0
    %5182 = vmatpush1.msra.mxu0 %v4765
    %5183 = vmatprep.subr.mxu0 0.0
    %5184 = vmatpush1.msra.mxu0 %v4766
    %5185 = vmatprep.subr.mxu0 0.0
    %5186 = vmatpush1.msra.mxu0 %v4767
    %5187 = vmatprep.subr.mxu0 0.0
    %5188 = vmatpush1.msra.mxu0 %v4768
    %5189 = vmatprep.subr.mxu0 0.0
    %5190 = vmatpush1.msra.mxu0 %v4769
    %5191 = vmatprep.subr.mxu0 0.0
    %5192 = vmatpush1.msra.mxu0 %v4770
    %5193 = vmatprep.subr.mxu0 0.0
    %5194 = vmatpush1.msra.mxu0 %v4771
    %5195 = vmatprep.subr.mxu0 0.0
    %5196 = vmatpush1.msra.mxu0 %v4772
    %5197 = vmatprep.subr.mxu0 0.0
    %5198 = vmatpush1.msra.mxu0 %v4773
    %5199 = vmatprep.subr.mxu0 0.0
    %5200 = vmatpush1.msra.mxu0 %v4774
    %5201 = vmatprep.subr.mxu0 0.0
    %5202 = vmatpush1.msra.mxu0 %v4775
    %5203 = vmatprep.subr.mxu0 0.0
    %5204 = vmatpush1.msra.mxu0 %v4776
    %5205 = vmatprep.subr.mxu0 0.0
    %5206 = vmatpush1.msra.mxu0 %v4777
    %5207 = vmatprep.subr.mxu0 0.0
    %5208 = vmatpush1.msra.mxu0 %v4778
    %5209 = vmatprep.subr.mxu0 0.0
    %5210 = vmatpush1.msra.mxu0 %v4779
    %5211 = vmatprep.subr.mxu0 0.0
    %5212 = vmatpush1.msra.mxu0 %v4780
    %5213 = vmatprep.subr.mxu0 0.0
    %5214 = vmatpush1.msra.mxu0 %v4781
    %5215 = vmatprep.subr.mxu0 0.0
    %5216 = vmatpush1.msra.mxu0 %v4782
    %5217 = vmatprep.subr.mxu0 0.0
    %5218 = vmatpush1.msra.mxu0 %v4783
    %5219 = vmatprep.subr.mxu0 0.0
    %5220 = vmatpush1.msra.mxu0 %v4784
    %5221 = vmatprep.subr.mxu0 0.0
    %5222 = vmatpush1.msra.mxu0 %v4785
    %5223 = vmatprep.subr.mxu0 0.0
    %5224 = vmatpush1.msra.mxu0 %v4786
    %5225 = vmatprep.subr.mxu0 0.0
    %5226 = vmatpush1.msra.mxu0 %v4787
    %5227 = vmatprep.subr.mxu0 0.0
    %5228 = vmatpush1.msra.mxu0 %v4788
    %5229 = vmatprep.subr.mxu0 0.0
    %5230 = vmatpush1.msra.mxu0 %v4789
    %5231 = vmatprep.subr.mxu0 0.0
    %5232 = vmatpush1.msra.mxu0 %v4790
    %5233 = vmatprep.subr.mxu0 0.0
    %5234 = vmatpush1.msra.mxu0 %v4791
    %5235 = vmatprep.subr.mxu0 0.0
    %5236 = vmatpush1.msra.mxu0 %v4792
    %5237 = vmatprep.subr.mxu0 0.0
    %5238 = vmatpush1.msra.mxu0 %v4793
    %5239 = vmatprep.subr.mxu0 0.0
    %5240 = vmatpush1.msra.mxu0 %v4794
    %5241 = vmatprep.subr.mxu0 0.0
    %5242 = vmatpush1.msra.mxu0 %v4795
    %5243 = vmatprep.mubr.f32.mxu0 %v4537
    %5244 = vmatmul.mubr.f32.gmra.mrb[0].mxu0 %v4536
    %v5245 = vpop.f32.mrb[0].mxu0
    %v5246 = vadd.f32 %v5176, %v5245
    %v5247 = vpop.f32.mrb[0].mxu0
    %5248 = vdwg.mxu0
    %5249 = vmatprep.subr.mxu0 0.0
    %5250 = vmatpush1.msra.mxu0 %v4796
    %5251 = vmatprep.subr.mxu0 0.0
    %5252 = vmatpush1.msra.mxu0 %v4797
    %5253 = vmatprep.subr.mxu0 0.0
    %5254 = vmatpush1.msra.mxu0 %v4798
    %5255 = vmatprep.subr.mxu0 0.0
    %5256 = vmatpush1.msra.mxu0 %v4799
    %5257 = vmatprep.subr.mxu0 0.0
    %5258 = vmatpush1.msra.mxu0 %v4800
    %5259 = vmatprep.subr.mxu0 0.0
    %5260 = vmatpush1.msra.mxu0 %v4801
    %5261 = vmatprep.subr.mxu0 0.0
    %5262 = vmatpush1.msra.mxu0 %v4802
    %5263 = vmatprep.subr.mxu0 0.0
    %5264 = vmatpush1.msra.mxu0 %v4803
    %5265 = vmatprep.subr.mxu0 0.0
    %5266 = vmatpush1.msra.mxu0 %v4804
    %5267 = vmatprep.subr.mxu0 0.0
    %5268 = vmatpush1.msra.mxu0 %v4805
    %5269 = vmatprep.subr.mxu0 0.0
    %5270 = vmatpush1.msra.mxu0 %v4806
    %5271 = vmatprep.subr.mxu0 0.0
    %5272 = vmatpush1.msra.mxu0 %v4807
    %5273 = vmatprep.subr.mxu0 0.0
    %5274 = vmatpush1.msra.mxu0 %v4808
    %5275 = vmatprep.subr.mxu0 0.0
    %5276 = vmatpush1.msra.mxu0 %v4809
    %5277 = vmatprep.subr.mxu0 0.0
    %5278 = vmatpush1.msra.mxu0 %v4810
    %5279 = vmatprep.subr.mxu0 0.0
    %5280 = vmatpush1.msra.mxu0 %v4811
    %5281 = vmatprep.subr.mxu0 0.0
    %5282 = vmatpush1.msra.mxu0 %v4812
    %5283 = vmatprep.subr.mxu0 0.0
    %5284 = vmatpush1.msra.mxu0 %v4813
    %5285 = vmatprep.subr.mxu0 0.0
    %5286 = vmatpush1.msra.mxu0 %v4814
    %5287 = vmatprep.subr.mxu0 0.0
    %5288 = vmatpush1.msra.mxu0 %v4815
    %5289 = vmatprep.subr.mxu0 0.0
    %5290 = vmatpush1.msra.mxu0 %v4816
    %5291 = vmatprep.subr.mxu0 0.0
    %5292 = vmatpush1.msra.mxu0 %v4817
    %5293 = vmatprep.subr.mxu0 0.0
    %5294 = vmatpush1.msra.mxu0 %v4818
    %5295 = vmatprep.subr.mxu0 0.0
    %5296 = vmatpush1.msra.mxu0 %v4819
    %5297 = vmatprep.subr.mxu0 0.0
    %5298 = vmatpush1.msra.mxu0 %v4820
    %5299 = vmatprep.subr.mxu0 0.0
    %5300 = vmatpush1.msra.mxu0 %v4821
    %5301 = vmatprep.subr.mxu0 0.0
    %5302 = vmatpush1.msra.mxu0 %v4822
    %5303 = vmatprep.subr.mxu0 0.0
    %5304 = vmatpush1.msra.mxu0 %v4823
    %5305 = vmatprep.subr.mxu0 0.0
    %5306 = vmatpush1.msra.mxu0 %v4824
    %5307 = vmatprep.subr.mxu0 0.0
    %5308 = vmatpush1.msra.mxu0 %v4825
    %5309 = vmatprep.subr.mxu0 0.0
    %5310 = vmatpush1.msra.mxu0 %v4826
    %5311 = vmatprep.subr.mxu0 0.0
    %5312 = vmatpush1.msra.mxu0 %v4827
    %5313 = vmatprep.mubr.f32.mxu0 %v4539
    %5314 = vmatmul.mubr.f32.gmra.mrb[0].mxu0 %v4538
    %v5315 = vpop.f32.mrb[0].mxu0
    %v5316 = vadd.f32 %v5246, %v5315
    %v5317 = vpop.f32.mrb[0].mxu0
    %5318 = vdwg.mxu0
    %5319 = vmatprep.subr.mxu0 0.0
    %5320 = vmatpush1.msra.mxu0 %v4828
    %5321 = vmatprep.subr.mxu0 0.0
    %5322 = vmatpush1.msra.mxu0 %v4829
    %5323 = vmatprep.subr.mxu0 0.0
    %5324 = vmatpush1.msra.mxu0 %v4830
    %5325 = vmatprep.subr.mxu0 0.0
    %5326 = vmatpush1.msra.mxu0 %v4831
    %5327 = vmatprep.subr.mxu0 0.0
    %5328 = vmatpush1.msra.mxu0 %v4832
    %5329 = vmatprep.subr.mxu0 0.0
    %5330 = vmatpush1.msra.mxu0 %v4833
    %5331 = vmatprep.subr.mxu0 0.0
    %5332 = vmatpush1.msra.mxu0 %v4834
    %5333 = vmatprep.subr.mxu0 0.0
    %5334 = vmatpush1.msra.mxu0 %v4835
    %5335 = vmatprep.subr.mxu0 0.0
    %5336 = vmatpush1.msra.mxu0 %v4836
    %5337 = vmatprep.subr.mxu0 0.0
    %5338 = vmatpush1.msra.mxu0 %v4837
    %5339 = vmatprep.subr.mxu0 0.0
    %5340 = vmatpush1.msra.mxu0 %v4838
    %5341 = vmatprep.subr.mxu0 0.0
    %5342 = vmatpush1.msra.mxu0 %v4839
    %5343 = vmatprep.subr.mxu0 0.0
    %5344 = vmatpush1.msra.mxu0 %v4840
    %5345 = vmatprep.subr.mxu0 0.0
    %5346 = vmatpush1.msra.mxu0 %v4841
    %5347 = vmatprep.subr.mxu0 0.0
    %5348 = vmatpush1.msra.mxu0 %v4842
    %5349 = vmatprep.subr.mxu0 0.0
    %5350 = vmatpush1.msra.mxu0 %v4843
    %5351 = vmatprep.subr.mxu0 0.0
    %5352 = vmatpush1.msra.mxu0 %v4844
    %5353 = vmatprep.subr.mxu0 0.0
    %5354 = vmatpush1.msra.mxu0 %v4845
    %5355 = vmatprep.subr.mxu0 0.0
    %5356 = vmatpush1.msra.mxu0 %v4846
    %5357 = vmatprep.subr.mxu0 0.0
    %5358 = vmatpush1.msra.mxu0 %v4847
    %5359 = vmatprep.subr.mxu0 0.0
    %5360 = vmatpush1.msra.mxu0 %v4848
    %5361 = vmatprep.subr.mxu0 0.0
    %5362 = vmatpush1.msra.mxu0 %v4849
    %5363 = vmatprep.subr.mxu0 0.0
    %5364 = vmatpush1.msra.mxu0 %v4850
    %5365 = vmatprep.subr.mxu0 0.0
    %5366 = vmatpush1.msra.mxu0 %v4851
    %5367 = vmatprep.subr.mxu0 0.0
    %5368 = vmatpush1.msra.mxu0 %v4852
    %5369 = vmatprep.subr.mxu0 0.0
    %5370 = vmatpush1.msra.mxu0 %v4853
    %5371 = vmatprep.subr.mxu0 0.0
    %5372 = vmatpush1.msra.mxu0 %v4854
    %5373 = vmatprep.subr.mxu0 0.0
    %5374 = vmatpush1.msra.mxu0 %v4855
    %5375 = vmatprep.subr.mxu0 0.0
    %5376 = vmatpush1.msra.mxu0 %v4856
    %5377 = vmatprep.subr.mxu0 0.0
    %5378 = vmatpush1.msra.mxu0 %v4857
    %5379 = vmatprep.subr.mxu0 0.0
    %5380 = vmatpush1.msra.mxu0 %v4858
    %5381 = vmatprep.subr.mxu0 0.0
    %5382 = vmatpush1.msra.mxu0 %v4859
    %5383 = vmatprep.mubr.f32.mxu0 %v4541
    %5384 = vmatmul.mubr.f32.gmra.mrb[0].mxu0 %v4540
    %v5385 = vpop.f32.mrb[0].mxu0
    %v5386 = vadd.f32 %v5316, %v5385
    %v5387 = vpop.f32.mrb[0].mxu0
    %5388 = vdwg.mxu0
    %5389 = vmatprep.subr.mxu0 0.0
    %5390 = vmatpush1.msra.mxu0 %v4860
    %5391 = vmatprep.subr.mxu0 0.0
    %5392 = vmatpush1.msra.mxu0 %v4861
    %5393 = vmatprep.subr.mxu0 0.0
    %5394 = vmatpush1.msra.mxu0 %v4862
    %5395 = vmatprep.subr.mxu0 0.0
    %5396 = vmatpush1.msra.mxu0 %v4863
    %5397 = vmatprep.subr.mxu0 0.0
    %5398 = vmatpush1.msra.mxu0 %v4864
    %5399 = vmatprep.subr.mxu0 0.0
    %5400 = vmatpush1.msra.mxu0 %v4865
    %5401 = vmatprep.subr.mxu0 0.0
    %5402 = vmatpush1.msra.mxu0 %v4866
    %5403 = vmatprep.subr.mxu0 0.0
    %5404 = vmatpush1.msra.mxu0 %v4867
    %5405 = vmatprep.subr.mxu0 0.0
    %5406 = vmatpush1.msra.mxu0 %v4868
    %5407 = vmatprep.subr.mxu0 0.0
    %5408 = vmatpush1.msra.mxu0 %v4869
    %5409 = vmatprep.subr.mxu0 0.0
    %5410 = vmatpush1.msra.mxu0 %v4870
    %5411 = vmatprep.subr.mxu0 0.0
    %5412 = vmatpush1.msra.mxu0 %v4871
    %5413 = vmatprep.subr.mxu0 0.0
    %5414 = vmatpush1.msra.mxu0 %v4872
    %5415 = vmatprep.subr.mxu0 0.0
    %5416 = vmatpush1.msra.mxu0 %v4873
    %5417 = vmatprep.subr.mxu0 0.0
    %5418 = vmatpush1.msra.mxu0 %v4874
    %5419 = vmatprep.subr.mxu0 0.0
    %5420 = vmatpush1.msra.mxu0 %v4875
    %5421 = vmatprep.subr.mxu0 0.0
    %5422 = vmatpush1.msra.mxu0 %v4876
    %5423 = vmatprep.subr.mxu0 0.0
    %5424 = vmatpush1.msra.mxu0 %v4877
    %5425 = vmatprep.subr.mxu0 0.0
    %5426 = vmatpush1.msra.mxu0 %v4878
    %5427 = vmatprep.subr.mxu0 0.0
    %5428 = vmatpush1.msra.mxu0 %v4879
    %5429 = vmatprep.subr.mxu0 0.0
    %5430 = vmatpush1.msra.mxu0 %v4880
    %5431 = vmatprep.subr.mxu0 0.0
    %5432 = vmatpush1.msra.mxu0 %v4881
    %5433 = vmatprep.subr.mxu0 0.0
    %5434 = vmatpush1.msra.mxu0 %v4882
    %5435 = vmatprep.subr.mxu0 0.0
    %5436 = vmatpush1.msra.mxu0 %v4883
    %5437 = vmatprep.subr.mxu0 0.0
    %5438 = vmatpush1.msra.mxu0 %v4884
    %5439 = vmatprep.subr.mxu0 0.0
    %5440 = vmatpush1.msra.mxu0 %v4885
    %5441 = vmatprep.subr.mxu0 0.0
    %5442 = vmatpush1.msra.mxu0 %v4886
    %5443 = vmatprep.subr.mxu0 0.0
    %5444 = vmatpush1.msra.mxu0 %v4887
    %5445 = vmatprep.subr.mxu0 0.0
    %5446 = vmatpush1.msra.mxu0 %v4888
    %5447 = vmatprep.subr.mxu0 0.0
    %5448 = vmatpush1.msra.mxu0 %v4889
    %5449 = vmatprep.subr.mxu0 0.0
    %5450 = vmatpush1.msra.mxu0 %v4890
    %5451 = vmatprep.subr.mxu0 0.0
    %5452 = vmatpush1.msra.mxu0 %v4891
    %5453 = vmatprep.mubr.f32.mxu0 %v4543
    %5454 = vmatmul.mubr.f32.gmra.mrb[0].mxu0 %v4542
    %v5455 = vpop.f32.mrb[0].mxu0
    %v5456 = vadd.f32 %v5386, %v5455
    %v5457 = vpop.f32.mrb[0].mxu0
    %5458 = vdwg.mxu0
    %v5459 = vmax.f32 %v5456, 0.0
    %v5460 = vld [vmem:[%s5] sm:$0xff]
    %v5461 = vld [vmem:[%s5 + $0x8] sm:$0xff]
    %v5462 = vld [vmem:[%s5 + $0x10] sm:$0xff]
    %v5463 = vld [vmem:[%s5 + $0x18] sm:$0xff]
    %v5464 = vld [vmem:[#allocation8] sm:$0x1]
    %v5466 = vlaneseq
    %v5467 = vshrl.u32 %v5466, 7
    %v5468 = vsub.s32 0, %v5467
    %v5469 = vrot.slane %v5464, %v5468
    %vm5471 = vcmask 261120
    %v5473 = vsel %vm5471, %v5459, 0
    %5475 = vmatprep.subr.mxu0 0.0
    %5476 = vmatpush1.msra.mxu0 %v5460
    %5477 = vmatprep.subr.mxu0 0.0
    %5478 = vmatpush1.msra.mxu0 %v5461
    %5479 = vmatprep.subr.mxu0 0.0
    %5480 = vmatpush1.msra.mxu0 %v5462
    %5481 = vmatprep.subr.mxu0 0.0
    %5482 = vmatpush1.msra.mxu0 %v5463
    %5483 = vmatprep.subr.mxu0 0.0
    %5484 = vmatpush1.msra.mxu0 0.0
    %5485 = vmatprep.subr.mxu0 0.0
    %5486 = vmatpush1.msra.mxu0 0.0
    %5487 = vmatprep.subr.mxu0 0.0
    %5488 = vmatpush1.msra.mxu0 0.0
    %5489 = vmatprep.subr.mxu0 0.0
    %5490 = vmatpush1.msra.mxu0 0.0
    %5491 = vmatprep.subr.mxu0 0.0
    %5492 = vmatpush1.msra.mxu0 0.0
    %5493 = vmatprep.subr.mxu0 0.0
    %5494 = vmatpush1.msra.mxu0 0.0
    %5495 = vmatprep.subr.mxu0 0.0
    %5496 = vmatpush1.msra.mxu0 0.0
    %5497 = vmatprep.subr.mxu0 0.0
    %5498 = vmatpush1.msra.mxu0 0.0
    %5499 = vmatprep.subr.mxu0 0.0
    %5500 = vmatpush1.msra.mxu0 0.0
    %5501 = vmatprep.subr.mxu0 0.0
    %5502 = vmatpush1.msra.mxu0 0.0
    %5503 = vmatprep.subr.mxu0 0.0
    %5504 = vmatpush1.msra.mxu0 0.0
    %5505 = vmatprep.subr.mxu0 0.0
    %5506 = vmatpush1.msra.mxu0 0.0
    %5507 = vmatprep.subr.mxu0 0.0
    %5508 = vmatpush1.msra.mxu0 0.0
    %5509 = vmatprep.subr.mxu0 0.0
    %5510 = vmatpush1.msra.mxu0 0.0
    %5511 = vmatprep.subr.mxu0 0.0
    %5512 = vmatpush1.msra.mxu0 0.0
    %5513 = vmatprep.subr.mxu0 0.0
    %5514 = vmatpush1.msra.mxu0 0.0
    %5515 = vmatprep.subr.mxu0 0.0
    %5516 = vmatpush1.msra.mxu0 0.0
    %5517 = vmatprep.subr.mxu0 0.0
    %5518 = vmatpush1.msra.mxu0 0.0
    %5519 = vmatprep.subr.mxu0 0.0
    %5520 = vmatpush1.msra.mxu0 0.0
    %5521 = vmatprep.subr.mxu0 0.0
    %5522 = vmatpush1.msra.mxu0 0.0
    %5523 = vmatprep.subr.mxu0 0.0
    %5524 = vmatpush1.msra.mxu0 0.0
    %5525 = vmatprep.subr.mxu0 0.0
    %5526 = vmatpush1.msra.mxu0 0.0
    %5527 = vmatprep.subr.mxu0 0.0
    %5528 = vmatpush1.msra.mxu0 0.0
    %5529 = vmatprep.subr.mxu0 0.0
    %5530 = vmatpush1.msra.mxu0 0.0
    %5531 = vmatprep.subr.mxu0 0.0
    %5532 = vmatpush1.msra.mxu0 0.0
    %5533 = vmatprep.subr.mxu0 0.0
    %5534 = vmatpush1.msra.mxu0 0.0
    %5535 = vmatprep.subr.mxu0 0.0
    %5536 = vmatpush1.msra.mxu0 0.0
    %5537 = vmatprep.subr.mxu0 0.0
    %5538 = vmatpush1.msra.mxu0 0.0
    %5539 = vmatprep.mubr.f32.mxu0 0.0
    %5540 = vmatmul.mubr.f32.gmra.mrb[0].mxu0 %v5473
    %v5541 = vpop.f32.mrb[0].mxu0
    %v5542 = vadd.f32 %v5469, %v5541
    %v5543 = vpop.f32.mrb[0].mxu0
    %5544 = vdwg.mxu0
    %vm5545 = vcmask 9216
    %5546 = vst.msk [vmem:[#allocation10] sm:$0x3] %vm5545, %v5542
    // Predicated region
    $region46: #{local_adversarial_combined_forward.1} parent=1 // pred_check
      _
    $region47: #{local_adversarial_combined_forward.1} parent=1 // pred_check_branch
      %5548 = sbr.rel (0) target = $region49
    $region48: #{local_adversarial_combined_forward.1} parent=1 // pred_region
      _
    $region49: #{local_adversarial_combined_forward.1} parent=1 // pred_fallthru
      _
    // Predicated region
    $region50: #{local_adversarial_combined_forward.1} parent=1 // pred_check
      _
    $region51: #{local_adversarial_combined_forward.1} parent=1 // pred_check_branch
      %5550 = sbr.rel (0) target = $region53
    $region52: #{local_adversarial_combined_forward.1} parent=1 // pred_region
      %s5552 = ssub.s32 32, 32
      %5553 = vsyncadd [#allocation4], %s5552
      %s5555 = sshll.u32 [#allocation10], 4
      %s5556 = int_to_ptr.vmem [resolvable:$true] %s5555
      %5558 = dma.vmem_to_hbm [thread:$0]  %s5556, 32, %s8, [#allocation4]
    $region53: #{local_adversarial_combined_forward.1} parent=1 // pred_fallthru
      _
    // Predicated region
    $region54: #{local_adversarial_combined_forward.1} parent=1 // pred_check
      _
    $region55: #{local_adversarial_combined_forward.1} parent=1 // pred_check_branch
      %5560 = sbr.rel (0) target = $region57
    $region56: #{local_adversarial_combined_forward.1} parent=1 // pred_region
      _
    $region57: #{local_adversarial_combined_forward.1} parent=1 // pred_fallthru
      _
    // Predicated region
    $region58: #{local_adversarial_combined_forward.1} parent=1 // pred_check
      _
    $region59: #{local_adversarial_combined_forward.1} parent=1 // pred_check_branch
      %5562 = sbr.rel (0) target = $region61
    $region60: #{local_adversarial_combined_forward.1} parent=1 // pred_region
      %5563 = dma.done [#allocation4], 32
    $region61: #{local_adversarial_combined_forward.1} parent=1 // pred_fallthru
      _
    %5564 = vsyncpa [#allocation3], 1
    %5565 = vsyncpa [#allocation6], 1
    %5566 = vsyncpa [#allocation9], 1
    %5567 = vsyncpa [#allocation4], 1

</llo_original>
